<compile_context>
chip_gen: v7x
topology: tpu7x:2x2x1
jax: 0.10.0
libtpu: 0.0.40
codegen_flags: <defaults>
</compile_context>

<pallas_src>
import jax
import jax.numpy as jnp
from jax.experimental import pallas as pl
from jax.experimental.pallas import tpu as pltpu


NUM_CLASSES = 5
CLASS_PAD = 128          # pad tiny class dim up to one lane-register width
NEG_PAD = -1e30          # large finite negative (safer than -inf arithmetic)
IN_DIM = 4096 * 3

LAYER_DIMS = [(IN_DIM, 256), (256, 512), (512, 512), (512, 256),
              (256, 128), (128, 64), (64, NUM_CLASSES)]


# ---------------------------------------------------------------------------
# Fused kernel: layer-1 K-stream + (layers 2..7 + log_softmax) epilogue
# ---------------------------------------------------------------------------
def _fused_mlp_kernel(x_ref, w1_ref, b1_ref, *rest):
    # rest = [w2, b2, w3, b3, w4, b4, w5, b5, w6, b6, w7_pad, b7_pad, o_ref, acc_ref]
    *wb_refs, o_ref, acc_ref = rest
    k = pl.program_id(0)

    # Fold layer-1 bias into the accumulator initialization.
    @pl.when(k == 0)
    def _():
        acc_ref[...] = jnp.broadcast_to(b1_ref[...], acc_ref.shape)

    # Layer-1 partial product: the only meaningful HBM traffic (12288x256 W1,
    # streamed as bf16 tiles), accumulated in f32 on the MXU.
    acc_ref[...] += jnp.dot(
        x_ref[...], w1_ref[...], preferred_element_type=jnp.float32
    )

    @pl.when(k == pl.num_programs(0) - 1)
    def _():
        # Layer 1 ReLU (bias already in the accumulator).
        h = jnp.maximum(acc_ref[...], 0.0)

        # Layers 2..6: relu(h @ W + b). Weights are bf16-resident in VMEM;
        # cast up to f32 for the (tiny, compute-negligible) epilogue matmuls.
        n_hidden = (len(wb_refs) - 2) // 2
        for l in range(n_hidden):
            w = wb_refs[2 * l][...].astype(jnp.float32)
            b = wb_refs[2 * l + 1][...]
            h = jnp.maximum(
                jnp.dot(h, w, preferred_element_type=jnp.float32) + b, 0.0
            )

        # Final layer (class dim padded to 128; padded bias = -1e30 so padded
        # columns give exp(.)=0 in the logsumexp) followed by log_softmax.
        w7 = wb_refs[-2][...].astype(jnp.float32)
        b7 = wb_refs[-1][...]
        logits = jnp.dot(h, w7, preferred_element_type=jnp.float32) + b7
        m = jnp.max(logits, axis=-1, keepdims=True)
        lse = jnp.log(jnp.sum(jnp.exp(logits - m), axis=-1, keepdims=True)) + m
        o_ref[...] = (logits - lse).astype(o_ref.dtype)


# ---------------------------------------------------------------------------
# Wrapper
# ---------------------------------------------------------------------------
def classifier_forward(x, params, *, tk: int = 6144,
                       weight_dtype=jnp.bfloat16):
    """x: (batch, 12288) f32, params: list of (W (in,out), b (out,)) f32."""
    batch, K = x.shape
    assert K == IN_DIM, (K, IN_DIM)

    # Pad batch rows to a multiple of 8 (sublane granularity).
    m_pad = max(8, ((batch + 7) // 8) * 8)
    if m_pad != batch:
        x = jnp.pad(x, ((0, m_pad - batch), (0, 0)))
    x = x.astype(weight_dtype)

    w1, b1 = params[0]
    n1 = w1.shape[1]
    w1 = w1.astype(weight_dtype)
    b1 = b1.astype(jnp.float32).reshape(1, n1)

    tk = min(tk, K)
    assert K % tk == 0, (K, tk)

    # Grid-invariant small operands: layers 2..6 then padded layer 7.
    # Weights stored bf16 (halves their HBM traffic); biases stay f32.
    small = []
    for (w, b) in params[1:-1]:
        small.append(w.astype(weight_dtype))
        small.append(b.astype(jnp.float32).reshape(1, -1))
    w7, b7 = params[-1]
    w7p = jnp.pad(w7, ((0, 0), (0, CLASS_PAD - NUM_CLASSES))).astype(weight_dtype)
    b7p = jnp.concatenate(
        [b7.astype(jnp.float32),
         jnp.full((CLASS_PAD - NUM_CLASSES,), NEG_PAD, jnp.float32)]
    ).reshape(1, CLASS_PAD)
    small.append(w7p)
    small.append(b7p)

    def full_block(arr):
        # Full-array block, constant index_map -> DMA'd once, resident in VMEM.
        return pl.BlockSpec(arr.shape, lambda k: (0, 0))

    small_specs = [full_block(a) for a in small]

    out = pl.pallas_call(
        _fused_mlp_kernel,
        out_shape=jax.ShapeDtypeStruct((m_pad, CLASS_PAD), jnp.float32),
        grid_spec=pltpu.PrefetchScalarGridSpec(
            num_scalar_prefetch=0,
            grid=(K // tk,),
            in_specs=[
                pl.BlockSpec((m_pad, tk), lambda k: (0, k)),   # x K-stream
                pl.BlockSpec((tk, n1), lambda k: (k, 0)),      # W1 K-stream
                pl.BlockSpec((1, n1), lambda k: (0, 0)),       # b1 (resident)
            ]
            + small_specs,
            out_specs=pl.BlockSpec((m_pad, CLASS_PAD), lambda k: (0, 0)),
            scratch_shapes=[pltpu.VMEM((m_pad, n1), jnp.float32)],
        ),
        compiler_params=pltpu.CompilerParams(
            dimension_semantics=("arbitrary",),          # K is a reduction axis
            vmem_limit_bytes=48 * 1024 * 1024,           # headroom on all gens
        ),
    )(x, w1, b1, *small)

    return out[:batch, :NUM_CLASSES]


# ---------------------------------------------------------------------------
# Parameter construction (deterministic, PyTorch-style uniform(-1/sqrt(fan_in)))
# ---------------------------------------------------------------------------
def init_params(key):
    params = []
    for (fan_in, fan_out) in LAYER_DIMS:
        key, kw, kb = jax.random.split(key, 3)
        bound = 1.0 / jnp.sqrt(float(fan_in))
        w = jax.random.uniform(kw, (fan_in, fan_out), jnp.float32, -bound, bound)
        b = jax.random.uniform(kb, (fan_out,), jnp.float32, -bound, bound)
        params.append((w, b))
    return params


def classifier_reference_f32(x, params):
    """Pure f32 reference matching the PyTorch module semantics."""
    h = x
    for (w, b) in params[:-1]:
        h = jnp.maximum(
            jnp.dot(h, w, precision=jax.lax.Precision.HIGHEST) + b, 0.0)
    w7, b7 = params[-1]
    logits = jnp.dot(h, w7, precision=jax.lax.Precision.HIGHEST) + b7
    return jax.nn.log_softmax(logits, axis=1)


def classifier_reference_mixed(x, params):
    """Reference with the same bf16 weight storage the kernel uses."""
    bf = jnp.bfloat16
    w1, b1 = params[0]
    h = jnp.dot(x.astype(bf), w1.astype(bf),
                preferred_element_type=jnp.float32) + b1
    h = jnp.maximum(h, 0.0)
    for (w, b) in params[1:-1]:
        h = jnp.maximum(
            jnp.dot(h, w.astype(bf).astype(jnp.float32),
                    precision=jax.lax.Precision.HIGHEST) + b, 0.0)
    w7, b7 = params[-1]
    logits = jnp.dot(h, w7.astype(bf).astype(jnp.float32),
                     precision=jax.lax.Precision.HIGHEST) + b7
    return jax.nn.log_softmax(logits, axis=1)


# ---------------------------------------------------------------------------
if __name__ == "__main__":
    key = jax.random.PRNGKey(0)
    kparam, kx = jax.random.split(key)

    params = init_params(kparam)

    batch = 2
    x = jax.random.normal(kx, (batch, IN_DIM), jnp.float32)

    out = jax.block_until_ready(classifier_forward(x, params))
    ref_mixed = jax.block_until_ready(classifier_reference_mixed(x, params))
    ref_f32 = jax.block_until_ready(classifier_reference_f32(x, params))

    assert out.shape == (batch, NUM_CLASSES), out.shape
    assert bool(jnp.all(jnp.isfinite(out)))
    # Tight check vs a reference using identical bf16 weight storage.
    assert jnp.allclose(out, ref_mixed, atol=5e-3, rtol=5e-3), (
        "mixed-precision mismatch, max |diff| = "
        f"{float(jnp.max(jnp.abs(out - ref_mixed)))}")
    # Loose check vs the pure-f32 module semantics (bf16 weight rounding).
    assert jnp.allclose(out, ref_f32, atol=2e-2, rtol=2e-2), (
        "f32-reference mismatch, max |diff| = "
        f"{float(jnp.max(jnp.abs(out - ref_f32)))}")
    print("KERNEL_OK")
</pallas_src>

<mosaic_0001>
module attributes {stable_mosaic.version = 11 : i64} {
  func.func @_fused_mlp_kernel(%arg0: i32, %arg1: memref<8x6144xbf16, #tpu.memory_space<vmem>>, %arg2: memref<6144x256xbf16, #tpu.memory_space<vmem>>, %arg3: memref<1x256xf32, #tpu.memory_space<vmem>>, %arg4: memref<256x512xbf16, #tpu.memory_space<vmem>>, %arg5: memref<1x512xf32, #tpu.memory_space<vmem>>, %arg6: memref<512x512xbf16, #tpu.memory_space<vmem>>, %arg7: memref<1x512xf32, #tpu.memory_space<vmem>>, %arg8: memref<512x256xbf16, #tpu.memory_space<vmem>>, %arg9: memref<1x256xf32, #tpu.memory_space<vmem>>, %arg10: memref<256x128xbf16, #tpu.memory_space<vmem>>, %arg11: memref<1x128xf32, #tpu.memory_space<vmem>>, %arg12: memref<128x64xbf16, #tpu.memory_space<vmem>>, %arg13: memref<1x64xf32, #tpu.memory_space<vmem>>, %arg14: memref<64x128xbf16, #tpu.memory_space<vmem>>, %arg15: memref<1x128xf32, #tpu.memory_space<vmem>>, %arg16: memref<8x128xf32, #tpu.memory_space<vmem>>, %arg17: memref<8x256xf32, #tpu.memory_space<vmem>>) attributes {dimension_semantics = [#tpu.dimension_semantics<arbitrary>], iteration_bounds = array<i64: 2>, scalar_prefetch = 0 : i64, scratch_operands = 1 : i64, tpu.core_type = #tpu.core_type<tc>, window_params = [{transform_indices = @transform_0, window_bounds = array<i64: 8, 6144>}, {transform_indices = @transform_1, window_bounds = array<i64: 6144, 256>}, {pipeline_mode = #tpu.pipeline_mode<synchronous>, transform_indices = @transform_2, window_bounds = array<i64: 1, 256>}, {pipeline_mode = #tpu.pipeline_mode<synchronous>, transform_indices = @transform_3, window_bounds = array<i64: 256, 512>}, {pipeline_mode = #tpu.pipeline_mode<synchronous>, transform_indices = @transform_4, window_bounds = array<i64: 1, 512>}, {pipeline_mode = #tpu.pipeline_mode<synchronous>, transform_indices = @transform_5, window_bounds = array<i64: 512, 512>}, {pipeline_mode = #tpu.pipeline_mode<synchronous>, transform_indices = @transform_6, window_bounds = array<i64: 1, 512>}, {pipeline_mode = #tpu.pipeline_mode<synchronous>, transform_indices = @transform_7, window_bounds = array<i64: 512, 256>}, {pipeline_mode = #tpu.pipeline_mode<synchronous>, transform_indices = @transform_8, window_bounds = array<i64: 1, 256>}, {pipeline_mode = #tpu.pipeline_mode<synchronous>, transform_indices = @transform_9, window_bounds = array<i64: 256, 128>}, {pipeline_mode = #tpu.pipeline_mode<synchronous>, transform_indices = @transform_10, window_bounds = array<i64: 1, 128>}, {pipeline_mode = #tpu.pipeline_mode<synchronous>, transform_indices = @transform_11, window_bounds = array<i64: 128, 64>}, {pipeline_mode = #tpu.pipeline_mode<synchronous>, transform_indices = @transform_12, window_bounds = array<i64: 1, 64>}, {pipeline_mode = #tpu.pipeline_mode<synchronous>, transform_indices = @transform_13, window_bounds = array<i64: 64, 128>}, {pipeline_mode = #tpu.pipeline_mode<synchronous>, transform_indices = @transform_14, window_bounds = array<i64: 1, 128>}, {pipeline_mode = #tpu.pipeline_mode<synchronous>, transform_indices = @transform_15, window_bounds = array<i64: 8, 128>}]} {
    %c0_i32 = arith.constant 0 : i32
    %0 = arith.cmpi eq, %arg0, %c0_i32 : i32
    %1 = arith.extui %0 : i1 to i32
    %c0_i32_0 = arith.constant 0 : i32
    %2 = arith.cmpi ne, %1, %c0_i32_0 : i32
    scf.if %2 {
      %c0_9 = arith.constant 0 : index
      %c0_10 = arith.constant 0 : index
      %12 = vector.load %arg3[%c0_9, %c0_10] : memref<1x256xf32, #tpu.memory_space<vmem>>, vector<1x256xf32>
      %13 = vector.shape_cast %12 : vector<1x256xf32> to vector<1x256xf32>
      %14 = vector.broadcast %13 : vector<1x256xf32> to vector<8x256xf32>
      %c0_11 = arith.constant 0 : index
      %c0_12 = arith.constant 0 : index
      %15 = vector.load %arg17[%c0_11, %c0_12] : memref<8x256xf32, #tpu.memory_space<vmem>>, vector<8x256xf32>
      tpu.vector_store %arg17[%c0_11, %c0_12], %14 {strides = array<i32>} : memref<8x256xf32, #tpu.memory_space<vmem>>, vector<8x256xf32>,
    } else {
    }
    %c0 = arith.constant 0 : index
    %c0_1 = arith.constant 0 : index
    %3 = vector.load %arg17[%c0, %c0_1] : memref<8x256xf32, #tpu.memory_space<vmem>>, vector<8x256xf32>
    %c0_2 = arith.constant 0 : index
    %c0_3 = arith.constant 0 : index
    %4 = vector.load %arg1[%c0_2, %c0_3] : memref<8x6144xbf16, #tpu.memory_space<vmem>>, vector<8x6144xbf16>
    %c0_4 = arith.constant 0 : index
    %c0_5 = arith.constant 0 : index
    %5 = vector.load %arg2[%c0_4, %c0_5] : memref<6144x256xbf16, #tpu.memory_space<vmem>>, vector<6144x256xbf16>
    %cst = arith.constant dense<0.000000e+00> : vector<8x256xf32>
    %6 = tpu.matmul %4, %5, %cst {dimension_numbers = #tpu.dot_dimension_numbers<[1], [0], [0], [1], [0, 0, 1, 1], [], []>} : vector<8x6144xbf16>, vector<6144x256xbf16>, vector<8x256xf32> -> vector<8x256xf32>
    %7 = arith.addf %3, %6 : vector<8x256xf32>
    %c0_6 = arith.constant 0 : index
    %c0_7 = arith.constant 0 : index
    %8 = vector.load %arg17[%c0_6, %c0_7] : memref<8x256xf32, #tpu.memory_space<vmem>>, vector<8x256xf32>
    tpu.vector_store %arg17[%c0_6, %c0_7], %7 {strides = array<i32>} : memref<8x256xf32, #tpu.memory_space<vmem>>, vector<8x256xf32>,
    %c1_i32 = arith.constant 1 : i32
    %9 = arith.cmpi eq, %arg0, %c1_i32 : i32
    %10 = arith.extui %9 : i1 to i32
    %c0_i32_8 = arith.constant 0 : i32
    %11 = arith.cmpi ne, %10, %c0_i32_8 : i32
    scf.if %11 {
      %c0_9 = arith.constant 0 : index
      %c0_10 = arith.constant 0 : index
      %12 = vector.load %arg17[%c0_9, %c0_10] : memref<8x256xf32, #tpu.memory_space<vmem>>, vector<8x256xf32>
      %cst_11 = arith.constant 0.000000e+00 : f32
      %13 = vector.broadcast %cst_11 : f32 to vector<8x256xf32>
      %14 = arith.maximumf %12, %13 : vector<8x256xf32>
      %c0_12 = arith.constant 0 : index
      %c0_13 = arith.constant 0 : index
      %15 = vector.load %arg4[%c0_12, %c0_13] : memref<256x512xbf16, #tpu.memory_space<vmem>>, vector<256x512xbf16>
      %16 = arith.extf %15 : vector<256x512xbf16> to vector<256x512xf32>
      %c0_14 = arith.constant 0 : index
      %c0_15 = arith.constant 0 : index
      %17 = vector.load %arg5[%c0_14, %c0_15] : memref<1x512xf32, #tpu.memory_space<vmem>>, vector<1x512xf32>
      %cst_16 = arith.constant dense<0.000000e+00> : vector<8x512xf32>
      %18 = tpu.matmul %14, %16, %cst_16 {dimension_numbers = #tpu.dot_dimension_numbers<[1], [0], [0], [1], [0, 0, 1, 1], [], []>} : vector<8x256xf32>, vector<256x512xf32>, vector<8x512xf32> -> vector<8x512xf32>
      %19 = vector.broadcast %17 : vector<1x512xf32> to vector<8x512xf32>
      %20 = arith.addf %18, %19 : vector<8x512xf32>
      %cst_17 = arith.constant 0.000000e+00 : f32
      %21 = vector.broadcast %cst_17 : f32 to vector<8x512xf32>
      %22 = arith.maximumf %20, %21 : vector<8x512xf32>
      %c0_18 = arith.constant 0 : index
      %c0_19 = arith.constant 0 : index
      %23 = vector.load %arg6[%c0_18, %c0_19] : memref<512x512xbf16, #tpu.memory_space<vmem>>, vector<512x512xbf16>
      %24 = arith.extf %23 : vector<512x512xbf16> to vector<512x512xf32>
      %c0_20 = arith.constant 0 : index
      %c0_21 = arith.constant 0 : index
      %25 = vector.load %arg7[%c0_20, %c0_21] : memref<1x512xf32, #tpu.memory_space<vmem>>, vector<1x512xf32>
      %cst_22 = arith.constant dense<0.000000e+00> : vector<8x512xf32>
      %26 = tpu.matmul %22, %24, %cst_22 {dimension_numbers = #tpu.dot_dimension_numbers<[1], [0], [0], [1], [0, 0, 1, 1], [], []>} : vector<8x512xf32>, vector<512x512xf32>, vector<8x512xf32> -> vector<8x512xf32>
      %27 = vector.broadcast %25 : vector<1x512xf32> to vector<8x512xf32>
      %28 = arith.addf %26, %27 : vector<8x512xf32>
      %cst_23 = arith.constant 0.000000e+00 : f32
      %29 = vector.broadcast %cst_23 : f32 to vector<8x512xf32>
      %30 = arith.maximumf %28, %29 : vector<8x512xf32>
      %c0_24 = arith.constant 0 : index
      %c0_25 = arith.constant 0 : index
      %31 = vector.load %arg8[%c0_24, %c0_25] : memref<512x256xbf16, #tpu.memory_space<vmem>>, vector<512x256xbf16>
      %32 = arith.extf %31 : vector<512x256xbf16> to vector<512x256xf32>
      %c0_26 = arith.constant 0 : index
      %c0_27 = arith.constant 0 : index
      %33 = vector.load %arg9[%c0_26, %c0_27] : memref<1x256xf32, #tpu.memory_space<vmem>>, vector<1x256xf32>
      %cst_28 = arith.constant dense<0.000000e+00> : vector<8x256xf32>
      %34 = tpu.matmul %30, %32, %cst_28 {dimension_numbers = #tpu.dot_dimension_numbers<[1], [0], [0], [1], [0, 0, 1, 1], [], []>} : vector<8x512xf32>, vector<512x256xf32>, vector<8x256xf32> -> vector<8x256xf32>
      %35 = vector.broadcast %33 : vector<1x256xf32> to vector<8x256xf32>
      %36 = arith.addf %34, %35 : vector<8x256xf32>
      %cst_29 = arith.constant 0.000000e+00 : f32
      %37 = vector.broadcast %cst_29 : f32 to vector<8x256xf32>
      %38 = arith.maximumf %36, %37 : vector<8x256xf32>
      %c0_30 = arith.constant 0 : index
      %c0_31 = arith.constant 0 : index
      %39 = vector.load %arg10[%c0_30, %c0_31] : memref<256x128xbf16, #tpu.memory_space<vmem>>, vector<256x128xbf16>
      %40 = arith.extf %39 : vector<256x128xbf16> to vector<256x128xf32>
      %c0_32 = arith.constant 0 : index
      %c0_33 = arith.constant 0 : index
      %41 = vector.load %arg11[%c0_32, %c0_33] : memref<1x128xf32, #tpu.memory_space<vmem>>, vector<1x128xf32>
      %cst_34 = arith.constant dense<0.000000e+00> : vector<8x128xf32>
      %42 = tpu.matmul %38, %40, %cst_34 {dimension_numbers = #tpu.dot_dimension_numbers<[1], [0], [0], [1], [0, 0, 1, 1], [], []>} : vector<8x256xf32>, vector<256x128xf32>, vector<8x128xf32> -> vector<8x128xf32>
      %43 = vector.broadcast %41 : vector<1x128xf32> to vector<8x128xf32>
      %44 = arith.addf %42, %43 : vector<8x128xf32>
      %cst_35 = arith.constant 0.000000e+00 : f32
      %45 = vector.broadcast %cst_35 : f32 to vector<8x128xf32>
      %46 = arith.maximumf %44, %45 : vector<8x128xf32>
      %c0_36 = arith.constant 0 : index
      %c0_37 = arith.constant 0 : index
      %47 = vector.load %arg12[%c0_36, %c0_37] : memref<128x64xbf16, #tpu.memory_space<vmem>>, vector<128x64xbf16>
      %48 = arith.extf %47 : vector<128x64xbf16> to vector<128x64xf32>
      %c0_38 = arith.constant 0 : index
      %c0_39 = arith.constant 0 : index
      %49 = vector.load %arg13[%c0_38, %c0_39] : memref<1x64xf32, #tpu.memory_space<vmem>>, vector<1x64xf32>
      %cst_40 = arith.constant dense<0.000000e+00> : vector<8x64xf32>
      %50 = tpu.matmul %46, %48, %cst_40 {dimension_numbers = #tpu.dot_dimension_numbers<[1], [0], [0], [1], [0, 0, 1, 1], [], []>} : vector<8x128xf32>, vector<128x64xf32>, vector<8x64xf32> -> vector<8x64xf32>
      %51 = vector.broadcast %49 : vector<1x64xf32> to vector<8x64xf32>
      %52 = arith.addf %50, %51 : vector<8x64xf32>
      %cst_41 = arith.constant 0.000000e+00 : f32
      %53 = vector.broadcast %cst_41 : f32 to vector<8x64xf32>
      %54 = arith.maximumf %52, %53 : vector<8x64xf32>
      %c0_42 = arith.constant 0 : index
      %c0_43 = arith.constant 0 : index
      %55 = vector.load %arg14[%c0_42, %c0_43] : memref<64x128xbf16, #tpu.memory_space<vmem>>, vector<64x128xbf16>
      %56 = arith.extf %55 : vector<64x128xbf16> to vector<64x128xf32>
      %c0_44 = arith.constant 0 : index
      %c0_45 = arith.constant 0 : index
      %57 = vector.load %arg15[%c0_44, %c0_45] : memref<1x128xf32, #tpu.memory_space<vmem>>, vector<1x128xf32>
      %cst_46 = arith.constant dense<0.000000e+00> : vector<8x128xf32>
      %58 = tpu.matmul %54, %56, %cst_46 {dimension_numbers = #tpu.dot_dimension_numbers<[1], [0], [0], [1], [0, 0, 1, 1], [], []>} : vector<8x64xf32>, vector<64x128xf32>, vector<8x128xf32> -> vector<8x128xf32>
      %59 = vector.broadcast %57 : vector<1x128xf32> to vector<8x128xf32>
      %60 = arith.addf %58, %59 : vector<8x128xf32>
      %cst_47 = arith.constant dense<0xFF800000> : vector<8xf32>
      %61 = vector.multi_reduction <maximumf>, %60, %cst_47 [1] : vector<8x128xf32> to vector<8xf32>
      %62 = vector.shape_cast %61 : vector<8xf32> to vector<8x1xf32>
      %63 = vector.broadcast %62 : vector<8x1xf32> to vector<8x128xf32>
      %64 = arith.subf %60, %63 : vector<8x128xf32>
      %65 = math.exp %64 : vector<8x128xf32>
      %cst_48 = arith.constant dense<0.000000e+00> : vector<8xf32>
      %66 = vector.multi_reduction <add>, %65, %cst_48 [1] : vector<8x128xf32> to vector<8xf32>
      %67 = vector.shape_cast %66 : vector<8xf32> to vector<8x1xf32>
      %68 = math.log %67 : vector<8x1xf32>
      %69 = arith.addf %68, %62 : vector<8x1xf32>
      %70 = vector.broadcast %69 : vector<8x1xf32> to vector<8x128xf32>
      %71 = arith.subf %60, %70 : vector<8x128xf32>
      %c0_49 = arith.constant 0 : index
      %c0_50 = arith.constant 0 : index
      %72 = vector.load %arg16[%c0_49, %c0_50] : memref<8x128xf32, #tpu.memory_space<vmem>>, vector<8x128xf32>
      tpu.vector_store %arg16[%c0_49, %c0_50], %71 {strides = array<i32>} : memref<8x128xf32, #tpu.memory_space<vmem>>, vector<8x128xf32>,
    } else {
    }
    return
  }
  func.func @transform_0(%arg0: i32) -> (i32, i32) {
    %c0_i32 = arith.constant 0 : i32
    %c0_i32_0 = arith.constant 0 : i32
    return %c0_i32, %arg0 : i32, i32
  }
  func.func @transform_1(%arg0: i32) -> (i32, i32) {
    %c0_i32 = arith.constant 0 : i32
    %c0_i32_0 = arith.constant 0 : i32
    return %arg0, %c0_i32 : i32, i32
  }
  func.func @transform_2(%arg0: i32) -> (i32, i32) {
    %c0_i32 = arith.constant 0 : i32
    %c0_i32_0 = arith.constant 0 : i32
    %c0_i32_1 = arith.constant 0 : i32
    return %c0_i32, %c0_i32_0 : i32, i32
  }
  func.func @transform_3(%arg0: i32) -> (i32, i32) {
    %c0_i32 = arith.constant 0 : i32
    %c0_i32_0 = arith.constant 0 : i32
    %c0_i32_1 = arith.constant 0 : i32
    return %c0_i32, %c0_i32_0 : i32, i32
  }
  func.func @transform_4(%arg0: i32) -> (i32, i32) {
    %c0_i32 = arith.constant 0 : i32
    %c0_i32_0 = arith.constant 0 : i32
    %c0_i32_1 = arith.constant 0 : i32
    return %c0_i32, %c0_i32_0 : i32, i32
  }
  func.func @transform_5(%arg0: i32) -> (i32, i32) {
    %c0_i32 = arith.constant 0 : i32
    %c0_i32_0 = arith.constant 0 : i32
    %c0_i32_1 = arith.constant 0 : i32
    return %c0_i32, %c0_i32_0 : i32, i32
  }
  func.func @transform_6(%arg0: i32) -> (i32, i32) {
    %c0_i32 = arith.constant 0 : i32
    %c0_i32_0 = arith.constant 0 : i32
    %c0_i32_1 = arith.constant 0 : i32
    return %c0_i32, %c0_i32_0 : i32, i32
  }
  func.func @transform_7(%arg0: i32) -> (i32, i32) {
    %c0_i32 = arith.constant 0 : i32
    %c0_i32_0 = arith.constant 0 : i32
    %c0_i32_1 = arith.constant 0 : i32
    return %c0_i32, %c0_i32_0 : i32, i32
  }
  func.func @transform_8(%arg0: i32) -> (i32, i32) {
    %c0_i32 = arith.constant 0 : i32
    %c0_i32_0 = arith.constant 0 : i32
    %c0_i32_1 = arith.constant 0 : i32
    return %c0_i32, %c0_i32_0 : i32, i32
  }
  func.func @transform_9(%arg0: i32) -> (i32, i32) {
    %c0_i32 = arith.constant 0 : i32
    %c0_i32_0 = arith.constant 0 : i32
    %c0_i32_1 = arith.constant 0 : i32
    return %c0_i32, %c0_i32_0 : i32, i32
  }
  func.func @transform_10(%arg0: i32) -> (i32, i32) {
    %c0_i32 = arith.constant 0 : i32
    %c0_i32_0 = arith.constant 0 : i32
    %c0_i32_1 = arith.constant 0 : i32
    return %c0_i32, %c0_i32_0 : i32, i32
  }
  func.func @transform_11(%arg0: i32) -> (i32, i32) {
    %c0_i32 = arith.constant 0 : i32
    %c0_i32_0 = arith.constant 0 : i32
    %c0_i32_1 = arith.constant 0 : i32
    return %c0_i32, %c0_i32_0 : i32, i32
  }
  func.func @transform_12(%arg0: i32) -> (i32, i32) {
    %c0_i32 = arith.constant 0 : i32
    %c0_i32_0 = arith.constant 0 : i32
    %c0_i32_1 = arith.constant 0 : i32
    return %c0_i32, %c0_i32_0 : i32, i32
  }
  func.func @transform_13(%arg0: i32) -> (i32, i32) {
    %c0_i32 = arith.constant 0 : i32
    %c0_i32_0 = arith.constant 0 : i32
    %c0_i32_1 = arith.constant 0 : i32
    return %c0_i32, %c0_i32_0 : i32, i32
  }
  func.func @transform_14(%arg0: i32) -> (i32, i32) {
    %c0_i32 = arith.constant 0 : i32
    %c0_i32_0 = arith.constant 0 : i32
    %c0_i32_1 = arith.constant 0 : i32
    return %c0_i32, %c0_i32_0 : i32, i32
  }
  func.func @transform_15(%arg0: i32) -> (i32, i32) {
    %c0_i32 = arith.constant 0 : i32
    %c0_i32_0 = arith.constant 0 : i32
    %c0_i32_1 = arith.constant 0 : i32
    return %c0_i32, %c0_i32_0 : i32, i32
  }
}

</mosaic_0001>

<llo_original>
// kernel: tpu_custom_call.1
$region0: #{tpu_custom_call.1}
  #allocation0 [shape = 'u32[]', space=smem, size = 0x4, offset = 0x4, fixed_abs, tag = 'smem constant byte address 0x4 - core index']
  #allocation1 [shape = 'u32[144,128]{1,0:T(1,128)}', space=vmem, size = 0x12000, scoped, tag = 'internal scratch']
  #allocation2 [shape = 'f32[8,256]{1,0:T(8,128)}', space=vmem, size = 0x2000, scoped, tag = 'scratch operand']
  %s0 = inlined_call_operand.hbm [shape: bf16[8,12288], index: 0, kind: input, shape index: {}]
  %s1 = inlined_call_operand.hbm [shape: bf16[12288,256], index: 1, kind: input, shape index: {}]
  %s2 = inlined_call_operand.hbm [shape: f32[1,256], index: 2, kind: input, shape index: {}]
  %s3 = inlined_call_operand.hbm [shape: bf16[256,512], index: 3, kind: input, shape index: {}]
  %s4 = inlined_call_operand.hbm [shape: f32[1,512], index: 4, kind: input, shape index: {}]
  %s5 = inlined_call_operand.hbm [shape: bf16[512,512], index: 5, kind: input, shape index: {}]
  %s6 = inlined_call_operand.hbm [shape: f32[1,512], index: 6, kind: input, shape index: {}]
  %s7 = inlined_call_operand.hbm [shape: bf16[512,256], index: 7, kind: input, shape index: {}]
  %s8 = inlined_call_operand.hbm [shape: f32[1,256], index: 8, kind: input, shape index: {}]
  %s9 = inlined_call_operand.hbm [shape: bf16[256,128], index: 9, kind: input, shape index: {}]
  %s10 = inlined_call_operand.hbm [shape: f32[1,128], index: 10, kind: input, shape index: {}]
  %s11 = inlined_call_operand.vmem [shape: bf16[128,64], index: 11, kind: input, shape index: {}]
  %s12 = inlined_call_operand.hbm [shape: f32[1,64], index: 12, kind: input, shape index: {}]
  %s13 = inlined_call_operand.hbm [shape: bf16[64,128], index: 13, kind: input, shape index: {}]
  %s14 = inlined_call_operand.hbm [shape: f32[1,128], index: 14, kind: input, shape index: {}]
  %s15 = inlined_call_operand.hbm [shape: f32[8,128], index: 15, kind: output, shape index: {}]
  %s16 = sld [smem:[#allocation0]]
  $region157: #{tpu_custom_call.1} parent=0
    _
  %s18 = ssub.s32 1, %s16
  %s19 = scalar_select 0, %s18, %s16
  $region1: #{tpu_custom_call.1} parent=0
    #allocation3 [shape = 'u8[196608]{0}', space=vmem, size = 0x30000, scoped, tag = 'input window, operand 0']
    #allocation4 [shape = 's32[2]{0}', space=sflag, size = 0x8, scoped, tag = 'scoped memory for tpu_custom_call.1']
    #allocation5 [shape = 's32[2]{0}', space=sflag, size = 0x8, scoped, tag = 'scoped memory for tpu_custom_call.1']
    #allocation6 [shape = 'u8[6291456]{0}', space=vmem, size = 0x600000, scoped, tag = 'input window, operand 1']
    #allocation7 [shape = 's32[2]{0}', space=sflag, size = 0x8, scoped, tag = 'scoped memory for tpu_custom_call.1']
    #allocation8 [shape = 'u8[1024]{0}', space=vmem, size = 0x400, scoped, tag = 'input window, operand 2, single buffered']
    #allocation9 [shape = 'u8[262144]{0}', space=vmem, size = 0x40000, scoped, tag = 'input window, operand 3, single buffered']
    #allocation10 [shape = 's32[1]{0}', space=sflag, size = 0x4, scoped, tag = 'scoped memory for tpu_custom_call.1']
    #allocation11 [shape = 'u8[2048]{0}', space=vmem, size = 0x800, scoped, tag = 'input window, operand 4, single buffered']
    #allocation12 [shape = 'u8[524288]{0}', space=vmem, size = 0x80000, scoped, tag = 'input window, operand 5, single buffered']
    #allocation13 [shape = 's32[1]{0}', space=sflag, size = 0x4, scoped, tag = 'scoped memory for tpu_custom_call.1']
    #allocation14 [shape = 'u8[2048]{0}', space=vmem, size = 0x800, scoped, tag = 'input window, operand 6, single buffered']
    #allocation15 [shape = 'u8[262144]{0}', space=vmem, size = 0x40000, scoped, tag = 'input window, operand 7, single buffered']
    #allocation16 [shape = 's32[1]{0}', space=sflag, size = 0x4, scoped, tag = 'scoped memory for tpu_custom_call.1']
    #allocation17 [shape = 'u8[1024]{0}', space=vmem, size = 0x400, scoped, tag = 'input window, operand 8, single buffered']
    #allocation18 [shape = 'u8[65536]{0}', space=vmem, size = 0x10000, scoped, tag = 'input window, operand 9, single buffered']
    #allocation19 [shape = 's32[1]{0}', space=sflag, size = 0x4, scoped, tag = 'scoped memory for tpu_custom_call.1']
    #allocation20 [shape = 'u8[512]{0}', space=vmem, size = 0x400, scoped, tag = 'input window, operand 10, single buffered']
    #allocation21 [shape = 'u8[512]{0}', space=vmem, size = 0x400, scoped, tag = 'input window, operand 12, single buffered']
    #allocation22 [shape = 's32[1]{0}', space=sflag, size = 0x4, scoped, tag = 'scoped memory for tpu_custom_call.1']
    #allocation23 [shape = 'u8[16384]{0}', space=vmem, size = 0x4000, scoped, tag = 'input window, operand 13, single buffered']
    #allocation24 [shape = 'u8[512]{0}', space=vmem, size = 0x400, scoped, tag = 'input window, operand 14, single buffered']
    #allocation25 [shape = 's32[1]{0}', space=sflag, size = 0x4, scoped, tag = 'scoped memory for tpu_custom_call.1']
    #allocation26 [shape = 'u8[4096]{0}', space=vmem, size = 0x1000, scoped, tag = 'output window, operand 0, single buffered']
    %20 = vsyncpa [#allocation4], 0
    %s21 = scalar_lea.sflag [#allocation4], 1
    %22 = vsyncpa %s21, 0
    %23 = vsyncpa [#allocation7], 0
    %s24 = scalar_lea.sflag [#allocation7], 1
    %25 = vsyncpa %s24, 0
    %26 = vsyncpa [#allocation10], 0
    %27 = vsyncpa [#allocation13], 0
    %28 = vsyncpa [#allocation16], 0
    %29 = vsyncpa [#allocation19], 0
    %30 = vsyncpa [#allocation22], 0
    %31 = vsyncpa [#allocation25], 0
    %32 = vsyncpa [#allocation5], 0
    loop: start=0, step=1, limit=4
    $region2: #{tpu_custom_call.1} parent=1 // loop_pre_header
      _
    $region3: #{tpu_custom_call.1} parent=1 // loop_header
      %s34 = sphi 0, %s38
      %p35 = scmp.ge.s32.totalorder %s34, 4
      %s44 = sphi 0, %s46
      %s47 = sphi 0, %s44
      %s48 = sphi 0, %s47
      %s64 = sphi 0, %s48
      %s70 = sphi 0, %s72
      %s73 = sphi 0, %s70
      %s74 = sphi 0, %s73
      %s90 = sphi 0, %s74
      %s94 = sphi 0, %s94
      %s96 = sphi 0, %s94
      %s97 = sphi 0, %s96
      %s111 = sphi 0, %s97
      %s115 = sphi 0, %s115
      %s117 = sphi 0, %s115
      %s118 = sphi 0, %s117
      %s132 = sphi 0, %s118
      %s136 = sphi 0, %s136
      %s138 = sphi 0, %s136
      %s139 = sphi 0, %s138
      %s153 = sphi 0, %s139
      %s157 = sphi 0, %s157
      %s159 = sphi 0, %s157
      %s160 = sphi 0, %s159
      %s174 = sphi 0, %s160
      %s178 = sphi 0, %s178
      %s180 = sphi 0, %s178
      %s181 = sphi 0, %s180
      %s195 = sphi 0, %s181
      %s199 = sphi 0, %s199
      %s201 = sphi 0, %s199
      %s202 = sphi 0, %s201
      %s216 = sphi 0, %s202
      %s220 = sphi 0, %s220
      %s222 = sphi 0, %s220
      %s223 = sphi 0, %s222
      %s237 = sphi 0, %s223
      %s241 = sphi 0, %s241
      %s243 = sphi 0, %s241
      %s244 = sphi 0, %s243
      %s258 = sphi 0, %s244
      %s262 = sphi 0, %s262
      %s264 = sphi 0, %s262
      %s265 = sphi 0, %s264
      %s279 = sphi 0, %s265
      %s283 = sphi 0, %s283
      %s285 = sphi 0, %s283
      %s286 = sphi 0, %s285
      %s300 = sphi 0, %s286
      %s304 = sphi 0, %s304
      %s306 = sphi 0, %s304
      %s307 = sphi 0, %s306
      %s321 = sphi 0, %s307
      %s325 = sphi 0, %s325
      %s327 = sphi 0, %s325
      %s328 = sphi 0, %s327
      %s342 = sphi 0, %s328
      %s346 = sphi 0, %s346
      %s348 = sphi 0, %s346
      %s349 = sphi 0, %s348
      %s363 = sphi 0, %s349
      %s367 = sphi 0, %s367
      %s369 = sphi 0, %s367
      %s370 = sphi 0, %s369
      %s384 = sphi 0, %s370
    $region4: #{tpu_custom_call.1} parent=1 // loop_header_branch
      %37 = sbr.rel (%p35) target = $region8
    $region5: #{tpu_custom_call.1} parent=1 // loop_body
      %s39 = ssub.s32 %s34, 1
      %s40 = ssub.s32 %s34, 2
      %s41 = sadd.s32 %s34, 1
      %s42 = ssub.s32 %s34, %s41
      %p43 = scmp.eq.s32.totalorder %s42, 0
      %s45 = sadd.s32 %s44, 1
      %s46 = scalar_select %p43, %s44, %s45
      %p49 = pneg %p43
      %p50 = scmp.eq.s32.totalorder %s34, 1
      %p51 = por %p49, %p50
      %p52 = scmp.ne.s32.totalorder %s44, %s47
      %p53 = scmp.eq.s32.totalorder %s34, 0
      %p54 = por %p52, %p53
      %p55 = scmp.ne.s32.totalorder %s44, %s47
      %p56 = scmp.eq.s32.totalorder %s39, 1
      %p57 = por %p55, %p56
      %p58 = scmp.ne.s32.totalorder %s47, %s48
      %p59 = scmp.eq.s32.totalorder %s39, 0
      %p60 = por %p58, %p59
      %p61 = scmp.ne.s32.totalorder %s47, %s48
      %p62 = scmp.eq.s32.totalorder %s40, 1
      %p63 = por %p61, %p62
      %p65 = scmp.ne.s32.totalorder %s48, %s64
      %p66 = scmp.eq.s32.totalorder %s40, 0
      %p67 = por %p65, %p66
      %s68 = ssub.s32 %s34, %s41
      %p69 = scmp.eq.s32.totalorder %s68, 0
      %s71 = sadd.s32 %s70, 1
      %s72 = scalar_select %p69, %s70, %s71
      %p75 = pneg %p69
      %p76 = scmp.eq.s32.totalorder %s34, 1
      %p77 = por %p75, %p76
      %p78 = scmp.ne.s32.totalorder %s70, %s73
      %p79 = scmp.eq.s32.totalorder %s34, 0
      %p80 = por %p78, %p79
      %p81 = scmp.ne.s32.totalorder %s70, %s73
      %p82 = scmp.eq.s32.totalorder %s39, 1
      %p83 = por %p81, %p82
      %p84 = scmp.ne.s32.totalorder %s73, %s74
      %p85 = scmp.eq.s32.totalorder %s39, 0
      %p86 = por %p84, %p85
      %p87 = scmp.ne.s32.totalorder %s73, %s74
      %p88 = scmp.eq.s32.totalorder %s40, 1
      %p89 = por %p87, %p88
      %p91 = scmp.ne.s32.totalorder %s74, %s90
      %p92 = scmp.eq.s32.totalorder %s40, 0
      %p93 = por %p91, %p92
      %s95 = sadd.s32 %s94, 1
      %p98 = scmp.eq.s32.totalorder %s34, 1
      %p99 = scmp.ne.s32.totalorder %s94, %s96
      %p100 = scmp.eq.s32.totalorder %s34, 0
      %p101 = por %p99, %p100
      %p102 = scmp.ne.s32.totalorder %s94, %s96
      %p103 = scmp.eq.s32.totalorder %s39, 1
      %p104 = por %p102, %p103
      %p105 = scmp.ne.s32.totalorder %s96, %s97
      %p106 = scmp.eq.s32.totalorder %s39, 0
      %p107 = por %p105, %p106
      %p108 = scmp.ne.s32.totalorder %s96, %s97
      %p109 = scmp.eq.s32.totalorder %s40, 1
      %p110 = por %p108, %p109
      %p112 = scmp.ne.s32.totalorder %s97, %s111
      %p113 = scmp.eq.s32.totalorder %s40, 0
      %p114 = por %p112, %p113
      %s116 = sadd.s32 %s115, 1
      %p119 = scmp.eq.s32.totalorder %s34, 1
      %p120 = scmp.ne.s32.totalorder %s115, %s117
      %p121 = scmp.eq.s32.totalorder %s34, 0
      %p122 = por %p120, %p121
      %p123 = scmp.ne.s32.totalorder %s115, %s117
      %p124 = scmp.eq.s32.totalorder %s39, 1
      %p125 = por %p123, %p124
      %p126 = scmp.ne.s32.totalorder %s117, %s118
      %p127 = scmp.eq.s32.totalorder %s39, 0
      %p128 = por %p126, %p127
      %p129 = scmp.ne.s32.totalorder %s117, %s118
      %p130 = scmp.eq.s32.totalorder %s40, 1
      %p131 = por %p129, %p130
      %p133 = scmp.ne.s32.totalorder %s118, %s132
      %p134 = scmp.eq.s32.totalorder %s40, 0
      %p135 = por %p133, %p134
      %s137 = sadd.s32 %s136, 1
      %p140 = scmp.eq.s32.totalorder %s34, 1
      %p141 = scmp.ne.s32.totalorder %s136, %s138
      %p142 = scmp.eq.s32.totalorder %s34, 0
      %p143 = por %p141, %p142
      %p144 = scmp.ne.s32.totalorder %s136, %s138
      %p145 = scmp.eq.s32.totalorder %s39, 1
      %p146 = por %p144, %p145
      %p147 = scmp.ne.s32.totalorder %s138, %s139
      %p148 = scmp.eq.s32.totalorder %s39, 0
      %p149 = por %p147, %p148
      %p150 = scmp.ne.s32.totalorder %s138, %s139
      %p151 = scmp.eq.s32.totalorder %s40, 1
      %p152 = por %p150, %p151
      %p154 = scmp.ne.s32.totalorder %s139, %s153
      %p155 = scmp.eq.s32.totalorder %s40, 0
      %p156 = por %p154, %p155
      %s158 = sadd.s32 %s157, 1
      %p161 = scmp.eq.s32.totalorder %s34, 1
      %p162 = scmp.ne.s32.totalorder %s157, %s159
      %p163 = scmp.eq.s32.totalorder %s34, 0
      %p164 = por %p162, %p163
      %p165 = scmp.ne.s32.totalorder %s157, %s159
      %p166 = scmp.eq.s32.totalorder %s39, 1
      %p167 = por %p165, %p166
      %p168 = scmp.ne.s32.totalorder %s159, %s160
      %p169 = scmp.eq.s32.totalorder %s39, 0
      %p170 = por %p168, %p169
      %p171 = scmp.ne.s32.totalorder %s159, %s160
      %p172 = scmp.eq.s32.totalorder %s40, 1
      %p173 = por %p171, %p172
      %p175 = scmp.ne.s32.totalorder %s160, %s174
      %p176 = scmp.eq.s32.totalorder %s40, 0
      %p177 = por %p175, %p176
      %s179 = sadd.s32 %s178, 1
      %p182 = scmp.eq.s32.totalorder %s34, 1
      %p183 = scmp.ne.s32.totalorder %s178, %s180
      %p184 = scmp.eq.s32.totalorder %s34, 0
      %p185 = por %p183, %p184
      %p186 = scmp.ne.s32.totalorder %s178, %s180
      %p187 = scmp.eq.s32.totalorder %s39, 1
      %p188 = por %p186, %p187
      %p189 = scmp.ne.s32.totalorder %s180, %s181
      %p190 = scmp.eq.s32.totalorder %s39, 0
      %p191 = por %p189, %p190
      %p192 = scmp.ne.s32.totalorder %s180, %s181
      %p193 = scmp.eq.s32.totalorder %s40, 1
      %p194 = por %p192, %p193
      %p196 = scmp.ne.s32.totalorder %s181, %s195
      %p197 = scmp.eq.s32.totalorder %s40, 0
      %p198 = por %p196, %p197
      %s200 = sadd.s32 %s199, 1
      %p203 = scmp.eq.s32.totalorder %s34, 1
      %p204 = scmp.ne.s32.totalorder %s199, %s201
      %p205 = scmp.eq.s32.totalorder %s34, 0
      %p206 = por %p204, %p205
      %p207 = scmp.ne.s32.totalorder %s199, %s201
      %p208 = scmp.eq.s32.totalorder %s39, 1
      %p209 = por %p207, %p208
      %p210 = scmp.ne.s32.totalorder %s201, %s202
      %p211 = scmp.eq.s32.totalorder %s39, 0
      %p212 = por %p210, %p211
      %p213 = scmp.ne.s32.totalorder %s201, %s202
      %p214 = scmp.eq.s32.totalorder %s40, 1
      %p215 = por %p213, %p214
      %p217 = scmp.ne.s32.totalorder %s202, %s216
      %p218 = scmp.eq.s32.totalorder %s40, 0
      %p219 = por %p217, %p218
      %s221 = sadd.s32 %s220, 1
      %p224 = scmp.eq.s32.totalorder %s34, 1
      %p225 = scmp.ne.s32.totalorder %s220, %s222
      %p226 = scmp.eq.s32.totalorder %s34, 0
      %p227 = por %p225, %p226
      %p228 = scmp.ne.s32.totalorder %s220, %s222
      %p229 = scmp.eq.s32.totalorder %s39, 1
      %p230 = por %p228, %p229
      %p231 = scmp.ne.s32.totalorder %s222, %s223
      %p232 = scmp.eq.s32.totalorder %s39, 0
      %p233 = por %p231, %p232
      %p234 = scmp.ne.s32.totalorder %s222, %s223
      %p235 = scmp.eq.s32.totalorder %s40, 1
      %p236 = por %p234, %p235
      %p238 = scmp.ne.s32.totalorder %s223, %s237
      %p239 = scmp.eq.s32.totalorder %s40, 0
      %p240 = por %p238, %p239
      %s242 = sadd.s32 %s241, 1
      %p245 = scmp.eq.s32.totalorder %s34, 1
      %p246 = scmp.ne.s32.totalorder %s241, %s243
      %p247 = scmp.eq.s32.totalorder %s34, 0
      %p248 = por %p246, %p247
      %p249 = scmp.ne.s32.totalorder %s241, %s243
      %p250 = scmp.eq.s32.totalorder %s39, 1
      %p251 = por %p249, %p250
      %p252 = scmp.ne.s32.totalorder %s243, %s244
      %p253 = scmp.eq.s32.totalorder %s39, 0
      %p254 = por %p252, %p253
      %p255 = scmp.ne.s32.totalorder %s243, %s244
      %p256 = scmp.eq.s32.totalorder %s40, 1
      %p257 = por %p255, %p256
      %p259 = scmp.ne.s32.totalorder %s244, %s258
      %p260 = scmp.eq.s32.totalorder %s40, 0
      %p261 = por %p259, %p260
      %s263 = sadd.s32 %s262, 1
      %p266 = scmp.eq.s32.totalorder %s34, 1
      %p267 = scmp.ne.s32.totalorder %s262, %s264
      %p268 = scmp.eq.s32.totalorder %s34, 0
      %p269 = por %p267, %p268
      %p270 = scmp.ne.s32.totalorder %s262, %s264
      %p271 = scmp.eq.s32.totalorder %s39, 1
      %p272 = por %p270, %p271
      %p273 = scmp.ne.s32.totalorder %s264, %s265
      %p274 = scmp.eq.s32.totalorder %s39, 0
      %p275 = por %p273, %p274
      %p276 = scmp.ne.s32.totalorder %s264, %s265
      %p277 = scmp.eq.s32.totalorder %s40, 1
      %p278 = por %p276, %p277
      %p280 = scmp.ne.s32.totalorder %s265, %s279
      %p281 = scmp.eq.s32.totalorder %s40, 0
      %p282 = por %p280, %p281
      %s284 = sadd.s32 %s283, 1
      %p287 = scmp.eq.s32.totalorder %s34, 1
      %p288 = scmp.ne.s32.totalorder %s283, %s285
      %p289 = scmp.eq.s32.totalorder %s34, 0
      %p290 = por %p288, %p289
      %p291 = scmp.ne.s32.totalorder %s283, %s285
      %p292 = scmp.eq.s32.totalorder %s39, 1
      %p293 = por %p291, %p292
      %p294 = scmp.ne.s32.totalorder %s285, %s286
      %p295 = scmp.eq.s32.totalorder %s39, 0
      %p296 = por %p294, %p295
      %p297 = scmp.ne.s32.totalorder %s285, %s286
      %p298 = scmp.eq.s32.totalorder %s40, 1
      %p299 = por %p297, %p298
      %p301 = scmp.ne.s32.totalorder %s286, %s300
      %p302 = scmp.eq.s32.totalorder %s40, 0
      %p303 = por %p301, %p302
      %s305 = sadd.s32 %s304, 1
      %p308 = scmp.eq.s32.totalorder %s34, 1
      %p309 = scmp.ne.s32.totalorder %s304, %s306
      %p310 = scmp.eq.s32.totalorder %s34, 0
      %p311 = por %p309, %p310
      %p312 = scmp.ne.s32.totalorder %s304, %s306
      %p313 = scmp.eq.s32.totalorder %s39, 1
      %p314 = por %p312, %p313
      %p315 = scmp.ne.s32.totalorder %s306, %s307
      %p316 = scmp.eq.s32.totalorder %s39, 0
      %p317 = por %p315, %p316
      %p318 = scmp.ne.s32.totalorder %s306, %s307
      %p319 = scmp.eq.s32.totalorder %s40, 1
      %p320 = por %p318, %p319
      %p322 = scmp.ne.s32.totalorder %s307, %s321
      %p323 = scmp.eq.s32.totalorder %s40, 0
      %p324 = por %p322, %p323
      %s326 = sadd.s32 %s325, 1
      %p329 = scmp.eq.s32.totalorder %s34, 1
      %p330 = scmp.ne.s32.totalorder %s325, %s327
      %p331 = scmp.eq.s32.totalorder %s34, 0
      %p332 = por %p330, %p331
      %p333 = scmp.ne.s32.totalorder %s325, %s327
      %p334 = scmp.eq.s32.totalorder %s39, 1
      %p335 = por %p333, %p334
      %p336 = scmp.ne.s32.totalorder %s327, %s328
      %p337 = scmp.eq.s32.totalorder %s39, 0
      %p338 = por %p336, %p337
      %p339 = scmp.ne.s32.totalorder %s327, %s328
      %p340 = scmp.eq.s32.totalorder %s40, 1
      %p341 = por %p339, %p340
      %p343 = scmp.ne.s32.totalorder %s328, %s342
      %p344 = scmp.eq.s32.totalorder %s40, 0
      %p345 = por %p343, %p344
      %s347 = sadd.s32 %s346, 1
      %p350 = scmp.eq.s32.totalorder %s34, 1
      %p351 = scmp.ne.s32.totalorder %s346, %s348
      %p352 = scmp.eq.s32.totalorder %s34, 0
      %p353 = por %p351, %p352
      %p354 = scmp.ne.s32.totalorder %s346, %s348
      %p355 = scmp.eq.s32.totalorder %s39, 1
      %p356 = por %p354, %p355
      %p357 = scmp.ne.s32.totalorder %s348, %s349
      %p358 = scmp.eq.s32.totalorder %s39, 0
      %p359 = por %p357, %p358
      %p360 = scmp.ne.s32.totalorder %s348, %s349
      %p361 = scmp.eq.s32.totalorder %s40, 1
      %p362 = por %p360, %p361
      %p364 = scmp.ne.s32.totalorder %s349, %s363
      %p365 = scmp.eq.s32.totalorder %s40, 0
      %p366 = por %p364, %p365
      %s368 = sadd.s32 %s367, 1
      %p371 = scmp.eq.s32.totalorder %s34, 1
      %p372 = scmp.ne.s32.totalorder %s367, %s369
      %p373 = scmp.eq.s32.totalorder %s34, 0
      %p374 = por %p372, %p373
      %p375 = scmp.ne.s32.totalorder %s367, %s369
      %p376 = scmp.eq.s32.totalorder %s39, 1
      %p377 = por %p375, %p376
      %p378 = scmp.ne.s32.totalorder %s369, %s370
      %p379 = scmp.eq.s32.totalorder %s39, 0
      %p380 = por %p378, %p379
      %p381 = scmp.ne.s32.totalorder %s369, %s370
      %p382 = scmp.eq.s32.totalorder %s40, 1
      %p383 = por %p381, %p382
      %p385 = scmp.ne.s32.totalorder %s370, %s384
      %p386 = scmp.eq.s32.totalorder %s40, 0
      %p387 = por %p385, %p386
      %p388 = scmp.le.s32.totalorder 1, %s34
      %p389 = scmp.lt.s32.totalorder %s34, 3
      %p390 = pnand %p388, %p389
      %p391 = pneg %p390
      // Predicated region
      $region9: #{tpu_custom_call.1} parent=5 // pred_check
        _
      $region10: #{tpu_custom_call.1} parent=5 // pred_check_branch
        %393 = sbr.rel (%p390) target = $region12
      $region11: #{tpu_custom_call.1} parent=5 // pred_region
        %s394 = ssub.s32 %s34, 1
        // Predicated region
        $region13: #{tpu_custom_call.1} parent=11 // pred_check
          %p395 = pneg %p107
        $region14: #{tpu_custom_call.1} parent=11 // pred_check_branch
          %397 = sbr.rel (%p395) target = $region16
        $region15: #{tpu_custom_call.1} parent=11 // pred_region
          %s399 = ssub.s32 32, 32
          %400 = vsyncadd [#allocation7], %s399
          %s402 = sshll.u32 [#allocation8], 4
          %s403 = int_to_ptr.vmem [resolvable:$true] %s402
          %405 = dma.hbm_to_vmem [thread:$0]  %s2, 32, %s403, [#allocation7]
        $region16: #{tpu_custom_call.1} parent=11 // pred_fallthru
          _
        // Predicated region
        $region17: #{tpu_custom_call.1} parent=11 // pred_check
          %p406 = pneg %p128
        $region18: #{tpu_custom_call.1} parent=11 // pred_check_branch
          %408 = sbr.rel (%p406) target = $region20
        $region19: #{tpu_custom_call.1} parent=11 // pred_region
          %s410 = ssub.s32 8192, 8192
          %411 = vsyncadd [#allocation10], %s410
          %s412 = sshll.u32 [#allocation9], 4
          %s413 = int_to_ptr.vmem [resolvable:$true] %s412
          %418 = dma.hbm_to_vmem [thread:$0]  %s3, 8192, %s413, [#allocation10], 256, 256, 16
        $region20: #{tpu_custom_call.1} parent=11 // pred_fallthru
          _
        // Predicated region
        $region21: #{tpu_custom_call.1} parent=11 // pred_check
          %p419 = pneg %p149
        $region22: #{tpu_custom_call.1} parent=11 // pred_check_branch
          %421 = sbr.rel (%p419) target = $region24
        $region23: #{tpu_custom_call.1} parent=11 // pred_region
          %s423 = ssub.s32 64, 64
          %424 = vsyncadd [#allocation10], %s423
          %s426 = sshll.u32 [#allocation11], 4
          %s427 = int_to_ptr.vmem [resolvable:$true] %s426
          %429 = dma.hbm_to_vmem [thread:$0]  %s4, 64, %s427, [#allocation10]
        $region24: #{tpu_custom_call.1} parent=11 // pred_fallthru
          _
        // Predicated region
        $region25: #{tpu_custom_call.1} parent=11 // pred_check
          %p430 = pneg %p170
        $region26: #{tpu_custom_call.1} parent=11 // pred_check_branch
          %432 = sbr.rel (%p430) target = $region28
        $region27: #{tpu_custom_call.1} parent=11 // pred_region
          %s434 = ssub.s32 16384, 16384
          %435 = vsyncadd [#allocation13], %s434
          %s436 = sshll.u32 [#allocation12], 4
          %s437 = int_to_ptr.vmem [resolvable:$true] %s436
          %442 = dma.hbm_to_vmem [thread:$0]  %s5, 16384, %s437, [#allocation13], 256, 256, 16
        $region28: #{tpu_custom_call.1} parent=11 // pred_fallthru
          _
        // Predicated region
        $region29: #{tpu_custom_call.1} parent=11 // pred_check
          %p443 = pneg %p191
        $region30: #{tpu_custom_call.1} parent=11 // pred_check_branch
          %445 = sbr.rel (%p443) target = $region32
        $region31: #{tpu_custom_call.1} parent=11 // pred_region
          %s447 = ssub.s32 64, 64
          %448 = vsyncadd [#allocation13], %s447
          %s450 = sshll.u32 [#allocation14], 4
          %s451 = int_to_ptr.vmem [resolvable:$true] %s450
          %453 = dma.hbm_to_vmem [thread:$0]  %s6, 64, %s451, [#allocation13]
        $region32: #{tpu_custom_call.1} parent=11 // pred_fallthru
          _
        // Predicated region
        $region33: #{tpu_custom_call.1} parent=11 // pred_check
          %p454 = pneg %p212
        $region34: #{tpu_custom_call.1} parent=11 // pred_check_branch
          %456 = sbr.rel (%p454) target = $region36
        $region35: #{tpu_custom_call.1} parent=11 // pred_region
          %s458 = ssub.s32 8192, 8192
          %459 = vsyncadd [#allocation16], %s458
          %s460 = sshll.u32 [#allocation15], 4
          %s461 = int_to_ptr.vmem [resolvable:$true] %s460
          %466 = dma.hbm_to_vmem [thread:$0]  %s7, 8192, %s461, [#allocation16], 128, 128, 8
        $region36: #{tpu_custom_call.1} parent=11 // pred_fallthru
          _
        // Predicated region
        $region37: #{tpu_custom_call.1} parent=11 // pred_check
          %p467 = pneg %p233
        $region38: #{tpu_custom_call.1} parent=11 // pred_check_branch
          %469 = sbr.rel (%p467) target = $region40
        $region39: #{tpu_custom_call.1} parent=11 // pred_region
          %s471 = ssub.s32 32, 32
          %472 = vsyncadd [#allocation16], %s471
          %s474 = sshll.u32 [#allocation17], 4
          %s475 = int_to_ptr.vmem [resolvable:$true] %s474
          %477 = dma.hbm_to_vmem [thread:$0]  %s8, 32, %s475, [#allocation16]
        $region40: #{tpu_custom_call.1} parent=11 // pred_fallthru
          _
        // Predicated region
        $region41: #{tpu_custom_call.1} parent=11 // pred_check
          %p478 = pneg %p254
        $region42: #{tpu_custom_call.1} parent=11 // pred_check_branch
          %480 = sbr.rel (%p478) target = $region44
        $region43: #{tpu_custom_call.1} parent=11 // pred_region
          %s482 = ssub.s32 2048, 2048
          %483 = vsyncadd [#allocation19], %s482
          %s484 = sshll.u32 [#allocation18], 4
          %s485 = int_to_ptr.vmem [resolvable:$true] %s484
          %490 = dma.hbm_to_vmem [thread:$0]  %s9, 2048, %s485, [#allocation19], 64, 64, 4
        $region44: #{tpu_custom_call.1} parent=11 // pred_fallthru
          _
        // Predicated region
        $region45: #{tpu_custom_call.1} parent=11 // pred_check
          %p491 = pneg %p275
        $region46: #{tpu_custom_call.1} parent=11 // pred_check_branch
          %493 = sbr.rel (%p491) target = $region48
        $region47: #{tpu_custom_call.1} parent=11 // pred_region
          %s495 = ssub.s32 16, 16
          %496 = vsyncadd [#allocation19], %s495
          %s498 = sshll.u32 [#allocation20], 4
          %s499 = int_to_ptr.vmem [resolvable:$true] %s498
          %501 = dma.hbm_to_vmem [thread:$0]  %s10, 16, %s499, [#allocation19]
        $region48: #{tpu_custom_call.1} parent=11 // pred_fallthru
          _
        // Predicated region
        $region49: #{tpu_custom_call.1} parent=11 // pred_check
          %p502 = pneg %p296
        $region50: #{tpu_custom_call.1} parent=11 // pred_check_branch
          %504 = sbr.rel (%p502) target = $region52
        $region51: #{tpu_custom_call.1} parent=11 // pred_region
          _
        $region52: #{tpu_custom_call.1} parent=11 // pred_fallthru
          _
        // Predicated region
        $region53: #{tpu_custom_call.1} parent=11 // pred_check
          %p505 = pneg %p317
        $region54: #{tpu_custom_call.1} parent=11 // pred_check_branch
          %507 = sbr.rel (%p505) target = $region56
        $region55: #{tpu_custom_call.1} parent=11 // pred_region
          %s509 = ssub.s32 16, 16
          %510 = vsyncadd [#allocation22], %s509
          %s512 = sshll.u32 [#allocation21], 4
          %s513 = int_to_ptr.vmem [resolvable:$true] %s512
          %515 = dma.hbm_to_vmem [thread:$0]  %s12, 16, %s513, [#allocation22]
        $region56: #{tpu_custom_call.1} parent=11 // pred_fallthru
          _
        // Predicated region
        $region57: #{tpu_custom_call.1} parent=11 // pred_check
          %p516 = pneg %p338
        $region58: #{tpu_custom_call.1} parent=11 // pred_check_branch
          %518 = sbr.rel (%p516) target = $region60
        $region59: #{tpu_custom_call.1} parent=11 // pred_region
          %s520 = ssub.s32 512, 512
          %521 = vsyncadd [#allocation22], %s520
          %s522 = sshll.u32 [#allocation23], 4
          %s523 = int_to_ptr.vmem [resolvable:$true] %s522
          %528 = dma.hbm_to_vmem [thread:$0]  %s13, 512, %s523, [#allocation22], 64, 64, 4
        $region60: #{tpu_custom_call.1} parent=11 // pred_fallthru
          _
        // Predicated region
        $region61: #{tpu_custom_call.1} parent=11 // pred_check
          %p529 = pneg %p359
        $region62: #{tpu_custom_call.1} parent=11 // pred_check_branch
          %531 = sbr.rel (%p529) target = $region64
        $region63: #{tpu_custom_call.1} parent=11 // pred_region
          %s533 = ssub.s32 16, 16
          %534 = vsyncadd [#allocation25], %s533
          %s536 = sshll.u32 [#allocation24], 4
          %s537 = int_to_ptr.vmem [resolvable:$true] %s536
          %539 = dma.hbm_to_vmem [thread:$0]  %s14, 16, %s537, [#allocation25]
        $region64: #{tpu_custom_call.1} parent=11 // pred_fallthru
          _
      $region12: #{tpu_custom_call.1} parent=5 // pred_fallthru
        _
      %p540 = scmp.lt.s32.totalorder %s34, 2
      // Predicated region
      $region65: #{tpu_custom_call.1} parent=5 // pred_check
        %p541 = pneg %p540
      $region66: #{tpu_custom_call.1} parent=5 // pred_check_branch
        %543 = sbr.rel (%p541) target = $region68
      $region67: #{tpu_custom_call.1} parent=5 // pred_region
        // Predicated region
        $region69: #{tpu_custom_call.1} parent=67 // pred_check
          %p544 = pneg %p54
        $region70: #{tpu_custom_call.1} parent=67 // pred_check_branch
          %546 = sbr.rel (%p544) target = $region72
        $region71: #{tpu_custom_call.1} parent=67 // pred_region
          %s547 = sand.u32 %s44, 1
          %s548 = scalar_lea.sflag [#allocation4], %s547
          %s549 = sand.u32 %s44, 1
          %s550 = smul.addr %s549, 192
          %s551 = scalar_lea.vmem [#allocation3], %s550
          %s552 = smul.u32 48, %s34
          %s554 = ssub.s32 3072, 3072
          %555 = vsyncadd %s548, %s554
          %s556 = smul.addr %s552, 64
          %s557 = scalar_lea.hbm %s0, %s556
          %s559 = sshll.u32 %s551, 4
          %s560 = int_to_ptr.vmem [resolvable:$true] %s559
          %562 = dma.hbm_to_vmem [thread:$0]  %s557, 3072, %s560, %s548
        $region72: #{tpu_custom_call.1} parent=67 // pred_fallthru
          _
        // Predicated region
        $region73: #{tpu_custom_call.1} parent=67 // pred_check
          %p563 = pneg %p80
        $region74: #{tpu_custom_call.1} parent=67 // pred_check_branch
          %565 = sbr.rel (%p563) target = $region76
        $region75: #{tpu_custom_call.1} parent=67 // pred_region
          %s566 = sand.u32 %s34, 1
          %s567 = scalar_lea.sflag [#allocation7], %s566
          %s568 = sand.u32 %s70, 1
          %s569 = smul.addr %s568, 6144
          %s570 = scalar_lea.vmem [#allocation6], %s569
          %s571 = smul.u32 768, %s34
          %s573 = ssub.s32 98304, 98304
          %574 = vsyncadd %s567, %s573
          %s575 = smul.addr %s571, 2
          %s576 = smul.addr %s575, 64
          %s577 = scalar_lea.hbm %s1, %s576
          %s578 = sshll.u32 %s570, 4
          %s579 = int_to_ptr.vmem [resolvable:$true] %s578
          %584 = dma.hbm_to_vmem [thread:$0]  %s577, 98304, %s579, %s567, 128, 128, 8
        $region76: #{tpu_custom_call.1} parent=67 // pred_fallthru
          _
      $region68: #{tpu_custom_call.1} parent=5 // pred_fallthru
        _
      %p585 = scmp.le.s32.totalorder 1, %s34
      %p586 = scmp.lt.s32.totalorder %s34, 3
      %p587 = pnand %p585, %p586
      %p588 = pneg %p587
      // Predicated region
      $region77: #{tpu_custom_call.1} parent=5 // pred_check
        _
      $region78: #{tpu_custom_call.1} parent=5 // pred_check_branch
        %590 = sbr.rel (%p587) target = $region80
      $region79: #{tpu_custom_call.1} parent=5 // pred_region
        %s591 = ssub.s32 %s34, 1
        %s592 = sand.u32 %s47, 1
        %s593 = scalar_lea.sflag [#allocation4], %s592
        %s594 = sand.u32 %s47, 1
        %s595 = smul.addr %s594, 192
        %s596 = scalar_lea.vmem [#allocation3], %s595
        // Predicated region
        $region81: #{tpu_custom_call.1} parent=79 // pred_check
          %p597 = pneg %p60
        $region82: #{tpu_custom_call.1} parent=79 // pred_check_branch
          %599 = sbr.rel (%p597) target = $region84
        $region83: #{tpu_custom_call.1} parent=79 // pred_region
          %600 = dma.done %s593, 3072
        $region84: #{tpu_custom_call.1} parent=79 // pred_fallthru
          _
        %s601 = sand.u32 %s39, 1
        %s602 = scalar_lea.sflag [#allocation7], %s601
        %s603 = sand.u32 %s73, 1
        %s604 = smul.addr %s603, 6144
        %s605 = scalar_lea.vmem [#allocation6], %s604
        // Predicated region
        $region85: #{tpu_custom_call.1} parent=79 // pred_check
          %p606 = pneg %p86
        $region86: #{tpu_custom_call.1} parent=79 // pred_check_branch
          %608 = sbr.rel (%p606) target = $region88
        $region87: #{tpu_custom_call.1} parent=79 // pred_region
          %609 = dma.done %s602, 98304
        $region88: #{tpu_custom_call.1} parent=79 // pred_fallthru
          _
        // Predicated region
        $region89: #{tpu_custom_call.1} parent=79 // pred_check
          %p610 = pneg %p107
        $region90: #{tpu_custom_call.1} parent=79 // pred_check_branch
          %612 = sbr.rel (%p610) target = $region92
        $region91: #{tpu_custom_call.1} parent=79 // pred_region
          %613 = dma.done [#allocation7], 32
        $region92: #{tpu_custom_call.1} parent=79 // pred_fallthru
          _
        // Predicated region
        $region93: #{tpu_custom_call.1} parent=79 // pred_check
          %p614 = pneg %p128
        $region94: #{tpu_custom_call.1} parent=79 // pred_check_branch
          %616 = sbr.rel (%p614) target = $region96
        $region95: #{tpu_custom_call.1} parent=79 // pred_region
          %617 = dma.done [#allocation10], 8192
        $region96: #{tpu_custom_call.1} parent=79 // pred_fallthru
          _
        // Predicated region
        $region97: #{tpu_custom_call.1} parent=79 // pred_check
          %p618 = pneg %p149
        $region98: #{tpu_custom_call.1} parent=79 // pred_check_branch
          %620 = sbr.rel (%p618) target = $region100
        $region99: #{tpu_custom_call.1} parent=79 // pred_region
          %621 = dma.done [#allocation10], 64
        $region100: #{tpu_custom_call.1} parent=79 // pred_fallthru
          _
        // Predicated region
        $region101: #{tpu_custom_call.1} parent=79 // pred_check
          %p622 = pneg %p170
        $region102: #{tpu_custom_call.1} parent=79 // pred_check_branch
          %624 = sbr.rel (%p622) target = $region104
        $region103: #{tpu_custom_call.1} parent=79 // pred_region
          %625 = dma.done [#allocation13], 16384
        $region104: #{tpu_custom_call.1} parent=79 // pred_fallthru
          _
        // Predicated region
        $region105: #{tpu_custom_call.1} parent=79 // pred_check
          %p626 = pneg %p191
        $region106: #{tpu_custom_call.1} parent=79 // pred_check_branch
          %628 = sbr.rel (%p626) target = $region108
        $region107: #{tpu_custom_call.1} parent=79 // pred_region
          %629 = dma.done [#allocation13], 64
        $region108: #{tpu_custom_call.1} parent=79 // pred_fallthru
          _
        // Predicated region
        $region109: #{tpu_custom_call.1} parent=79 // pred_check
          %p630 = pneg %p212
        $region110: #{tpu_custom_call.1} parent=79 // pred_check_branch
          %632 = sbr.rel (%p630) target = $region112
        $region111: #{tpu_custom_call.1} parent=79 // pred_region
          %633 = dma.done [#allocation16], 8192
        $region112: #{tpu_custom_call.1} parent=79 // pred_fallthru
          _
        // Predicated region
        $region113: #{tpu_custom_call.1} parent=79 // pred_check
          %p634 = pneg %p233
        $region114: #{tpu_custom_call.1} parent=79 // pred_check_branch
          %636 = sbr.rel (%p634) target = $region116
        $region115: #{tpu_custom_call.1} parent=79 // pred_region
          %637 = dma.done [#allocation16], 32
        $region116: #{tpu_custom_call.1} parent=79 // pred_fallthru
          _
        // Predicated region
        $region117: #{tpu_custom_call.1} parent=79 // pred_check
          %p638 = pneg %p254
        $region118: #{tpu_custom_call.1} parent=79 // pred_check_branch
          %640 = sbr.rel (%p638) target = $region120
        $region119: #{tpu_custom_call.1} parent=79 // pred_region
          %641 = dma.done [#allocation19], 2048
        $region120: #{tpu_custom_call.1} parent=79 // pred_fallthru
          _
        // Predicated region
        $region121: #{tpu_custom_call.1} parent=79 // pred_check
          %p642 = pneg %p275
        $region122: #{tpu_custom_call.1} parent=79 // pred_check_branch
          %644 = sbr.rel (%p642) target = $region124
        $region123: #{tpu_custom_call.1} parent=79 // pred_region
          %645 = dma.done [#allocation19], 16
        $region124: #{tpu_custom_call.1} parent=79 // pred_fallthru
          _
        // Predicated region
        $region125: #{tpu_custom_call.1} parent=79 // pred_check
          %p646 = pneg %p317
        $region126: #{tpu_custom_call.1} parent=79 // pred_check_branch
          %648 = sbr.rel (%p646) target = $region128
        $region127: #{tpu_custom_call.1} parent=79 // pred_region
          %649 = dma.done [#allocation22], 16
        $region128: #{tpu_custom_call.1} parent=79 // pred_fallthru
          _
        // Predicated region
        $region129: #{tpu_custom_call.1} parent=79 // pred_check
          %p650 = pneg %p338
        $region130: #{tpu_custom_call.1} parent=79 // pred_check_branch
          %652 = sbr.rel (%p650) target = $region132
        $region131: #{tpu_custom_call.1} parent=79 // pred_region
          %653 = dma.done [#allocation22], 512
        $region132: #{tpu_custom_call.1} parent=79 // pred_fallthru
          _
        // Predicated region
        $region133: #{tpu_custom_call.1} parent=79 // pred_check
          %p654 = pneg %p359
        $region134: #{tpu_custom_call.1} parent=79 // pred_check_branch
          %656 = sbr.rel (%p654) target = $region136
        $region135: #{tpu_custom_call.1} parent=79 // pred_region
          %657 = dma.done [#allocation25], 16
        $region136: #{tpu_custom_call.1} parent=79 // pred_fallthru
          _
        %s658 = sand.u32 %s47, 1
        %s659 = scalar_lea.sflag [#allocation4], %s658
        %s660 = sand.u32 %s47, 1
        %s661 = smul.addr %s660, 192
        %s662 = scalar_lea.vmem [#allocation3], %s661
        %p663 = pneg %p60
        %p664 = pneg %p57
        %s665 = sand.u32 %s39, 1
        %s666 = scalar_lea.sflag [#allocation7], %s665
        %s667 = sand.u32 %s73, 1
        %s668 = smul.addr %s667, 6144
        %s669 = scalar_lea.vmem [#allocation6], %s668
        %p670 = pneg %p86
        %p671 = pneg %p83
        %p672 = pneg %p107
        %p673 = pneg %p104
        %p674 = pneg %p128
        %p675 = pneg %p125
        %p676 = pneg %p149
        %p677 = pneg %p146
        %p678 = pneg %p170
        %p679 = pneg %p167
        %p680 = pneg %p191
        %p681 = pneg %p188
        %p682 = pneg %p212
        %p683 = pneg %p209
        %p684 = pneg %p233
        %p685 = pneg %p230
        %p686 = pneg %p254
        %p687 = pneg %p251
        %p688 = pneg %p275
        %p689 = pneg %p272
        %p690 = pneg %p296
        %p691 = pneg %p293
        %p692 = pneg %p317
        %p693 = pneg %p314
        %p694 = pneg %p338
        %p695 = pneg %p335
        %p696 = pneg %p359
        %p697 = pneg %p356
        %p698 = pneg %p380
        %p699 = pneg %p377
        %s700 = smul.u32 48, %s39
        %s701 = smul.u32 768, %s39
        %p702 = scmp.eq.s32.totalorder %s39, 0
        // Predicated region
        $region137: #{tpu_custom_call.1} parent=79 // pred_check
          %p703 = pneg %p702
        $region138: #{tpu_custom_call.1} parent=79 // pred_check_branch
          %705 = sbr.rel (%p703) target = $region140
        $region139: #{tpu_custom_call.1} parent=79 // pred_region
          %v706 = vld [vmem:[#allocation8] sm:$0x3]
          %v708 = vlaneseq
          %v709 = vshrl.u32 %v708, 7
          %v710 = vsub.s32 0, %v709
          %v711 = vrot.slane %v706, %v710
          %v712 = vlaneseq
          %v713 = vshrl.u32 %v712, 7
          %v714 = vsub.s32 1, %v713
          %v715 = vrot.slane %v706, %v714
          %718 = vst [vmem:[#allocation2] sm:$0xff] %v711
          %719 = vst [vmem:[#allocation2 + $0x8] sm:$0xff] %v715
        $region140: #{tpu_custom_call.1} parent=79 // pred_fallthru
          _
        %v720 = vld [vmem:[#allocation2] sm:$0xff]
        %v721 = vld [vmem:[#allocation2 + $0x8] sm:$0xff]
        %v722 = vld [vmem:[%s596] sm:$0xff]
        %v723 = vld [vmem:[%s596 + $0x8] sm:$0xff]
        %v724 = vld [vmem:[%s596 + $0x10] sm:$0xff]
        %v725 = vld [vmem:[%s596 + $0x18] sm:$0xff]
        %v726 = vld [vmem:[%s596 + $0x20] sm:$0xff]
        %v727 = vld [vmem:[%s596 + $0x28] sm:$0xff]
        %v728 = vld [vmem:[%s596 + $0x30] sm:$0xff]
        %v729 = vld [vmem:[%s596 + $0x38] sm:$0xff]
        %v730 = vld [vmem:[%s596 + $0x40] sm:$0xff]
        %v731 = vld [vmem:[%s596 + $0x48] sm:$0xff]
        %v732 = vld [vmem:[%s596 + $0x50] sm:$0xff]
        %v733 = vld [vmem:[%s596 + $0x58] sm:$0xff]
        %v734 = vld [vmem:[%s596 + $0x60] sm:$0xff]
        %v735 = vld [vmem:[%s596 + $0x68] sm:$0xff]
        %v736 = vld [vmem:[%s596 + $0x70] sm:$0xff]
        %v737 = vld [vmem:[%s596 + $0x78] sm:$0xff]
        %v738 = vld [vmem:[%s596 + $0x80] sm:$0xff]
        %v739 = vld [vmem:[%s596 + $0x88] sm:$0xff]
        %v740 = vld [vmem:[%s596 + $0x90] sm:$0xff]
        %v741 = vld [vmem:[%s596 + $0x98] sm:$0xff]
        %v742 = vld [vmem:[%s596 + $0xa0] sm:$0xff]
        %v743 = vld [vmem:[%s596 + $0xa8] sm:$0xff]
        %v744 = vld [vmem:[%s596 + $0xb0] sm:$0xff]
        %v745 = vld [vmem:[%s596 + $0xb8] sm:$0xff]
        %v746 = vld [vmem:[%s605] sm:$0xff]
        %v747 = vld [vmem:[%s605 + $0x8] sm:$0xff]
        %v748 = vld [vmem:[%s605 + $0x10] sm:$0xff]
        %v749 = vld [vmem:[%s605 + $0x18] sm:$0xff]
        %v750 = vld [vmem:[%s605 + $0x20] sm:$0xff]
        %v751 = vld [vmem:[%s605 + $0x28] sm:$0xff]
        %v752 = vld [vmem:[%s605 + $0x30] sm:$0xff]
        %v753 = vld [vmem:[%s605 + $0x38] sm:$0xff]
        %v754 = vld [vmem:[%s605 + $0x40] sm:$0xff]
        %v755 = vld [vmem:[%s605 + $0x48] sm:$0xff]
        %v756 = vld [vmem:[%s605 + $0x50] sm:$0xff]
        %v757 = vld [vmem:[%s605 + $0x58] sm:$0xff]
        %v758 = vld [vmem:[%s605 + $0x60] sm:$0xff]
        %v759 = vld [vmem:[%s605 + $0x68] sm:$0xff]
        %v760 = vld [vmem:[%s605 + $0x70] sm:$0xff]
        %v761 = vld [vmem:[%s605 + $0x78] sm:$0xff]
        %v762 = vld [vmem:[%s605 + $0x80] sm:$0xff]
        %v763 = vld [vmem:[%s605 + $0x88] sm:$0xff]
        %v764 = vld [vmem:[%s605 + $0x90] sm:$0xff]
        %v765 = vld [vmem:[%s605 + $0x98] sm:$0xff]
        %v766 = vld [vmem:[%s605 + $0xa0] sm:$0xff]
        %v767 = vld [vmem:[%s605 + $0xa8] sm:$0xff]
        %v768 = vld [vmem:[%s605 + $0xb0] sm:$0xff]
        %v769 = vld [vmem:[%s605 + $0xb8] sm:$0xff]
        %v770 = vld [vmem:[%s605 + $0xc0] sm:$0xff]
        %v771 = vld [vmem:[%s605 + $0xc8] sm:$0xff]
        %v772 = vld [vmem:[%s605 + $0xd0] sm:$0xff]
        %v773 = vld [vmem:[%s605 + $0xd8] sm:$0xff]
        %v774 = vld [vmem:[%s605 + $0xe0] sm:$0xff]
        %v775 = vld [vmem:[%s605 + $0xe8] sm:$0xff]
        %v776 = vld [vmem:[%s605 + $0xf0] sm:$0xff]
        %v777 = vld [vmem:[%s605 + $0xf8] sm:$0xff]
        %v778 = vld [vmem:[%s605 + $0x100] sm:$0xff]
        %v779 = vld [vmem:[%s605 + $0x108] sm:$0xff]
        %v780 = vld [vmem:[%s605 + $0x110] sm:$0xff]
        %v781 = vld [vmem:[%s605 + $0x118] sm:$0xff]
        %v782 = vld [vmem:[%s605 + $0x120] sm:$0xff]
        %v783 = vld [vmem:[%s605 + $0x128] sm:$0xff]
        %v784 = vld [vmem:[%s605 + $0x130] sm:$0xff]
        %v785 = vld [vmem:[%s605 + $0x138] sm:$0xff]
        %v786 = vld [vmem:[%s605 + $0x140] sm:$0xff]
        %v787 = vld [vmem:[%s605 + $0x148] sm:$0xff]
        %v788 = vld [vmem:[%s605 + $0x150] sm:$0xff]
        %v789 = vld [vmem:[%s605 + $0x158] sm:$0xff]
        %v790 = vld [vmem:[%s605 + $0x160] sm:$0xff]
        %v791 = vld [vmem:[%s605 + $0x168] sm:$0xff]
        %v792 = vld [vmem:[%s605 + $0x170] sm:$0xff]
        %v793 = vld [vmem:[%s605 + $0x178] sm:$0xff]
        %v794 = vld [vmem:[%s605 + $0x180] sm:$0xff]
        %v795 = vld [vmem:[%s605 + $0x188] sm:$0xff]
        %v796 = vld [vmem:[%s605 + $0x190] sm:$0xff]
        %v797 = vld [vmem:[%s605 + $0x198] sm:$0xff]
        %v798 = vld [vmem:[%s605 + $0x1a0] sm:$0xff]
        %v799 = vld [vmem:[%s605 + $0x1a8] sm:$0xff]
        %v800 = vld [vmem:[%s605 + $0x1b0] sm:$0xff]
        %v801 = vld [vmem:[%s605 + $0x1b8] sm:$0xff]
        %v802 = vld [vmem:[%s605 + $0x1c0] sm:$0xff]
        %v803 = vld [vmem:[%s605 + $0x1c8] sm:$0xff]
        %v804 = vld [vmem:[%s605 + $0x1d0] sm:$0xff]
        %v805 = vld [vmem:[%s605 + $0x1d8] sm:$0xff]
        %v806 = vld [vmem:[%s605 + $0x1e0] sm:$0xff]
        %v807 = vld [vmem:[%s605 + $0x1e8] sm:$0xff]
        %v808 = vld [vmem:[%s605 + $0x1f0] sm:$0xff]
        %v809 = vld [vmem:[%s605 + $0x1f8] sm:$0xff]
        %v810 = vld [vmem:[%s605 + $0x200] sm:$0xff]
        %v811 = vld [vmem:[%s605 + $0x208] sm:$0xff]
        %v812 = vld [vmem:[%s605 + $0x210] sm:$0xff]
        %v813 = vld [vmem:[%s605 + $0x218] sm:$0xff]
        %v814 = vld [vmem:[%s605 + $0x220] sm:$0xff]
        %v815 = vld [vmem:[%s605 + $0x228] sm:$0xff]
        %v816 = vld [vmem:[%s605 + $0x230] sm:$0xff]
        %v817 = vld [vmem:[%s605 + $0x238] sm:$0xff]
        %v818 = vld [vmem:[%s605 + $0x240] sm:$0xff]
        %v819 = vld [vmem:[%s605 + $0x248] sm:$0xff]
        %v820 = vld [vmem:[%s605 + $0x250] sm:$0xff]
        %v821 = vld [vmem:[%s605 + $0x258] sm:$0xff]
        %v822 = vld [vmem:[%s605 + $0x260] sm:$0xff]
        %v823 = vld [vmem:[%s605 + $0x268] sm:$0xff]
        %v824 = vld [vmem:[%s605 + $0x270] sm:$0xff]
        %v825 = vld [vmem:[%s605 + $0x278] sm:$0xff]
        %v826 = vld [vmem:[%s605 + $0x280] sm:$0xff]
        %v827 = vld [vmem:[%s605 + $0x288] sm:$0xff]
        %v828 = vld [vmem:[%s605 + $0x290] sm:$0xff]
        %v829 = vld [vmem:[%s605 + $0x298] sm:$0xff]
        %v830 = vld [vmem:[%s605 + $0x2a0] sm:$0xff]
        %v831 = vld [vmem:[%s605 + $0x2a8] sm:$0xff]
        %v832 = vld [vmem:[%s605 + $0x2b0] sm:$0xff]
        %v833 = vld [vmem:[%s605 + $0x2b8] sm:$0xff]
        %v834 = vld [vmem:[%s605 + $0x2c0] sm:$0xff]
        %v835 = vld [vmem:[%s605 + $0x2c8] sm:$0xff]
        %v836 = vld [vmem:[%s605 + $0x2d0] sm:$0xff]
        %v837 = vld [vmem:[%s605 + $0x2d8] sm:$0xff]
        %v838 = vld [vmem:[%s605 + $0x2e0] sm:$0xff]
        %v839 = vld [vmem:[%s605 + $0x2e8] sm:$0xff]
        %v840 = vld [vmem:[%s605 + $0x2f0] sm:$0xff]
        %v841 = vld [vmem:[%s605 + $0x2f8] sm:$0xff]
        %v842 = vld [vmem:[%s605 + $0x300] sm:$0xff]
        %v843 = vld [vmem:[%s605 + $0x308] sm:$0xff]
        %v844 = vld [vmem:[%s605 + $0x310] sm:$0xff]
        %v845 = vld [vmem:[%s605 + $0x318] sm:$0xff]
        %v846 = vld [vmem:[%s605 + $0x320] sm:$0xff]
        %v847 = vld [vmem:[%s605 + $0x328] sm:$0xff]
        %v848 = vld [vmem:[%s605 + $0x330] sm:$0xff]
        %v849 = vld [vmem:[%s605 + $0x338] sm:$0xff]
        %v850 = vld [vmem:[%s605 + $0x340] sm:$0xff]
        %v851 = vld [vmem:[%s605 + $0x348] sm:$0xff]
        %v852 = vld [vmem:[%s605 + $0x350] sm:$0xff]
        %v853 = vld [vmem:[%s605 + $0x358] sm:$0xff]
        %v854 = vld [vmem:[%s605 + $0x360] sm:$0xff]
        %v855 = vld [vmem:[%s605 + $0x368] sm:$0xff]
        %v856 = vld [vmem:[%s605 + $0x370] sm:$0xff]
        %v857 = vld [vmem:[%s605 + $0x378] sm:$0xff]
        %v858 = vld [vmem:[%s605 + $0x380] sm:$0xff]
        %v859 = vld [vmem:[%s605 + $0x388] sm:$0xff]
        %v860 = vld [vmem:[%s605 + $0x390] sm:$0xff]
        %v861 = vld [vmem:[%s605 + $0x398] sm:$0xff]
        %v862 = vld [vmem:[%s605 + $0x3a0] sm:$0xff]
        %v863 = vld [vmem:[%s605 + $0x3a8] sm:$0xff]
        %v864 = vld [vmem:[%s605 + $0x3b0] sm:$0xff]
        %v865 = vld [vmem:[%s605 + $0x3b8] sm:$0xff]
        %v866 = vld [vmem:[%s605 + $0x3c0] sm:$0xff]
        %v867 = vld [vmem:[%s605 + $0x3c8] sm:$0xff]
        %v868 = vld [vmem:[%s605 + $0x3d0] sm:$0xff]
        %v869 = vld [vmem:[%s605 + $0x3d8] sm:$0xff]
        %v870 = vld [vmem:[%s605 + $0x3e0] sm:$0xff]
        %v871 = vld [vmem:[%s605 + $0x3e8] sm:$0xff]
        %v872 = vld [vmem:[%s605 + $0x3f0] sm:$0xff]
        %v873 = vld [vmem:[%s605 + $0x3f8] sm:$0xff]
        %v874 = vld [vmem:[%s605 + $0x400] sm:$0xff]
        %v875 = vld [vmem:[%s605 + $0x408] sm:$0xff]
        %v876 = vld [vmem:[%s605 + $0x410] sm:$0xff]
        %v877 = vld [vmem:[%s605 + $0x418] sm:$0xff]
        %v878 = vld [vmem:[%s605 + $0x420] sm:$0xff]
        %v879 = vld [vmem:[%s605 + $0x428] sm:$0xff]
        %v880 = vld [vmem:[%s605 + $0x430] sm:$0xff]
        %v881 = vld [vmem:[%s605 + $0x438] sm:$0xff]
        %v882 = vld [vmem:[%s605 + $0x440] sm:$0xff]
        %v883 = vld [vmem:[%s605 + $0x448] sm:$0xff]
        %v884 = vld [vmem:[%s605 + $0x450] sm:$0xff]
        %v885 = vld [vmem:[%s605 + $0x458] sm:$0xff]
        %v886 = vld [vmem:[%s605 + $0x460] sm:$0xff]
        %v887 = vld [vmem:[%s605 + $0x468] sm:$0xff]
        %v888 = vld [vmem:[%s605 + $0x470] sm:$0xff]
        %v889 = vld [vmem:[%s605 + $0x478] sm:$0xff]
        %v890 = vld [vmem:[%s605 + $0x480] sm:$0xff]
        %v891 = vld [vmem:[%s605 + $0x488] sm:$0xff]
        %v892 = vld [vmem:[%s605 + $0x490] sm:$0xff]
        %v893 = vld [vmem:[%s605 + $0x498] sm:$0xff]
        %v894 = vld [vmem:[%s605 + $0x4a0] sm:$0xff]
        %v895 = vld [vmem:[%s605 + $0x4a8] sm:$0xff]
        %v896 = vld [vmem:[%s605 + $0x4b0] sm:$0xff]
        %v897 = vld [vmem:[%s605 + $0x4b8] sm:$0xff]
        %v898 = vld [vmem:[%s605 + $0x4c0] sm:$0xff]
        %v899 = vld [vmem:[%s605 + $0x4c8] sm:$0xff]
        %v900 = vld [vmem:[%s605 + $0x4d0] sm:$0xff]
        %v901 = vld [vmem:[%s605 + $0x4d8] sm:$0xff]
        %v902 = vld [vmem:[%s605 + $0x4e0] sm:$0xff]
        %v903 = vld [vmem:[%s605 + $0x4e8] sm:$0xff]
        %v904 = vld [vmem:[%s605 + $0x4f0] sm:$0xff]
        %v905 = vld [vmem:[%s605 + $0x4f8] sm:$0xff]
        %v906 = vld [vmem:[%s605 + $0x500] sm:$0xff]
        %v907 = vld [vmem:[%s605 + $0x508] sm:$0xff]
        %v908 = vld [vmem:[%s605 + $0x510] sm:$0xff]
        %v909 = vld [vmem:[%s605 + $0x518] sm:$0xff]
        %v910 = vld [vmem:[%s605 + $0x520] sm:$0xff]
        %v911 = vld [vmem:[%s605 + $0x528] sm:$0xff]
        %v912 = vld [vmem:[%s605 + $0x530] sm:$0xff]
        %v913 = vld [vmem:[%s605 + $0x538] sm:$0xff]
        %v914 = vld [vmem:[%s605 + $0x540] sm:$0xff]
        %v915 = vld [vmem:[%s605 + $0x548] sm:$0xff]
        %v916 = vld [vmem:[%s605 + $0x550] sm:$0xff]
        %v917 = vld [vmem:[%s605 + $0x558] sm:$0xff]
        %v918 = vld [vmem:[%s605 + $0x560] sm:$0xff]
        %v919 = vld [vmem:[%s605 + $0x568] sm:$0xff]
        %v920 = vld [vmem:[%s605 + $0x570] sm:$0xff]
        %v921 = vld [vmem:[%s605 + $0x578] sm:$0xff]
        %v922 = vld [vmem:[%s605 + $0x580] sm:$0xff]
        %v923 = vld [vmem:[%s605 + $0x588] sm:$0xff]
        %v924 = vld [vmem:[%s605 + $0x590] sm:$0xff]
        %v925 = vld [vmem:[%s605 + $0x598] sm:$0xff]
        %v926 = vld [vmem:[%s605 + $0x5a0] sm:$0xff]
        %v927 = vld [vmem:[%s605 + $0x5a8] sm:$0xff]
        %v928 = vld [vmem:[%s605 + $0x5b0] sm:$0xff]
        %v929 = vld [vmem:[%s605 + $0x5b8] sm:$0xff]
        %v930 = vld [vmem:[%s605 + $0x5c0] sm:$0xff]
        %v931 = vld [vmem:[%s605 + $0x5c8] sm:$0xff]
        %v932 = vld [vmem:[%s605 + $0x5d0] sm:$0xff]
        %v933 = vld [vmem:[%s605 + $0x5d8] sm:$0xff]
        %v934 = vld [vmem:[%s605 + $0x5e0] sm:$0xff]
        %v935 = vld [vmem:[%s605 + $0x5e8] sm:$0xff]
        %v936 = vld [vmem:[%s605 + $0x5f0] sm:$0xff]
        %v937 = vld [vmem:[%s605 + $0x5f8] sm:$0xff]
        %v938 = vld [vmem:[%s605 + $0x600] sm:$0xff]
        %v939 = vld [vmem:[%s605 + $0x608] sm:$0xff]
        %v940 = vld [vmem:[%s605 + $0x610] sm:$0xff]
        %v941 = vld [vmem:[%s605 + $0x618] sm:$0xff]
        %v942 = vld [vmem:[%s605 + $0x620] sm:$0xff]
        %v943 = vld [vmem:[%s605 + $0x628] sm:$0xff]
        %v944 = vld [vmem:[%s605 + $0x630] sm:$0xff]
        %v945 = vld [vmem:[%s605 + $0x638] sm:$0xff]
        %v946 = vld [vmem:[%s605 + $0x640] sm:$0xff]
        %v947 = vld [vmem:[%s605 + $0x648] sm:$0xff]
        %v948 = vld [vmem:[%s605 + $0x650] sm:$0xff]
        %v949 = vld [vmem:[%s605 + $0x658] sm:$0xff]
        %v950 = vld [vmem:[%s605 + $0x660] sm:$0xff]
        %v951 = vld [vmem:[%s605 + $0x668] sm:$0xff]
        %v952 = vld [vmem:[%s605 + $0x670] sm:$0xff]
        %v953 = vld [vmem:[%s605 + $0x678] sm:$0xff]
        %v954 = vld [vmem:[%s605 + $0x680] sm:$0xff]
        %v955 = vld [vmem:[%s605 + $0x688] sm:$0xff]
        %v956 = vld [vmem:[%s605 + $0x690] sm:$0xff]
        %v957 = vld [vmem:[%s605 + $0x698] sm:$0xff]
        %v958 = vld [vmem:[%s605 + $0x6a0] sm:$0xff]
        %v959 = vld [vmem:[%s605 + $0x6a8] sm:$0xff]
        %v960 = vld [vmem:[%s605 + $0x6b0] sm:$0xff]
        %v961 = vld [vmem:[%s605 + $0x6b8] sm:$0xff]
        %v962 = vld [vmem:[%s605 + $0x6c0] sm:$0xff]
        %v963 = vld [vmem:[%s605 + $0x6c8] sm:$0xff]
        %v964 = vld [vmem:[%s605 + $0x6d0] sm:$0xff]
        %v965 = vld [vmem:[%s605 + $0x6d8] sm:$0xff]
        %v966 = vld [vmem:[%s605 + $0x6e0] sm:$0xff]
        %v967 = vld [vmem:[%s605 + $0x6e8] sm:$0xff]
        %v968 = vld [vmem:[%s605 + $0x6f0] sm:$0xff]
        %v969 = vld [vmem:[%s605 + $0x6f8] sm:$0xff]
        %v970 = vld [vmem:[%s605 + $0x700] sm:$0xff]
        %v971 = vld [vmem:[%s605 + $0x708] sm:$0xff]
        %v972 = vld [vmem:[%s605 + $0x710] sm:$0xff]
        %v973 = vld [vmem:[%s605 + $0x718] sm:$0xff]
        %v974 = vld [vmem:[%s605 + $0x720] sm:$0xff]
        %v975 = vld [vmem:[%s605 + $0x728] sm:$0xff]
        %v976 = vld [vmem:[%s605 + $0x730] sm:$0xff]
        %v977 = vld [vmem:[%s605 + $0x738] sm:$0xff]
        %v978 = vld [vmem:[%s605 + $0x740] sm:$0xff]
        %v979 = vld [vmem:[%s605 + $0x748] sm:$0xff]
        %v980 = vld [vmem:[%s605 + $0x750] sm:$0xff]
        %v981 = vld [vmem:[%s605 + $0x758] sm:$0xff]
        %v982 = vld [vmem:[%s605 + $0x760] sm:$0xff]
        %v983 = vld [vmem:[%s605 + $0x768] sm:$0xff]
        %v984 = vld [vmem:[%s605 + $0x770] sm:$0xff]
        %v985 = vld [vmem:[%s605 + $0x778] sm:$0xff]
        %v986 = vld [vmem:[%s605 + $0x780] sm:$0xff]
        %v987 = vld [vmem:[%s605 + $0x788] sm:$0xff]
        %v988 = vld [vmem:[%s605 + $0x790] sm:$0xff]
        %v989 = vld [vmem:[%s605 + $0x798] sm:$0xff]
        %v990 = vld [vmem:[%s605 + $0x7a0] sm:$0xff]
        %v991 = vld [vmem:[%s605 + $0x7a8] sm:$0xff]
        %v992 = vld [vmem:[%s605 + $0x7b0] sm:$0xff]
        %v993 = vld [vmem:[%s605 + $0x7b8] sm:$0xff]
        %v994 = vld [vmem:[%s605 + $0x7c0] sm:$0xff]
        %v995 = vld [vmem:[%s605 + $0x7c8] sm:$0xff]
        %v996 = vld [vmem:[%s605 + $0x7d0] sm:$0xff]
        %v997 = vld [vmem:[%s605 + $0x7d8] sm:$0xff]
        %v998 = vld [vmem:[%s605 + $0x7e0] sm:$0xff]
        %v999 = vld [vmem:[%s605 + $0x7e8] sm:$0xff]
        %v1000 = vld [vmem:[%s605 + $0x7f0] sm:$0xff]
        %v1001 = vld [vmem:[%s605 + $0x7f8] sm:$0xff]
        %v1002 = vld [vmem:[%s605 + $0x800] sm:$0xff]
        %v1003 = vld [vmem:[%s605 + $0x808] sm:$0xff]
        %v1004 = vld [vmem:[%s605 + $0x810] sm:$0xff]
        %v1005 = vld [vmem:[%s605 + $0x818] sm:$0xff]
        %v1006 = vld [vmem:[%s605 + $0x820] sm:$0xff]
        %v1007 = vld [vmem:[%s605 + $0x828] sm:$0xff]
        %v1008 = vld [vmem:[%s605 + $0x830] sm:$0xff]
        %v1009 = vld [vmem:[%s605 + $0x838] sm:$0xff]
        %v1010 = vld [vmem:[%s605 + $0x840] sm:$0xff]
        %v1011 = vld [vmem:[%s605 + $0x848] sm:$0xff]
        %v1012 = vld [vmem:[%s605 + $0x850] sm:$0xff]
        %v1013 = vld [vmem:[%s605 + $0x858] sm:$0xff]
        %v1014 = vld [vmem:[%s605 + $0x860] sm:$0xff]
        %v1015 = vld [vmem:[%s605 + $0x868] sm:$0xff]
        %v1016 = vld [vmem:[%s605 + $0x870] sm:$0xff]
        %v1017 = vld [vmem:[%s605 + $0x878] sm:$0xff]
        %v1018 = vld [vmem:[%s605 + $0x880] sm:$0xff]
        %v1019 = vld [vmem:[%s605 + $0x888] sm:$0xff]
        %v1020 = vld [vmem:[%s605 + $0x890] sm:$0xff]
        %v1021 = vld [vmem:[%s605 + $0x898] sm:$0xff]
        %v1022 = vld [vmem:[%s605 + $0x8a0] sm:$0xff]
        %v1023 = vld [vmem:[%s605 + $0x8a8] sm:$0xff]
        %v1024 = vld [vmem:[%s605 + $0x8b0] sm:$0xff]
        %v1025 = vld [vmem:[%s605 + $0x8b8] sm:$0xff]
        %v1026 = vld [vmem:[%s605 + $0x8c0] sm:$0xff]
        %v1027 = vld [vmem:[%s605 + $0x8c8] sm:$0xff]
        %v1028 = vld [vmem:[%s605 + $0x8d0] sm:$0xff]
        %v1029 = vld [vmem:[%s605 + $0x8d8] sm:$0xff]
        %v1030 = vld [vmem:[%s605 + $0x8e0] sm:$0xff]
        %v1031 = vld [vmem:[%s605 + $0x8e8] sm:$0xff]
        %v1032 = vld [vmem:[%s605 + $0x8f0] sm:$0xff]
        %v1033 = vld [vmem:[%s605 + $0x8f8] sm:$0xff]
        %v1034 = vld [vmem:[%s605 + $0x900] sm:$0xff]
        %v1035 = vld [vmem:[%s605 + $0x908] sm:$0xff]
        %v1036 = vld [vmem:[%s605 + $0x910] sm:$0xff]
        %v1037 = vld [vmem:[%s605 + $0x918] sm:$0xff]
        %v1038 = vld [vmem:[%s605 + $0x920] sm:$0xff]
        %v1039 = vld [vmem:[%s605 + $0x928] sm:$0xff]
        %v1040 = vld [vmem:[%s605 + $0x930] sm:$0xff]
        %v1041 = vld [vmem:[%s605 + $0x938] sm:$0xff]
        %v1042 = vld [vmem:[%s605 + $0x940] sm:$0xff]
        %v1043 = vld [vmem:[%s605 + $0x948] sm:$0xff]
        %v1044 = vld [vmem:[%s605 + $0x950] sm:$0xff]
        %v1045 = vld [vmem:[%s605 + $0x958] sm:$0xff]
        %v1046 = vld [vmem:[%s605 + $0x960] sm:$0xff]
        %v1047 = vld [vmem:[%s605 + $0x968] sm:$0xff]
        %v1048 = vld [vmem:[%s605 + $0x970] sm:$0xff]
        %v1049 = vld [vmem:[%s605 + $0x978] sm:$0xff]
        %v1050 = vld [vmem:[%s605 + $0x980] sm:$0xff]
        %v1051 = vld [vmem:[%s605 + $0x988] sm:$0xff]
        %v1052 = vld [vmem:[%s605 + $0x990] sm:$0xff]
        %v1053 = vld [vmem:[%s605 + $0x998] sm:$0xff]
        %v1054 = vld [vmem:[%s605 + $0x9a0] sm:$0xff]
        %v1055 = vld [vmem:[%s605 + $0x9a8] sm:$0xff]
        %v1056 = vld [vmem:[%s605 + $0x9b0] sm:$0xff]
        %v1057 = vld [vmem:[%s605 + $0x9b8] sm:$0xff]
        %v1058 = vld [vmem:[%s605 + $0x9c0] sm:$0xff]
        %v1059 = vld [vmem:[%s605 + $0x9c8] sm:$0xff]
        %v1060 = vld [vmem:[%s605 + $0x9d0] sm:$0xff]
        %v1061 = vld [vmem:[%s605 + $0x9d8] sm:$0xff]
        %v1062 = vld [vmem:[%s605 + $0x9e0] sm:$0xff]
        %v1063 = vld [vmem:[%s605 + $0x9e8] sm:$0xff]
        %v1064 = vld [vmem:[%s605 + $0x9f0] sm:$0xff]
        %v1065 = vld [vmem:[%s605 + $0x9f8] sm:$0xff]
        %v1066 = vld [vmem:[%s605 + $0xa00] sm:$0xff]
        %v1067 = vld [vmem:[%s605 + $0xa08] sm:$0xff]
        %v1068 = vld [vmem:[%s605 + $0xa10] sm:$0xff]
        %v1069 = vld [vmem:[%s605 + $0xa18] sm:$0xff]
        %v1070 = vld [vmem:[%s605 + $0xa20] sm:$0xff]
        %v1071 = vld [vmem:[%s605 + $0xa28] sm:$0xff]
        %v1072 = vld [vmem:[%s605 + $0xa30] sm:$0xff]
        %v1073 = vld [vmem:[%s605 + $0xa38] sm:$0xff]
        %v1074 = vld [vmem:[%s605 + $0xa40] sm:$0xff]
        %v1075 = vld [vmem:[%s605 + $0xa48] sm:$0xff]
        %v1076 = vld [vmem:[%s605 + $0xa50] sm:$0xff]
        %v1077 = vld [vmem:[%s605 + $0xa58] sm:$0xff]
        %v1078 = vld [vmem:[%s605 + $0xa60] sm:$0xff]
        %v1079 = vld [vmem:[%s605 + $0xa68] sm:$0xff]
        %v1080 = vld [vmem:[%s605 + $0xa70] sm:$0xff]
        %v1081 = vld [vmem:[%s605 + $0xa78] sm:$0xff]
        %v1082 = vld [vmem:[%s605 + $0xa80] sm:$0xff]
        %v1083 = vld [vmem:[%s605 + $0xa88] sm:$0xff]
        %v1084 = vld [vmem:[%s605 + $0xa90] sm:$0xff]
        %v1085 = vld [vmem:[%s605 + $0xa98] sm:$0xff]
        %v1086 = vld [vmem:[%s605 + $0xaa0] sm:$0xff]
        %v1087 = vld [vmem:[%s605 + $0xaa8] sm:$0xff]
        %v1088 = vld [vmem:[%s605 + $0xab0] sm:$0xff]
        %v1089 = vld [vmem:[%s605 + $0xab8] sm:$0xff]
        %v1090 = vld [vmem:[%s605 + $0xac0] sm:$0xff]
        %v1091 = vld [vmem:[%s605 + $0xac8] sm:$0xff]
        %v1092 = vld [vmem:[%s605 + $0xad0] sm:$0xff]
        %v1093 = vld [vmem:[%s605 + $0xad8] sm:$0xff]
        %v1094 = vld [vmem:[%s605 + $0xae0] sm:$0xff]
        %v1095 = vld [vmem:[%s605 + $0xae8] sm:$0xff]
        %v1096 = vld [vmem:[%s605 + $0xaf0] sm:$0xff]
        %v1097 = vld [vmem:[%s605 + $0xaf8] sm:$0xff]
        %v1098 = vld [vmem:[%s605 + $0xb00] sm:$0xff]
        %v1099 = vld [vmem:[%s605 + $0xb08] sm:$0xff]
        %v1100 = vld [vmem:[%s605 + $0xb10] sm:$0xff]
        %v1101 = vld [vmem:[%s605 + $0xb18] sm:$0xff]
        %v1102 = vld [vmem:[%s605 + $0xb20] sm:$0xff]
        %v1103 = vld [vmem:[%s605 + $0xb28] sm:$0xff]
        %v1104 = vld [vmem:[%s605 + $0xb30] sm:$0xff]
        %v1105 = vld [vmem:[%s605 + $0xb38] sm:$0xff]
        %v1106 = vld [vmem:[%s605 + $0xb40] sm:$0xff]
        %v1107 = vld [vmem:[%s605 + $0xb48] sm:$0xff]
        %v1108 = vld [vmem:[%s605 + $0xb50] sm:$0xff]
        %v1109 = vld [vmem:[%s605 + $0xb58] sm:$0xff]
        %v1110 = vld [vmem:[%s605 + $0xb60] sm:$0xff]
        %v1111 = vld [vmem:[%s605 + $0xb68] sm:$0xff]
        %v1112 = vld [vmem:[%s605 + $0xb70] sm:$0xff]
        %v1113 = vld [vmem:[%s605 + $0xb78] sm:$0xff]
        %v1114 = vld [vmem:[%s605 + $0xb80] sm:$0xff]
        %v1115 = vld [vmem:[%s605 + $0xb88] sm:$0xff]
        %v1116 = vld [vmem:[%s605 + $0xb90] sm:$0xff]
        %v1117 = vld [vmem:[%s605 + $0xb98] sm:$0xff]
        %v1118 = vld [vmem:[%s605 + $0xba0] sm:$0xff]
        %v1119 = vld [vmem:[%s605 + $0xba8] sm:$0xff]
        %v1120 = vld [vmem:[%s605 + $0xbb0] sm:$0xff]
        %v1121 = vld [vmem:[%s605 + $0xbb8] sm:$0xff]
        %v1122 = vld [vmem:[%s605 + $0xbc0] sm:$0xff]
        %v1123 = vld [vmem:[%s605 + $0xbc8] sm:$0xff]
        %v1124 = vld [vmem:[%s605 + $0xbd0] sm:$0xff]
        %v1125 = vld [vmem:[%s605 + $0xbd8] sm:$0xff]
        %v1126 = vld [vmem:[%s605 + $0xbe0] sm:$0xff]
        %v1127 = vld [vmem:[%s605 + $0xbe8] sm:$0xff]
        %v1128 = vld [vmem:[%s605 + $0xbf0] sm:$0xff]
        %v1129 = vld [vmem:[%s605 + $0xbf8] sm:$0xff]
        %v1130 = vld [vmem:[%s605 + $0xc00] sm:$0xff]
        %v1131 = vld [vmem:[%s605 + $0xc08] sm:$0xff]
        %v1132 = vld [vmem:[%s605 + $0xc10] sm:$0xff]
        %v1133 = vld [vmem:[%s605 + $0xc18] sm:$0xff]
        %v1134 = vld [vmem:[%s605 + $0xc20] sm:$0xff]
        %v1135 = vld [vmem:[%s605 + $0xc28] sm:$0xff]
        %v1136 = vld [vmem:[%s605 + $0xc30] sm:$0xff]
        %v1137 = vld [vmem:[%s605 + $0xc38] sm:$0xff]
        %v1138 = vld [vmem:[%s605 + $0xc40] sm:$0xff]
        %v1139 = vld [vmem:[%s605 + $0xc48] sm:$0xff]
        %v1140 = vld [vmem:[%s605 + $0xc50] sm:$0xff]
        %v1141 = vld [vmem:[%s605 + $0xc58] sm:$0xff]
        %v1142 = vld [vmem:[%s605 + $0xc60] sm:$0xff]
        %v1143 = vld [vmem:[%s605 + $0xc68] sm:$0xff]
        %v1144 = vld [vmem:[%s605 + $0xc70] sm:$0xff]
        %v1145 = vld [vmem:[%s605 + $0xc78] sm:$0xff]
        %v1146 = vld [vmem:[%s605 + $0xc80] sm:$0xff]
        %v1147 = vld [vmem:[%s605 + $0xc88] sm:$0xff]
        %v1148 = vld [vmem:[%s605 + $0xc90] sm:$0xff]
        %v1149 = vld [vmem:[%s605 + $0xc98] sm:$0xff]
        %v1150 = vld [vmem:[%s605 + $0xca0] sm:$0xff]
        %v1151 = vld [vmem:[%s605 + $0xca8] sm:$0xff]
        %v1152 = vld [vmem:[%s605 + $0xcb0] sm:$0xff]
        %v1153 = vld [vmem:[%s605 + $0xcb8] sm:$0xff]
        %v1154 = vld [vmem:[%s605 + $0xcc0] sm:$0xff]
        %v1155 = vld [vmem:[%s605 + $0xcc8] sm:$0xff]
        %v1156 = vld [vmem:[%s605 + $0xcd0] sm:$0xff]
        %v1157 = vld [vmem:[%s605 + $0xcd8] sm:$0xff]
        %v1158 = vld [vmem:[%s605 + $0xce0] sm:$0xff]
        %v1159 = vld [vmem:[%s605 + $0xce8] sm:$0xff]
        %v1160 = vld [vmem:[%s605 + $0xcf0] sm:$0xff]
        %v1161 = vld [vmem:[%s605 + $0xcf8] sm:$0xff]
        %v1162 = vld [vmem:[%s605 + $0xd00] sm:$0xff]
        %v1163 = vld [vmem:[%s605 + $0xd08] sm:$0xff]
        %v1164 = vld [vmem:[%s605 + $0xd10] sm:$0xff]
        %v1165 = vld [vmem:[%s605 + $0xd18] sm:$0xff]
        %v1166 = vld [vmem:[%s605 + $0xd20] sm:$0xff]
        %v1167 = vld [vmem:[%s605 + $0xd28] sm:$0xff]
        %v1168 = vld [vmem:[%s605 + $0xd30] sm:$0xff]
        %v1169 = vld [vmem:[%s605 + $0xd38] sm:$0xff]
        %v1170 = vld [vmem:[%s605 + $0xd40] sm:$0xff]
        %v1171 = vld [vmem:[%s605 + $0xd48] sm:$0xff]
        %v1172 = vld [vmem:[%s605 + $0xd50] sm:$0xff]
        %v1173 = vld [vmem:[%s605 + $0xd58] sm:$0xff]
        %v1174 = vld [vmem:[%s605 + $0xd60] sm:$0xff]
        %v1175 = vld [vmem:[%s605 + $0xd68] sm:$0xff]
        %v1176 = vld [vmem:[%s605 + $0xd70] sm:$0xff]
        %v1177 = vld [vmem:[%s605 + $0xd78] sm:$0xff]
        %v1178 = vld [vmem:[%s605 + $0xd80] sm:$0xff]
        %v1179 = vld [vmem:[%s605 + $0xd88] sm:$0xff]
        %v1180 = vld [vmem:[%s605 + $0xd90] sm:$0xff]
        %v1181 = vld [vmem:[%s605 + $0xd98] sm:$0xff]
        %v1182 = vld [vmem:[%s605 + $0xda0] sm:$0xff]
        %v1183 = vld [vmem:[%s605 + $0xda8] sm:$0xff]
        %v1184 = vld [vmem:[%s605 + $0xdb0] sm:$0xff]
        %v1185 = vld [vmem:[%s605 + $0xdb8] sm:$0xff]
        %v1186 = vld [vmem:[%s605 + $0xdc0] sm:$0xff]
        %v1187 = vld [vmem:[%s605 + $0xdc8] sm:$0xff]
        %v1188 = vld [vmem:[%s605 + $0xdd0] sm:$0xff]
        %v1189 = vld [vmem:[%s605 + $0xdd8] sm:$0xff]
        %v1190 = vld [vmem:[%s605 + $0xde0] sm:$0xff]
        %v1191 = vld [vmem:[%s605 + $0xde8] sm:$0xff]
        %v1192 = vld [vmem:[%s605 + $0xdf0] sm:$0xff]
        %v1193 = vld [vmem:[%s605 + $0xdf8] sm:$0xff]
        %v1194 = vld [vmem:[%s605 + $0xe00] sm:$0xff]
        %v1195 = vld [vmem:[%s605 + $0xe08] sm:$0xff]
        %v1196 = vld [vmem:[%s605 + $0xe10] sm:$0xff]
        %v1197 = vld [vmem:[%s605 + $0xe18] sm:$0xff]
        %v1198 = vld [vmem:[%s605 + $0xe20] sm:$0xff]
        %v1199 = vld [vmem:[%s605 + $0xe28] sm:$0xff]
        %v1200 = vld [vmem:[%s605 + $0xe30] sm:$0xff]
        %v1201 = vld [vmem:[%s605 + $0xe38] sm:$0xff]
        %v1202 = vld [vmem:[%s605 + $0xe40] sm:$0xff]
        %v1203 = vld [vmem:[%s605 + $0xe48] sm:$0xff]
        %v1204 = vld [vmem:[%s605 + $0xe50] sm:$0xff]
        %v1205 = vld [vmem:[%s605 + $0xe58] sm:$0xff]
        %v1206 = vld [vmem:[%s605 + $0xe60] sm:$0xff]
        %v1207 = vld [vmem:[%s605 + $0xe68] sm:$0xff]
        %v1208 = vld [vmem:[%s605 + $0xe70] sm:$0xff]
        %v1209 = vld [vmem:[%s605 + $0xe78] sm:$0xff]
        %v1210 = vld [vmem:[%s605 + $0xe80] sm:$0xff]
        %v1211 = vld [vmem:[%s605 + $0xe88] sm:$0xff]
        %v1212 = vld [vmem:[%s605 + $0xe90] sm:$0xff]
        %v1213 = vld [vmem:[%s605 + $0xe98] sm:$0xff]
        %v1214 = vld [vmem:[%s605 + $0xea0] sm:$0xff]
        %v1215 = vld [vmem:[%s605 + $0xea8] sm:$0xff]
        %v1216 = vld [vmem:[%s605 + $0xeb0] sm:$0xff]
        %v1217 = vld [vmem:[%s605 + $0xeb8] sm:$0xff]
        %v1218 = vld [vmem:[%s605 + $0xec0] sm:$0xff]
        %v1219 = vld [vmem:[%s605 + $0xec8] sm:$0xff]
        %v1220 = vld [vmem:[%s605 + $0xed0] sm:$0xff]
        %v1221 = vld [vmem:[%s605 + $0xed8] sm:$0xff]
        %v1222 = vld [vmem:[%s605 + $0xee0] sm:$0xff]
        %v1223 = vld [vmem:[%s605 + $0xee8] sm:$0xff]
        %v1224 = vld [vmem:[%s605 + $0xef0] sm:$0xff]
        %v1225 = vld [vmem:[%s605 + $0xef8] sm:$0xff]
        %v1226 = vld [vmem:[%s605 + $0xf00] sm:$0xff]
        %v1227 = vld [vmem:[%s605 + $0xf08] sm:$0xff]
        %v1228 = vld [vmem:[%s605 + $0xf10] sm:$0xff]
        %v1229 = vld [vmem:[%s605 + $0xf18] sm:$0xff]
        %v1230 = vld [vmem:[%s605 + $0xf20] sm:$0xff]
        %v1231 = vld [vmem:[%s605 + $0xf28] sm:$0xff]
        %v1232 = vld [vmem:[%s605 + $0xf30] sm:$0xff]
        %v1233 = vld [vmem:[%s605 + $0xf38] sm:$0xff]
        %v1234 = vld [vmem:[%s605 + $0xf40] sm:$0xff]
        %v1235 = vld [vmem:[%s605 + $0xf48] sm:$0xff]
        %v1236 = vld [vmem:[%s605 + $0xf50] sm:$0xff]
        %v1237 = vld [vmem:[%s605 + $0xf58] sm:$0xff]
        %v1238 = vld [vmem:[%s605 + $0xf60] sm:$0xff]
        %v1239 = vld [vmem:[%s605 + $0xf68] sm:$0xff]
        %v1240 = vld [vmem:[%s605 + $0xf70] sm:$0xff]
        %v1241 = vld [vmem:[%s605 + $0xf78] sm:$0xff]
        %v1242 = vld [vmem:[%s605 + $0xf80] sm:$0xff]
        %v1243 = vld [vmem:[%s605 + $0xf88] sm:$0xff]
        %v1244 = vld [vmem:[%s605 + $0xf90] sm:$0xff]
        %v1245 = vld [vmem:[%s605 + $0xf98] sm:$0xff]
        %v1246 = vld [vmem:[%s605 + $0xfa0] sm:$0xff]
        %v1247 = vld [vmem:[%s605 + $0xfa8] sm:$0xff]
        %v1248 = vld [vmem:[%s605 + $0xfb0] sm:$0xff]
        %v1249 = vld [vmem:[%s605 + $0xfb8] sm:$0xff]
        %v1250 = vld [vmem:[%s605 + $0xfc0] sm:$0xff]
        %v1251 = vld [vmem:[%s605 + $0xfc8] sm:$0xff]
        %v1252 = vld [vmem:[%s605 + $0xfd0] sm:$0xff]
        %v1253 = vld [vmem:[%s605 + $0xfd8] sm:$0xff]
        %v1254 = vld [vmem:[%s605 + $0xfe0] sm:$0xff]
        %v1255 = vld [vmem:[%s605 + $0xfe8] sm:$0xff]
        %v1256 = vld [vmem:[%s605 + $0xff0] sm:$0xff]
        %v1257 = vld [vmem:[%s605 + $0xff8] sm:$0xff]
        %v1258 = vld [vmem:[%s605 + $0x1000] sm:$0xff]
        %v1259 = vld [vmem:[%s605 + $0x1008] sm:$0xff]
        %v1260 = vld [vmem:[%s605 + $0x1010] sm:$0xff]
        %v1261 = vld [vmem:[%s605 + $0x1018] sm:$0xff]
        %v1262 = vld [vmem:[%s605 + $0x1020] sm:$0xff]
        %v1263 = vld [vmem:[%s605 + $0x1028] sm:$0xff]
        %v1264 = vld [vmem:[%s605 + $0x1030] sm:$0xff]
        %v1265 = vld [vmem:[%s605 + $0x1038] sm:$0xff]
        %v1266 = vld [vmem:[%s605 + $0x1040] sm:$0xff]
        %v1267 = vld [vmem:[%s605 + $0x1048] sm:$0xff]
        %v1268 = vld [vmem:[%s605 + $0x1050] sm:$0xff]
        %v1269 = vld [vmem:[%s605 + $0x1058] sm:$0xff]
        %v1270 = vld [vmem:[%s605 + $0x1060] sm:$0xff]
        %v1271 = vld [vmem:[%s605 + $0x1068] sm:$0xff]
        %v1272 = vld [vmem:[%s605 + $0x1070] sm:$0xff]
        %v1273 = vld [vmem:[%s605 + $0x1078] sm:$0xff]
        %v1274 = vld [vmem:[%s605 + $0x1080] sm:$0xff]
        %v1275 = vld [vmem:[%s605 + $0x1088] sm:$0xff]
        %v1276 = vld [vmem:[%s605 + $0x1090] sm:$0xff]
        %v1277 = vld [vmem:[%s605 + $0x1098] sm:$0xff]
        %v1278 = vld [vmem:[%s605 + $0x10a0] sm:$0xff]
        %v1279 = vld [vmem:[%s605 + $0x10a8] sm:$0xff]
        %v1280 = vld [vmem:[%s605 + $0x10b0] sm:$0xff]
        %v1281 = vld [vmem:[%s605 + $0x10b8] sm:$0xff]
        %v1282 = vld [vmem:[%s605 + $0x10c0] sm:$0xff]
        %v1283 = vld [vmem:[%s605 + $0x10c8] sm:$0xff]
        %v1284 = vld [vmem:[%s605 + $0x10d0] sm:$0xff]
        %v1285 = vld [vmem:[%s605 + $0x10d8] sm:$0xff]
        %v1286 = vld [vmem:[%s605 + $0x10e0] sm:$0xff]
        %v1287 = vld [vmem:[%s605 + $0x10e8] sm:$0xff]
        %v1288 = vld [vmem:[%s605 + $0x10f0] sm:$0xff]
        %v1289 = vld [vmem:[%s605 + $0x10f8] sm:$0xff]
        %v1290 = vld [vmem:[%s605 + $0x1100] sm:$0xff]
        %v1291 = vld [vmem:[%s605 + $0x1108] sm:$0xff]
        %v1292 = vld [vmem:[%s605 + $0x1110] sm:$0xff]
        %v1293 = vld [vmem:[%s605 + $0x1118] sm:$0xff]
        %v1294 = vld [vmem:[%s605 + $0x1120] sm:$0xff]
        %v1295 = vld [vmem:[%s605 + $0x1128] sm:$0xff]
        %v1296 = vld [vmem:[%s605 + $0x1130] sm:$0xff]
        %v1297 = vld [vmem:[%s605 + $0x1138] sm:$0xff]
        %v1298 = vld [vmem:[%s605 + $0x1140] sm:$0xff]
        %v1299 = vld [vmem:[%s605 + $0x1148] sm:$0xff]
        %v1300 = vld [vmem:[%s605 + $0x1150] sm:$0xff]
        %v1301 = vld [vmem:[%s605 + $0x1158] sm:$0xff]
        %v1302 = vld [vmem:[%s605 + $0x1160] sm:$0xff]
        %v1303 = vld [vmem:[%s605 + $0x1168] sm:$0xff]
        %v1304 = vld [vmem:[%s605 + $0x1170] sm:$0xff]
        %v1305 = vld [vmem:[%s605 + $0x1178] sm:$0xff]
        %v1306 = vld [vmem:[%s605 + $0x1180] sm:$0xff]
        %v1307 = vld [vmem:[%s605 + $0x1188] sm:$0xff]
        %v1308 = vld [vmem:[%s605 + $0x1190] sm:$0xff]
        %v1309 = vld [vmem:[%s605 + $0x1198] sm:$0xff]
        %v1310 = vld [vmem:[%s605 + $0x11a0] sm:$0xff]
        %v1311 = vld [vmem:[%s605 + $0x11a8] sm:$0xff]
        %v1312 = vld [vmem:[%s605 + $0x11b0] sm:$0xff]
        %v1313 = vld [vmem:[%s605 + $0x11b8] sm:$0xff]
        %v1314 = vld [vmem:[%s605 + $0x11c0] sm:$0xff]
        %v1315 = vld [vmem:[%s605 + $0x11c8] sm:$0xff]
        %v1316 = vld [vmem:[%s605 + $0x11d0] sm:$0xff]
        %v1317 = vld [vmem:[%s605 + $0x11d8] sm:$0xff]
        %v1318 = vld [vmem:[%s605 + $0x11e0] sm:$0xff]
        %v1319 = vld [vmem:[%s605 + $0x11e8] sm:$0xff]
        %v1320 = vld [vmem:[%s605 + $0x11f0] sm:$0xff]
        %v1321 = vld [vmem:[%s605 + $0x11f8] sm:$0xff]
        %v1322 = vld [vmem:[%s605 + $0x1200] sm:$0xff]
        %v1323 = vld [vmem:[%s605 + $0x1208] sm:$0xff]
        %v1324 = vld [vmem:[%s605 + $0x1210] sm:$0xff]
        %v1325 = vld [vmem:[%s605 + $0x1218] sm:$0xff]
        %v1326 = vld [vmem:[%s605 + $0x1220] sm:$0xff]
        %v1327 = vld [vmem:[%s605 + $0x1228] sm:$0xff]
        %v1328 = vld [vmem:[%s605 + $0x1230] sm:$0xff]
        %v1329 = vld [vmem:[%s605 + $0x1238] sm:$0xff]
        %v1330 = vld [vmem:[%s605 + $0x1240] sm:$0xff]
        %v1331 = vld [vmem:[%s605 + $0x1248] sm:$0xff]
        %v1332 = vld [vmem:[%s605 + $0x1250] sm:$0xff]
        %v1333 = vld [vmem:[%s605 + $0x1258] sm:$0xff]
        %v1334 = vld [vmem:[%s605 + $0x1260] sm:$0xff]
        %v1335 = vld [vmem:[%s605 + $0x1268] sm:$0xff]
        %v1336 = vld [vmem:[%s605 + $0x1270] sm:$0xff]
        %v1337 = vld [vmem:[%s605 + $0x1278] sm:$0xff]
        %v1338 = vld [vmem:[%s605 + $0x1280] sm:$0xff]
        %v1339 = vld [vmem:[%s605 + $0x1288] sm:$0xff]
        %v1340 = vld [vmem:[%s605 + $0x1290] sm:$0xff]
        %v1341 = vld [vmem:[%s605 + $0x1298] sm:$0xff]
        %v1342 = vld [vmem:[%s605 + $0x12a0] sm:$0xff]
        %v1343 = vld [vmem:[%s605 + $0x12a8] sm:$0xff]
        %v1344 = vld [vmem:[%s605 + $0x12b0] sm:$0xff]
        %v1345 = vld [vmem:[%s605 + $0x12b8] sm:$0xff]
        %v1346 = vld [vmem:[%s605 + $0x12c0] sm:$0xff]
        %v1347 = vld [vmem:[%s605 + $0x12c8] sm:$0xff]
        %v1348 = vld [vmem:[%s605 + $0x12d0] sm:$0xff]
        %v1349 = vld [vmem:[%s605 + $0x12d8] sm:$0xff]
        %v1350 = vld [vmem:[%s605 + $0x12e0] sm:$0xff]
        %v1351 = vld [vmem:[%s605 + $0x12e8] sm:$0xff]
        %v1352 = vld [vmem:[%s605 + $0x12f0] sm:$0xff]
        %v1353 = vld [vmem:[%s605 + $0x12f8] sm:$0xff]
        %v1354 = vld [vmem:[%s605 + $0x1300] sm:$0xff]
        %v1355 = vld [vmem:[%s605 + $0x1308] sm:$0xff]
        %v1356 = vld [vmem:[%s605 + $0x1310] sm:$0xff]
        %v1357 = vld [vmem:[%s605 + $0x1318] sm:$0xff]
        %v1358 = vld [vmem:[%s605 + $0x1320] sm:$0xff]
        %v1359 = vld [vmem:[%s605 + $0x1328] sm:$0xff]
        %v1360 = vld [vmem:[%s605 + $0x1330] sm:$0xff]
        %v1361 = vld [vmem:[%s605 + $0x1338] sm:$0xff]
        %v1362 = vld [vmem:[%s605 + $0x1340] sm:$0xff]
        %v1363 = vld [vmem:[%s605 + $0x1348] sm:$0xff]
        %v1364 = vld [vmem:[%s605 + $0x1350] sm:$0xff]
        %v1365 = vld [vmem:[%s605 + $0x1358] sm:$0xff]
        %v1366 = vld [vmem:[%s605 + $0x1360] sm:$0xff]
        %v1367 = vld [vmem:[%s605 + $0x1368] sm:$0xff]
        %v1368 = vld [vmem:[%s605 + $0x1370] sm:$0xff]
        %v1369 = vld [vmem:[%s605 + $0x1378] sm:$0xff]
        %v1370 = vld [vmem:[%s605 + $0x1380] sm:$0xff]
        %v1371 = vld [vmem:[%s605 + $0x1388] sm:$0xff]
        %v1372 = vld [vmem:[%s605 + $0x1390] sm:$0xff]
        %v1373 = vld [vmem:[%s605 + $0x1398] sm:$0xff]
        %v1374 = vld [vmem:[%s605 + $0x13a0] sm:$0xff]
        %v1375 = vld [vmem:[%s605 + $0x13a8] sm:$0xff]
        %v1376 = vld [vmem:[%s605 + $0x13b0] sm:$0xff]
        %v1377 = vld [vmem:[%s605 + $0x13b8] sm:$0xff]
        %v1378 = vld [vmem:[%s605 + $0x13c0] sm:$0xff]
        %v1379 = vld [vmem:[%s605 + $0x13c8] sm:$0xff]
        %v1380 = vld [vmem:[%s605 + $0x13d0] sm:$0xff]
        %v1381 = vld [vmem:[%s605 + $0x13d8] sm:$0xff]
        %v1382 = vld [vmem:[%s605 + $0x13e0] sm:$0xff]
        %v1383 = vld [vmem:[%s605 + $0x13e8] sm:$0xff]
        %v1384 = vld [vmem:[%s605 + $0x13f0] sm:$0xff]
        %v1385 = vld [vmem:[%s605 + $0x13f8] sm:$0xff]
        %v1386 = vld [vmem:[%s605 + $0x1400] sm:$0xff]
        %v1387 = vld [vmem:[%s605 + $0x1408] sm:$0xff]
        %v1388 = vld [vmem:[%s605 + $0x1410] sm:$0xff]
        %v1389 = vld [vmem:[%s605 + $0x1418] sm:$0xff]
        %v1390 = vld [vmem:[%s605 + $0x1420] sm:$0xff]
        %v1391 = vld [vmem:[%s605 + $0x1428] sm:$0xff]
        %v1392 = vld [vmem:[%s605 + $0x1430] sm:$0xff]
        %v1393 = vld [vmem:[%s605 + $0x1438] sm:$0xff]
        %v1394 = vld [vmem:[%s605 + $0x1440] sm:$0xff]
        %v1395 = vld [vmem:[%s605 + $0x1448] sm:$0xff]
        %v1396 = vld [vmem:[%s605 + $0x1450] sm:$0xff]
        %v1397 = vld [vmem:[%s605 + $0x1458] sm:$0xff]
        %v1398 = vld [vmem:[%s605 + $0x1460] sm:$0xff]
        %v1399 = vld [vmem:[%s605 + $0x1468] sm:$0xff]
        %v1400 = vld [vmem:[%s605 + $0x1470] sm:$0xff]
        %v1401 = vld [vmem:[%s605 + $0x1478] sm:$0xff]
        %v1402 = vld [vmem:[%s605 + $0x1480] sm:$0xff]
        %v1403 = vld [vmem:[%s605 + $0x1488] sm:$0xff]
        %v1404 = vld [vmem:[%s605 + $0x1490] sm:$0xff]
        %v1405 = vld [vmem:[%s605 + $0x1498] sm:$0xff]
        %v1406 = vld [vmem:[%s605 + $0x14a0] sm:$0xff]
        %v1407 = vld [vmem:[%s605 + $0x14a8] sm:$0xff]
        %v1408 = vld [vmem:[%s605 + $0x14b0] sm:$0xff]
        %v1409 = vld [vmem:[%s605 + $0x14b8] sm:$0xff]
        %v1410 = vld [vmem:[%s605 + $0x14c0] sm:$0xff]
        %v1411 = vld [vmem:[%s605 + $0x14c8] sm:$0xff]
        %v1412 = vld [vmem:[%s605 + $0x14d0] sm:$0xff]
        %v1413 = vld [vmem:[%s605 + $0x14d8] sm:$0xff]
        %v1414 = vld [vmem:[%s605 + $0x14e0] sm:$0xff]
        %v1415 = vld [vmem:[%s605 + $0x14e8] sm:$0xff]
        %v1416 = vld [vmem:[%s605 + $0x14f0] sm:$0xff]
        %v1417 = vld [vmem:[%s605 + $0x14f8] sm:$0xff]
        %v1418 = vld [vmem:[%s605 + $0x1500] sm:$0xff]
        %v1419 = vld [vmem:[%s605 + $0x1508] sm:$0xff]
        %v1420 = vld [vmem:[%s605 + $0x1510] sm:$0xff]
        %v1421 = vld [vmem:[%s605 + $0x1518] sm:$0xff]
        %v1422 = vld [vmem:[%s605 + $0x1520] sm:$0xff]
        %v1423 = vld [vmem:[%s605 + $0x1528] sm:$0xff]
        %v1424 = vld [vmem:[%s605 + $0x1530] sm:$0xff]
        %v1425 = vld [vmem:[%s605 + $0x1538] sm:$0xff]
        %v1426 = vld [vmem:[%s605 + $0x1540] sm:$0xff]
        %v1427 = vld [vmem:[%s605 + $0x1548] sm:$0xff]
        %v1428 = vld [vmem:[%s605 + $0x1550] sm:$0xff]
        %v1429 = vld [vmem:[%s605 + $0x1558] sm:$0xff]
        %v1430 = vld [vmem:[%s605 + $0x1560] sm:$0xff]
        %v1431 = vld [vmem:[%s605 + $0x1568] sm:$0xff]
        %v1432 = vld [vmem:[%s605 + $0x1570] sm:$0xff]
        %v1433 = vld [vmem:[%s605 + $0x1578] sm:$0xff]
        %v1434 = vld [vmem:[%s605 + $0x1580] sm:$0xff]
        %v1435 = vld [vmem:[%s605 + $0x1588] sm:$0xff]
        %v1436 = vld [vmem:[%s605 + $0x1590] sm:$0xff]
        %v1437 = vld [vmem:[%s605 + $0x1598] sm:$0xff]
        %v1438 = vld [vmem:[%s605 + $0x15a0] sm:$0xff]
        %v1439 = vld [vmem:[%s605 + $0x15a8] sm:$0xff]
        %v1440 = vld [vmem:[%s605 + $0x15b0] sm:$0xff]
        %v1441 = vld [vmem:[%s605 + $0x15b8] sm:$0xff]
        %v1442 = vld [vmem:[%s605 + $0x15c0] sm:$0xff]
        %v1443 = vld [vmem:[%s605 + $0x15c8] sm:$0xff]
        %v1444 = vld [vmem:[%s605 + $0x15d0] sm:$0xff]
        %v1445 = vld [vmem:[%s605 + $0x15d8] sm:$0xff]
        %v1446 = vld [vmem:[%s605 + $0x15e0] sm:$0xff]
        %v1447 = vld [vmem:[%s605 + $0x15e8] sm:$0xff]
        %v1448 = vld [vmem:[%s605 + $0x15f0] sm:$0xff]
        %v1449 = vld [vmem:[%s605 + $0x15f8] sm:$0xff]
        %v1450 = vld [vmem:[%s605 + $0x1600] sm:$0xff]
        %v1451 = vld [vmem:[%s605 + $0x1608] sm:$0xff]
        %v1452 = vld [vmem:[%s605 + $0x1610] sm:$0xff]
        %v1453 = vld [vmem:[%s605 + $0x1618] sm:$0xff]
        %v1454 = vld [vmem:[%s605 + $0x1620] sm:$0xff]
        %v1455 = vld [vmem:[%s605 + $0x1628] sm:$0xff]
        %v1456 = vld [vmem:[%s605 + $0x1630] sm:$0xff]
        %v1457 = vld [vmem:[%s605 + $0x1638] sm:$0xff]
        %v1458 = vld [vmem:[%s605 + $0x1640] sm:$0xff]
        %v1459 = vld [vmem:[%s605 + $0x1648] sm:$0xff]
        %v1460 = vld [vmem:[%s605 + $0x1650] sm:$0xff]
        %v1461 = vld [vmem:[%s605 + $0x1658] sm:$0xff]
        %v1462 = vld [vmem:[%s605 + $0x1660] sm:$0xff]
        %v1463 = vld [vmem:[%s605 + $0x1668] sm:$0xff]
        %v1464 = vld [vmem:[%s605 + $0x1670] sm:$0xff]
        %v1465 = vld [vmem:[%s605 + $0x1678] sm:$0xff]
        %v1466 = vld [vmem:[%s605 + $0x1680] sm:$0xff]
        %v1467 = vld [vmem:[%s605 + $0x1688] sm:$0xff]
        %v1468 = vld [vmem:[%s605 + $0x1690] sm:$0xff]
        %v1469 = vld [vmem:[%s605 + $0x1698] sm:$0xff]
        %v1470 = vld [vmem:[%s605 + $0x16a0] sm:$0xff]
        %v1471 = vld [vmem:[%s605 + $0x16a8] sm:$0xff]
        %v1472 = vld [vmem:[%s605 + $0x16b0] sm:$0xff]
        %v1473 = vld [vmem:[%s605 + $0x16b8] sm:$0xff]
        %v1474 = vld [vmem:[%s605 + $0x16c0] sm:$0xff]
        %v1475 = vld [vmem:[%s605 + $0x16c8] sm:$0xff]
        %v1476 = vld [vmem:[%s605 + $0x16d0] sm:$0xff]
        %v1477 = vld [vmem:[%s605 + $0x16d8] sm:$0xff]
        %v1478 = vld [vmem:[%s605 + $0x16e0] sm:$0xff]
        %v1479 = vld [vmem:[%s605 + $0x16e8] sm:$0xff]
        %v1480 = vld [vmem:[%s605 + $0x16f0] sm:$0xff]
        %v1481 = vld [vmem:[%s605 + $0x16f8] sm:$0xff]
        %v1482 = vld [vmem:[%s605 + $0x1700] sm:$0xff]
        %v1483 = vld [vmem:[%s605 + $0x1708] sm:$0xff]
        %v1484 = vld [vmem:[%s605 + $0x1710] sm:$0xff]
        %v1485 = vld [vmem:[%s605 + $0x1718] sm:$0xff]
        %v1486 = vld [vmem:[%s605 + $0x1720] sm:$0xff]
        %v1487 = vld [vmem:[%s605 + $0x1728] sm:$0xff]
        %v1488 = vld [vmem:[%s605 + $0x1730] sm:$0xff]
        %v1489 = vld [vmem:[%s605 + $0x1738] sm:$0xff]
        %v1490 = vld [vmem:[%s605 + $0x1740] sm:$0xff]
        %v1491 = vld [vmem:[%s605 + $0x1748] sm:$0xff]
        %v1492 = vld [vmem:[%s605 + $0x1750] sm:$0xff]
        %v1493 = vld [vmem:[%s605 + $0x1758] sm:$0xff]
        %v1494 = vld [vmem:[%s605 + $0x1760] sm:$0xff]
        %v1495 = vld [vmem:[%s605 + $0x1768] sm:$0xff]
        %v1496 = vld [vmem:[%s605 + $0x1770] sm:$0xff]
        %v1497 = vld [vmem:[%s605 + $0x1778] sm:$0xff]
        %v1498 = vld [vmem:[%s605 + $0x1780] sm:$0xff]
        %v1499 = vld [vmem:[%s605 + $0x1788] sm:$0xff]
        %v1500 = vld [vmem:[%s605 + $0x1790] sm:$0xff]
        %v1501 = vld [vmem:[%s605 + $0x1798] sm:$0xff]
        %v1502 = vld [vmem:[%s605 + $0x17a0] sm:$0xff]
        %v1503 = vld [vmem:[%s605 + $0x17a8] sm:$0xff]
        %v1504 = vld [vmem:[%s605 + $0x17b0] sm:$0xff]
        %v1505 = vld [vmem:[%s605 + $0x17b8] sm:$0xff]
        %v1506 = vld [vmem:[%s605 + $0x17c0] sm:$0xff]
        %v1507 = vld [vmem:[%s605 + $0x17c8] sm:$0xff]
        %v1508 = vld [vmem:[%s605 + $0x17d0] sm:$0xff]
        %v1509 = vld [vmem:[%s605 + $0x17d8] sm:$0xff]
        %v1510 = vld [vmem:[%s605 + $0x17e0] sm:$0xff]
        %v1511 = vld [vmem:[%s605 + $0x17e8] sm:$0xff]
        %v1512 = vld [vmem:[%s605 + $0x17f0] sm:$0xff]
        %v1513 = vld [vmem:[%s605 + $0x17f8] sm:$0xff]
        %v1538 = vunpack.c.l.b16 %v722
        %v1539 = vunpack.c.h.b16 %v722
        %v1540 = vunpack.c.l.b16 %v723
        %v1541 = vunpack.c.h.b16 %v723
        %v1542 = vunpack.c.l.b16 %v724
        %v1543 = vunpack.c.h.b16 %v724
        %v1544 = vunpack.c.l.b16 %v725
        %v1545 = vunpack.c.h.b16 %v725
        %v1546 = vunpack.c.l.b16 %v726
        %v1547 = vunpack.c.h.b16 %v726
        %v1548 = vunpack.c.l.b16 %v727
        %v1549 = vunpack.c.h.b16 %v727
        %v1550 = vunpack.c.l.b16 %v728
        %v1551 = vunpack.c.h.b16 %v728
        %v1552 = vunpack.c.l.b16 %v729
        %v1553 = vunpack.c.h.b16 %v729
        %v1554 = vunpack.c.l.b16 %v730
        %v1555 = vunpack.c.h.b16 %v730
        %v1556 = vunpack.c.l.b16 %v731
        %v1557 = vunpack.c.h.b16 %v731
        %v1558 = vunpack.c.l.b16 %v732
        %v1559 = vunpack.c.h.b16 %v732
        %v1560 = vunpack.c.l.b16 %v733
        %v1561 = vunpack.c.h.b16 %v733
        %v1562 = vunpack.c.l.b16 %v734
        %v1563 = vunpack.c.h.b16 %v734
        %v1564 = vunpack.c.l.b16 %v735
        %v1565 = vunpack.c.h.b16 %v735
        %v1566 = vunpack.c.l.b16 %v736
        %v1567 = vunpack.c.h.b16 %v736
        %v1568 = vunpack.c.l.b16 %v737
        %v1569 = vunpack.c.h.b16 %v737
        %v1570 = vunpack.c.l.b16 %v738
        %v1571 = vunpack.c.h.b16 %v738
        %v1572 = vunpack.c.l.b16 %v739
        %v1573 = vunpack.c.h.b16 %v739
        %v1574 = vunpack.c.l.b16 %v740
        %v1575 = vunpack.c.h.b16 %v740
        %v1576 = vunpack.c.l.b16 %v741
        %v1577 = vunpack.c.h.b16 %v741
        %v1578 = vunpack.c.l.b16 %v742
        %v1579 = vunpack.c.h.b16 %v742
        %v1580 = vunpack.c.l.b16 %v743
        %v1581 = vunpack.c.h.b16 %v743
        %v1582 = vunpack.c.l.b16 %v744
        %v1583 = vunpack.c.h.b16 %v744
        %v1584 = vunpack.c.l.b16 %v745
        %v1585 = vunpack.c.h.b16 %v745
        %v1586 = vpack.c.b16 %v1538, %v1538
        %v1587 = vpack.c.b16 %v1539, %v1539
        %v1588 = vpack.c.b16 %v1540, %v1540
        %v1589 = vpack.c.b16 %v1541, %v1541
        %v1590 = vpack.c.b16 %v1542, %v1542
        %v1591 = vpack.c.b16 %v1543, %v1543
        %v1592 = vpack.c.b16 %v1544, %v1544
        %v1593 = vpack.c.b16 %v1545, %v1545
        %v1594 = vpack.c.b16 %v1546, %v1546
        %v1595 = vpack.c.b16 %v1547, %v1547
        %v1596 = vpack.c.b16 %v1548, %v1548
        %v1597 = vpack.c.b16 %v1549, %v1549
        %v1598 = vpack.c.b16 %v1550, %v1550
        %v1599 = vpack.c.b16 %v1551, %v1551
        %v1600 = vpack.c.b16 %v1552, %v1552
        %v1601 = vpack.c.b16 %v1553, %v1553
        %v1602 = vpack.c.b16 %v1554, %v1554
        %v1603 = vpack.c.b16 %v1555, %v1555
        %v1604 = vpack.c.b16 %v1556, %v1556
        %v1605 = vpack.c.b16 %v1557, %v1557
        %v1606 = vpack.c.b16 %v1558, %v1558
        %v1607 = vpack.c.b16 %v1559, %v1559
        %v1608 = vpack.c.b16 %v1560, %v1560
        %v1609 = vpack.c.b16 %v1561, %v1561
        %v1610 = vpack.c.b16 %v1562, %v1562
        %v1611 = vpack.c.b16 %v1563, %v1563
        %v1612 = vpack.c.b16 %v1564, %v1564
        %v1613 = vpack.c.b16 %v1565, %v1565
        %v1614 = vpack.c.b16 %v1566, %v1566
        %v1615 = vpack.c.b16 %v1567, %v1567
        %v1616 = vpack.c.b16 %v1568, %v1568
        %v1617 = vpack.c.b16 %v1569, %v1569
        %v1618 = vpack.c.b16 %v1570, %v1570
        %v1619 = vpack.c.b16 %v1571, %v1571
        %v1620 = vpack.c.b16 %v1572, %v1572
        %v1621 = vpack.c.b16 %v1573, %v1573
        %v1622 = vpack.c.b16 %v1574, %v1574
        %v1623 = vpack.c.b16 %v1575, %v1575
        %v1624 = vpack.c.b16 %v1576, %v1576
        %v1625 = vpack.c.b16 %v1577, %v1577
        %v1626 = vpack.c.b16 %v1578, %v1578
        %v1627 = vpack.c.b16 %v1579, %v1579
        %v1628 = vpack.c.b16 %v1580, %v1580
        %v1629 = vpack.c.b16 %v1581, %v1581
        %v1630 = vpack.c.b16 %v1582, %v1582
        %v1631 = vpack.c.b16 %v1583, %v1583
        %v1632 = vpack.c.b16 %v1584, %v1584
        %v1633 = vpack.c.b16 %v1585, %v1585
        %v2450 = vunpack.c.l.b16 %v746
        %v2451 = vunpack.c.h.b16 %v746
        %v2452 = vunpack.c.l.b16 %v747
        %v2453 = vunpack.c.h.b16 %v747
        %v2454 = vunpack.c.l.b16 %v748
        %v2455 = vunpack.c.h.b16 %v748
        %v2456 = vunpack.c.l.b16 %v749
        %v2457 = vunpack.c.h.b16 %v749
        %v2458 = vunpack.c.l.b16 %v750
        %v2459 = vunpack.c.h.b16 %v750
        %v2460 = vunpack.c.l.b16 %v751
        %v2461 = vunpack.c.h.b16 %v751
        %v2462 = vunpack.c.l.b16 %v752
        %v2463 = vunpack.c.h.b16 %v752
        %v2464 = vunpack.c.l.b16 %v753
        %v2465 = vunpack.c.h.b16 %v753
        %v2466 = vunpack.c.l.b16 %v754
        %v2467 = vunpack.c.h.b16 %v754
        %v2468 = vunpack.c.l.b16 %v755
        %v2469 = vunpack.c.h.b16 %v755
        %v2470 = vunpack.c.l.b16 %v756
        %v2471 = vunpack.c.h.b16 %v756
        %v2472 = vunpack.c.l.b16 %v757
        %v2473 = vunpack.c.h.b16 %v757
        %v2474 = vunpack.c.l.b16 %v758
        %v2475 = vunpack.c.h.b16 %v758
        %v2476 = vunpack.c.l.b16 %v759
        %v2477 = vunpack.c.h.b16 %v759
        %v2478 = vunpack.c.l.b16 %v760
        %v2479 = vunpack.c.h.b16 %v760
        %v2480 = vunpack.c.l.b16 %v761
        %v2481 = vunpack.c.h.b16 %v761
        %v2482 = vunpack.c.l.b16 %v762
        %v2483 = vunpack.c.h.b16 %v762
        %v2484 = vunpack.c.l.b16 %v763
        %v2485 = vunpack.c.h.b16 %v763
        %v2486 = vunpack.c.l.b16 %v764
        %v2487 = vunpack.c.h.b16 %v764
        %v2488 = vunpack.c.l.b16 %v765
        %v2489 = vunpack.c.h.b16 %v765
        %v2490 = vunpack.c.l.b16 %v766
        %v2491 = vunpack.c.h.b16 %v766
        %v2492 = vunpack.c.l.b16 %v767
        %v2493 = vunpack.c.h.b16 %v767
        %v2494 = vunpack.c.l.b16 %v768
        %v2495 = vunpack.c.h.b16 %v768
        %v2496 = vunpack.c.l.b16 %v769
        %v2497 = vunpack.c.h.b16 %v769
        %v2498 = vunpack.c.l.b16 %v770
        %v2499 = vunpack.c.h.b16 %v770
        %v2500 = vunpack.c.l.b16 %v771
        %v2501 = vunpack.c.h.b16 %v771
        %v2502 = vunpack.c.l.b16 %v772
        %v2503 = vunpack.c.h.b16 %v772
        %v2504 = vunpack.c.l.b16 %v773
        %v2505 = vunpack.c.h.b16 %v773
        %v2506 = vunpack.c.l.b16 %v774
        %v2507 = vunpack.c.h.b16 %v774
        %v2508 = vunpack.c.l.b16 %v775
        %v2509 = vunpack.c.h.b16 %v775
        %v2510 = vunpack.c.l.b16 %v776
        %v2511 = vunpack.c.h.b16 %v776
        %v2512 = vunpack.c.l.b16 %v777
        %v2513 = vunpack.c.h.b16 %v777
        %v2514 = vunpack.c.l.b16 %v778
        %v2515 = vunpack.c.h.b16 %v778
        %v2516 = vunpack.c.l.b16 %v779
        %v2517 = vunpack.c.h.b16 %v779
        %v2518 = vunpack.c.l.b16 %v780
        %v2519 = vunpack.c.h.b16 %v780
        %v2520 = vunpack.c.l.b16 %v781
        %v2521 = vunpack.c.h.b16 %v781
        %v2522 = vunpack.c.l.b16 %v782
        %v2523 = vunpack.c.h.b16 %v782
        %v2524 = vunpack.c.l.b16 %v783
        %v2525 = vunpack.c.h.b16 %v783
        %v2526 = vunpack.c.l.b16 %v784
        %v2527 = vunpack.c.h.b16 %v784
        %v2528 = vunpack.c.l.b16 %v785
        %v2529 = vunpack.c.h.b16 %v785
        %v2530 = vunpack.c.l.b16 %v786
        %v2531 = vunpack.c.h.b16 %v786
        %v2532 = vunpack.c.l.b16 %v787
        %v2533 = vunpack.c.h.b16 %v787
        %v2534 = vunpack.c.l.b16 %v788
        %v2535 = vunpack.c.h.b16 %v788
        %v2536 = vunpack.c.l.b16 %v789
        %v2537 = vunpack.c.h.b16 %v789
        %v2538 = vunpack.c.l.b16 %v790
        %v2539 = vunpack.c.h.b16 %v790
        %v2540 = vunpack.c.l.b16 %v791
        %v2541 = vunpack.c.h.b16 %v791
        %v2542 = vunpack.c.l.b16 %v792
        %v2543 = vunpack.c.h.b16 %v792
        %v2544 = vunpack.c.l.b16 %v793
        %v2545 = vunpack.c.h.b16 %v793
        %v2546 = vunpack.c.l.b16 %v794
        %v2547 = vunpack.c.h.b16 %v794
        %v2548 = vunpack.c.l.b16 %v795
        %v2549 = vunpack.c.h.b16 %v795
        %v2550 = vunpack.c.l.b16 %v796
        %v2551 = vunpack.c.h.b16 %v796
        %v2552 = vunpack.c.l.b16 %v797
        %v2553 = vunpack.c.h.b16 %v797
        %v2554 = vunpack.c.l.b16 %v798
        %v2555 = vunpack.c.h.b16 %v798
        %v2556 = vunpack.c.l.b16 %v799
        %v2557 = vunpack.c.h.b16 %v799
        %v2558 = vunpack.c.l.b16 %v800
        %v2559 = vunpack.c.h.b16 %v800
        %v2560 = vunpack.c.l.b16 %v801
        %v2561 = vunpack.c.h.b16 %v801
        %v2562 = vunpack.c.l.b16 %v802
        %v2563 = vunpack.c.h.b16 %v802
        %v2564 = vunpack.c.l.b16 %v803
        %v2565 = vunpack.c.h.b16 %v803
        %v2566 = vunpack.c.l.b16 %v804
        %v2567 = vunpack.c.h.b16 %v804
        %v2568 = vunpack.c.l.b16 %v805
        %v2569 = vunpack.c.h.b16 %v805
        %v2570 = vunpack.c.l.b16 %v806
        %v2571 = vunpack.c.h.b16 %v806
        %v2572 = vunpack.c.l.b16 %v807
        %v2573 = vunpack.c.h.b16 %v807
        %v2574 = vunpack.c.l.b16 %v808
        %v2575 = vunpack.c.h.b16 %v808
        %v2576 = vunpack.c.l.b16 %v809
        %v2577 = vunpack.c.h.b16 %v809
        %v2578 = vunpack.c.l.b16 %v810
        %v2579 = vunpack.c.h.b16 %v810
        %v2580 = vunpack.c.l.b16 %v811
        %v2581 = vunpack.c.h.b16 %v811
        %v2582 = vunpack.c.l.b16 %v812
        %v2583 = vunpack.c.h.b16 %v812
        %v2584 = vunpack.c.l.b16 %v813
        %v2585 = vunpack.c.h.b16 %v813
        %v2586 = vunpack.c.l.b16 %v814
        %v2587 = vunpack.c.h.b16 %v814
        %v2588 = vunpack.c.l.b16 %v815
        %v2589 = vunpack.c.h.b16 %v815
        %v2590 = vunpack.c.l.b16 %v816
        %v2591 = vunpack.c.h.b16 %v816
        %v2592 = vunpack.c.l.b16 %v817
        %v2593 = vunpack.c.h.b16 %v817
        %v2594 = vunpack.c.l.b16 %v818
        %v2595 = vunpack.c.h.b16 %v818
        %v2596 = vunpack.c.l.b16 %v819
        %v2597 = vunpack.c.h.b16 %v819
        %v2598 = vunpack.c.l.b16 %v820
        %v2599 = vunpack.c.h.b16 %v820
        %v2600 = vunpack.c.l.b16 %v821
        %v2601 = vunpack.c.h.b16 %v821
        %v2602 = vunpack.c.l.b16 %v822
        %v2603 = vunpack.c.h.b16 %v822
        %v2604 = vunpack.c.l.b16 %v823
        %v2605 = vunpack.c.h.b16 %v823
        %v2606 = vunpack.c.l.b16 %v824
        %v2607 = vunpack.c.h.b16 %v824
        %v2608 = vunpack.c.l.b16 %v825
        %v2609 = vunpack.c.h.b16 %v825
        %v2610 = vunpack.c.l.b16 %v826
        %v2611 = vunpack.c.h.b16 %v826
        %v2612 = vunpack.c.l.b16 %v827
        %v2613 = vunpack.c.h.b16 %v827
        %v2614 = vunpack.c.l.b16 %v828
        %v2615 = vunpack.c.h.b16 %v828
        %v2616 = vunpack.c.l.b16 %v829
        %v2617 = vunpack.c.h.b16 %v829
        %v2618 = vunpack.c.l.b16 %v830
        %v2619 = vunpack.c.h.b16 %v830
        %v2620 = vunpack.c.l.b16 %v831
        %v2621 = vunpack.c.h.b16 %v831
        %v2622 = vunpack.c.l.b16 %v832
        %v2623 = vunpack.c.h.b16 %v832
        %v2624 = vunpack.c.l.b16 %v833
        %v2625 = vunpack.c.h.b16 %v833
        %v2626 = vunpack.c.l.b16 %v834
        %v2627 = vunpack.c.h.b16 %v834
        %v2628 = vunpack.c.l.b16 %v835
        %v2629 = vunpack.c.h.b16 %v835
        %v2630 = vunpack.c.l.b16 %v836
        %v2631 = vunpack.c.h.b16 %v836
        %v2632 = vunpack.c.l.b16 %v837
        %v2633 = vunpack.c.h.b16 %v837
        %v2634 = vunpack.c.l.b16 %v838
        %v2635 = vunpack.c.h.b16 %v838
        %v2636 = vunpack.c.l.b16 %v839
        %v2637 = vunpack.c.h.b16 %v839
        %v2638 = vunpack.c.l.b16 %v840
        %v2639 = vunpack.c.h.b16 %v840
        %v2640 = vunpack.c.l.b16 %v841
        %v2641 = vunpack.c.h.b16 %v841
        %v2642 = vunpack.c.l.b16 %v842
        %v2643 = vunpack.c.h.b16 %v842
        %v2644 = vunpack.c.l.b16 %v843
        %v2645 = vunpack.c.h.b16 %v843
        %v2646 = vunpack.c.l.b16 %v844
        %v2647 = vunpack.c.h.b16 %v844
        %v2648 = vunpack.c.l.b16 %v845
        %v2649 = vunpack.c.h.b16 %v845
        %v2650 = vunpack.c.l.b16 %v846
        %v2651 = vunpack.c.h.b16 %v846
        %v2652 = vunpack.c.l.b16 %v847
        %v2653 = vunpack.c.h.b16 %v847
        %v2654 = vunpack.c.l.b16 %v848
        %v2655 = vunpack.c.h.b16 %v848
        %v2656 = vunpack.c.l.b16 %v849
        %v2657 = vunpack.c.h.b16 %v849
        %v2658 = vunpack.c.l.b16 %v850
        %v2659 = vunpack.c.h.b16 %v850
        %v2660 = vunpack.c.l.b16 %v851
        %v2661 = vunpack.c.h.b16 %v851
        %v2662 = vunpack.c.l.b16 %v852
        %v2663 = vunpack.c.h.b16 %v852
        %v2664 = vunpack.c.l.b16 %v853
        %v2665 = vunpack.c.h.b16 %v853
        %v2666 = vunpack.c.l.b16 %v854
        %v2667 = vunpack.c.h.b16 %v854
        %v2668 = vunpack.c.l.b16 %v855
        %v2669 = vunpack.c.h.b16 %v855
        %v2670 = vunpack.c.l.b16 %v856
        %v2671 = vunpack.c.h.b16 %v856
        %v2672 = vunpack.c.l.b16 %v857
        %v2673 = vunpack.c.h.b16 %v857
        %v2674 = vunpack.c.l.b16 %v858
        %v2675 = vunpack.c.h.b16 %v858
        %v2676 = vunpack.c.l.b16 %v859
        %v2677 = vunpack.c.h.b16 %v859
        %v2678 = vunpack.c.l.b16 %v860
        %v2679 = vunpack.c.h.b16 %v860
        %v2680 = vunpack.c.l.b16 %v861
        %v2681 = vunpack.c.h.b16 %v861
        %v2682 = vunpack.c.l.b16 %v862
        %v2683 = vunpack.c.h.b16 %v862
        %v2684 = vunpack.c.l.b16 %v863
        %v2685 = vunpack.c.h.b16 %v863
        %v2686 = vunpack.c.l.b16 %v864
        %v2687 = vunpack.c.h.b16 %v864
        %v2688 = vunpack.c.l.b16 %v865
        %v2689 = vunpack.c.h.b16 %v865
        %v2690 = vunpack.c.l.b16 %v866
        %v2691 = vunpack.c.h.b16 %v866
        %v2692 = vunpack.c.l.b16 %v867
        %v2693 = vunpack.c.h.b16 %v867
        %v2694 = vunpack.c.l.b16 %v868
        %v2695 = vunpack.c.h.b16 %v868
        %v2696 = vunpack.c.l.b16 %v869
        %v2697 = vunpack.c.h.b16 %v869
        %v2698 = vunpack.c.l.b16 %v870
        %v2699 = vunpack.c.h.b16 %v870
        %v2700 = vunpack.c.l.b16 %v871
        %v2701 = vunpack.c.h.b16 %v871
        %v2702 = vunpack.c.l.b16 %v872
        %v2703 = vunpack.c.h.b16 %v872
        %v2704 = vunpack.c.l.b16 %v873
        %v2705 = vunpack.c.h.b16 %v873
        %v2706 = vunpack.c.l.b16 %v874
        %v2707 = vunpack.c.h.b16 %v874
        %v2708 = vunpack.c.l.b16 %v875
        %v2709 = vunpack.c.h.b16 %v875
        %v2710 = vunpack.c.l.b16 %v876
        %v2711 = vunpack.c.h.b16 %v876
        %v2712 = vunpack.c.l.b16 %v877
        %v2713 = vunpack.c.h.b16 %v877
        %v2714 = vunpack.c.l.b16 %v878
        %v2715 = vunpack.c.h.b16 %v878
        %v2716 = vunpack.c.l.b16 %v879
        %v2717 = vunpack.c.h.b16 %v879
        %v2718 = vunpack.c.l.b16 %v880
        %v2719 = vunpack.c.h.b16 %v880
        %v2720 = vunpack.c.l.b16 %v881
        %v2721 = vunpack.c.h.b16 %v881
        %v2722 = vunpack.c.l.b16 %v882
        %v2723 = vunpack.c.h.b16 %v882
        %v2724 = vunpack.c.l.b16 %v883
        %v2725 = vunpack.c.h.b16 %v883
        %v2726 = vunpack.c.l.b16 %v884
        %v2727 = vunpack.c.h.b16 %v884
        %v2728 = vunpack.c.l.b16 %v885
        %v2729 = vunpack.c.h.b16 %v885
        %v2730 = vunpack.c.l.b16 %v886
        %v2731 = vunpack.c.h.b16 %v886
        %v2732 = vunpack.c.l.b16 %v887
        %v2733 = vunpack.c.h.b16 %v887
        %v2734 = vunpack.c.l.b16 %v888
        %v2735 = vunpack.c.h.b16 %v888
        %v2736 = vunpack.c.l.b16 %v889
        %v2737 = vunpack.c.h.b16 %v889
        %v2738 = vunpack.c.l.b16 %v890
        %v2739 = vunpack.c.h.b16 %v890
        %v2740 = vunpack.c.l.b16 %v891
        %v2741 = vunpack.c.h.b16 %v891
        %v2742 = vunpack.c.l.b16 %v892
        %v2743 = vunpack.c.h.b16 %v892
        %v2744 = vunpack.c.l.b16 %v893
        %v2745 = vunpack.c.h.b16 %v893
        %v2746 = vunpack.c.l.b16 %v894
        %v2747 = vunpack.c.h.b16 %v894
        %v2748 = vunpack.c.l.b16 %v895
        %v2749 = vunpack.c.h.b16 %v895
        %v2750 = vunpack.c.l.b16 %v896
        %v2751 = vunpack.c.h.b16 %v896
        %v2752 = vunpack.c.l.b16 %v897
        %v2753 = vunpack.c.h.b16 %v897
        %v2754 = vunpack.c.l.b16 %v898
        %v2755 = vunpack.c.h.b16 %v898
        %v2756 = vunpack.c.l.b16 %v899
        %v2757 = vunpack.c.h.b16 %v899
        %v2758 = vunpack.c.l.b16 %v900
        %v2759 = vunpack.c.h.b16 %v900
        %v2760 = vunpack.c.l.b16 %v901
        %v2761 = vunpack.c.h.b16 %v901
        %v2762 = vunpack.c.l.b16 %v902
        %v2763 = vunpack.c.h.b16 %v902
        %v2764 = vunpack.c.l.b16 %v903
        %v2765 = vunpack.c.h.b16 %v903
        %v2766 = vunpack.c.l.b16 %v904
        %v2767 = vunpack.c.h.b16 %v904
        %v2768 = vunpack.c.l.b16 %v905
        %v2769 = vunpack.c.h.b16 %v905
        %v2770 = vunpack.c.l.b16 %v906
        %v2771 = vunpack.c.h.b16 %v906
        %v2772 = vunpack.c.l.b16 %v907
        %v2773 = vunpack.c.h.b16 %v907
        %v2774 = vunpack.c.l.b16 %v908
        %v2775 = vunpack.c.h.b16 %v908
        %v2776 = vunpack.c.l.b16 %v909
        %v2777 = vunpack.c.h.b16 %v909
        %v2778 = vunpack.c.l.b16 %v910
        %v2779 = vunpack.c.h.b16 %v910
        %v2780 = vunpack.c.l.b16 %v911
        %v2781 = vunpack.c.h.b16 %v911
        %v2782 = vunpack.c.l.b16 %v912
        %v2783 = vunpack.c.h.b16 %v912
        %v2784 = vunpack.c.l.b16 %v913
        %v2785 = vunpack.c.h.b16 %v913
        %v2786 = vunpack.c.l.b16 %v914
        %v2787 = vunpack.c.h.b16 %v914
        %v2788 = vunpack.c.l.b16 %v915
        %v2789 = vunpack.c.h.b16 %v915
        %v2790 = vunpack.c.l.b16 %v916
        %v2791 = vunpack.c.h.b16 %v916
        %v2792 = vunpack.c.l.b16 %v917
        %v2793 = vunpack.c.h.b16 %v917
        %v2794 = vunpack.c.l.b16 %v918
        %v2795 = vunpack.c.h.b16 %v918
        %v2796 = vunpack.c.l.b16 %v919
        %v2797 = vunpack.c.h.b16 %v919
        %v2798 = vunpack.c.l.b16 %v920
        %v2799 = vunpack.c.h.b16 %v920
        %v2800 = vunpack.c.l.b16 %v921
        %v2801 = vunpack.c.h.b16 %v921
        %v2802 = vunpack.c.l.b16 %v922
        %v2803 = vunpack.c.h.b16 %v922
        %v2804 = vunpack.c.l.b16 %v923
        %v2805 = vunpack.c.h.b16 %v923
        %v2806 = vunpack.c.l.b16 %v924
        %v2807 = vunpack.c.h.b16 %v924
        %v2808 = vunpack.c.l.b16 %v925
        %v2809 = vunpack.c.h.b16 %v925
        %v2810 = vunpack.c.l.b16 %v926
        %v2811 = vunpack.c.h.b16 %v926
        %v2812 = vunpack.c.l.b16 %v927
        %v2813 = vunpack.c.h.b16 %v927
        %v2814 = vunpack.c.l.b16 %v928
        %v2815 = vunpack.c.h.b16 %v928
        %v2816 = vunpack.c.l.b16 %v929
        %v2817 = vunpack.c.h.b16 %v929
        %v2818 = vunpack.c.l.b16 %v930
        %v2819 = vunpack.c.h.b16 %v930
        %v2820 = vunpack.c.l.b16 %v931
        %v2821 = vunpack.c.h.b16 %v931
        %v2822 = vunpack.c.l.b16 %v932
        %v2823 = vunpack.c.h.b16 %v932
        %v2824 = vunpack.c.l.b16 %v933
        %v2825 = vunpack.c.h.b16 %v933
        %v2826 = vunpack.c.l.b16 %v934
        %v2827 = vunpack.c.h.b16 %v934
        %v2828 = vunpack.c.l.b16 %v935
        %v2829 = vunpack.c.h.b16 %v935
        %v2830 = vunpack.c.l.b16 %v936
        %v2831 = vunpack.c.h.b16 %v936
        %v2832 = vunpack.c.l.b16 %v937
        %v2833 = vunpack.c.h.b16 %v937
        %v2834 = vunpack.c.l.b16 %v938
        %v2835 = vunpack.c.h.b16 %v938
        %v2836 = vunpack.c.l.b16 %v939
        %v2837 = vunpack.c.h.b16 %v939
        %v2838 = vunpack.c.l.b16 %v940
        %v2839 = vunpack.c.h.b16 %v940
        %v2840 = vunpack.c.l.b16 %v941
        %v2841 = vunpack.c.h.b16 %v941
        %v2842 = vunpack.c.l.b16 %v942
        %v2843 = vunpack.c.h.b16 %v942
        %v2844 = vunpack.c.l.b16 %v943
        %v2845 = vunpack.c.h.b16 %v943
        %v2846 = vunpack.c.l.b16 %v944
        %v2847 = vunpack.c.h.b16 %v944
        %v2848 = vunpack.c.l.b16 %v945
        %v2849 = vunpack.c.h.b16 %v945
        %v2850 = vunpack.c.l.b16 %v946
        %v2851 = vunpack.c.h.b16 %v946
        %v2852 = vunpack.c.l.b16 %v947
        %v2853 = vunpack.c.h.b16 %v947
        %v2854 = vunpack.c.l.b16 %v948
        %v2855 = vunpack.c.h.b16 %v948
        %v2856 = vunpack.c.l.b16 %v949
        %v2857 = vunpack.c.h.b16 %v949
        %v2858 = vunpack.c.l.b16 %v950
        %v2859 = vunpack.c.h.b16 %v950
        %v2860 = vunpack.c.l.b16 %v951
        %v2861 = vunpack.c.h.b16 %v951
        %v2862 = vunpack.c.l.b16 %v952
        %v2863 = vunpack.c.h.b16 %v952
        %v2864 = vunpack.c.l.b16 %v953
        %v2865 = vunpack.c.h.b16 %v953
        %v2866 = vunpack.c.l.b16 %v954
        %v2867 = vunpack.c.h.b16 %v954
        %v2868 = vunpack.c.l.b16 %v955
        %v2869 = vunpack.c.h.b16 %v955
        %v2870 = vunpack.c.l.b16 %v956
        %v2871 = vunpack.c.h.b16 %v956
        %v2872 = vunpack.c.l.b16 %v957
        %v2873 = vunpack.c.h.b16 %v957
        %v2874 = vunpack.c.l.b16 %v958
        %v2875 = vunpack.c.h.b16 %v958
        %v2876 = vunpack.c.l.b16 %v959
        %v2877 = vunpack.c.h.b16 %v959
        %v2878 = vunpack.c.l.b16 %v960
        %v2879 = vunpack.c.h.b16 %v960
        %v2880 = vunpack.c.l.b16 %v961
        %v2881 = vunpack.c.h.b16 %v961
        %v2882 = vunpack.c.l.b16 %v962
        %v2883 = vunpack.c.h.b16 %v962
        %v2884 = vunpack.c.l.b16 %v963
        %v2885 = vunpack.c.h.b16 %v963
        %v2886 = vunpack.c.l.b16 %v964
        %v2887 = vunpack.c.h.b16 %v964
        %v2888 = vunpack.c.l.b16 %v965
        %v2889 = vunpack.c.h.b16 %v965
        %v2890 = vunpack.c.l.b16 %v966
        %v2891 = vunpack.c.h.b16 %v966
        %v2892 = vunpack.c.l.b16 %v967
        %v2893 = vunpack.c.h.b16 %v967
        %v2894 = vunpack.c.l.b16 %v968
        %v2895 = vunpack.c.h.b16 %v968
        %v2896 = vunpack.c.l.b16 %v969
        %v2897 = vunpack.c.h.b16 %v969
        %v2898 = vunpack.c.l.b16 %v970
        %v2899 = vunpack.c.h.b16 %v970
        %v2900 = vunpack.c.l.b16 %v971
        %v2901 = vunpack.c.h.b16 %v971
        %v2902 = vunpack.c.l.b16 %v972
        %v2903 = vunpack.c.h.b16 %v972
        %v2904 = vunpack.c.l.b16 %v973
        %v2905 = vunpack.c.h.b16 %v973
        %v2906 = vunpack.c.l.b16 %v974
        %v2907 = vunpack.c.h.b16 %v974
        %v2908 = vunpack.c.l.b16 %v975
        %v2909 = vunpack.c.h.b16 %v975
        %v2910 = vunpack.c.l.b16 %v976
        %v2911 = vunpack.c.h.b16 %v976
        %v2912 = vunpack.c.l.b16 %v977
        %v2913 = vunpack.c.h.b16 %v977
        %v2914 = vunpack.c.l.b16 %v978
        %v2915 = vunpack.c.h.b16 %v978
        %v2916 = vunpack.c.l.b16 %v979
        %v2917 = vunpack.c.h.b16 %v979
        %v2918 = vunpack.c.l.b16 %v980
        %v2919 = vunpack.c.h.b16 %v980
        %v2920 = vunpack.c.l.b16 %v981
        %v2921 = vunpack.c.h.b16 %v981
        %v2922 = vunpack.c.l.b16 %v982
        %v2923 = vunpack.c.h.b16 %v982
        %v2924 = vunpack.c.l.b16 %v983
        %v2925 = vunpack.c.h.b16 %v983
        %v2926 = vunpack.c.l.b16 %v984
        %v2927 = vunpack.c.h.b16 %v984
        %v2928 = vunpack.c.l.b16 %v985
        %v2929 = vunpack.c.h.b16 %v985
        %v2930 = vunpack.c.l.b16 %v986
        %v2931 = vunpack.c.h.b16 %v986
        %v2932 = vunpack.c.l.b16 %v987
        %v2933 = vunpack.c.h.b16 %v987
        %v2934 = vunpack.c.l.b16 %v988
        %v2935 = vunpack.c.h.b16 %v988
        %v2936 = vunpack.c.l.b16 %v989
        %v2937 = vunpack.c.h.b16 %v989
        %v2938 = vunpack.c.l.b16 %v990
        %v2939 = vunpack.c.h.b16 %v990
        %v2940 = vunpack.c.l.b16 %v991
        %v2941 = vunpack.c.h.b16 %v991
        %v2942 = vunpack.c.l.b16 %v992
        %v2943 = vunpack.c.h.b16 %v992
        %v2944 = vunpack.c.l.b16 %v993
        %v2945 = vunpack.c.h.b16 %v993
        %v2946 = vunpack.c.l.b16 %v994
        %v2947 = vunpack.c.h.b16 %v994
        %v2948 = vunpack.c.l.b16 %v995
        %v2949 = vunpack.c.h.b16 %v995
        %v2950 = vunpack.c.l.b16 %v996
        %v2951 = vunpack.c.h.b16 %v996
        %v2952 = vunpack.c.l.b16 %v997
        %v2953 = vunpack.c.h.b16 %v997
        %v2954 = vunpack.c.l.b16 %v998
        %v2955 = vunpack.c.h.b16 %v998
        %v2956 = vunpack.c.l.b16 %v999
        %v2957 = vunpack.c.h.b16 %v999
        %v2958 = vunpack.c.l.b16 %v1000
        %v2959 = vunpack.c.h.b16 %v1000
        %v2960 = vunpack.c.l.b16 %v1001
        %v2961 = vunpack.c.h.b16 %v1001
        %v2962 = vunpack.c.l.b16 %v1002
        %v2963 = vunpack.c.h.b16 %v1002
        %v2964 = vunpack.c.l.b16 %v1003
        %v2965 = vunpack.c.h.b16 %v1003
        %v2966 = vunpack.c.l.b16 %v1004
        %v2967 = vunpack.c.h.b16 %v1004
        %v2968 = vunpack.c.l.b16 %v1005
        %v2969 = vunpack.c.h.b16 %v1005
        %v2970 = vunpack.c.l.b16 %v1006
        %v2971 = vunpack.c.h.b16 %v1006
        %v2972 = vunpack.c.l.b16 %v1007
        %v2973 = vunpack.c.h.b16 %v1007
        %v2974 = vunpack.c.l.b16 %v1008
        %v2975 = vunpack.c.h.b16 %v1008
        %v2976 = vunpack.c.l.b16 %v1009
        %v2977 = vunpack.c.h.b16 %v1009
        %v2978 = vunpack.c.l.b16 %v1010
        %v2979 = vunpack.c.h.b16 %v1010
        %v2980 = vunpack.c.l.b16 %v1011
        %v2981 = vunpack.c.h.b16 %v1011
        %v2982 = vunpack.c.l.b16 %v1012
        %v2983 = vunpack.c.h.b16 %v1012
        %v2984 = vunpack.c.l.b16 %v1013
        %v2985 = vunpack.c.h.b16 %v1013
        %v2986 = vunpack.c.l.b16 %v1014
        %v2987 = vunpack.c.h.b16 %v1014
        %v2988 = vunpack.c.l.b16 %v1015
        %v2989 = vunpack.c.h.b16 %v1015
        %v2990 = vunpack.c.l.b16 %v1016
        %v2991 = vunpack.c.h.b16 %v1016
        %v2992 = vunpack.c.l.b16 %v1017
        %v2993 = vunpack.c.h.b16 %v1017
        %v2994 = vunpack.c.l.b16 %v1018
        %v2995 = vunpack.c.h.b16 %v1018
        %v2996 = vunpack.c.l.b16 %v1019
        %v2997 = vunpack.c.h.b16 %v1019
        %v2998 = vunpack.c.l.b16 %v1020
        %v2999 = vunpack.c.h.b16 %v1020
        %v3000 = vunpack.c.l.b16 %v1021
        %v3001 = vunpack.c.h.b16 %v1021
        %v3002 = vunpack.c.l.b16 %v1022
        %v3003 = vunpack.c.h.b16 %v1022
        %v3004 = vunpack.c.l.b16 %v1023
        %v3005 = vunpack.c.h.b16 %v1023
        %v3006 = vunpack.c.l.b16 %v1024
        %v3007 = vunpack.c.h.b16 %v1024
        %v3008 = vunpack.c.l.b16 %v1025
        %v3009 = vunpack.c.h.b16 %v1025
        %v3010 = vunpack.c.l.b16 %v1026
        %v3011 = vunpack.c.h.b16 %v1026
        %v3012 = vunpack.c.l.b16 %v1027
        %v3013 = vunpack.c.h.b16 %v1027
        %v3014 = vunpack.c.l.b16 %v1028
        %v3015 = vunpack.c.h.b16 %v1028
        %v3016 = vunpack.c.l.b16 %v1029
        %v3017 = vunpack.c.h.b16 %v1029
        %v3018 = vunpack.c.l.b16 %v1030
        %v3019 = vunpack.c.h.b16 %v1030
        %v3020 = vunpack.c.l.b16 %v1031
        %v3021 = vunpack.c.h.b16 %v1031
        %v3022 = vunpack.c.l.b16 %v1032
        %v3023 = vunpack.c.h.b16 %v1032
        %v3024 = vunpack.c.l.b16 %v1033
        %v3025 = vunpack.c.h.b16 %v1033
        %v3026 = vunpack.c.l.b16 %v1034
        %v3027 = vunpack.c.h.b16 %v1034
        %v3028 = vunpack.c.l.b16 %v1035
        %v3029 = vunpack.c.h.b16 %v1035
        %v3030 = vunpack.c.l.b16 %v1036
        %v3031 = vunpack.c.h.b16 %v1036
        %v3032 = vunpack.c.l.b16 %v1037
        %v3033 = vunpack.c.h.b16 %v1037
        %v3034 = vunpack.c.l.b16 %v1038
        %v3035 = vunpack.c.h.b16 %v1038
        %v3036 = vunpack.c.l.b16 %v1039
        %v3037 = vunpack.c.h.b16 %v1039
        %v3038 = vunpack.c.l.b16 %v1040
        %v3039 = vunpack.c.h.b16 %v1040
        %v3040 = vunpack.c.l.b16 %v1041
        %v3041 = vunpack.c.h.b16 %v1041
        %v3042 = vunpack.c.l.b16 %v1042
        %v3043 = vunpack.c.h.b16 %v1042
        %v3044 = vunpack.c.l.b16 %v1043
        %v3045 = vunpack.c.h.b16 %v1043
        %v3046 = vunpack.c.l.b16 %v1044
        %v3047 = vunpack.c.h.b16 %v1044
        %v3048 = vunpack.c.l.b16 %v1045
        %v3049 = vunpack.c.h.b16 %v1045
        %v3050 = vunpack.c.l.b16 %v1046
        %v3051 = vunpack.c.h.b16 %v1046
        %v3052 = vunpack.c.l.b16 %v1047
        %v3053 = vunpack.c.h.b16 %v1047
        %v3054 = vunpack.c.l.b16 %v1048
        %v3055 = vunpack.c.h.b16 %v1048
        %v3056 = vunpack.c.l.b16 %v1049
        %v3057 = vunpack.c.h.b16 %v1049
        %v3058 = vunpack.c.l.b16 %v1050
        %v3059 = vunpack.c.h.b16 %v1050
        %v3060 = vunpack.c.l.b16 %v1051
        %v3061 = vunpack.c.h.b16 %v1051
        %v3062 = vunpack.c.l.b16 %v1052
        %v3063 = vunpack.c.h.b16 %v1052
        %v3064 = vunpack.c.l.b16 %v1053
        %v3065 = vunpack.c.h.b16 %v1053
        %v3066 = vunpack.c.l.b16 %v1054
        %v3067 = vunpack.c.h.b16 %v1054
        %v3068 = vunpack.c.l.b16 %v1055
        %v3069 = vunpack.c.h.b16 %v1055
        %v3070 = vunpack.c.l.b16 %v1056
        %v3071 = vunpack.c.h.b16 %v1056
        %v3072 = vunpack.c.l.b16 %v1057
        %v3073 = vunpack.c.h.b16 %v1057
        %v3074 = vunpack.c.l.b16 %v1058
        %v3075 = vunpack.c.h.b16 %v1058
        %v3076 = vunpack.c.l.b16 %v1059
        %v3077 = vunpack.c.h.b16 %v1059
        %v3078 = vunpack.c.l.b16 %v1060
        %v3079 = vunpack.c.h.b16 %v1060
        %v3080 = vunpack.c.l.b16 %v1061
        %v3081 = vunpack.c.h.b16 %v1061
        %v3082 = vunpack.c.l.b16 %v1062
        %v3083 = vunpack.c.h.b16 %v1062
        %v3084 = vunpack.c.l.b16 %v1063
        %v3085 = vunpack.c.h.b16 %v1063
        %v3086 = vunpack.c.l.b16 %v1064
        %v3087 = vunpack.c.h.b16 %v1064
        %v3088 = vunpack.c.l.b16 %v1065
        %v3089 = vunpack.c.h.b16 %v1065
        %v3090 = vunpack.c.l.b16 %v1066
        %v3091 = vunpack.c.h.b16 %v1066
        %v3092 = vunpack.c.l.b16 %v1067
        %v3093 = vunpack.c.h.b16 %v1067
        %v3094 = vunpack.c.l.b16 %v1068
        %v3095 = vunpack.c.h.b16 %v1068
        %v3096 = vunpack.c.l.b16 %v1069
        %v3097 = vunpack.c.h.b16 %v1069
        %v3098 = vunpack.c.l.b16 %v1070
        %v3099 = vunpack.c.h.b16 %v1070
        %v3100 = vunpack.c.l.b16 %v1071
        %v3101 = vunpack.c.h.b16 %v1071
        %v3102 = vunpack.c.l.b16 %v1072
        %v3103 = vunpack.c.h.b16 %v1072
        %v3104 = vunpack.c.l.b16 %v1073
        %v3105 = vunpack.c.h.b16 %v1073
        %v3106 = vunpack.c.l.b16 %v1074
        %v3107 = vunpack.c.h.b16 %v1074
        %v3108 = vunpack.c.l.b16 %v1075
        %v3109 = vunpack.c.h.b16 %v1075
        %v3110 = vunpack.c.l.b16 %v1076
        %v3111 = vunpack.c.h.b16 %v1076
        %v3112 = vunpack.c.l.b16 %v1077
        %v3113 = vunpack.c.h.b16 %v1077
        %v3114 = vunpack.c.l.b16 %v1078
        %v3115 = vunpack.c.h.b16 %v1078
        %v3116 = vunpack.c.l.b16 %v1079
        %v3117 = vunpack.c.h.b16 %v1079
        %v3118 = vunpack.c.l.b16 %v1080
        %v3119 = vunpack.c.h.b16 %v1080
        %v3120 = vunpack.c.l.b16 %v1081
        %v3121 = vunpack.c.h.b16 %v1081
        %v3122 = vunpack.c.l.b16 %v1082
        %v3123 = vunpack.c.h.b16 %v1082
        %v3124 = vunpack.c.l.b16 %v1083
        %v3125 = vunpack.c.h.b16 %v1083
        %v3126 = vunpack.c.l.b16 %v1084
        %v3127 = vunpack.c.h.b16 %v1084
        %v3128 = vunpack.c.l.b16 %v1085
        %v3129 = vunpack.c.h.b16 %v1085
        %v3130 = vunpack.c.l.b16 %v1086
        %v3131 = vunpack.c.h.b16 %v1086
        %v3132 = vunpack.c.l.b16 %v1087
        %v3133 = vunpack.c.h.b16 %v1087
        %v3134 = vunpack.c.l.b16 %v1088
        %v3135 = vunpack.c.h.b16 %v1088
        %v3136 = vunpack.c.l.b16 %v1089
        %v3137 = vunpack.c.h.b16 %v1089
        %v3138 = vunpack.c.l.b16 %v1090
        %v3139 = vunpack.c.h.b16 %v1090
        %v3140 = vunpack.c.l.b16 %v1091
        %v3141 = vunpack.c.h.b16 %v1091
        %v3142 = vunpack.c.l.b16 %v1092
        %v3143 = vunpack.c.h.b16 %v1092
        %v3144 = vunpack.c.l.b16 %v1093
        %v3145 = vunpack.c.h.b16 %v1093
        %v3146 = vunpack.c.l.b16 %v1094
        %v3147 = vunpack.c.h.b16 %v1094
        %v3148 = vunpack.c.l.b16 %v1095
        %v3149 = vunpack.c.h.b16 %v1095
        %v3150 = vunpack.c.l.b16 %v1096
        %v3151 = vunpack.c.h.b16 %v1096
        %v3152 = vunpack.c.l.b16 %v1097
        %v3153 = vunpack.c.h.b16 %v1097
        %v3154 = vunpack.c.l.b16 %v1098
        %v3155 = vunpack.c.h.b16 %v1098
        %v3156 = vunpack.c.l.b16 %v1099
        %v3157 = vunpack.c.h.b16 %v1099
        %v3158 = vunpack.c.l.b16 %v1100
        %v3159 = vunpack.c.h.b16 %v1100
        %v3160 = vunpack.c.l.b16 %v1101
        %v3161 = vunpack.c.h.b16 %v1101
        %v3162 = vunpack.c.l.b16 %v1102
        %v3163 = vunpack.c.h.b16 %v1102
        %v3164 = vunpack.c.l.b16 %v1103
        %v3165 = vunpack.c.h.b16 %v1103
        %v3166 = vunpack.c.l.b16 %v1104
        %v3167 = vunpack.c.h.b16 %v1104
        %v3168 = vunpack.c.l.b16 %v1105
        %v3169 = vunpack.c.h.b16 %v1105
        %v3170 = vunpack.c.l.b16 %v1106
        %v3171 = vunpack.c.h.b16 %v1106
        %v3172 = vunpack.c.l.b16 %v1107
        %v3173 = vunpack.c.h.b16 %v1107
        %v3174 = vunpack.c.l.b16 %v1108
        %v3175 = vunpack.c.h.b16 %v1108
        %v3176 = vunpack.c.l.b16 %v1109
        %v3177 = vunpack.c.h.b16 %v1109
        %v3178 = vunpack.c.l.b16 %v1110
        %v3179 = vunpack.c.h.b16 %v1110
        %v3180 = vunpack.c.l.b16 %v1111
        %v3181 = vunpack.c.h.b16 %v1111
        %v3182 = vunpack.c.l.b16 %v1112
        %v3183 = vunpack.c.h.b16 %v1112
        %v3184 = vunpack.c.l.b16 %v1113
        %v3185 = vunpack.c.h.b16 %v1113
        %v3186 = vunpack.c.l.b16 %v1114
        %v3187 = vunpack.c.h.b16 %v1114
        %v3188 = vunpack.c.l.b16 %v1115
        %v3189 = vunpack.c.h.b16 %v1115
        %v3190 = vunpack.c.l.b16 %v1116
        %v3191 = vunpack.c.h.b16 %v1116
        %v3192 = vunpack.c.l.b16 %v1117
        %v3193 = vunpack.c.h.b16 %v1117
        %v3194 = vunpack.c.l.b16 %v1118
        %v3195 = vunpack.c.h.b16 %v1118
        %v3196 = vunpack.c.l.b16 %v1119
        %v3197 = vunpack.c.h.b16 %v1119
        %v3198 = vunpack.c.l.b16 %v1120
        %v3199 = vunpack.c.h.b16 %v1120
        %v3200 = vunpack.c.l.b16 %v1121
        %v3201 = vunpack.c.h.b16 %v1121
        %v3202 = vunpack.c.l.b16 %v1122
        %v3203 = vunpack.c.h.b16 %v1122
        %v3204 = vunpack.c.l.b16 %v1123
        %v3205 = vunpack.c.h.b16 %v1123
        %v3206 = vunpack.c.l.b16 %v1124
        %v3207 = vunpack.c.h.b16 %v1124
        %v3208 = vunpack.c.l.b16 %v1125
        %v3209 = vunpack.c.h.b16 %v1125
        %v3210 = vunpack.c.l.b16 %v1126
        %v3211 = vunpack.c.h.b16 %v1126
        %v3212 = vunpack.c.l.b16 %v1127
        %v3213 = vunpack.c.h.b16 %v1127
        %v3214 = vunpack.c.l.b16 %v1128
        %v3215 = vunpack.c.h.b16 %v1128
        %v3216 = vunpack.c.l.b16 %v1129
        %v3217 = vunpack.c.h.b16 %v1129
        %v3218 = vunpack.c.l.b16 %v1130
        %v3219 = vunpack.c.h.b16 %v1130
        %v3220 = vunpack.c.l.b16 %v1131
        %v3221 = vunpack.c.h.b16 %v1131
        %v3222 = vunpack.c.l.b16 %v1132
        %v3223 = vunpack.c.h.b16 %v1132
        %v3224 = vunpack.c.l.b16 %v1133
        %v3225 = vunpack.c.h.b16 %v1133
        %v3226 = vunpack.c.l.b16 %v1134
        %v3227 = vunpack.c.h.b16 %v1134
        %v3228 = vunpack.c.l.b16 %v1135
        %v3229 = vunpack.c.h.b16 %v1135
        %v3230 = vunpack.c.l.b16 %v1136
        %v3231 = vunpack.c.h.b16 %v1136
        %v3232 = vunpack.c.l.b16 %v1137
        %v3233 = vunpack.c.h.b16 %v1137
        %v3234 = vunpack.c.l.b16 %v1138
        %v3235 = vunpack.c.h.b16 %v1138
        %v3236 = vunpack.c.l.b16 %v1139
        %v3237 = vunpack.c.h.b16 %v1139
        %v3238 = vunpack.c.l.b16 %v1140
        %v3239 = vunpack.c.h.b16 %v1140
        %v3240 = vunpack.c.l.b16 %v1141
        %v3241 = vunpack.c.h.b16 %v1141
        %v3242 = vunpack.c.l.b16 %v1142
        %v3243 = vunpack.c.h.b16 %v1142
        %v3244 = vunpack.c.l.b16 %v1143
        %v3245 = vunpack.c.h.b16 %v1143
        %v3246 = vunpack.c.l.b16 %v1144
        %v3247 = vunpack.c.h.b16 %v1144
        %v3248 = vunpack.c.l.b16 %v1145
        %v3249 = vunpack.c.h.b16 %v1145
        %v3250 = vunpack.c.l.b16 %v1146
        %v3251 = vunpack.c.h.b16 %v1146
        %v3252 = vunpack.c.l.b16 %v1147
        %v3253 = vunpack.c.h.b16 %v1147
        %v3254 = vunpack.c.l.b16 %v1148
        %v3255 = vunpack.c.h.b16 %v1148
        %v3256 = vunpack.c.l.b16 %v1149
        %v3257 = vunpack.c.h.b16 %v1149
        %v3258 = vunpack.c.l.b16 %v1150
        %v3259 = vunpack.c.h.b16 %v1150
        %v3260 = vunpack.c.l.b16 %v1151
        %v3261 = vunpack.c.h.b16 %v1151
        %v3262 = vunpack.c.l.b16 %v1152
        %v3263 = vunpack.c.h.b16 %v1152
        %v3264 = vunpack.c.l.b16 %v1153
        %v3265 = vunpack.c.h.b16 %v1153
        %v3266 = vunpack.c.l.b16 %v1154
        %v3267 = vunpack.c.h.b16 %v1154
        %v3268 = vunpack.c.l.b16 %v1155
        %v3269 = vunpack.c.h.b16 %v1155
        %v3270 = vunpack.c.l.b16 %v1156
        %v3271 = vunpack.c.h.b16 %v1156
        %v3272 = vunpack.c.l.b16 %v1157
        %v3273 = vunpack.c.h.b16 %v1157
        %v3274 = vunpack.c.l.b16 %v1158
        %v3275 = vunpack.c.h.b16 %v1158
        %v3276 = vunpack.c.l.b16 %v1159
        %v3277 = vunpack.c.h.b16 %v1159
        %v3278 = vunpack.c.l.b16 %v1160
        %v3279 = vunpack.c.h.b16 %v1160
        %v3280 = vunpack.c.l.b16 %v1161
        %v3281 = vunpack.c.h.b16 %v1161
        %v3282 = vunpack.c.l.b16 %v1162
        %v3283 = vunpack.c.h.b16 %v1162
        %v3284 = vunpack.c.l.b16 %v1163
        %v3285 = vunpack.c.h.b16 %v1163
        %v3286 = vunpack.c.l.b16 %v1164
        %v3287 = vunpack.c.h.b16 %v1164
        %v3288 = vunpack.c.l.b16 %v1165
        %v3289 = vunpack.c.h.b16 %v1165
        %v3290 = vunpack.c.l.b16 %v1166
        %v3291 = vunpack.c.h.b16 %v1166
        %v3292 = vunpack.c.l.b16 %v1167
        %v3293 = vunpack.c.h.b16 %v1167
        %v3294 = vunpack.c.l.b16 %v1168
        %v3295 = vunpack.c.h.b16 %v1168
        %v3296 = vunpack.c.l.b16 %v1169
        %v3297 = vunpack.c.h.b16 %v1169
        %v3298 = vunpack.c.l.b16 %v1170
        %v3299 = vunpack.c.h.b16 %v1170
        %v3300 = vunpack.c.l.b16 %v1171
        %v3301 = vunpack.c.h.b16 %v1171
        %v3302 = vunpack.c.l.b16 %v1172
        %v3303 = vunpack.c.h.b16 %v1172
        %v3304 = vunpack.c.l.b16 %v1173
        %v3305 = vunpack.c.h.b16 %v1173
        %v3306 = vunpack.c.l.b16 %v1174
        %v3307 = vunpack.c.h.b16 %v1174
        %v3308 = vunpack.c.l.b16 %v1175
        %v3309 = vunpack.c.h.b16 %v1175
        %v3310 = vunpack.c.l.b16 %v1176
        %v3311 = vunpack.c.h.b16 %v1176
        %v3312 = vunpack.c.l.b16 %v1177
        %v3313 = vunpack.c.h.b16 %v1177
        %v3314 = vunpack.c.l.b16 %v1178
        %v3315 = vunpack.c.h.b16 %v1178
        %v3316 = vunpack.c.l.b16 %v1179
        %v3317 = vunpack.c.h.b16 %v1179
        %v3318 = vunpack.c.l.b16 %v1180
        %v3319 = vunpack.c.h.b16 %v1180
        %v3320 = vunpack.c.l.b16 %v1181
        %v3321 = vunpack.c.h.b16 %v1181
        %v3322 = vunpack.c.l.b16 %v1182
        %v3323 = vunpack.c.h.b16 %v1182
        %v3324 = vunpack.c.l.b16 %v1183
        %v3325 = vunpack.c.h.b16 %v1183
        %v3326 = vunpack.c.l.b16 %v1184
        %v3327 = vunpack.c.h.b16 %v1184
        %v3328 = vunpack.c.l.b16 %v1185
        %v3329 = vunpack.c.h.b16 %v1185
        %v3330 = vunpack.c.l.b16 %v1186
        %v3331 = vunpack.c.h.b16 %v1186
        %v3332 = vunpack.c.l.b16 %v1187
        %v3333 = vunpack.c.h.b16 %v1187
        %v3334 = vunpack.c.l.b16 %v1188
        %v3335 = vunpack.c.h.b16 %v1188
        %v3336 = vunpack.c.l.b16 %v1189
        %v3337 = vunpack.c.h.b16 %v1189
        %v3338 = vunpack.c.l.b16 %v1190
        %v3339 = vunpack.c.h.b16 %v1190
        %v3340 = vunpack.c.l.b16 %v1191
        %v3341 = vunpack.c.h.b16 %v1191
        %v3342 = vunpack.c.l.b16 %v1192
        %v3343 = vunpack.c.h.b16 %v1192
        %v3344 = vunpack.c.l.b16 %v1193
        %v3345 = vunpack.c.h.b16 %v1193
        %v3346 = vunpack.c.l.b16 %v1194
        %v3347 = vunpack.c.h.b16 %v1194
        %v3348 = vunpack.c.l.b16 %v1195
        %v3349 = vunpack.c.h.b16 %v1195
        %v3350 = vunpack.c.l.b16 %v1196
        %v3351 = vunpack.c.h.b16 %v1196
        %v3352 = vunpack.c.l.b16 %v1197
        %v3353 = vunpack.c.h.b16 %v1197
        %v3354 = vunpack.c.l.b16 %v1198
        %v3355 = vunpack.c.h.b16 %v1198
        %v3356 = vunpack.c.l.b16 %v1199
        %v3357 = vunpack.c.h.b16 %v1199
        %v3358 = vunpack.c.l.b16 %v1200
        %v3359 = vunpack.c.h.b16 %v1200
        %v3360 = vunpack.c.l.b16 %v1201
        %v3361 = vunpack.c.h.b16 %v1201
        %v3362 = vunpack.c.l.b16 %v1202
        %v3363 = vunpack.c.h.b16 %v1202
        %v3364 = vunpack.c.l.b16 %v1203
        %v3365 = vunpack.c.h.b16 %v1203
        %v3366 = vunpack.c.l.b16 %v1204
        %v3367 = vunpack.c.h.b16 %v1204
        %v3368 = vunpack.c.l.b16 %v1205
        %v3369 = vunpack.c.h.b16 %v1205
        %v3370 = vunpack.c.l.b16 %v1206
        %v3371 = vunpack.c.h.b16 %v1206
        %v3372 = vunpack.c.l.b16 %v1207
        %v3373 = vunpack.c.h.b16 %v1207
        %v3374 = vunpack.c.l.b16 %v1208
        %v3375 = vunpack.c.h.b16 %v1208
        %v3376 = vunpack.c.l.b16 %v1209
        %v3377 = vunpack.c.h.b16 %v1209
        %v3378 = vunpack.c.l.b16 %v1210
        %v3379 = vunpack.c.h.b16 %v1210
        %v3380 = vunpack.c.l.b16 %v1211
        %v3381 = vunpack.c.h.b16 %v1211
        %v3382 = vunpack.c.l.b16 %v1212
        %v3383 = vunpack.c.h.b16 %v1212
        %v3384 = vunpack.c.l.b16 %v1213
        %v3385 = vunpack.c.h.b16 %v1213
        %v3386 = vunpack.c.l.b16 %v1214
        %v3387 = vunpack.c.h.b16 %v1214
        %v3388 = vunpack.c.l.b16 %v1215
        %v3389 = vunpack.c.h.b16 %v1215
        %v3390 = vunpack.c.l.b16 %v1216
        %v3391 = vunpack.c.h.b16 %v1216
        %v3392 = vunpack.c.l.b16 %v1217
        %v3393 = vunpack.c.h.b16 %v1217
        %v3394 = vunpack.c.l.b16 %v1218
        %v3395 = vunpack.c.h.b16 %v1218
        %v3396 = vunpack.c.l.b16 %v1219
        %v3397 = vunpack.c.h.b16 %v1219
        %v3398 = vunpack.c.l.b16 %v1220
        %v3399 = vunpack.c.h.b16 %v1220
        %v3400 = vunpack.c.l.b16 %v1221
        %v3401 = vunpack.c.h.b16 %v1221
        %v3402 = vunpack.c.l.b16 %v1222
        %v3403 = vunpack.c.h.b16 %v1222
        %v3404 = vunpack.c.l.b16 %v1223
        %v3405 = vunpack.c.h.b16 %v1223
        %v3406 = vunpack.c.l.b16 %v1224
        %v3407 = vunpack.c.h.b16 %v1224
        %v3408 = vunpack.c.l.b16 %v1225
        %v3409 = vunpack.c.h.b16 %v1225
        %v3410 = vunpack.c.l.b16 %v1226
        %v3411 = vunpack.c.h.b16 %v1226
        %v3412 = vunpack.c.l.b16 %v1227
        %v3413 = vunpack.c.h.b16 %v1227
        %v3414 = vunpack.c.l.b16 %v1228
        %v3415 = vunpack.c.h.b16 %v1228
        %v3416 = vunpack.c.l.b16 %v1229
        %v3417 = vunpack.c.h.b16 %v1229
        %v3418 = vunpack.c.l.b16 %v1230
        %v3419 = vunpack.c.h.b16 %v1230
        %v3420 = vunpack.c.l.b16 %v1231
        %v3421 = vunpack.c.h.b16 %v1231
        %v3422 = vunpack.c.l.b16 %v1232
        %v3423 = vunpack.c.h.b16 %v1232
        %v3424 = vunpack.c.l.b16 %v1233
        %v3425 = vunpack.c.h.b16 %v1233
        %v3426 = vunpack.c.l.b16 %v1234
        %v3427 = vunpack.c.h.b16 %v1234
        %v3428 = vunpack.c.l.b16 %v1235
        %v3429 = vunpack.c.h.b16 %v1235
        %v3430 = vunpack.c.l.b16 %v1236
        %v3431 = vunpack.c.h.b16 %v1236
        %v3432 = vunpack.c.l.b16 %v1237
        %v3433 = vunpack.c.h.b16 %v1237
        %v3434 = vunpack.c.l.b16 %v1238
        %v3435 = vunpack.c.h.b16 %v1238
        %v3436 = vunpack.c.l.b16 %v1239
        %v3437 = vunpack.c.h.b16 %v1239
        %v3438 = vunpack.c.l.b16 %v1240
        %v3439 = vunpack.c.h.b16 %v1240
        %v3440 = vunpack.c.l.b16 %v1241
        %v3441 = vunpack.c.h.b16 %v1241
        %v3442 = vunpack.c.l.b16 %v1242
        %v3443 = vunpack.c.h.b16 %v1242
        %v3444 = vunpack.c.l.b16 %v1243
        %v3445 = vunpack.c.h.b16 %v1243
        %v3446 = vunpack.c.l.b16 %v1244
        %v3447 = vunpack.c.h.b16 %v1244
        %v3448 = vunpack.c.l.b16 %v1245
        %v3449 = vunpack.c.h.b16 %v1245
        %v3450 = vunpack.c.l.b16 %v1246
        %v3451 = vunpack.c.h.b16 %v1246
        %v3452 = vunpack.c.l.b16 %v1247
        %v3453 = vunpack.c.h.b16 %v1247
        %v3454 = vunpack.c.l.b16 %v1248
        %v3455 = vunpack.c.h.b16 %v1248
        %v3456 = vunpack.c.l.b16 %v1249
        %v3457 = vunpack.c.h.b16 %v1249
        %v3458 = vunpack.c.l.b16 %v1250
        %v3459 = vunpack.c.h.b16 %v1250
        %v3460 = vunpack.c.l.b16 %v1251
        %v3461 = vunpack.c.h.b16 %v1251
        %v3462 = vunpack.c.l.b16 %v1252
        %v3463 = vunpack.c.h.b16 %v1252
        %v3464 = vunpack.c.l.b16 %v1253
        %v3465 = vunpack.c.h.b16 %v1253
        %v3466 = vunpack.c.l.b16 %v1254
        %v3467 = vunpack.c.h.b16 %v1254
        %v3468 = vunpack.c.l.b16 %v1255
        %v3469 = vunpack.c.h.b16 %v1255
        %v3470 = vunpack.c.l.b16 %v1256
        %v3471 = vunpack.c.h.b16 %v1256
        %v3472 = vunpack.c.l.b16 %v1257
        %v3473 = vunpack.c.h.b16 %v1257
        %v3474 = vunpack.c.l.b16 %v1258
        %v3475 = vunpack.c.h.b16 %v1258
        %v3476 = vunpack.c.l.b16 %v1259
        %v3477 = vunpack.c.h.b16 %v1259
        %v3478 = vunpack.c.l.b16 %v1260
        %v3479 = vunpack.c.h.b16 %v1260
        %v3480 = vunpack.c.l.b16 %v1261
        %v3481 = vunpack.c.h.b16 %v1261
        %v3482 = vunpack.c.l.b16 %v1262
        %v3483 = vunpack.c.h.b16 %v1262
        %v3484 = vunpack.c.l.b16 %v1263
        %v3485 = vunpack.c.h.b16 %v1263
        %v3486 = vunpack.c.l.b16 %v1264
        %v3487 = vunpack.c.h.b16 %v1264
        %v3488 = vunpack.c.l.b16 %v1265
        %v3489 = vunpack.c.h.b16 %v1265
        %v3490 = vunpack.c.l.b16 %v1266
        %v3491 = vunpack.c.h.b16 %v1266
        %v3492 = vunpack.c.l.b16 %v1267
        %v3493 = vunpack.c.h.b16 %v1267
        %v3494 = vunpack.c.l.b16 %v1268
        %v3495 = vunpack.c.h.b16 %v1268
        %v3496 = vunpack.c.l.b16 %v1269
        %v3497 = vunpack.c.h.b16 %v1269
        %v3498 = vunpack.c.l.b16 %v1270
        %v3499 = vunpack.c.h.b16 %v1270
        %v3500 = vunpack.c.l.b16 %v1271
        %v3501 = vunpack.c.h.b16 %v1271
        %v3502 = vunpack.c.l.b16 %v1272
        %v3503 = vunpack.c.h.b16 %v1272
        %v3504 = vunpack.c.l.b16 %v1273
        %v3505 = vunpack.c.h.b16 %v1273
        %v3506 = vunpack.c.l.b16 %v1274
        %v3507 = vunpack.c.h.b16 %v1274
        %v3508 = vunpack.c.l.b16 %v1275
        %v3509 = vunpack.c.h.b16 %v1275
        %v3510 = vunpack.c.l.b16 %v1276
        %v3511 = vunpack.c.h.b16 %v1276
        %v3512 = vunpack.c.l.b16 %v1277
        %v3513 = vunpack.c.h.b16 %v1277
        %v3514 = vunpack.c.l.b16 %v1278
        %v3515 = vunpack.c.h.b16 %v1278
        %v3516 = vunpack.c.l.b16 %v1279
        %v3517 = vunpack.c.h.b16 %v1279
        %v3518 = vunpack.c.l.b16 %v1280
        %v3519 = vunpack.c.h.b16 %v1280
        %v3520 = vunpack.c.l.b16 %v1281
        %v3521 = vunpack.c.h.b16 %v1281
        %v3522 = vunpack.c.l.b16 %v1282
        %v3523 = vunpack.c.h.b16 %v1282
        %v3524 = vunpack.c.l.b16 %v1283
        %v3525 = vunpack.c.h.b16 %v1283
        %v3526 = vunpack.c.l.b16 %v1284
        %v3527 = vunpack.c.h.b16 %v1284
        %v3528 = vunpack.c.l.b16 %v1285
        %v3529 = vunpack.c.h.b16 %v1285
        %v3530 = vunpack.c.l.b16 %v1286
        %v3531 = vunpack.c.h.b16 %v1286
        %v3532 = vunpack.c.l.b16 %v1287
        %v3533 = vunpack.c.h.b16 %v1287
        %v3534 = vunpack.c.l.b16 %v1288
        %v3535 = vunpack.c.h.b16 %v1288
        %v3536 = vunpack.c.l.b16 %v1289
        %v3537 = vunpack.c.h.b16 %v1289
        %v3538 = vunpack.c.l.b16 %v1290
        %v3539 = vunpack.c.h.b16 %v1290
        %v3540 = vunpack.c.l.b16 %v1291
        %v3541 = vunpack.c.h.b16 %v1291
        %v3542 = vunpack.c.l.b16 %v1292
        %v3543 = vunpack.c.h.b16 %v1292
        %v3544 = vunpack.c.l.b16 %v1293
        %v3545 = vunpack.c.h.b16 %v1293
        %v3546 = vunpack.c.l.b16 %v1294
        %v3547 = vunpack.c.h.b16 %v1294
        %v3548 = vunpack.c.l.b16 %v1295
        %v3549 = vunpack.c.h.b16 %v1295
        %v3550 = vunpack.c.l.b16 %v1296
        %v3551 = vunpack.c.h.b16 %v1296
        %v3552 = vunpack.c.l.b16 %v1297
        %v3553 = vunpack.c.h.b16 %v1297
        %v3554 = vunpack.c.l.b16 %v1298
        %v3555 = vunpack.c.h.b16 %v1298
        %v3556 = vunpack.c.l.b16 %v1299
        %v3557 = vunpack.c.h.b16 %v1299
        %v3558 = vunpack.c.l.b16 %v1300
        %v3559 = vunpack.c.h.b16 %v1300
        %v3560 = vunpack.c.l.b16 %v1301
        %v3561 = vunpack.c.h.b16 %v1301
        %v3562 = vunpack.c.l.b16 %v1302
        %v3563 = vunpack.c.h.b16 %v1302
        %v3564 = vunpack.c.l.b16 %v1303
        %v3565 = vunpack.c.h.b16 %v1303
        %v3566 = vunpack.c.l.b16 %v1304
        %v3567 = vunpack.c.h.b16 %v1304
        %v3568 = vunpack.c.l.b16 %v1305
        %v3569 = vunpack.c.h.b16 %v1305
        %v3570 = vunpack.c.l.b16 %v1306
        %v3571 = vunpack.c.h.b16 %v1306
        %v3572 = vunpack.c.l.b16 %v1307
        %v3573 = vunpack.c.h.b16 %v1307
        %v3574 = vunpack.c.l.b16 %v1308
        %v3575 = vunpack.c.h.b16 %v1308
        %v3576 = vunpack.c.l.b16 %v1309
        %v3577 = vunpack.c.h.b16 %v1309
        %v3578 = vunpack.c.l.b16 %v1310
        %v3579 = vunpack.c.h.b16 %v1310
        %v3580 = vunpack.c.l.b16 %v1311
        %v3581 = vunpack.c.h.b16 %v1311
        %v3582 = vunpack.c.l.b16 %v1312
        %v3583 = vunpack.c.h.b16 %v1312
        %v3584 = vunpack.c.l.b16 %v1313
        %v3585 = vunpack.c.h.b16 %v1313
        %v3586 = vunpack.c.l.b16 %v1314
        %v3587 = vunpack.c.h.b16 %v1314
        %v3588 = vunpack.c.l.b16 %v1315
        %v3589 = vunpack.c.h.b16 %v1315
        %v3590 = vunpack.c.l.b16 %v1316
        %v3591 = vunpack.c.h.b16 %v1316
        %v3592 = vunpack.c.l.b16 %v1317
        %v3593 = vunpack.c.h.b16 %v1317
        %v3594 = vunpack.c.l.b16 %v1318
        %v3595 = vunpack.c.h.b16 %v1318
        %v3596 = vunpack.c.l.b16 %v1319
        %v3597 = vunpack.c.h.b16 %v1319
        %v3598 = vunpack.c.l.b16 %v1320
        %v3599 = vunpack.c.h.b16 %v1320
        %v3600 = vunpack.c.l.b16 %v1321
        %v3601 = vunpack.c.h.b16 %v1321
        %v3602 = vunpack.c.l.b16 %v1322
        %v3603 = vunpack.c.h.b16 %v1322
        %v3604 = vunpack.c.l.b16 %v1323
        %v3605 = vunpack.c.h.b16 %v1323
        %v3606 = vunpack.c.l.b16 %v1324
        %v3607 = vunpack.c.h.b16 %v1324
        %v3608 = vunpack.c.l.b16 %v1325
        %v3609 = vunpack.c.h.b16 %v1325
        %v3610 = vunpack.c.l.b16 %v1326
        %v3611 = vunpack.c.h.b16 %v1326
        %v3612 = vunpack.c.l.b16 %v1327
        %v3613 = vunpack.c.h.b16 %v1327
        %v3614 = vunpack.c.l.b16 %v1328
        %v3615 = vunpack.c.h.b16 %v1328
        %v3616 = vunpack.c.l.b16 %v1329
        %v3617 = vunpack.c.h.b16 %v1329
        %v3618 = vunpack.c.l.b16 %v1330
        %v3619 = vunpack.c.h.b16 %v1330
        %v3620 = vunpack.c.l.b16 %v1331
        %v3621 = vunpack.c.h.b16 %v1331
        %v3622 = vunpack.c.l.b16 %v1332
        %v3623 = vunpack.c.h.b16 %v1332
        %v3624 = vunpack.c.l.b16 %v1333
        %v3625 = vunpack.c.h.b16 %v1333
        %v3626 = vunpack.c.l.b16 %v1334
        %v3627 = vunpack.c.h.b16 %v1334
        %v3628 = vunpack.c.l.b16 %v1335
        %v3629 = vunpack.c.h.b16 %v1335
        %v3630 = vunpack.c.l.b16 %v1336
        %v3631 = vunpack.c.h.b16 %v1336
        %v3632 = vunpack.c.l.b16 %v1337
        %v3633 = vunpack.c.h.b16 %v1337
        %v3634 = vunpack.c.l.b16 %v1338
        %v3635 = vunpack.c.h.b16 %v1338
        %v3636 = vunpack.c.l.b16 %v1339
        %v3637 = vunpack.c.h.b16 %v1339
        %v3638 = vunpack.c.l.b16 %v1340
        %v3639 = vunpack.c.h.b16 %v1340
        %v3640 = vunpack.c.l.b16 %v1341
        %v3641 = vunpack.c.h.b16 %v1341
        %v3642 = vunpack.c.l.b16 %v1342
        %v3643 = vunpack.c.h.b16 %v1342
        %v3644 = vunpack.c.l.b16 %v1343
        %v3645 = vunpack.c.h.b16 %v1343
        %v3646 = vunpack.c.l.b16 %v1344
        %v3647 = vunpack.c.h.b16 %v1344
        %v3648 = vunpack.c.l.b16 %v1345
        %v3649 = vunpack.c.h.b16 %v1345
        %v3650 = vunpack.c.l.b16 %v1346
        %v3651 = vunpack.c.h.b16 %v1346
        %v3652 = vunpack.c.l.b16 %v1347
        %v3653 = vunpack.c.h.b16 %v1347
        %v3654 = vunpack.c.l.b16 %v1348
        %v3655 = vunpack.c.h.b16 %v1348
        %v3656 = vunpack.c.l.b16 %v1349
        %v3657 = vunpack.c.h.b16 %v1349
        %v3658 = vunpack.c.l.b16 %v1350
        %v3659 = vunpack.c.h.b16 %v1350
        %v3660 = vunpack.c.l.b16 %v1351
        %v3661 = vunpack.c.h.b16 %v1351
        %v3662 = vunpack.c.l.b16 %v1352
        %v3663 = vunpack.c.h.b16 %v1352
        %v3664 = vunpack.c.l.b16 %v1353
        %v3665 = vunpack.c.h.b16 %v1353
        %v3666 = vunpack.c.l.b16 %v1354
        %v3667 = vunpack.c.h.b16 %v1354
        %v3668 = vunpack.c.l.b16 %v1355
        %v3669 = vunpack.c.h.b16 %v1355
        %v3670 = vunpack.c.l.b16 %v1356
        %v3671 = vunpack.c.h.b16 %v1356
        %v3672 = vunpack.c.l.b16 %v1357
        %v3673 = vunpack.c.h.b16 %v1357
        %v3674 = vunpack.c.l.b16 %v1358
        %v3675 = vunpack.c.h.b16 %v1358
        %v3676 = vunpack.c.l.b16 %v1359
        %v3677 = vunpack.c.h.b16 %v1359
        %v3678 = vunpack.c.l.b16 %v1360
        %v3679 = vunpack.c.h.b16 %v1360
        %v3680 = vunpack.c.l.b16 %v1361
        %v3681 = vunpack.c.h.b16 %v1361
        %v3682 = vunpack.c.l.b16 %v1362
        %v3683 = vunpack.c.h.b16 %v1362
        %v3684 = vunpack.c.l.b16 %v1363
        %v3685 = vunpack.c.h.b16 %v1363
        %v3686 = vunpack.c.l.b16 %v1364
        %v3687 = vunpack.c.h.b16 %v1364
        %v3688 = vunpack.c.l.b16 %v1365
        %v3689 = vunpack.c.h.b16 %v1365
        %v3690 = vunpack.c.l.b16 %v1366
        %v3691 = vunpack.c.h.b16 %v1366
        %v3692 = vunpack.c.l.b16 %v1367
        %v3693 = vunpack.c.h.b16 %v1367
        %v3694 = vunpack.c.l.b16 %v1368
        %v3695 = vunpack.c.h.b16 %v1368
        %v3696 = vunpack.c.l.b16 %v1369
        %v3697 = vunpack.c.h.b16 %v1369
        %v3698 = vunpack.c.l.b16 %v1370
        %v3699 = vunpack.c.h.b16 %v1370
        %v3700 = vunpack.c.l.b16 %v1371
        %v3701 = vunpack.c.h.b16 %v1371
        %v3702 = vunpack.c.l.b16 %v1372
        %v3703 = vunpack.c.h.b16 %v1372
        %v3704 = vunpack.c.l.b16 %v1373
        %v3705 = vunpack.c.h.b16 %v1373
        %v3706 = vunpack.c.l.b16 %v1374
        %v3707 = vunpack.c.h.b16 %v1374
        %v3708 = vunpack.c.l.b16 %v1375
        %v3709 = vunpack.c.h.b16 %v1375
        %v3710 = vunpack.c.l.b16 %v1376
        %v3711 = vunpack.c.h.b16 %v1376
        %v3712 = vunpack.c.l.b16 %v1377
        %v3713 = vunpack.c.h.b16 %v1377
        %v3714 = vunpack.c.l.b16 %v1378
        %v3715 = vunpack.c.h.b16 %v1378
        %v3716 = vunpack.c.l.b16 %v1379
        %v3717 = vunpack.c.h.b16 %v1379
        %v3718 = vunpack.c.l.b16 %v1380
        %v3719 = vunpack.c.h.b16 %v1380
        %v3720 = vunpack.c.l.b16 %v1381
        %v3721 = vunpack.c.h.b16 %v1381
        %v3722 = vunpack.c.l.b16 %v1382
        %v3723 = vunpack.c.h.b16 %v1382
        %v3724 = vunpack.c.l.b16 %v1383
        %v3725 = vunpack.c.h.b16 %v1383
        %v3726 = vunpack.c.l.b16 %v1384
        %v3727 = vunpack.c.h.b16 %v1384
        %v3728 = vunpack.c.l.b16 %v1385
        %v3729 = vunpack.c.h.b16 %v1385
        %v3730 = vunpack.c.l.b16 %v1386
        %v3731 = vunpack.c.h.b16 %v1386
        %v3732 = vunpack.c.l.b16 %v1387
        %v3733 = vunpack.c.h.b16 %v1387
        %v3734 = vunpack.c.l.b16 %v1388
        %v3735 = vunpack.c.h.b16 %v1388
        %v3736 = vunpack.c.l.b16 %v1389
        %v3737 = vunpack.c.h.b16 %v1389
        %v3738 = vunpack.c.l.b16 %v1390
        %v3739 = vunpack.c.h.b16 %v1390
        %v3740 = vunpack.c.l.b16 %v1391
        %v3741 = vunpack.c.h.b16 %v1391
        %v3742 = vunpack.c.l.b16 %v1392
        %v3743 = vunpack.c.h.b16 %v1392
        %v3744 = vunpack.c.l.b16 %v1393
        %v3745 = vunpack.c.h.b16 %v1393
        %v3746 = vunpack.c.l.b16 %v1394
        %v3747 = vunpack.c.h.b16 %v1394
        %v3748 = vunpack.c.l.b16 %v1395
        %v3749 = vunpack.c.h.b16 %v1395
        %v3750 = vunpack.c.l.b16 %v1396
        %v3751 = vunpack.c.h.b16 %v1396
        %v3752 = vunpack.c.l.b16 %v1397
        %v3753 = vunpack.c.h.b16 %v1397
        %v3754 = vunpack.c.l.b16 %v1398
        %v3755 = vunpack.c.h.b16 %v1398
        %v3756 = vunpack.c.l.b16 %v1399
        %v3757 = vunpack.c.h.b16 %v1399
        %v3758 = vunpack.c.l.b16 %v1400
        %v3759 = vunpack.c.h.b16 %v1400
        %v3760 = vunpack.c.l.b16 %v1401
        %v3761 = vunpack.c.h.b16 %v1401
        %v3762 = vunpack.c.l.b16 %v1402
        %v3763 = vunpack.c.h.b16 %v1402
        %v3764 = vunpack.c.l.b16 %v1403
        %v3765 = vunpack.c.h.b16 %v1403
        %v3766 = vunpack.c.l.b16 %v1404
        %v3767 = vunpack.c.h.b16 %v1404
        %v3768 = vunpack.c.l.b16 %v1405
        %v3769 = vunpack.c.h.b16 %v1405
        %v3770 = vunpack.c.l.b16 %v1406
        %v3771 = vunpack.c.h.b16 %v1406
        %v3772 = vunpack.c.l.b16 %v1407
        %v3773 = vunpack.c.h.b16 %v1407
        %v3774 = vunpack.c.l.b16 %v1408
        %v3775 = vunpack.c.h.b16 %v1408
        %v3776 = vunpack.c.l.b16 %v1409
        %v3777 = vunpack.c.h.b16 %v1409
        %v3778 = vunpack.c.l.b16 %v1410
        %v3779 = vunpack.c.h.b16 %v1410
        %v3780 = vunpack.c.l.b16 %v1411
        %v3781 = vunpack.c.h.b16 %v1411
        %v3782 = vunpack.c.l.b16 %v1412
        %v3783 = vunpack.c.h.b16 %v1412
        %v3784 = vunpack.c.l.b16 %v1413
        %v3785 = vunpack.c.h.b16 %v1413
        %v3786 = vunpack.c.l.b16 %v1414
        %v3787 = vunpack.c.h.b16 %v1414
        %v3788 = vunpack.c.l.b16 %v1415
        %v3789 = vunpack.c.h.b16 %v1415
        %v3790 = vunpack.c.l.b16 %v1416
        %v3791 = vunpack.c.h.b16 %v1416
        %v3792 = vunpack.c.l.b16 %v1417
        %v3793 = vunpack.c.h.b16 %v1417
        %v3794 = vunpack.c.l.b16 %v1418
        %v3795 = vunpack.c.h.b16 %v1418
        %v3796 = vunpack.c.l.b16 %v1419
        %v3797 = vunpack.c.h.b16 %v1419
        %v3798 = vunpack.c.l.b16 %v1420
        %v3799 = vunpack.c.h.b16 %v1420
        %v3800 = vunpack.c.l.b16 %v1421
        %v3801 = vunpack.c.h.b16 %v1421
        %v3802 = vunpack.c.l.b16 %v1422
        %v3803 = vunpack.c.h.b16 %v1422
        %v3804 = vunpack.c.l.b16 %v1423
        %v3805 = vunpack.c.h.b16 %v1423
        %v3806 = vunpack.c.l.b16 %v1424
        %v3807 = vunpack.c.h.b16 %v1424
        %v3808 = vunpack.c.l.b16 %v1425
        %v3809 = vunpack.c.h.b16 %v1425
        %v3810 = vunpack.c.l.b16 %v1426
        %v3811 = vunpack.c.h.b16 %v1426
        %v3812 = vunpack.c.l.b16 %v1427
        %v3813 = vunpack.c.h.b16 %v1427
        %v3814 = vunpack.c.l.b16 %v1428
        %v3815 = vunpack.c.h.b16 %v1428
        %v3816 = vunpack.c.l.b16 %v1429
        %v3817 = vunpack.c.h.b16 %v1429
        %v3818 = vunpack.c.l.b16 %v1430
        %v3819 = vunpack.c.h.b16 %v1430
        %v3820 = vunpack.c.l.b16 %v1431
        %v3821 = vunpack.c.h.b16 %v1431
        %v3822 = vunpack.c.l.b16 %v1432
        %v3823 = vunpack.c.h.b16 %v1432
        %v3824 = vunpack.c.l.b16 %v1433
        %v3825 = vunpack.c.h.b16 %v1433
        %v3826 = vunpack.c.l.b16 %v1434
        %v3827 = vunpack.c.h.b16 %v1434
        %v3828 = vunpack.c.l.b16 %v1435
        %v3829 = vunpack.c.h.b16 %v1435
        %v3830 = vunpack.c.l.b16 %v1436
        %v3831 = vunpack.c.h.b16 %v1436
        %v3832 = vunpack.c.l.b16 %v1437
        %v3833 = vunpack.c.h.b16 %v1437
        %v3834 = vunpack.c.l.b16 %v1438
        %v3835 = vunpack.c.h.b16 %v1438
        %v3836 = vunpack.c.l.b16 %v1439
        %v3837 = vunpack.c.h.b16 %v1439
        %v3838 = vunpack.c.l.b16 %v1440
        %v3839 = vunpack.c.h.b16 %v1440
        %v3840 = vunpack.c.l.b16 %v1441
        %v3841 = vunpack.c.h.b16 %v1441
        %v3842 = vunpack.c.l.b16 %v1442
        %v3843 = vunpack.c.h.b16 %v1442
        %v3844 = vunpack.c.l.b16 %v1443
        %v3845 = vunpack.c.h.b16 %v1443
        %v3846 = vunpack.c.l.b16 %v1444
        %v3847 = vunpack.c.h.b16 %v1444
        %v3848 = vunpack.c.l.b16 %v1445
        %v3849 = vunpack.c.h.b16 %v1445
        %v3850 = vunpack.c.l.b16 %v1446
        %v3851 = vunpack.c.h.b16 %v1446
        %v3852 = vunpack.c.l.b16 %v1447
        %v3853 = vunpack.c.h.b16 %v1447
        %v3854 = vunpack.c.l.b16 %v1448
        %v3855 = vunpack.c.h.b16 %v1448
        %v3856 = vunpack.c.l.b16 %v1449
        %v3857 = vunpack.c.h.b16 %v1449
        %v3858 = vunpack.c.l.b16 %v1450
        %v3859 = vunpack.c.h.b16 %v1450
        %v3860 = vunpack.c.l.b16 %v1451
        %v3861 = vunpack.c.h.b16 %v1451
        %v3862 = vunpack.c.l.b16 %v1452
        %v3863 = vunpack.c.h.b16 %v1452
        %v3864 = vunpack.c.l.b16 %v1453
        %v3865 = vunpack.c.h.b16 %v1453
        %v3866 = vunpack.c.l.b16 %v1454
        %v3867 = vunpack.c.h.b16 %v1454
        %v3868 = vunpack.c.l.b16 %v1455
        %v3869 = vunpack.c.h.b16 %v1455
        %v3870 = vunpack.c.l.b16 %v1456
        %v3871 = vunpack.c.h.b16 %v1456
        %v3872 = vunpack.c.l.b16 %v1457
        %v3873 = vunpack.c.h.b16 %v1457
        %v3874 = vunpack.c.l.b16 %v1458
        %v3875 = vunpack.c.h.b16 %v1458
        %v3876 = vunpack.c.l.b16 %v1459
        %v3877 = vunpack.c.h.b16 %v1459
        %v3878 = vunpack.c.l.b16 %v1460
        %v3879 = vunpack.c.h.b16 %v1460
        %v3880 = vunpack.c.l.b16 %v1461
        %v3881 = vunpack.c.h.b16 %v1461
        %v3882 = vunpack.c.l.b16 %v1462
        %v3883 = vunpack.c.h.b16 %v1462
        %v3884 = vunpack.c.l.b16 %v1463
        %v3885 = vunpack.c.h.b16 %v1463
        %v3886 = vunpack.c.l.b16 %v1464
        %v3887 = vunpack.c.h.b16 %v1464
        %v3888 = vunpack.c.l.b16 %v1465
        %v3889 = vunpack.c.h.b16 %v1465
        %v3890 = vunpack.c.l.b16 %v1466
        %v3891 = vunpack.c.h.b16 %v1466
        %v3892 = vunpack.c.l.b16 %v1467
        %v3893 = vunpack.c.h.b16 %v1467
        %v3894 = vunpack.c.l.b16 %v1468
        %v3895 = vunpack.c.h.b16 %v1468
        %v3896 = vunpack.c.l.b16 %v1469
        %v3897 = vunpack.c.h.b16 %v1469
        %v3898 = vunpack.c.l.b16 %v1470
        %v3899 = vunpack.c.h.b16 %v1470
        %v3900 = vunpack.c.l.b16 %v1471
        %v3901 = vunpack.c.h.b16 %v1471
        %v3902 = vunpack.c.l.b16 %v1472
        %v3903 = vunpack.c.h.b16 %v1472
        %v3904 = vunpack.c.l.b16 %v1473
        %v3905 = vunpack.c.h.b16 %v1473
        %v3906 = vunpack.c.l.b16 %v1474
        %v3907 = vunpack.c.h.b16 %v1474
        %v3908 = vunpack.c.l.b16 %v1475
        %v3909 = vunpack.c.h.b16 %v1475
        %v3910 = vunpack.c.l.b16 %v1476
        %v3911 = vunpack.c.h.b16 %v1476
        %v3912 = vunpack.c.l.b16 %v1477
        %v3913 = vunpack.c.h.b16 %v1477
        %v3914 = vunpack.c.l.b16 %v1478
        %v3915 = vunpack.c.h.b16 %v1478
        %v3916 = vunpack.c.l.b16 %v1479
        %v3917 = vunpack.c.h.b16 %v1479
        %v3918 = vunpack.c.l.b16 %v1480
        %v3919 = vunpack.c.h.b16 %v1480
        %v3920 = vunpack.c.l.b16 %v1481
        %v3921 = vunpack.c.h.b16 %v1481
        %v3922 = vunpack.c.l.b16 %v1482
        %v3923 = vunpack.c.h.b16 %v1482
        %v3924 = vunpack.c.l.b16 %v1483
        %v3925 = vunpack.c.h.b16 %v1483
        %v3926 = vunpack.c.l.b16 %v1484
        %v3927 = vunpack.c.h.b16 %v1484
        %v3928 = vunpack.c.l.b16 %v1485
        %v3929 = vunpack.c.h.b16 %v1485
        %v3930 = vunpack.c.l.b16 %v1486
        %v3931 = vunpack.c.h.b16 %v1486
        %v3932 = vunpack.c.l.b16 %v1487
        %v3933 = vunpack.c.h.b16 %v1487
        %v3934 = vunpack.c.l.b16 %v1488
        %v3935 = vunpack.c.h.b16 %v1488
        %v3936 = vunpack.c.l.b16 %v1489
        %v3937 = vunpack.c.h.b16 %v1489
        %v3938 = vunpack.c.l.b16 %v1490
        %v3939 = vunpack.c.h.b16 %v1490
        %v3940 = vunpack.c.l.b16 %v1491
        %v3941 = vunpack.c.h.b16 %v1491
        %v3942 = vunpack.c.l.b16 %v1492
        %v3943 = vunpack.c.h.b16 %v1492
        %v3944 = vunpack.c.l.b16 %v1493
        %v3945 = vunpack.c.h.b16 %v1493
        %v3946 = vunpack.c.l.b16 %v1494
        %v3947 = vunpack.c.h.b16 %v1494
        %v3948 = vunpack.c.l.b16 %v1495
        %v3949 = vunpack.c.h.b16 %v1495
        %v3950 = vunpack.c.l.b16 %v1496
        %v3951 = vunpack.c.h.b16 %v1496
        %v3952 = vunpack.c.l.b16 %v1497
        %v3953 = vunpack.c.h.b16 %v1497
        %v3954 = vunpack.c.l.b16 %v1498
        %v3955 = vunpack.c.h.b16 %v1498
        %v3956 = vunpack.c.l.b16 %v1499
        %v3957 = vunpack.c.h.b16 %v1499
        %v3958 = vunpack.c.l.b16 %v1500
        %v3959 = vunpack.c.h.b16 %v1500
        %v3960 = vunpack.c.l.b16 %v1501
        %v3961 = vunpack.c.h.b16 %v1501
        %v3962 = vunpack.c.l.b16 %v1502
        %v3963 = vunpack.c.h.b16 %v1502
        %v3964 = vunpack.c.l.b16 %v1503
        %v3965 = vunpack.c.h.b16 %v1503
        %v3966 = vunpack.c.l.b16 %v1504
        %v3967 = vunpack.c.h.b16 %v1504
        %v3968 = vunpack.c.l.b16 %v1505
        %v3969 = vunpack.c.h.b16 %v1505
        %v3970 = vunpack.c.l.b16 %v1506
        %v3971 = vunpack.c.h.b16 %v1506
        %v3972 = vunpack.c.l.b16 %v1507
        %v3973 = vunpack.c.h.b16 %v1507
        %v3974 = vunpack.c.l.b16 %v1508
        %v3975 = vunpack.c.h.b16 %v1508
        %v3976 = vunpack.c.l.b16 %v1509
        %v3977 = vunpack.c.h.b16 %v1509
        %v3978 = vunpack.c.l.b16 %v1510
        %v3979 = vunpack.c.h.b16 %v1510
        %v3980 = vunpack.c.l.b16 %v1511
        %v3981 = vunpack.c.h.b16 %v1511
        %v3982 = vunpack.c.l.b16 %v1512
        %v3983 = vunpack.c.h.b16 %v1512
        %v3984 = vunpack.c.l.b16 %v1513
        %v3985 = vunpack.c.h.b16 %v1513
        %v3986 = vpack.c.b16 %v2452, %v2450
        %v3987 = vpack.c.b16 %v2453, %v2451
        %v3988 = vpack.c.b16 %v2456, %v2454
        %v3989 = vpack.c.b16 %v2457, %v2455
        %v3990 = vpack.c.b16 %v2460, %v2458
        %v3991 = vpack.c.b16 %v2461, %v2459
        %v3992 = vpack.c.b16 %v2464, %v2462
        %v3993 = vpack.c.b16 %v2465, %v2463
        %v3994 = vpack.c.b16 %v2468, %v2466
        %v3995 = vpack.c.b16 %v2469, %v2467
        %v3996 = vpack.c.b16 %v2472, %v2470
        %v3997 = vpack.c.b16 %v2473, %v2471
        %v3998 = vpack.c.b16 %v2476, %v2474
        %v3999 = vpack.c.b16 %v2477, %v2475
        %v4000 = vpack.c.b16 %v2480, %v2478
        %v4001 = vpack.c.b16 %v2481, %v2479
        %v4002 = vpack.c.b16 %v2484, %v2482
        %v4003 = vpack.c.b16 %v2485, %v2483
        %v4004 = vpack.c.b16 %v2488, %v2486
        %v4005 = vpack.c.b16 %v2489, %v2487
        %v4006 = vpack.c.b16 %v2492, %v2490
        %v4007 = vpack.c.b16 %v2493, %v2491
        %v4008 = vpack.c.b16 %v2496, %v2494
        %v4009 = vpack.c.b16 %v2497, %v2495
        %v4010 = vpack.c.b16 %v2500, %v2498
        %v4011 = vpack.c.b16 %v2501, %v2499
        %v4012 = vpack.c.b16 %v2504, %v2502
        %v4013 = vpack.c.b16 %v2505, %v2503
        %v4014 = vpack.c.b16 %v2508, %v2506
        %v4015 = vpack.c.b16 %v2509, %v2507
        %v4016 = vpack.c.b16 %v2512, %v2510
        %v4017 = vpack.c.b16 %v2513, %v2511
        %v4018 = vpack.c.b16 %v2516, %v2514
        %v4019 = vpack.c.b16 %v2517, %v2515
        %v4020 = vpack.c.b16 %v2520, %v2518
        %v4021 = vpack.c.b16 %v2521, %v2519
        %v4022 = vpack.c.b16 %v2524, %v2522
        %v4023 = vpack.c.b16 %v2525, %v2523
        %v4024 = vpack.c.b16 %v2528, %v2526
        %v4025 = vpack.c.b16 %v2529, %v2527
        %v4026 = vpack.c.b16 %v2532, %v2530
        %v4027 = vpack.c.b16 %v2533, %v2531
        %v4028 = vpack.c.b16 %v2536, %v2534
        %v4029 = vpack.c.b16 %v2537, %v2535
        %v4030 = vpack.c.b16 %v2540, %v2538
        %v4031 = vpack.c.b16 %v2541, %v2539
        %v4032 = vpack.c.b16 %v2544, %v2542
        %v4033 = vpack.c.b16 %v2545, %v2543
        %v4034 = vpack.c.b16 %v2548, %v2546
        %v4035 = vpack.c.b16 %v2549, %v2547
        %v4036 = vpack.c.b16 %v2552, %v2550
        %v4037 = vpack.c.b16 %v2553, %v2551
        %v4038 = vpack.c.b16 %v2556, %v2554
        %v4039 = vpack.c.b16 %v2557, %v2555
        %v4040 = vpack.c.b16 %v2560, %v2558
        %v4041 = vpack.c.b16 %v2561, %v2559
        %v4042 = vpack.c.b16 %v2564, %v2562
        %v4043 = vpack.c.b16 %v2565, %v2563
        %v4044 = vpack.c.b16 %v2568, %v2566
        %v4045 = vpack.c.b16 %v2569, %v2567
        %v4046 = vpack.c.b16 %v2572, %v2570
        %v4047 = vpack.c.b16 %v2573, %v2571
        %v4048 = vpack.c.b16 %v2576, %v2574
        %v4049 = vpack.c.b16 %v2577, %v2575
        %v4050 = vpack.c.b16 %v2580, %v2578
        %v4051 = vpack.c.b16 %v2581, %v2579
        %v4052 = vpack.c.b16 %v2584, %v2582
        %v4053 = vpack.c.b16 %v2585, %v2583
        %v4054 = vpack.c.b16 %v2588, %v2586
        %v4055 = vpack.c.b16 %v2589, %v2587
        %v4056 = vpack.c.b16 %v2592, %v2590
        %v4057 = vpack.c.b16 %v2593, %v2591
        %v4058 = vpack.c.b16 %v2596, %v2594
        %v4059 = vpack.c.b16 %v2597, %v2595
        %v4060 = vpack.c.b16 %v2600, %v2598
        %v4061 = vpack.c.b16 %v2601, %v2599
        %v4062 = vpack.c.b16 %v2604, %v2602
        %v4063 = vpack.c.b16 %v2605, %v2603
        %v4064 = vpack.c.b16 %v2608, %v2606
        %v4065 = vpack.c.b16 %v2609, %v2607
        %v4066 = vpack.c.b16 %v2612, %v2610
        %v4067 = vpack.c.b16 %v2613, %v2611
        %v4068 = vpack.c.b16 %v2616, %v2614
        %v4069 = vpack.c.b16 %v2617, %v2615
        %v4070 = vpack.c.b16 %v2620, %v2618
        %v4071 = vpack.c.b16 %v2621, %v2619
        %v4072 = vpack.c.b16 %v2624, %v2622
        %v4073 = vpack.c.b16 %v2625, %v2623
        %v4074 = vpack.c.b16 %v2628, %v2626
        %v4075 = vpack.c.b16 %v2629, %v2627
        %v4076 = vpack.c.b16 %v2632, %v2630
        %v4077 = vpack.c.b16 %v2633, %v2631
        %v4078 = vpack.c.b16 %v2636, %v2634
        %v4079 = vpack.c.b16 %v2637, %v2635
        %v4080 = vpack.c.b16 %v2640, %v2638
        %v4081 = vpack.c.b16 %v2641, %v2639
        %v4082 = vpack.c.b16 %v2644, %v2642
        %v4083 = vpack.c.b16 %v2645, %v2643
        %v4084 = vpack.c.b16 %v2648, %v2646
        %v4085 = vpack.c.b16 %v2649, %v2647
        %v4086 = vpack.c.b16 %v2652, %v2650
        %v4087 = vpack.c.b16 %v2653, %v2651
        %v4088 = vpack.c.b16 %v2656, %v2654
        %v4089 = vpack.c.b16 %v2657, %v2655
        %v4090 = vpack.c.b16 %v2660, %v2658
        %v4091 = vpack.c.b16 %v2661, %v2659
        %v4092 = vpack.c.b16 %v2664, %v2662
        %v4093 = vpack.c.b16 %v2665, %v2663
        %v4094 = vpack.c.b16 %v2668, %v2666
        %v4095 = vpack.c.b16 %v2669, %v2667
        %v4096 = vpack.c.b16 %v2672, %v2670
        %v4097 = vpack.c.b16 %v2673, %v2671
        %v4098 = vpack.c.b16 %v2676, %v2674
        %v4099 = vpack.c.b16 %v2677, %v2675
        %v4100 = vpack.c.b16 %v2680, %v2678
        %v4101 = vpack.c.b16 %v2681, %v2679
        %v4102 = vpack.c.b16 %v2684, %v2682
        %v4103 = vpack.c.b16 %v2685, %v2683
        %v4104 = vpack.c.b16 %v2688, %v2686
        %v4105 = vpack.c.b16 %v2689, %v2687
        %v4106 = vpack.c.b16 %v2692, %v2690
        %v4107 = vpack.c.b16 %v2693, %v2691
        %v4108 = vpack.c.b16 %v2696, %v2694
        %v4109 = vpack.c.b16 %v2697, %v2695
        %v4110 = vpack.c.b16 %v2700, %v2698
        %v4111 = vpack.c.b16 %v2701, %v2699
        %v4112 = vpack.c.b16 %v2704, %v2702
        %v4113 = vpack.c.b16 %v2705, %v2703
        %v4114 = vpack.c.b16 %v2708, %v2706
        %v4115 = vpack.c.b16 %v2709, %v2707
        %v4116 = vpack.c.b16 %v2712, %v2710
        %v4117 = vpack.c.b16 %v2713, %v2711
        %v4118 = vpack.c.b16 %v2716, %v2714
        %v4119 = vpack.c.b16 %v2717, %v2715
        %v4120 = vpack.c.b16 %v2720, %v2718
        %v4121 = vpack.c.b16 %v2721, %v2719
        %v4122 = vpack.c.b16 %v2724, %v2722
        %v4123 = vpack.c.b16 %v2725, %v2723
        %v4124 = vpack.c.b16 %v2728, %v2726
        %v4125 = vpack.c.b16 %v2729, %v2727
        %v4126 = vpack.c.b16 %v2732, %v2730
        %v4127 = vpack.c.b16 %v2733, %v2731
        %v4128 = vpack.c.b16 %v2736, %v2734
        %v4129 = vpack.c.b16 %v2737, %v2735
        %v4130 = vpack.c.b16 %v2740, %v2738
        %v4131 = vpack.c.b16 %v2741, %v2739
        %v4132 = vpack.c.b16 %v2744, %v2742
        %v4133 = vpack.c.b16 %v2745, %v2743
        %v4134 = vpack.c.b16 %v2748, %v2746
        %v4135 = vpack.c.b16 %v2749, %v2747
        %v4136 = vpack.c.b16 %v2752, %v2750
        %v4137 = vpack.c.b16 %v2753, %v2751
        %v4138 = vpack.c.b16 %v2756, %v2754
        %v4139 = vpack.c.b16 %v2757, %v2755
        %v4140 = vpack.c.b16 %v2760, %v2758
        %v4141 = vpack.c.b16 %v2761, %v2759
        %v4142 = vpack.c.b16 %v2764, %v2762
        %v4143 = vpack.c.b16 %v2765, %v2763
        %v4144 = vpack.c.b16 %v2768, %v2766
        %v4145 = vpack.c.b16 %v2769, %v2767
        %v4146 = vpack.c.b16 %v2772, %v2770
        %v4147 = vpack.c.b16 %v2773, %v2771
        %v4148 = vpack.c.b16 %v2776, %v2774
        %v4149 = vpack.c.b16 %v2777, %v2775
        %v4150 = vpack.c.b16 %v2780, %v2778
        %v4151 = vpack.c.b16 %v2781, %v2779
        %v4152 = vpack.c.b16 %v2784, %v2782
        %v4153 = vpack.c.b16 %v2785, %v2783
        %v4154 = vpack.c.b16 %v2788, %v2786
        %v4155 = vpack.c.b16 %v2789, %v2787
        %v4156 = vpack.c.b16 %v2792, %v2790
        %v4157 = vpack.c.b16 %v2793, %v2791
        %v4158 = vpack.c.b16 %v2796, %v2794
        %v4159 = vpack.c.b16 %v2797, %v2795
        %v4160 = vpack.c.b16 %v2800, %v2798
        %v4161 = vpack.c.b16 %v2801, %v2799
        %v4162 = vpack.c.b16 %v2804, %v2802
        %v4163 = vpack.c.b16 %v2805, %v2803
        %v4164 = vpack.c.b16 %v2808, %v2806
        %v4165 = vpack.c.b16 %v2809, %v2807
        %v4166 = vpack.c.b16 %v2812, %v2810
        %v4167 = vpack.c.b16 %v2813, %v2811
        %v4168 = vpack.c.b16 %v2816, %v2814
        %v4169 = vpack.c.b16 %v2817, %v2815
        %v4170 = vpack.c.b16 %v2820, %v2818
        %v4171 = vpack.c.b16 %v2821, %v2819
        %v4172 = vpack.c.b16 %v2824, %v2822
        %v4173 = vpack.c.b16 %v2825, %v2823
        %v4174 = vpack.c.b16 %v2828, %v2826
        %v4175 = vpack.c.b16 %v2829, %v2827
        %v4176 = vpack.c.b16 %v2832, %v2830
        %v4177 = vpack.c.b16 %v2833, %v2831
        %v4178 = vpack.c.b16 %v2836, %v2834
        %v4179 = vpack.c.b16 %v2837, %v2835
        %v4180 = vpack.c.b16 %v2840, %v2838
        %v4181 = vpack.c.b16 %v2841, %v2839
        %v4182 = vpack.c.b16 %v2844, %v2842
        %v4183 = vpack.c.b16 %v2845, %v2843
        %v4184 = vpack.c.b16 %v2848, %v2846
        %v4185 = vpack.c.b16 %v2849, %v2847
        %v4186 = vpack.c.b16 %v2852, %v2850
        %v4187 = vpack.c.b16 %v2853, %v2851
        %v4188 = vpack.c.b16 %v2856, %v2854
        %v4189 = vpack.c.b16 %v2857, %v2855
        %v4190 = vpack.c.b16 %v2860, %v2858
        %v4191 = vpack.c.b16 %v2861, %v2859
        %v4192 = vpack.c.b16 %v2864, %v2862
        %v4193 = vpack.c.b16 %v2865, %v2863
        %v4194 = vpack.c.b16 %v2868, %v2866
        %v4195 = vpack.c.b16 %v2869, %v2867
        %v4196 = vpack.c.b16 %v2872, %v2870
        %v4197 = vpack.c.b16 %v2873, %v2871
        %v4198 = vpack.c.b16 %v2876, %v2874
        %v4199 = vpack.c.b16 %v2877, %v2875
        %v4200 = vpack.c.b16 %v2880, %v2878
        %v4201 = vpack.c.b16 %v2881, %v2879
        %v4202 = vpack.c.b16 %v2884, %v2882
        %v4203 = vpack.c.b16 %v2885, %v2883
        %v4204 = vpack.c.b16 %v2888, %v2886
        %v4205 = vpack.c.b16 %v2889, %v2887
        %v4206 = vpack.c.b16 %v2892, %v2890
        %v4207 = vpack.c.b16 %v2893, %v2891
        %v4208 = vpack.c.b16 %v2896, %v2894
        %v4209 = vpack.c.b16 %v2897, %v2895
        %v4210 = vpack.c.b16 %v2900, %v2898
        %v4211 = vpack.c.b16 %v2901, %v2899
        %v4212 = vpack.c.b16 %v2904, %v2902
        %v4213 = vpack.c.b16 %v2905, %v2903
        %v4214 = vpack.c.b16 %v2908, %v2906
        %v4215 = vpack.c.b16 %v2909, %v2907
        %v4216 = vpack.c.b16 %v2912, %v2910
        %v4217 = vpack.c.b16 %v2913, %v2911
        %v4218 = vpack.c.b16 %v2916, %v2914
        %v4219 = vpack.c.b16 %v2917, %v2915
        %v4220 = vpack.c.b16 %v2920, %v2918
        %v4221 = vpack.c.b16 %v2921, %v2919
        %v4222 = vpack.c.b16 %v2924, %v2922
        %v4223 = vpack.c.b16 %v2925, %v2923
        %v4224 = vpack.c.b16 %v2928, %v2926
        %v4225 = vpack.c.b16 %v2929, %v2927
        %v4226 = vpack.c.b16 %v2932, %v2930
        %v4227 = vpack.c.b16 %v2933, %v2931
        %v4228 = vpack.c.b16 %v2936, %v2934
        %v4229 = vpack.c.b16 %v2937, %v2935
        %v4230 = vpack.c.b16 %v2940, %v2938
        %v4231 = vpack.c.b16 %v2941, %v2939
        %v4232 = vpack.c.b16 %v2944, %v2942
        %v4233 = vpack.c.b16 %v2945, %v2943
        %v4234 = vpack.c.b16 %v2948, %v2946
        %v4235 = vpack.c.b16 %v2949, %v2947
        %v4236 = vpack.c.b16 %v2952, %v2950
        %v4237 = vpack.c.b16 %v2953, %v2951
        %v4238 = vpack.c.b16 %v2956, %v2954
        %v4239 = vpack.c.b16 %v2957, %v2955
        %v4240 = vpack.c.b16 %v2960, %v2958
        %v4241 = vpack.c.b16 %v2961, %v2959
        %v4242 = vpack.c.b16 %v2964, %v2962
        %v4243 = vpack.c.b16 %v2965, %v2963
        %v4244 = vpack.c.b16 %v2968, %v2966
        %v4245 = vpack.c.b16 %v2969, %v2967
        %v4246 = vpack.c.b16 %v2972, %v2970
        %v4247 = vpack.c.b16 %v2973, %v2971
        %v4248 = vpack.c.b16 %v2976, %v2974
        %v4249 = vpack.c.b16 %v2977, %v2975
        %v4250 = vpack.c.b16 %v2980, %v2978
        %v4251 = vpack.c.b16 %v2981, %v2979
        %v4252 = vpack.c.b16 %v2984, %v2982
        %v4253 = vpack.c.b16 %v2985, %v2983
        %v4254 = vpack.c.b16 %v2988, %v2986
        %v4255 = vpack.c.b16 %v2989, %v2987
        %v4256 = vpack.c.b16 %v2992, %v2990
        %v4257 = vpack.c.b16 %v2993, %v2991
        %v4258 = vpack.c.b16 %v2996, %v2994
        %v4259 = vpack.c.b16 %v2997, %v2995
        %v4260 = vpack.c.b16 %v3000, %v2998
        %v4261 = vpack.c.b16 %v3001, %v2999
        %v4262 = vpack.c.b16 %v3004, %v3002
        %v4263 = vpack.c.b16 %v3005, %v3003
        %v4264 = vpack.c.b16 %v3008, %v3006
        %v4265 = vpack.c.b16 %v3009, %v3007
        %v4266 = vpack.c.b16 %v3012, %v3010
        %v4267 = vpack.c.b16 %v3013, %v3011
        %v4268 = vpack.c.b16 %v3016, %v3014
        %v4269 = vpack.c.b16 %v3017, %v3015
        %v4270 = vpack.c.b16 %v3020, %v3018
        %v4271 = vpack.c.b16 %v3021, %v3019
        %v4272 = vpack.c.b16 %v3024, %v3022
        %v4273 = vpack.c.b16 %v3025, %v3023
        %v4274 = vpack.c.b16 %v3028, %v3026
        %v4275 = vpack.c.b16 %v3029, %v3027
        %v4276 = vpack.c.b16 %v3032, %v3030
        %v4277 = vpack.c.b16 %v3033, %v3031
        %v4278 = vpack.c.b16 %v3036, %v3034
        %v4279 = vpack.c.b16 %v3037, %v3035
        %v4280 = vpack.c.b16 %v3040, %v3038
        %v4281 = vpack.c.b16 %v3041, %v3039
        %v4282 = vpack.c.b16 %v3044, %v3042
        %v4283 = vpack.c.b16 %v3045, %v3043
        %v4284 = vpack.c.b16 %v3048, %v3046
        %v4285 = vpack.c.b16 %v3049, %v3047
        %v4286 = vpack.c.b16 %v3052, %v3050
        %v4287 = vpack.c.b16 %v3053, %v3051
        %v4288 = vpack.c.b16 %v3056, %v3054
        %v4289 = vpack.c.b16 %v3057, %v3055
        %v4290 = vpack.c.b16 %v3060, %v3058
        %v4291 = vpack.c.b16 %v3061, %v3059
        %v4292 = vpack.c.b16 %v3064, %v3062
        %v4293 = vpack.c.b16 %v3065, %v3063
        %v4294 = vpack.c.b16 %v3068, %v3066
        %v4295 = vpack.c.b16 %v3069, %v3067
        %v4296 = vpack.c.b16 %v3072, %v3070
        %v4297 = vpack.c.b16 %v3073, %v3071
        %v4298 = vpack.c.b16 %v3076, %v3074
        %v4299 = vpack.c.b16 %v3077, %v3075
        %v4300 = vpack.c.b16 %v3080, %v3078
        %v4301 = vpack.c.b16 %v3081, %v3079
        %v4302 = vpack.c.b16 %v3084, %v3082
        %v4303 = vpack.c.b16 %v3085, %v3083
        %v4304 = vpack.c.b16 %v3088, %v3086
        %v4305 = vpack.c.b16 %v3089, %v3087
        %v4306 = vpack.c.b16 %v3092, %v3090
        %v4307 = vpack.c.b16 %v3093, %v3091
        %v4308 = vpack.c.b16 %v3096, %v3094
        %v4309 = vpack.c.b16 %v3097, %v3095
        %v4310 = vpack.c.b16 %v3100, %v3098
        %v4311 = vpack.c.b16 %v3101, %v3099
        %v4312 = vpack.c.b16 %v3104, %v3102
        %v4313 = vpack.c.b16 %v3105, %v3103
        %v4314 = vpack.c.b16 %v3108, %v3106
        %v4315 = vpack.c.b16 %v3109, %v3107
        %v4316 = vpack.c.b16 %v3112, %v3110
        %v4317 = vpack.c.b16 %v3113, %v3111
        %v4318 = vpack.c.b16 %v3116, %v3114
        %v4319 = vpack.c.b16 %v3117, %v3115
        %v4320 = vpack.c.b16 %v3120, %v3118
        %v4321 = vpack.c.b16 %v3121, %v3119
        %v4322 = vpack.c.b16 %v3124, %v3122
        %v4323 = vpack.c.b16 %v3125, %v3123
        %v4324 = vpack.c.b16 %v3128, %v3126
        %v4325 = vpack.c.b16 %v3129, %v3127
        %v4326 = vpack.c.b16 %v3132, %v3130
        %v4327 = vpack.c.b16 %v3133, %v3131
        %v4328 = vpack.c.b16 %v3136, %v3134
        %v4329 = vpack.c.b16 %v3137, %v3135
        %v4330 = vpack.c.b16 %v3140, %v3138
        %v4331 = vpack.c.b16 %v3141, %v3139
        %v4332 = vpack.c.b16 %v3144, %v3142
        %v4333 = vpack.c.b16 %v3145, %v3143
        %v4334 = vpack.c.b16 %v3148, %v3146
        %v4335 = vpack.c.b16 %v3149, %v3147
        %v4336 = vpack.c.b16 %v3152, %v3150
        %v4337 = vpack.c.b16 %v3153, %v3151
        %v4338 = vpack.c.b16 %v3156, %v3154
        %v4339 = vpack.c.b16 %v3157, %v3155
        %v4340 = vpack.c.b16 %v3160, %v3158
        %v4341 = vpack.c.b16 %v3161, %v3159
        %v4342 = vpack.c.b16 %v3164, %v3162
        %v4343 = vpack.c.b16 %v3165, %v3163
        %v4344 = vpack.c.b16 %v3168, %v3166
        %v4345 = vpack.c.b16 %v3169, %v3167
        %v4346 = vpack.c.b16 %v3172, %v3170
        %v4347 = vpack.c.b16 %v3173, %v3171
        %v4348 = vpack.c.b16 %v3176, %v3174
        %v4349 = vpack.c.b16 %v3177, %v3175
        %v4350 = vpack.c.b16 %v3180, %v3178
        %v4351 = vpack.c.b16 %v3181, %v3179
        %v4352 = vpack.c.b16 %v3184, %v3182
        %v4353 = vpack.c.b16 %v3185, %v3183
        %v4354 = vpack.c.b16 %v3188, %v3186
        %v4355 = vpack.c.b16 %v3189, %v3187
        %v4356 = vpack.c.b16 %v3192, %v3190
        %v4357 = vpack.c.b16 %v3193, %v3191
        %v4358 = vpack.c.b16 %v3196, %v3194
        %v4359 = vpack.c.b16 %v3197, %v3195
        %v4360 = vpack.c.b16 %v3200, %v3198
        %v4361 = vpack.c.b16 %v3201, %v3199
        %v4362 = vpack.c.b16 %v3204, %v3202
        %v4363 = vpack.c.b16 %v3205, %v3203
        %v4364 = vpack.c.b16 %v3208, %v3206
        %v4365 = vpack.c.b16 %v3209, %v3207
        %v4366 = vpack.c.b16 %v3212, %v3210
        %v4367 = vpack.c.b16 %v3213, %v3211
        %v4368 = vpack.c.b16 %v3216, %v3214
        %v4369 = vpack.c.b16 %v3217, %v3215
        %v4370 = vpack.c.b16 %v3220, %v3218
        %v4371 = vpack.c.b16 %v3221, %v3219
        %v4372 = vpack.c.b16 %v3224, %v3222
        %v4373 = vpack.c.b16 %v3225, %v3223
        %v4374 = vpack.c.b16 %v3228, %v3226
        %v4375 = vpack.c.b16 %v3229, %v3227
        %v4376 = vpack.c.b16 %v3232, %v3230
        %v4377 = vpack.c.b16 %v3233, %v3231
        %v4378 = vpack.c.b16 %v3236, %v3234
        %v4379 = vpack.c.b16 %v3237, %v3235
        %v4380 = vpack.c.b16 %v3240, %v3238
        %v4381 = vpack.c.b16 %v3241, %v3239
        %v4382 = vpack.c.b16 %v3244, %v3242
        %v4383 = vpack.c.b16 %v3245, %v3243
        %v4384 = vpack.c.b16 %v3248, %v3246
        %v4385 = vpack.c.b16 %v3249, %v3247
        %v4386 = vpack.c.b16 %v3252, %v3250
        %v4387 = vpack.c.b16 %v3253, %v3251
        %v4388 = vpack.c.b16 %v3256, %v3254
        %v4389 = vpack.c.b16 %v3257, %v3255
        %v4390 = vpack.c.b16 %v3260, %v3258
        %v4391 = vpack.c.b16 %v3261, %v3259
        %v4392 = vpack.c.b16 %v3264, %v3262
        %v4393 = vpack.c.b16 %v3265, %v3263
        %v4394 = vpack.c.b16 %v3268, %v3266
        %v4395 = vpack.c.b16 %v3269, %v3267
        %v4396 = vpack.c.b16 %v3272, %v3270
        %v4397 = vpack.c.b16 %v3273, %v3271
        %v4398 = vpack.c.b16 %v3276, %v3274
        %v4399 = vpack.c.b16 %v3277, %v3275
        %v4400 = vpack.c.b16 %v3280, %v3278
        %v4401 = vpack.c.b16 %v3281, %v3279
        %v4402 = vpack.c.b16 %v3284, %v3282
        %v4403 = vpack.c.b16 %v3285, %v3283
        %v4404 = vpack.c.b16 %v3288, %v3286
        %v4405 = vpack.c.b16 %v3289, %v3287
        %v4406 = vpack.c.b16 %v3292, %v3290
        %v4407 = vpack.c.b16 %v3293, %v3291
        %v4408 = vpack.c.b16 %v3296, %v3294
        %v4409 = vpack.c.b16 %v3297, %v3295
        %v4410 = vpack.c.b16 %v3300, %v3298
        %v4411 = vpack.c.b16 %v3301, %v3299
        %v4412 = vpack.c.b16 %v3304, %v3302
        %v4413 = vpack.c.b16 %v3305, %v3303
        %v4414 = vpack.c.b16 %v3308, %v3306
        %v4415 = vpack.c.b16 %v3309, %v3307
        %v4416 = vpack.c.b16 %v3312, %v3310
        %v4417 = vpack.c.b16 %v3313, %v3311
        %v4418 = vpack.c.b16 %v3316, %v3314
        %v4419 = vpack.c.b16 %v3317, %v3315
        %v4420 = vpack.c.b16 %v3320, %v3318
        %v4421 = vpack.c.b16 %v3321, %v3319
        %v4422 = vpack.c.b16 %v3324, %v3322
        %v4423 = vpack.c.b16 %v3325, %v3323
        %v4424 = vpack.c.b16 %v3328, %v3326
        %v4425 = vpack.c.b16 %v3329, %v3327
        %v4426 = vpack.c.b16 %v3332, %v3330
        %v4427 = vpack.c.b16 %v3333, %v3331
        %v4428 = vpack.c.b16 %v3336, %v3334
        %v4429 = vpack.c.b16 %v3337, %v3335
        %v4430 = vpack.c.b16 %v3340, %v3338
        %v4431 = vpack.c.b16 %v3341, %v3339
        %v4432 = vpack.c.b16 %v3344, %v3342
        %v4433 = vpack.c.b16 %v3345, %v3343
        %v4434 = vpack.c.b16 %v3348, %v3346
        %v4435 = vpack.c.b16 %v3349, %v3347
        %v4436 = vpack.c.b16 %v3352, %v3350
        %v4437 = vpack.c.b16 %v3353, %v3351
        %v4438 = vpack.c.b16 %v3356, %v3354
        %v4439 = vpack.c.b16 %v3357, %v3355
        %v4440 = vpack.c.b16 %v3360, %v3358
        %v4441 = vpack.c.b16 %v3361, %v3359
        %v4442 = vpack.c.b16 %v3364, %v3362
        %v4443 = vpack.c.b16 %v3365, %v3363
        %v4444 = vpack.c.b16 %v3368, %v3366
        %v4445 = vpack.c.b16 %v3369, %v3367
        %v4446 = vpack.c.b16 %v3372, %v3370
        %v4447 = vpack.c.b16 %v3373, %v3371
        %v4448 = vpack.c.b16 %v3376, %v3374
        %v4449 = vpack.c.b16 %v3377, %v3375
        %v4450 = vpack.c.b16 %v3380, %v3378
        %v4451 = vpack.c.b16 %v3381, %v3379
        %v4452 = vpack.c.b16 %v3384, %v3382
        %v4453 = vpack.c.b16 %v3385, %v3383
        %v4454 = vpack.c.b16 %v3388, %v3386
        %v4455 = vpack.c.b16 %v3389, %v3387
        %v4456 = vpack.c.b16 %v3392, %v3390
        %v4457 = vpack.c.b16 %v3393, %v3391
        %v4458 = vpack.c.b16 %v3396, %v3394
        %v4459 = vpack.c.b16 %v3397, %v3395
        %v4460 = vpack.c.b16 %v3400, %v3398
        %v4461 = vpack.c.b16 %v3401, %v3399
        %v4462 = vpack.c.b16 %v3404, %v3402
        %v4463 = vpack.c.b16 %v3405, %v3403
        %v4464 = vpack.c.b16 %v3408, %v3406
        %v4465 = vpack.c.b16 %v3409, %v3407
        %v4466 = vpack.c.b16 %v3412, %v3410
        %v4467 = vpack.c.b16 %v3413, %v3411
        %v4468 = vpack.c.b16 %v3416, %v3414
        %v4469 = vpack.c.b16 %v3417, %v3415
        %v4470 = vpack.c.b16 %v3420, %v3418
        %v4471 = vpack.c.b16 %v3421, %v3419
        %v4472 = vpack.c.b16 %v3424, %v3422
        %v4473 = vpack.c.b16 %v3425, %v3423
        %v4474 = vpack.c.b16 %v3428, %v3426
        %v4475 = vpack.c.b16 %v3429, %v3427
        %v4476 = vpack.c.b16 %v3432, %v3430
        %v4477 = vpack.c.b16 %v3433, %v3431
        %v4478 = vpack.c.b16 %v3436, %v3434
        %v4479 = vpack.c.b16 %v3437, %v3435
        %v4480 = vpack.c.b16 %v3440, %v3438
        %v4481 = vpack.c.b16 %v3441, %v3439
        %v4482 = vpack.c.b16 %v3444, %v3442
        %v4483 = vpack.c.b16 %v3445, %v3443
        %v4484 = vpack.c.b16 %v3448, %v3446
        %v4485 = vpack.c.b16 %v3449, %v3447
        %v4486 = vpack.c.b16 %v3452, %v3450
        %v4487 = vpack.c.b16 %v3453, %v3451
        %v4488 = vpack.c.b16 %v3456, %v3454
        %v4489 = vpack.c.b16 %v3457, %v3455
        %v4490 = vpack.c.b16 %v3460, %v3458
        %v4491 = vpack.c.b16 %v3461, %v3459
        %v4492 = vpack.c.b16 %v3464, %v3462
        %v4493 = vpack.c.b16 %v3465, %v3463
        %v4494 = vpack.c.b16 %v3468, %v3466
        %v4495 = vpack.c.b16 %v3469, %v3467
        %v4496 = vpack.c.b16 %v3472, %v3470
        %v4497 = vpack.c.b16 %v3473, %v3471
        %v4498 = vpack.c.b16 %v3476, %v3474
        %v4499 = vpack.c.b16 %v3477, %v3475
        %v4500 = vpack.c.b16 %v3480, %v3478
        %v4501 = vpack.c.b16 %v3481, %v3479
        %v4502 = vpack.c.b16 %v3484, %v3482
        %v4503 = vpack.c.b16 %v3485, %v3483
        %v4504 = vpack.c.b16 %v3488, %v3486
        %v4505 = vpack.c.b16 %v3489, %v3487
        %v4506 = vpack.c.b16 %v3492, %v3490
        %v4507 = vpack.c.b16 %v3493, %v3491
        %v4508 = vpack.c.b16 %v3496, %v3494
        %v4509 = vpack.c.b16 %v3497, %v3495
        %v4510 = vpack.c.b16 %v3500, %v3498
        %v4511 = vpack.c.b16 %v3501, %v3499
        %v4512 = vpack.c.b16 %v3504, %v3502
        %v4513 = vpack.c.b16 %v3505, %v3503
        %v4514 = vpack.c.b16 %v3508, %v3506
        %v4515 = vpack.c.b16 %v3509, %v3507
        %v4516 = vpack.c.b16 %v3512, %v3510
        %v4517 = vpack.c.b16 %v3513, %v3511
        %v4518 = vpack.c.b16 %v3516, %v3514
        %v4519 = vpack.c.b16 %v3517, %v3515
        %v4520 = vpack.c.b16 %v3520, %v3518
        %v4521 = vpack.c.b16 %v3521, %v3519
        %v4522 = vpack.c.b16 %v3524, %v3522
        %v4523 = vpack.c.b16 %v3525, %v3523
        %v4524 = vpack.c.b16 %v3528, %v3526
        %v4525 = vpack.c.b16 %v3529, %v3527
        %v4526 = vpack.c.b16 %v3532, %v3530
        %v4527 = vpack.c.b16 %v3533, %v3531
        %v4528 = vpack.c.b16 %v3536, %v3534
        %v4529 = vpack.c.b16 %v3537, %v3535
        %v4530 = vpack.c.b16 %v3540, %v3538
        %v4531 = vpack.c.b16 %v3541, %v3539
        %v4532 = vpack.c.b16 %v3544, %v3542
        %v4533 = vpack.c.b16 %v3545, %v3543
        %v4534 = vpack.c.b16 %v3548, %v3546
        %v4535 = vpack.c.b16 %v3549, %v3547
        %v4536 = vpack.c.b16 %v3552, %v3550
        %v4537 = vpack.c.b16 %v3553, %v3551
        %v4538 = vpack.c.b16 %v3556, %v3554
        %v4539 = vpack.c.b16 %v3557, %v3555
        %v4540 = vpack.c.b16 %v3560, %v3558
        %v4541 = vpack.c.b16 %v3561, %v3559
        %v4542 = vpack.c.b16 %v3564, %v3562
        %v4543 = vpack.c.b16 %v3565, %v3563
        %v4544 = vpack.c.b16 %v3568, %v3566
        %v4545 = vpack.c.b16 %v3569, %v3567
        %v4546 = vpack.c.b16 %v3572, %v3570
        %v4547 = vpack.c.b16 %v3573, %v3571
        %v4548 = vpack.c.b16 %v3576, %v3574
        %v4549 = vpack.c.b16 %v3577, %v3575
        %v4550 = vpack.c.b16 %v3580, %v3578
        %v4551 = vpack.c.b16 %v3581, %v3579
        %v4552 = vpack.c.b16 %v3584, %v3582
        %v4553 = vpack.c.b16 %v3585, %v3583
        %v4554 = vpack.c.b16 %v3588, %v3586
        %v4555 = vpack.c.b16 %v3589, %v3587
        %v4556 = vpack.c.b16 %v3592, %v3590
        %v4557 = vpack.c.b16 %v3593, %v3591
        %v4558 = vpack.c.b16 %v3596, %v3594
        %v4559 = vpack.c.b16 %v3597, %v3595
        %v4560 = vpack.c.b16 %v3600, %v3598
        %v4561 = vpack.c.b16 %v3601, %v3599
        %v4562 = vpack.c.b16 %v3604, %v3602
        %v4563 = vpack.c.b16 %v3605, %v3603
        %v4564 = vpack.c.b16 %v3608, %v3606
        %v4565 = vpack.c.b16 %v3609, %v3607
        %v4566 = vpack.c.b16 %v3612, %v3610
        %v4567 = vpack.c.b16 %v3613, %v3611
        %v4568 = vpack.c.b16 %v3616, %v3614
        %v4569 = vpack.c.b16 %v3617, %v3615
        %v4570 = vpack.c.b16 %v3620, %v3618
        %v4571 = vpack.c.b16 %v3621, %v3619
        %v4572 = vpack.c.b16 %v3624, %v3622
        %v4573 = vpack.c.b16 %v3625, %v3623
        %v4574 = vpack.c.b16 %v3628, %v3626
        %v4575 = vpack.c.b16 %v3629, %v3627
        %v4576 = vpack.c.b16 %v3632, %v3630
        %v4577 = vpack.c.b16 %v3633, %v3631
        %v4578 = vpack.c.b16 %v3636, %v3634
        %v4579 = vpack.c.b16 %v3637, %v3635
        %v4580 = vpack.c.b16 %v3640, %v3638
        %v4581 = vpack.c.b16 %v3641, %v3639
        %v4582 = vpack.c.b16 %v3644, %v3642
        %v4583 = vpack.c.b16 %v3645, %v3643
        %v4584 = vpack.c.b16 %v3648, %v3646
        %v4585 = vpack.c.b16 %v3649, %v3647
        %v4586 = vpack.c.b16 %v3652, %v3650
        %v4587 = vpack.c.b16 %v3653, %v3651
        %v4588 = vpack.c.b16 %v3656, %v3654
        %v4589 = vpack.c.b16 %v3657, %v3655
        %v4590 = vpack.c.b16 %v3660, %v3658
        %v4591 = vpack.c.b16 %v3661, %v3659
        %v4592 = vpack.c.b16 %v3664, %v3662
        %v4593 = vpack.c.b16 %v3665, %v3663
        %v4594 = vpack.c.b16 %v3668, %v3666
        %v4595 = vpack.c.b16 %v3669, %v3667
        %v4596 = vpack.c.b16 %v3672, %v3670
        %v4597 = vpack.c.b16 %v3673, %v3671
        %v4598 = vpack.c.b16 %v3676, %v3674
        %v4599 = vpack.c.b16 %v3677, %v3675
        %v4600 = vpack.c.b16 %v3680, %v3678
        %v4601 = vpack.c.b16 %v3681, %v3679
        %v4602 = vpack.c.b16 %v3684, %v3682
        %v4603 = vpack.c.b16 %v3685, %v3683
        %v4604 = vpack.c.b16 %v3688, %v3686
        %v4605 = vpack.c.b16 %v3689, %v3687
        %v4606 = vpack.c.b16 %v3692, %v3690
        %v4607 = vpack.c.b16 %v3693, %v3691
        %v4608 = vpack.c.b16 %v3696, %v3694
        %v4609 = vpack.c.b16 %v3697, %v3695
        %v4610 = vpack.c.b16 %v3700, %v3698
        %v4611 = vpack.c.b16 %v3701, %v3699
        %v4612 = vpack.c.b16 %v3704, %v3702
        %v4613 = vpack.c.b16 %v3705, %v3703
        %v4614 = vpack.c.b16 %v3708, %v3706
        %v4615 = vpack.c.b16 %v3709, %v3707
        %v4616 = vpack.c.b16 %v3712, %v3710
        %v4617 = vpack.c.b16 %v3713, %v3711
        %v4618 = vpack.c.b16 %v3716, %v3714
        %v4619 = vpack.c.b16 %v3717, %v3715
        %v4620 = vpack.c.b16 %v3720, %v3718
        %v4621 = vpack.c.b16 %v3721, %v3719
        %v4622 = vpack.c.b16 %v3724, %v3722
        %v4623 = vpack.c.b16 %v3725, %v3723
        %v4624 = vpack.c.b16 %v3728, %v3726
        %v4625 = vpack.c.b16 %v3729, %v3727
        %v4626 = vpack.c.b16 %v3732, %v3730
        %v4627 = vpack.c.b16 %v3733, %v3731
        %v4628 = vpack.c.b16 %v3736, %v3734
        %v4629 = vpack.c.b16 %v3737, %v3735
        %v4630 = vpack.c.b16 %v3740, %v3738
        %v4631 = vpack.c.b16 %v3741, %v3739
        %v4632 = vpack.c.b16 %v3744, %v3742
        %v4633 = vpack.c.b16 %v3745, %v3743
        %v4634 = vpack.c.b16 %v3748, %v3746
        %v4635 = vpack.c.b16 %v3749, %v3747
        %v4636 = vpack.c.b16 %v3752, %v3750
        %v4637 = vpack.c.b16 %v3753, %v3751
        %v4638 = vpack.c.b16 %v3756, %v3754
        %v4639 = vpack.c.b16 %v3757, %v3755
        %v4640 = vpack.c.b16 %v3760, %v3758
        %v4641 = vpack.c.b16 %v3761, %v3759
        %v4642 = vpack.c.b16 %v3764, %v3762
        %v4643 = vpack.c.b16 %v3765, %v3763
        %v4644 = vpack.c.b16 %v3768, %v3766
        %v4645 = vpack.c.b16 %v3769, %v3767
        %v4646 = vpack.c.b16 %v3772, %v3770
        %v4647 = vpack.c.b16 %v3773, %v3771
        %v4648 = vpack.c.b16 %v3776, %v3774
        %v4649 = vpack.c.b16 %v3777, %v3775
        %v4650 = vpack.c.b16 %v3780, %v3778
        %v4651 = vpack.c.b16 %v3781, %v3779
        %v4652 = vpack.c.b16 %v3784, %v3782
        %v4653 = vpack.c.b16 %v3785, %v3783
        %v4654 = vpack.c.b16 %v3788, %v3786
        %v4655 = vpack.c.b16 %v3789, %v3787
        %v4656 = vpack.c.b16 %v3792, %v3790
        %v4657 = vpack.c.b16 %v3793, %v3791
        %v4658 = vpack.c.b16 %v3796, %v3794
        %v4659 = vpack.c.b16 %v3797, %v3795
        %v4660 = vpack.c.b16 %v3800, %v3798
        %v4661 = vpack.c.b16 %v3801, %v3799
        %v4662 = vpack.c.b16 %v3804, %v3802
        %v4663 = vpack.c.b16 %v3805, %v3803
        %v4664 = vpack.c.b16 %v3808, %v3806
        %v4665 = vpack.c.b16 %v3809, %v3807
        %v4666 = vpack.c.b16 %v3812, %v3810
        %v4667 = vpack.c.b16 %v3813, %v3811
        %v4668 = vpack.c.b16 %v3816, %v3814
        %v4669 = vpack.c.b16 %v3817, %v3815
        %v4670 = vpack.c.b16 %v3820, %v3818
        %v4671 = vpack.c.b16 %v3821, %v3819
        %v4672 = vpack.c.b16 %v3824, %v3822
        %v4673 = vpack.c.b16 %v3825, %v3823
        %v4674 = vpack.c.b16 %v3828, %v3826
        %v4675 = vpack.c.b16 %v3829, %v3827
        %v4676 = vpack.c.b16 %v3832, %v3830
        %v4677 = vpack.c.b16 %v3833, %v3831
        %v4678 = vpack.c.b16 %v3836, %v3834
        %v4679 = vpack.c.b16 %v3837, %v3835
        %v4680 = vpack.c.b16 %v3840, %v3838
        %v4681 = vpack.c.b16 %v3841, %v3839
        %v4682 = vpack.c.b16 %v3844, %v3842
        %v4683 = vpack.c.b16 %v3845, %v3843
        %v4684 = vpack.c.b16 %v3848, %v3846
        %v4685 = vpack.c.b16 %v3849, %v3847
        %v4686 = vpack.c.b16 %v3852, %v3850
        %v4687 = vpack.c.b16 %v3853, %v3851
        %v4688 = vpack.c.b16 %v3856, %v3854
        %v4689 = vpack.c.b16 %v3857, %v3855
        %v4690 = vpack.c.b16 %v3860, %v3858
        %v4691 = vpack.c.b16 %v3861, %v3859
        %v4692 = vpack.c.b16 %v3864, %v3862
        %v4693 = vpack.c.b16 %v3865, %v3863
        %v4694 = vpack.c.b16 %v3868, %v3866
        %v4695 = vpack.c.b16 %v3869, %v3867
        %v4696 = vpack.c.b16 %v3872, %v3870
        %v4697 = vpack.c.b16 %v3873, %v3871
        %v4698 = vpack.c.b16 %v3876, %v3874
        %v4699 = vpack.c.b16 %v3877, %v3875
        %v4700 = vpack.c.b16 %v3880, %v3878
        %v4701 = vpack.c.b16 %v3881, %v3879
        %v4702 = vpack.c.b16 %v3884, %v3882
        %v4703 = vpack.c.b16 %v3885, %v3883
        %v4704 = vpack.c.b16 %v3888, %v3886
        %v4705 = vpack.c.b16 %v3889, %v3887
        %v4706 = vpack.c.b16 %v3892, %v3890
        %v4707 = vpack.c.b16 %v3893, %v3891
        %v4708 = vpack.c.b16 %v3896, %v3894
        %v4709 = vpack.c.b16 %v3897, %v3895
        %v4710 = vpack.c.b16 %v3900, %v3898
        %v4711 = vpack.c.b16 %v3901, %v3899
        %v4712 = vpack.c.b16 %v3904, %v3902
        %v4713 = vpack.c.b16 %v3905, %v3903
        %v4714 = vpack.c.b16 %v3908, %v3906
        %v4715 = vpack.c.b16 %v3909, %v3907
        %v4716 = vpack.c.b16 %v3912, %v3910
        %v4717 = vpack.c.b16 %v3913, %v3911
        %v4718 = vpack.c.b16 %v3916, %v3914
        %v4719 = vpack.c.b16 %v3917, %v3915
        %v4720 = vpack.c.b16 %v3920, %v3918
        %v4721 = vpack.c.b16 %v3921, %v3919
        %v4722 = vpack.c.b16 %v3924, %v3922
        %v4723 = vpack.c.b16 %v3925, %v3923
        %v4724 = vpack.c.b16 %v3928, %v3926
        %v4725 = vpack.c.b16 %v3929, %v3927
        %v4726 = vpack.c.b16 %v3932, %v3930
        %v4727 = vpack.c.b16 %v3933, %v3931
        %v4728 = vpack.c.b16 %v3936, %v3934
        %v4729 = vpack.c.b16 %v3937, %v3935
        %v4730 = vpack.c.b16 %v3940, %v3938
        %v4731 = vpack.c.b16 %v3941, %v3939
        %v4732 = vpack.c.b16 %v3944, %v3942
        %v4733 = vpack.c.b16 %v3945, %v3943
        %v4734 = vpack.c.b16 %v3948, %v3946
        %v4735 = vpack.c.b16 %v3949, %v3947
        %v4736 = vpack.c.b16 %v3952, %v3950
        %v4737 = vpack.c.b16 %v3953, %v3951
        %v4738 = vpack.c.b16 %v3956, %v3954
        %v4739 = vpack.c.b16 %v3957, %v3955
        %v4740 = vpack.c.b16 %v3960, %v3958
        %v4741 = vpack.c.b16 %v3961, %v3959
        %v4742 = vpack.c.b16 %v3964, %v3962
        %v4743 = vpack.c.b16 %v3965, %v3963
        %v4744 = vpack.c.b16 %v3968, %v3966
        %v4745 = vpack.c.b16 %v3969, %v3967
        %v4746 = vpack.c.b16 %v3972, %v3970
        %v4747 = vpack.c.b16 %v3973, %v3971
        %v4748 = vpack.c.b16 %v3976, %v3974
        %v4749 = vpack.c.b16 %v3977, %v3975
        %v4750 = vpack.c.b16 %v3980, %v3978
        %v4751 = vpack.c.b16 %v3981, %v3979
        %v4752 = vpack.c.b16 %v3984, %v3982
        %v4753 = vpack.c.b16 %v3985, %v3983
        %5522 = vmatprep.subr.bf16.mxu0 %v3987
        %5523 = vmatpush1.bf16.msra.mxu0 %v3986
        %5524 = vmatprep.subr.bf16.mxu0 %v3989
        %5525 = vmatpush1.bf16.msra.mxu0 %v3988
        %5526 = vmatprep.subr.bf16.mxu0 %v3991
        %5527 = vmatpush1.bf16.msra.mxu0 %v3990
        %5528 = vmatprep.subr.bf16.mxu0 %v3993
        %5529 = vmatpush1.bf16.msra.mxu0 %v3992
        %5530 = vmatprep.subr.bf16.mxu0 %v3995
        %5531 = vmatpush1.bf16.msra.mxu0 %v3994
        %5532 = vmatprep.subr.bf16.mxu0 %v3997
        %5533 = vmatpush1.bf16.msra.mxu0 %v3996
        %5534 = vmatprep.subr.bf16.mxu0 %v3999
        %5535 = vmatpush1.bf16.msra.mxu0 %v3998
        %5536 = vmatprep.subr.bf16.mxu0 %v4001
        %5537 = vmatpush1.bf16.msra.mxu0 %v4000
        %5538 = vmatprep.subr.bf16.mxu0 %v4003
        %5539 = vmatpush1.bf16.msra.mxu0 %v4002
        %5540 = vmatprep.subr.bf16.mxu0 %v4005
        %5541 = vmatpush1.bf16.msra.mxu0 %v4004
        %5542 = vmatprep.subr.bf16.mxu0 %v4007
        %5543 = vmatpush1.bf16.msra.mxu0 %v4006
        %5544 = vmatprep.subr.bf16.mxu0 %v4009
        %5545 = vmatpush1.bf16.msra.mxu0 %v4008
        %5546 = vmatprep.subr.bf16.mxu0 %v4011
        %5547 = vmatpush1.bf16.msra.mxu0 %v4010
        %5548 = vmatprep.subr.bf16.mxu0 %v4013
        %5549 = vmatpush1.bf16.msra.mxu0 %v4012
        %5550 = vmatprep.subr.bf16.mxu0 %v4015
        %5551 = vmatpush1.bf16.msra.mxu0 %v4014
        %5552 = vmatprep.subr.bf16.mxu0 %v4017
        %5553 = vmatpush1.bf16.msra.mxu0 %v4016
        %5554 = vmatprep.mubr.bf16.mxu0 %v1587
        %5555 = vmatmul.mubr.bf16.gmra.mrb[0].mxu0 %v1586
        %v5556 = vpop.f32.mrb[0].mxu0
        %v5557 = vadd.f32 0.0, %v5556
        %v5558 = vpop.f32.mrb[0].mxu0
        %v5559 = vadd.f32 0.0, %v5558
        %v5560 = vpop.f32.mrb[0].mxu0
        %v5561 = vpop.f32.mrb[0].mxu0
        %5562 = vdwg.mxu0
        %5563 = vmatprep.subr.bf16.mxu0 %v4019
        %5564 = vmatpush1.bf16.msra.mxu0 %v4018
        %5565 = vmatprep.subr.bf16.mxu0 %v4021
        %5566 = vmatpush1.bf16.msra.mxu0 %v4020
        %5567 = vmatprep.subr.bf16.mxu0 %v4023
        %5568 = vmatpush1.bf16.msra.mxu0 %v4022
        %5569 = vmatprep.subr.bf16.mxu0 %v4025
        %5570 = vmatpush1.bf16.msra.mxu0 %v4024
        %5571 = vmatprep.subr.bf16.mxu0 %v4027
        %5572 = vmatpush1.bf16.msra.mxu0 %v4026
        %5573 = vmatprep.subr.bf16.mxu0 %v4029
        %5574 = vmatpush1.bf16.msra.mxu0 %v4028
        %5575 = vmatprep.subr.bf16.mxu0 %v4031
        %5576 = vmatpush1.bf16.msra.mxu0 %v4030
        %5577 = vmatprep.subr.bf16.mxu0 %v4033
        %5578 = vmatpush1.bf16.msra.mxu0 %v4032
        %5579 = vmatprep.subr.bf16.mxu0 %v4035
        %5580 = vmatpush1.bf16.msra.mxu0 %v4034
        %5581 = vmatprep.subr.bf16.mxu0 %v4037
        %5582 = vmatpush1.bf16.msra.mxu0 %v4036
        %5583 = vmatprep.subr.bf16.mxu0 %v4039
        %5584 = vmatpush1.bf16.msra.mxu0 %v4038
        %5585 = vmatprep.subr.bf16.mxu0 %v4041
        %5586 = vmatpush1.bf16.msra.mxu0 %v4040
        %5587 = vmatprep.subr.bf16.mxu0 %v4043
        %5588 = vmatpush1.bf16.msra.mxu0 %v4042
        %5589 = vmatprep.subr.bf16.mxu0 %v4045
        %5590 = vmatpush1.bf16.msra.mxu0 %v4044
        %5591 = vmatprep.subr.bf16.mxu0 %v4047
        %5592 = vmatpush1.bf16.msra.mxu0 %v4046
        %5593 = vmatprep.subr.bf16.mxu0 %v4049
        %5594 = vmatpush1.bf16.msra.mxu0 %v4048
        %5595 = vmatprep.mubr.bf16.mxu0 %v1589
        %5596 = vmatmul.mubr.bf16.gmra.mrb[0].mxu0 %v1588
        %v5597 = vpop.f32.mrb[0].mxu0
        %v5598 = vadd.f32 %v5557, %v5597
        %v5599 = vpop.f32.mrb[0].mxu0
        %v5600 = vadd.f32 %v5559, %v5599
        %v5601 = vpop.f32.mrb[0].mxu0
        %v5602 = vpop.f32.mrb[0].mxu0
        %5603 = vdwg.mxu0
        %5604 = vmatprep.subr.bf16.mxu0 %v4051
        %5605 = vmatpush1.bf16.msra.mxu0 %v4050
        %5606 = vmatprep.subr.bf16.mxu0 %v4053
        %5607 = vmatpush1.bf16.msra.mxu0 %v4052
        %5608 = vmatprep.subr.bf16.mxu0 %v4055
        %5609 = vmatpush1.bf16.msra.mxu0 %v4054
        %5610 = vmatprep.subr.bf16.mxu0 %v4057
        %5611 = vmatpush1.bf16.msra.mxu0 %v4056
        %5612 = vmatprep.subr.bf16.mxu0 %v4059
        %5613 = vmatpush1.bf16.msra.mxu0 %v4058
        %5614 = vmatprep.subr.bf16.mxu0 %v4061
        %5615 = vmatpush1.bf16.msra.mxu0 %v4060
        %5616 = vmatprep.subr.bf16.mxu0 %v4063
        %5617 = vmatpush1.bf16.msra.mxu0 %v4062
        %5618 = vmatprep.subr.bf16.mxu0 %v4065
        %5619 = vmatpush1.bf16.msra.mxu0 %v4064
        %5620 = vmatprep.subr.bf16.mxu0 %v4067
        %5621 = vmatpush1.bf16.msra.mxu0 %v4066
        %5622 = vmatprep.subr.bf16.mxu0 %v4069
        %5623 = vmatpush1.bf16.msra.mxu0 %v4068
        %5624 = vmatprep.subr.bf16.mxu0 %v4071
        %5625 = vmatpush1.bf16.msra.mxu0 %v4070
        %5626 = vmatprep.subr.bf16.mxu0 %v4073
        %5627 = vmatpush1.bf16.msra.mxu0 %v4072
        %5628 = vmatprep.subr.bf16.mxu0 %v4075
        %5629 = vmatpush1.bf16.msra.mxu0 %v4074
        %5630 = vmatprep.subr.bf16.mxu0 %v4077
        %5631 = vmatpush1.bf16.msra.mxu0 %v4076
        %5632 = vmatprep.subr.bf16.mxu0 %v4079
        %5633 = vmatpush1.bf16.msra.mxu0 %v4078
        %5634 = vmatprep.subr.bf16.mxu0 %v4081
        %5635 = vmatpush1.bf16.msra.mxu0 %v4080
        %5636 = vmatprep.mubr.bf16.mxu0 %v1591
        %5637 = vmatmul.mubr.bf16.gmra.mrb[0].mxu0 %v1590
        %v5638 = vpop.f32.mrb[0].mxu0
        %v5639 = vadd.f32 %v5598, %v5638
        %v5640 = vpop.f32.mrb[0].mxu0
        %v5641 = vadd.f32 %v5600, %v5640
        %v5642 = vpop.f32.mrb[0].mxu0
        %v5643 = vpop.f32.mrb[0].mxu0
        %5644 = vdwg.mxu0
        %5645 = vmatprep.subr.bf16.mxu0 %v4083
        %5646 = vmatpush1.bf16.msra.mxu0 %v4082
        %5647 = vmatprep.subr.bf16.mxu0 %v4085
        %5648 = vmatpush1.bf16.msra.mxu0 %v4084
        %5649 = vmatprep.subr.bf16.mxu0 %v4087
        %5650 = vmatpush1.bf16.msra.mxu0 %v4086
        %5651 = vmatprep.subr.bf16.mxu0 %v4089
        %5652 = vmatpush1.bf16.msra.mxu0 %v4088
        %5653 = vmatprep.subr.bf16.mxu0 %v4091
        %5654 = vmatpush1.bf16.msra.mxu0 %v4090
        %5655 = vmatprep.subr.bf16.mxu0 %v4093
        %5656 = vmatpush1.bf16.msra.mxu0 %v4092
        %5657 = vmatprep.subr.bf16.mxu0 %v4095
        %5658 = vmatpush1.bf16.msra.mxu0 %v4094
        %5659 = vmatprep.subr.bf16.mxu0 %v4097
        %5660 = vmatpush1.bf16.msra.mxu0 %v4096
        %5661 = vmatprep.subr.bf16.mxu0 %v4099
        %5662 = vmatpush1.bf16.msra.mxu0 %v4098
        %5663 = vmatprep.subr.bf16.mxu0 %v4101
        %5664 = vmatpush1.bf16.msra.mxu0 %v4100
        %5665 = vmatprep.subr.bf16.mxu0 %v4103
        %5666 = vmatpush1.bf16.msra.mxu0 %v4102
        %5667 = vmatprep.subr.bf16.mxu0 %v4105
        %5668 = vmatpush1.bf16.msra.mxu0 %v4104
        %5669 = vmatprep.subr.bf16.mxu0 %v4107
        %5670 = vmatpush1.bf16.msra.mxu0 %v4106
        %5671 = vmatprep.subr.bf16.mxu0 %v4109
        %5672 = vmatpush1.bf16.msra.mxu0 %v4108
        %5673 = vmatprep.subr.bf16.mxu0 %v4111
        %5674 = vmatpush1.bf16.msra.mxu0 %v4110
        %5675 = vmatprep.subr.bf16.mxu0 %v4113
        %5676 = vmatpush1.bf16.msra.mxu0 %v4112
        %5677 = vmatprep.mubr.bf16.mxu0 %v1593
        %5678 = vmatmul.mubr.bf16.gmra.mrb[0].mxu0 %v1592
        %v5679 = vpop.f32.mrb[0].mxu0
        %v5680 = vadd.f32 %v5639, %v5679
        %v5681 = vpop.f32.mrb[0].mxu0
        %v5682 = vadd.f32 %v5641, %v5681
        %v5683 = vpop.f32.mrb[0].mxu0
        %v5684 = vpop.f32.mrb[0].mxu0
        %5685 = vdwg.mxu0
        %5686 = vmatprep.subr.bf16.mxu0 %v4115
        %5687 = vmatpush1.bf16.msra.mxu0 %v4114
        %5688 = vmatprep.subr.bf16.mxu0 %v4117
        %5689 = vmatpush1.bf16.msra.mxu0 %v4116
        %5690 = vmatprep.subr.bf16.mxu0 %v4119
        %5691 = vmatpush1.bf16.msra.mxu0 %v4118
        %5692 = vmatprep.subr.bf16.mxu0 %v4121
        %5693 = vmatpush1.bf16.msra.mxu0 %v4120
        %5694 = vmatprep.subr.bf16.mxu0 %v4123
        %5695 = vmatpush1.bf16.msra.mxu0 %v4122
        %5696 = vmatprep.subr.bf16.mxu0 %v4125
        %5697 = vmatpush1.bf16.msra.mxu0 %v4124
        %5698 = vmatprep.subr.bf16.mxu0 %v4127
        %5699 = vmatpush1.bf16.msra.mxu0 %v4126
        %5700 = vmatprep.subr.bf16.mxu0 %v4129
        %5701 = vmatpush1.bf16.msra.mxu0 %v4128
        %5702 = vmatprep.subr.bf16.mxu0 %v4131
        %5703 = vmatpush1.bf16.msra.mxu0 %v4130
        %5704 = vmatprep.subr.bf16.mxu0 %v4133
        %5705 = vmatpush1.bf16.msra.mxu0 %v4132
        %5706 = vmatprep.subr.bf16.mxu0 %v4135
        %5707 = vmatpush1.bf16.msra.mxu0 %v4134
        %5708 = vmatprep.subr.bf16.mxu0 %v4137
        %5709 = vmatpush1.bf16.msra.mxu0 %v4136
        %5710 = vmatprep.subr.bf16.mxu0 %v4139
        %5711 = vmatpush1.bf16.msra.mxu0 %v4138
        %5712 = vmatprep.subr.bf16.mxu0 %v4141
        %5713 = vmatpush1.bf16.msra.mxu0 %v4140
        %5714 = vmatprep.subr.bf16.mxu0 %v4143
        %5715 = vmatpush1.bf16.msra.mxu0 %v4142
        %5716 = vmatprep.subr.bf16.mxu0 %v4145
        %5717 = vmatpush1.bf16.msra.mxu0 %v4144
        %5718 = vmatprep.mubr.bf16.mxu0 %v1595
        %5719 = vmatmul.mubr.bf16.gmra.mrb[0].mxu0 %v1594
        %v5720 = vpop.f32.mrb[0].mxu0
        %v5721 = vadd.f32 %v5680, %v5720
        %v5722 = vpop.f32.mrb[0].mxu0
        %v5723 = vadd.f32 %v5682, %v5722
        %v5724 = vpop.f32.mrb[0].mxu0
        %v5725 = vpop.f32.mrb[0].mxu0
        %5726 = vdwg.mxu0
        %5727 = vmatprep.subr.bf16.mxu0 %v4147
        %5728 = vmatpush1.bf16.msra.mxu0 %v4146
        %5729 = vmatprep.subr.bf16.mxu0 %v4149
        %5730 = vmatpush1.bf16.msra.mxu0 %v4148
        %5731 = vmatprep.subr.bf16.mxu0 %v4151
        %5732 = vmatpush1.bf16.msra.mxu0 %v4150
        %5733 = vmatprep.subr.bf16.mxu0 %v4153
        %5734 = vmatpush1.bf16.msra.mxu0 %v4152
        %5735 = vmatprep.subr.bf16.mxu0 %v4155
        %5736 = vmatpush1.bf16.msra.mxu0 %v4154
        %5737 = vmatprep.subr.bf16.mxu0 %v4157
        %5738 = vmatpush1.bf16.msra.mxu0 %v4156
        %5739 = vmatprep.subr.bf16.mxu0 %v4159
        %5740 = vmatpush1.bf16.msra.mxu0 %v4158
        %5741 = vmatprep.subr.bf16.mxu0 %v4161
        %5742 = vmatpush1.bf16.msra.mxu0 %v4160
        %5743 = vmatprep.subr.bf16.mxu0 %v4163
        %5744 = vmatpush1.bf16.msra.mxu0 %v4162
        %5745 = vmatprep.subr.bf16.mxu0 %v4165
        %5746 = vmatpush1.bf16.msra.mxu0 %v4164
        %5747 = vmatprep.subr.bf16.mxu0 %v4167
        %5748 = vmatpush1.bf16.msra.mxu0 %v4166
        %5749 = vmatprep.subr.bf16.mxu0 %v4169
        %5750 = vmatpush1.bf16.msra.mxu0 %v4168
        %5751 = vmatprep.subr.bf16.mxu0 %v4171
        %5752 = vmatpush1.bf16.msra.mxu0 %v4170
        %5753 = vmatprep.subr.bf16.mxu0 %v4173
        %5754 = vmatpush1.bf16.msra.mxu0 %v4172
        %5755 = vmatprep.subr.bf16.mxu0 %v4175
        %5756 = vmatpush1.bf16.msra.mxu0 %v4174
        %5757 = vmatprep.subr.bf16.mxu0 %v4177
        %5758 = vmatpush1.bf16.msra.mxu0 %v4176
        %5759 = vmatprep.mubr.bf16.mxu0 %v1597
        %5760 = vmatmul.mubr.bf16.gmra.mrb[0].mxu0 %v1596
        %v5761 = vpop.f32.mrb[0].mxu0
        %v5762 = vadd.f32 %v5721, %v5761
        %v5763 = vpop.f32.mrb[0].mxu0
        %v5764 = vadd.f32 %v5723, %v5763
        %v5765 = vpop.f32.mrb[0].mxu0
        %v5766 = vpop.f32.mrb[0].mxu0
        %5767 = vdwg.mxu0
        %5768 = vmatprep.subr.bf16.mxu0 %v4179
        %5769 = vmatpush1.bf16.msra.mxu0 %v4178
        %5770 = vmatprep.subr.bf16.mxu0 %v4181
        %5771 = vmatpush1.bf16.msra.mxu0 %v4180
        %5772 = vmatprep.subr.bf16.mxu0 %v4183
        %5773 = vmatpush1.bf16.msra.mxu0 %v4182
        %5774 = vmatprep.subr.bf16.mxu0 %v4185
        %5775 = vmatpush1.bf16.msra.mxu0 %v4184
        %5776 = vmatprep.subr.bf16.mxu0 %v4187
        %5777 = vmatpush1.bf16.msra.mxu0 %v4186
        %5778 = vmatprep.subr.bf16.mxu0 %v4189
        %5779 = vmatpush1.bf16.msra.mxu0 %v4188
        %5780 = vmatprep.subr.bf16.mxu0 %v4191
        %5781 = vmatpush1.bf16.msra.mxu0 %v4190
        %5782 = vmatprep.subr.bf16.mxu0 %v4193
        %5783 = vmatpush1.bf16.msra.mxu0 %v4192
        %5784 = vmatprep.subr.bf16.mxu0 %v4195
        %5785 = vmatpush1.bf16.msra.mxu0 %v4194
        %5786 = vmatprep.subr.bf16.mxu0 %v4197
        %5787 = vmatpush1.bf16.msra.mxu0 %v4196
        %5788 = vmatprep.subr.bf16.mxu0 %v4199
        %5789 = vmatpush1.bf16.msra.mxu0 %v4198
        %5790 = vmatprep.subr.bf16.mxu0 %v4201
        %5791 = vmatpush1.bf16.msra.mxu0 %v4200
        %5792 = vmatprep.subr.bf16.mxu0 %v4203
        %5793 = vmatpush1.bf16.msra.mxu0 %v4202
        %5794 = vmatprep.subr.bf16.mxu0 %v4205
        %5795 = vmatpush1.bf16.msra.mxu0 %v4204
        %5796 = vmatprep.subr.bf16.mxu0 %v4207
        %5797 = vmatpush1.bf16.msra.mxu0 %v4206
        %5798 = vmatprep.subr.bf16.mxu0 %v4209
        %5799 = vmatpush1.bf16.msra.mxu0 %v4208
        %5800 = vmatprep.mubr.bf16.mxu0 %v1599
        %5801 = vmatmul.mubr.bf16.gmra.mrb[0].mxu0 %v1598
        %v5802 = vpop.f32.mrb[0].mxu0
        %v5803 = vadd.f32 %v5762, %v5802
        %v5804 = vpop.f32.mrb[0].mxu0
        %v5805 = vadd.f32 %v5764, %v5804
        %v5806 = vpop.f32.mrb[0].mxu0
        %v5807 = vpop.f32.mrb[0].mxu0
        %5808 = vdwg.mxu0
        %5809 = vmatprep.subr.bf16.mxu0 %v4211
        %5810 = vmatpush1.bf16.msra.mxu0 %v4210
        %5811 = vmatprep.subr.bf16.mxu0 %v4213
        %5812 = vmatpush1.bf16.msra.mxu0 %v4212
        %5813 = vmatprep.subr.bf16.mxu0 %v4215
        %5814 = vmatpush1.bf16.msra.mxu0 %v4214
        %5815 = vmatprep.subr.bf16.mxu0 %v4217
        %5816 = vmatpush1.bf16.msra.mxu0 %v4216
        %5817 = vmatprep.subr.bf16.mxu0 %v4219
        %5818 = vmatpush1.bf16.msra.mxu0 %v4218
        %5819 = vmatprep.subr.bf16.mxu0 %v4221
        %5820 = vmatpush1.bf16.msra.mxu0 %v4220
        %5821 = vmatprep.subr.bf16.mxu0 %v4223
        %5822 = vmatpush1.bf16.msra.mxu0 %v4222
        %5823 = vmatprep.subr.bf16.mxu0 %v4225
        %5824 = vmatpush1.bf16.msra.mxu0 %v4224
        %5825 = vmatprep.subr.bf16.mxu0 %v4227
        %5826 = vmatpush1.bf16.msra.mxu0 %v4226
        %5827 = vmatprep.subr.bf16.mxu0 %v4229
        %5828 = vmatpush1.bf16.msra.mxu0 %v4228
        %5829 = vmatprep.subr.bf16.mxu0 %v4231
        %5830 = vmatpush1.bf16.msra.mxu0 %v4230
        %5831 = vmatprep.subr.bf16.mxu0 %v4233
        %5832 = vmatpush1.bf16.msra.mxu0 %v4232
        %5833 = vmatprep.subr.bf16.mxu0 %v4235
        %5834 = vmatpush1.bf16.msra.mxu0 %v4234
        %5835 = vmatprep.subr.bf16.mxu0 %v4237
        %5836 = vmatpush1.bf16.msra.mxu0 %v4236
        %5837 = vmatprep.subr.bf16.mxu0 %v4239
        %5838 = vmatpush1.bf16.msra.mxu0 %v4238
        %5839 = vmatprep.subr.bf16.mxu0 %v4241
        %5840 = vmatpush1.bf16.msra.mxu0 %v4240
        %5841 = vmatprep.mubr.bf16.mxu0 %v1601
        %5842 = vmatmul.mubr.bf16.gmra.mrb[0].mxu0 %v1600
        %v5843 = vpop.f32.mrb[0].mxu0
        %v5844 = vadd.f32 %v5803, %v5843
        %v5845 = vpop.f32.mrb[0].mxu0
        %v5846 = vadd.f32 %v5805, %v5845
        %v5847 = vpop.f32.mrb[0].mxu0
        %v5848 = vpop.f32.mrb[0].mxu0
        %5849 = vdwg.mxu0
        %5850 = vmatprep.subr.bf16.mxu0 %v4243
        %5851 = vmatpush1.bf16.msra.mxu0 %v4242
        %5852 = vmatprep.subr.bf16.mxu0 %v4245
        %5853 = vmatpush1.bf16.msra.mxu0 %v4244
        %5854 = vmatprep.subr.bf16.mxu0 %v4247
        %5855 = vmatpush1.bf16.msra.mxu0 %v4246
        %5856 = vmatprep.subr.bf16.mxu0 %v4249
        %5857 = vmatpush1.bf16.msra.mxu0 %v4248
        %5858 = vmatprep.subr.bf16.mxu0 %v4251
        %5859 = vmatpush1.bf16.msra.mxu0 %v4250
        %5860 = vmatprep.subr.bf16.mxu0 %v4253
        %5861 = vmatpush1.bf16.msra.mxu0 %v4252
        %5862 = vmatprep.subr.bf16.mxu0 %v4255
        %5863 = vmatpush1.bf16.msra.mxu0 %v4254
        %5864 = vmatprep.subr.bf16.mxu0 %v4257
        %5865 = vmatpush1.bf16.msra.mxu0 %v4256
        %5866 = vmatprep.subr.bf16.mxu0 %v4259
        %5867 = vmatpush1.bf16.msra.mxu0 %v4258
        %5868 = vmatprep.subr.bf16.mxu0 %v4261
        %5869 = vmatpush1.bf16.msra.mxu0 %v4260
        %5870 = vmatprep.subr.bf16.mxu0 %v4263
        %5871 = vmatpush1.bf16.msra.mxu0 %v4262
        %5872 = vmatprep.subr.bf16.mxu0 %v4265
        %5873 = vmatpush1.bf16.msra.mxu0 %v4264
        %5874 = vmatprep.subr.bf16.mxu0 %v4267
        %5875 = vmatpush1.bf16.msra.mxu0 %v4266
        %5876 = vmatprep.subr.bf16.mxu0 %v4269
        %5877 = vmatpush1.bf16.msra.mxu0 %v4268
        %5878 = vmatprep.subr.bf16.mxu0 %v4271
        %5879 = vmatpush1.bf16.msra.mxu0 %v4270
        %5880 = vmatprep.subr.bf16.mxu0 %v4273
        %5881 = vmatpush1.bf16.msra.mxu0 %v4272
        %5882 = vmatprep.mubr.bf16.mxu0 %v1603
        %5883 = vmatmul.mubr.bf16.gmra.mrb[0].mxu0 %v1602
        %v5884 = vpop.f32.mrb[0].mxu0
        %v5885 = vadd.f32 %v5844, %v5884
        %v5886 = vpop.f32.mrb[0].mxu0
        %v5887 = vadd.f32 %v5846, %v5886
        %v5888 = vpop.f32.mrb[0].mxu0
        %v5889 = vpop.f32.mrb[0].mxu0
        %5890 = vdwg.mxu0
        %5891 = vmatprep.subr.bf16.mxu0 %v4275
        %5892 = vmatpush1.bf16.msra.mxu0 %v4274
        %5893 = vmatprep.subr.bf16.mxu0 %v4277
        %5894 = vmatpush1.bf16.msra.mxu0 %v4276
        %5895 = vmatprep.subr.bf16.mxu0 %v4279
        %5896 = vmatpush1.bf16.msra.mxu0 %v4278
        %5897 = vmatprep.subr.bf16.mxu0 %v4281
        %5898 = vmatpush1.bf16.msra.mxu0 %v4280
        %5899 = vmatprep.subr.bf16.mxu0 %v4283
        %5900 = vmatpush1.bf16.msra.mxu0 %v4282
        %5901 = vmatprep.subr.bf16.mxu0 %v4285
        %5902 = vmatpush1.bf16.msra.mxu0 %v4284
        %5903 = vmatprep.subr.bf16.mxu0 %v4287
        %5904 = vmatpush1.bf16.msra.mxu0 %v4286
        %5905 = vmatprep.subr.bf16.mxu0 %v4289
        %5906 = vmatpush1.bf16.msra.mxu0 %v4288
        %5907 = vmatprep.subr.bf16.mxu0 %v4291
        %5908 = vmatpush1.bf16.msra.mxu0 %v4290
        %5909 = vmatprep.subr.bf16.mxu0 %v4293
        %5910 = vmatpush1.bf16.msra.mxu0 %v4292
        %5911 = vmatprep.subr.bf16.mxu0 %v4295
        %5912 = vmatpush1.bf16.msra.mxu0 %v4294
        %5913 = vmatprep.subr.bf16.mxu0 %v4297
        %5914 = vmatpush1.bf16.msra.mxu0 %v4296
        %5915 = vmatprep.subr.bf16.mxu0 %v4299
        %5916 = vmatpush1.bf16.msra.mxu0 %v4298
        %5917 = vmatprep.subr.bf16.mxu0 %v4301
        %5918 = vmatpush1.bf16.msra.mxu0 %v4300
        %5919 = vmatprep.subr.bf16.mxu0 %v4303
        %5920 = vmatpush1.bf16.msra.mxu0 %v4302
        %5921 = vmatprep.subr.bf16.mxu0 %v4305
        %5922 = vmatpush1.bf16.msra.mxu0 %v4304
        %5923 = vmatprep.mubr.bf16.mxu0 %v1605
        %5924 = vmatmul.mubr.bf16.gmra.mrb[0].mxu0 %v1604
        %v5925 = vpop.f32.mrb[0].mxu0
        %v5926 = vadd.f32 %v5885, %v5925
        %v5927 = vpop.f32.mrb[0].mxu0
        %v5928 = vadd.f32 %v5887, %v5927
        %v5929 = vpop.f32.mrb[0].mxu0
        %v5930 = vpop.f32.mrb[0].mxu0
        %5931 = vdwg.mxu0
        %5932 = vmatprep.subr.bf16.mxu0 %v4307
        %5933 = vmatpush1.bf16.msra.mxu0 %v4306
        %5934 = vmatprep.subr.bf16.mxu0 %v4309
        %5935 = vmatpush1.bf16.msra.mxu0 %v4308
        %5936 = vmatprep.subr.bf16.mxu0 %v4311
        %5937 = vmatpush1.bf16.msra.mxu0 %v4310
        %5938 = vmatprep.subr.bf16.mxu0 %v4313
        %5939 = vmatpush1.bf16.msra.mxu0 %v4312
        %5940 = vmatprep.subr.bf16.mxu0 %v4315
        %5941 = vmatpush1.bf16.msra.mxu0 %v4314
        %5942 = vmatprep.subr.bf16.mxu0 %v4317
        %5943 = vmatpush1.bf16.msra.mxu0 %v4316
        %5944 = vmatprep.subr.bf16.mxu0 %v4319
        %5945 = vmatpush1.bf16.msra.mxu0 %v4318
        %5946 = vmatprep.subr.bf16.mxu0 %v4321
        %5947 = vmatpush1.bf16.msra.mxu0 %v4320
        %5948 = vmatprep.subr.bf16.mxu0 %v4323
        %5949 = vmatpush1.bf16.msra.mxu0 %v4322
        %5950 = vmatprep.subr.bf16.mxu0 %v4325
        %5951 = vmatpush1.bf16.msra.mxu0 %v4324
        %5952 = vmatprep.subr.bf16.mxu0 %v4327
        %5953 = vmatpush1.bf16.msra.mxu0 %v4326
        %5954 = vmatprep.subr.bf16.mxu0 %v4329
        %5955 = vmatpush1.bf16.msra.mxu0 %v4328
        %5956 = vmatprep.subr.bf16.mxu0 %v4331
        %5957 = vmatpush1.bf16.msra.mxu0 %v4330
        %5958 = vmatprep.subr.bf16.mxu0 %v4333
        %5959 = vmatpush1.bf16.msra.mxu0 %v4332
        %5960 = vmatprep.subr.bf16.mxu0 %v4335
        %5961 = vmatpush1.bf16.msra.mxu0 %v4334
        %5962 = vmatprep.subr.bf16.mxu0 %v4337
        %5963 = vmatpush1.bf16.msra.mxu0 %v4336
        %5964 = vmatprep.mubr.bf16.mxu0 %v1607
        %5965 = vmatmul.mubr.bf16.gmra.mrb[0].mxu0 %v1606
        %v5966 = vpop.f32.mrb[0].mxu0
        %v5967 = vadd.f32 %v5926, %v5966
        %v5968 = vpop.f32.mrb[0].mxu0
        %v5969 = vadd.f32 %v5928, %v5968
        %v5970 = vpop.f32.mrb[0].mxu0
        %v5971 = vpop.f32.mrb[0].mxu0
        %5972 = vdwg.mxu0
        %5973 = vmatprep.subr.bf16.mxu0 %v4339
        %5974 = vmatpush1.bf16.msra.mxu0 %v4338
        %5975 = vmatprep.subr.bf16.mxu0 %v4341
        %5976 = vmatpush1.bf16.msra.mxu0 %v4340
        %5977 = vmatprep.subr.bf16.mxu0 %v4343
        %5978 = vmatpush1.bf16.msra.mxu0 %v4342
        %5979 = vmatprep.subr.bf16.mxu0 %v4345
        %5980 = vmatpush1.bf16.msra.mxu0 %v4344
        %5981 = vmatprep.subr.bf16.mxu0 %v4347
        %5982 = vmatpush1.bf16.msra.mxu0 %v4346
        %5983 = vmatprep.subr.bf16.mxu0 %v4349
        %5984 = vmatpush1.bf16.msra.mxu0 %v4348
        %5985 = vmatprep.subr.bf16.mxu0 %v4351
        %5986 = vmatpush1.bf16.msra.mxu0 %v4350
        %5987 = vmatprep.subr.bf16.mxu0 %v4353
        %5988 = vmatpush1.bf16.msra.mxu0 %v4352
        %5989 = vmatprep.subr.bf16.mxu0 %v4355
        %5990 = vmatpush1.bf16.msra.mxu0 %v4354
        %5991 = vmatprep.subr.bf16.mxu0 %v4357
        %5992 = vmatpush1.bf16.msra.mxu0 %v4356
        %5993 = vmatprep.subr.bf16.mxu0 %v4359
        %5994 = vmatpush1.bf16.msra.mxu0 %v4358
        %5995 = vmatprep.subr.bf16.mxu0 %v4361
        %5996 = vmatpush1.bf16.msra.mxu0 %v4360
        %5997 = vmatprep.subr.bf16.mxu0 %v4363
        %5998 = vmatpush1.bf16.msra.mxu0 %v4362
        %5999 = vmatprep.subr.bf16.mxu0 %v4365
        %6000 = vmatpush1.bf16.msra.mxu0 %v4364
        %6001 = vmatprep.subr.bf16.mxu0 %v4367
        %6002 = vmatpush1.bf16.msra.mxu0 %v4366
        %6003 = vmatprep.subr.bf16.mxu0 %v4369
        %6004 = vmatpush1.bf16.msra.mxu0 %v4368
        %6005 = vmatprep.mubr.bf16.mxu0 %v1609
        %6006 = vmatmul.mubr.bf16.gmra.mrb[0].mxu0 %v1608
        %v6007 = vpop.f32.mrb[0].mxu0
        %v6008 = vadd.f32 %v5967, %v6007
        %v6009 = vpop.f32.mrb[0].mxu0
        %v6010 = vadd.f32 %v5969, %v6009
        %v6011 = vpop.f32.mrb[0].mxu0
        %v6012 = vpop.f32.mrb[0].mxu0
        %6013 = vdwg.mxu0
        %6014 = vmatprep.subr.bf16.mxu0 %v4371
        %6015 = vmatpush1.bf16.msra.mxu0 %v4370
        %6016 = vmatprep.subr.bf16.mxu0 %v4373
        %6017 = vmatpush1.bf16.msra.mxu0 %v4372
        %6018 = vmatprep.subr.bf16.mxu0 %v4375
        %6019 = vmatpush1.bf16.msra.mxu0 %v4374
        %6020 = vmatprep.subr.bf16.mxu0 %v4377
        %6021 = vmatpush1.bf16.msra.mxu0 %v4376
        %6022 = vmatprep.subr.bf16.mxu0 %v4379
        %6023 = vmatpush1.bf16.msra.mxu0 %v4378
        %6024 = vmatprep.subr.bf16.mxu0 %v4381
        %6025 = vmatpush1.bf16.msra.mxu0 %v4380
        %6026 = vmatprep.subr.bf16.mxu0 %v4383
        %6027 = vmatpush1.bf16.msra.mxu0 %v4382
        %6028 = vmatprep.subr.bf16.mxu0 %v4385
        %6029 = vmatpush1.bf16.msra.mxu0 %v4384
        %6030 = vmatprep.subr.bf16.mxu0 %v4387
        %6031 = vmatpush1.bf16.msra.mxu0 %v4386
        %6032 = vmatprep.subr.bf16.mxu0 %v4389
        %6033 = vmatpush1.bf16.msra.mxu0 %v4388
        %6034 = vmatprep.subr.bf16.mxu0 %v4391
        %6035 = vmatpush1.bf16.msra.mxu0 %v4390
        %6036 = vmatprep.subr.bf16.mxu0 %v4393
        %6037 = vmatpush1.bf16.msra.mxu0 %v4392
        %6038 = vmatprep.subr.bf16.mxu0 %v4395
        %6039 = vmatpush1.bf16.msra.mxu0 %v4394
        %6040 = vmatprep.subr.bf16.mxu0 %v4397
        %6041 = vmatpush1.bf16.msra.mxu0 %v4396
        %6042 = vmatprep.subr.bf16.mxu0 %v4399
        %6043 = vmatpush1.bf16.msra.mxu0 %v4398
        %6044 = vmatprep.subr.bf16.mxu0 %v4401
        %6045 = vmatpush1.bf16.msra.mxu0 %v4400
        %6046 = vmatprep.mubr.bf16.mxu0 %v1611
        %6047 = vmatmul.mubr.bf16.gmra.mrb[0].mxu0 %v1610
        %v6048 = vpop.f32.mrb[0].mxu0
        %v6049 = vadd.f32 %v6008, %v6048
        %v6050 = vpop.f32.mrb[0].mxu0
        %v6051 = vadd.f32 %v6010, %v6050
        %v6052 = vpop.f32.mrb[0].mxu0
        %v6053 = vpop.f32.mrb[0].mxu0
        %6054 = vdwg.mxu0
        %6055 = vmatprep.subr.bf16.mxu0 %v4403
        %6056 = vmatpush1.bf16.msra.mxu0 %v4402
        %6057 = vmatprep.subr.bf16.mxu0 %v4405
        %6058 = vmatpush1.bf16.msra.mxu0 %v4404
        %6059 = vmatprep.subr.bf16.mxu0 %v4407
        %6060 = vmatpush1.bf16.msra.mxu0 %v4406
        %6061 = vmatprep.subr.bf16.mxu0 %v4409
        %6062 = vmatpush1.bf16.msra.mxu0 %v4408
        %6063 = vmatprep.subr.bf16.mxu0 %v4411
        %6064 = vmatpush1.bf16.msra.mxu0 %v4410
        %6065 = vmatprep.subr.bf16.mxu0 %v4413
        %6066 = vmatpush1.bf16.msra.mxu0 %v4412
        %6067 = vmatprep.subr.bf16.mxu0 %v4415
        %6068 = vmatpush1.bf16.msra.mxu0 %v4414
        %6069 = vmatprep.subr.bf16.mxu0 %v4417
        %6070 = vmatpush1.bf16.msra.mxu0 %v4416
        %6071 = vmatprep.subr.bf16.mxu0 %v4419
        %6072 = vmatpush1.bf16.msra.mxu0 %v4418
        %6073 = vmatprep.subr.bf16.mxu0 %v4421
        %6074 = vmatpush1.bf16.msra.mxu0 %v4420
        %6075 = vmatprep.subr.bf16.mxu0 %v4423
        %6076 = vmatpush1.bf16.msra.mxu0 %v4422
        %6077 = vmatprep.subr.bf16.mxu0 %v4425
        %6078 = vmatpush1.bf16.msra.mxu0 %v4424
        %6079 = vmatprep.subr.bf16.mxu0 %v4427
        %6080 = vmatpush1.bf16.msra.mxu0 %v4426
        %6081 = vmatprep.subr.bf16.mxu0 %v4429
        %6082 = vmatpush1.bf16.msra.mxu0 %v4428
        %6083 = vmatprep.subr.bf16.mxu0 %v4431
        %6084 = vmatpush1.bf16.msra.mxu0 %v4430
        %6085 = vmatprep.subr.bf16.mxu0 %v4433
        %6086 = vmatpush1.bf16.msra.mxu0 %v4432
        %6087 = vmatprep.mubr.bf16.mxu0 %v1613
        %6088 = vmatmul.mubr.bf16.gmra.mrb[0].mxu0 %v1612
        %v6089 = vpop.f32.mrb[0].mxu0
        %v6090 = vadd.f32 %v6049, %v6089
        %v6091 = vpop.f32.mrb[0].mxu0
        %v6092 = vadd.f32 %v6051, %v6091
        %v6093 = vpop.f32.mrb[0].mxu0
        %v6094 = vpop.f32.mrb[0].mxu0
        %6095 = vdwg.mxu0
        %6096 = vmatprep.subr.bf16.mxu0 %v4435
        %6097 = vmatpush1.bf16.msra.mxu0 %v4434
        %6098 = vmatprep.subr.bf16.mxu0 %v4437
        %6099 = vmatpush1.bf16.msra.mxu0 %v4436
        %6100 = vmatprep.subr.bf16.mxu0 %v4439
        %6101 = vmatpush1.bf16.msra.mxu0 %v4438
        %6102 = vmatprep.subr.bf16.mxu0 %v4441
        %6103 = vmatpush1.bf16.msra.mxu0 %v4440
        %6104 = vmatprep.subr.bf16.mxu0 %v4443
        %6105 = vmatpush1.bf16.msra.mxu0 %v4442
        %6106 = vmatprep.subr.bf16.mxu0 %v4445
        %6107 = vmatpush1.bf16.msra.mxu0 %v4444
        %6108 = vmatprep.subr.bf16.mxu0 %v4447
        %6109 = vmatpush1.bf16.msra.mxu0 %v4446
        %6110 = vmatprep.subr.bf16.mxu0 %v4449
        %6111 = vmatpush1.bf16.msra.mxu0 %v4448
        %6112 = vmatprep.subr.bf16.mxu0 %v4451
        %6113 = vmatpush1.bf16.msra.mxu0 %v4450
        %6114 = vmatprep.subr.bf16.mxu0 %v4453
        %6115 = vmatpush1.bf16.msra.mxu0 %v4452
        %6116 = vmatprep.subr.bf16.mxu0 %v4455
        %6117 = vmatpush1.bf16.msra.mxu0 %v4454
        %6118 = vmatprep.subr.bf16.mxu0 %v4457
        %6119 = vmatpush1.bf16.msra.mxu0 %v4456
        %6120 = vmatprep.subr.bf16.mxu0 %v4459
        %6121 = vmatpush1.bf16.msra.mxu0 %v4458
        %6122 = vmatprep.subr.bf16.mxu0 %v4461
        %6123 = vmatpush1.bf16.msra.mxu0 %v4460
        %6124 = vmatprep.subr.bf16.mxu0 %v4463
        %6125 = vmatpush1.bf16.msra.mxu0 %v4462
        %6126 = vmatprep.subr.bf16.mxu0 %v4465
        %6127 = vmatpush1.bf16.msra.mxu0 %v4464
        %6128 = vmatprep.mubr.bf16.mxu0 %v1615
        %6129 = vmatmul.mubr.bf16.gmra.mrb[0].mxu0 %v1614
        %v6130 = vpop.f32.mrb[0].mxu0
        %v6131 = vadd.f32 %v6090, %v6130
        %v6132 = vpop.f32.mrb[0].mxu0
        %v6133 = vadd.f32 %v6092, %v6132
        %v6134 = vpop.f32.mrb[0].mxu0
        %v6135 = vpop.f32.mrb[0].mxu0
        %6136 = vdwg.mxu0
        %6137 = vmatprep.subr.bf16.mxu0 %v4467
        %6138 = vmatpush1.bf16.msra.mxu0 %v4466
        %6139 = vmatprep.subr.bf16.mxu0 %v4469
        %6140 = vmatpush1.bf16.msra.mxu0 %v4468
        %6141 = vmatprep.subr.bf16.mxu0 %v4471
        %6142 = vmatpush1.bf16.msra.mxu0 %v4470
        %6143 = vmatprep.subr.bf16.mxu0 %v4473
        %6144 = vmatpush1.bf16.msra.mxu0 %v4472
        %6145 = vmatprep.subr.bf16.mxu0 %v4475
        %6146 = vmatpush1.bf16.msra.mxu0 %v4474
        %6147 = vmatprep.subr.bf16.mxu0 %v4477
        %6148 = vmatpush1.bf16.msra.mxu0 %v4476
        %6149 = vmatprep.subr.bf16.mxu0 %v4479
        %6150 = vmatpush1.bf16.msra.mxu0 %v4478
        %6151 = vmatprep.subr.bf16.mxu0 %v4481
        %6152 = vmatpush1.bf16.msra.mxu0 %v4480
        %6153 = vmatprep.subr.bf16.mxu0 %v4483
        %6154 = vmatpush1.bf16.msra.mxu0 %v4482
        %6155 = vmatprep.subr.bf16.mxu0 %v4485
        %6156 = vmatpush1.bf16.msra.mxu0 %v4484
        %6157 = vmatprep.subr.bf16.mxu0 %v4487
        %6158 = vmatpush1.bf16.msra.mxu0 %v4486
        %6159 = vmatprep.subr.bf16.mxu0 %v4489
        %6160 = vmatpush1.bf16.msra.mxu0 %v4488
        %6161 = vmatprep.subr.bf16.mxu0 %v4491
        %6162 = vmatpush1.bf16.msra.mxu0 %v4490
        %6163 = vmatprep.subr.bf16.mxu0 %v4493
        %6164 = vmatpush1.bf16.msra.mxu0 %v4492
        %6165 = vmatprep.subr.bf16.mxu0 %v4495
        %6166 = vmatpush1.bf16.msra.mxu0 %v4494
        %6167 = vmatprep.subr.bf16.mxu0 %v4497
        %6168 = vmatpush1.bf16.msra.mxu0 %v4496
        %6169 = vmatprep.mubr.bf16.mxu0 %v1617
        %6170 = vmatmul.mubr.bf16.gmra.mrb[0].mxu0 %v1616
        %v6171 = vpop.f32.mrb[0].mxu0
        %v6172 = vadd.f32 %v6131, %v6171
        %v6173 = vpop.f32.mrb[0].mxu0
        %v6174 = vadd.f32 %v6133, %v6173
        %v6175 = vpop.f32.mrb[0].mxu0
        %v6176 = vpop.f32.mrb[0].mxu0
        %6177 = vdwg.mxu0
        %6178 = vmatprep.subr.bf16.mxu0 %v4499
        %6179 = vmatpush1.bf16.msra.mxu0 %v4498
        %6180 = vmatprep.subr.bf16.mxu0 %v4501
        %6181 = vmatpush1.bf16.msra.mxu0 %v4500
        %6182 = vmatprep.subr.bf16.mxu0 %v4503
        %6183 = vmatpush1.bf16.msra.mxu0 %v4502
        %6184 = vmatprep.subr.bf16.mxu0 %v4505
        %6185 = vmatpush1.bf16.msra.mxu0 %v4504
        %6186 = vmatprep.subr.bf16.mxu0 %v4507
        %6187 = vmatpush1.bf16.msra.mxu0 %v4506
        %6188 = vmatprep.subr.bf16.mxu0 %v4509
        %6189 = vmatpush1.bf16.msra.mxu0 %v4508
        %6190 = vmatprep.subr.bf16.mxu0 %v4511
        %6191 = vmatpush1.bf16.msra.mxu0 %v4510
        %6192 = vmatprep.subr.bf16.mxu0 %v4513
        %6193 = vmatpush1.bf16.msra.mxu0 %v4512
        %6194 = vmatprep.subr.bf16.mxu0 %v4515
        %6195 = vmatpush1.bf16.msra.mxu0 %v4514
        %6196 = vmatprep.subr.bf16.mxu0 %v4517
        %6197 = vmatpush1.bf16.msra.mxu0 %v4516
        %6198 = vmatprep.subr.bf16.mxu0 %v4519
        %6199 = vmatpush1.bf16.msra.mxu0 %v4518
        %6200 = vmatprep.subr.bf16.mxu0 %v4521
        %6201 = vmatpush1.bf16.msra.mxu0 %v4520
        %6202 = vmatprep.subr.bf16.mxu0 %v4523
        %6203 = vmatpush1.bf16.msra.mxu0 %v4522
        %6204 = vmatprep.subr.bf16.mxu0 %v4525
        %6205 = vmatpush1.bf16.msra.mxu0 %v4524
        %6206 = vmatprep.subr.bf16.mxu0 %v4527
        %6207 = vmatpush1.bf16.msra.mxu0 %v4526
        %6208 = vmatprep.subr.bf16.mxu0 %v4529
        %6209 = vmatpush1.bf16.msra.mxu0 %v4528
        %6210 = vmatprep.mubr.bf16.mxu0 %v1619
        %6211 = vmatmul.mubr.bf16.gmra.mrb[0].mxu0 %v1618
        %v6212 = vpop.f32.mrb[0].mxu0
        %v6213 = vadd.f32 %v6172, %v6212
        %v6214 = vpop.f32.mrb[0].mxu0
        %v6215 = vadd.f32 %v6174, %v6214
        %v6216 = vpop.f32.mrb[0].mxu0
        %v6217 = vpop.f32.mrb[0].mxu0
        %6218 = vdwg.mxu0
        %6219 = vmatprep.subr.bf16.mxu0 %v4531
        %6220 = vmatpush1.bf16.msra.mxu0 %v4530
        %6221 = vmatprep.subr.bf16.mxu0 %v4533
        %6222 = vmatpush1.bf16.msra.mxu0 %v4532
        %6223 = vmatprep.subr.bf16.mxu0 %v4535
        %6224 = vmatpush1.bf16.msra.mxu0 %v4534
        %6225 = vmatprep.subr.bf16.mxu0 %v4537
        %6226 = vmatpush1.bf16.msra.mxu0 %v4536
        %6227 = vmatprep.subr.bf16.mxu0 %v4539
        %6228 = vmatpush1.bf16.msra.mxu0 %v4538
        %6229 = vmatprep.subr.bf16.mxu0 %v4541
        %6230 = vmatpush1.bf16.msra.mxu0 %v4540
        %6231 = vmatprep.subr.bf16.mxu0 %v4543
        %6232 = vmatpush1.bf16.msra.mxu0 %v4542
        %6233 = vmatprep.subr.bf16.mxu0 %v4545
        %6234 = vmatpush1.bf16.msra.mxu0 %v4544
        %6235 = vmatprep.subr.bf16.mxu0 %v4547
        %6236 = vmatpush1.bf16.msra.mxu0 %v4546
        %6237 = vmatprep.subr.bf16.mxu0 %v4549
        %6238 = vmatpush1.bf16.msra.mxu0 %v4548
        %6239 = vmatprep.subr.bf16.mxu0 %v4551
        %6240 = vmatpush1.bf16.msra.mxu0 %v4550
        %6241 = vmatprep.subr.bf16.mxu0 %v4553
        %6242 = vmatpush1.bf16.msra.mxu0 %v4552
        %6243 = vmatprep.subr.bf16.mxu0 %v4555
        %6244 = vmatpush1.bf16.msra.mxu0 %v4554
        %6245 = vmatprep.subr.bf16.mxu0 %v4557
        %6246 = vmatpush1.bf16.msra.mxu0 %v4556
        %6247 = vmatprep.subr.bf16.mxu0 %v4559
        %6248 = vmatpush1.bf16.msra.mxu0 %v4558
        %6249 = vmatprep.subr.bf16.mxu0 %v4561
        %6250 = vmatpush1.bf16.msra.mxu0 %v4560
        %6251 = vmatprep.mubr.bf16.mxu0 %v1621
        %6252 = vmatmul.mubr.bf16.gmra.mrb[0].mxu0 %v1620
        %v6253 = vpop.f32.mrb[0].mxu0
        %v6254 = vadd.f32 %v6213, %v6253
        %v6255 = vpop.f32.mrb[0].mxu0
        %v6256 = vadd.f32 %v6215, %v6255
        %v6257 = vpop.f32.mrb[0].mxu0
        %v6258 = vpop.f32.mrb[0].mxu0
        %6259 = vdwg.mxu0
        %6260 = vmatprep.subr.bf16.mxu0 %v4563
        %6261 = vmatpush1.bf16.msra.mxu0 %v4562
        %6262 = vmatprep.subr.bf16.mxu0 %v4565
        %6263 = vmatpush1.bf16.msra.mxu0 %v4564
        %6264 = vmatprep.subr.bf16.mxu0 %v4567
        %6265 = vmatpush1.bf16.msra.mxu0 %v4566
        %6266 = vmatprep.subr.bf16.mxu0 %v4569
        %6267 = vmatpush1.bf16.msra.mxu0 %v4568
        %6268 = vmatprep.subr.bf16.mxu0 %v4571
        %6269 = vmatpush1.bf16.msra.mxu0 %v4570
        %6270 = vmatprep.subr.bf16.mxu0 %v4573
        %6271 = vmatpush1.bf16.msra.mxu0 %v4572
        %6272 = vmatprep.subr.bf16.mxu0 %v4575
        %6273 = vmatpush1.bf16.msra.mxu0 %v4574
        %6274 = vmatprep.subr.bf16.mxu0 %v4577
        %6275 = vmatpush1.bf16.msra.mxu0 %v4576
        %6276 = vmatprep.subr.bf16.mxu0 %v4579
        %6277 = vmatpush1.bf16.msra.mxu0 %v4578
        %6278 = vmatprep.subr.bf16.mxu0 %v4581
        %6279 = vmatpush1.bf16.msra.mxu0 %v4580
        %6280 = vmatprep.subr.bf16.mxu0 %v4583
        %6281 = vmatpush1.bf16.msra.mxu0 %v4582
        %6282 = vmatprep.subr.bf16.mxu0 %v4585
        %6283 = vmatpush1.bf16.msra.mxu0 %v4584
        %6284 = vmatprep.subr.bf16.mxu0 %v4587
        %6285 = vmatpush1.bf16.msra.mxu0 %v4586
        %6286 = vmatprep.subr.bf16.mxu0 %v4589
        %6287 = vmatpush1.bf16.msra.mxu0 %v4588
        %6288 = vmatprep.subr.bf16.mxu0 %v4591
        %6289 = vmatpush1.bf16.msra.mxu0 %v4590
        %6290 = vmatprep.subr.bf16.mxu0 %v4593
        %6291 = vmatpush1.bf16.msra.mxu0 %v4592
        %6292 = vmatprep.mubr.bf16.mxu0 %v1623
        %6293 = vmatmul.mubr.bf16.gmra.mrb[0].mxu0 %v1622
        %v6294 = vpop.f32.mrb[0].mxu0
        %v6295 = vadd.f32 %v6254, %v6294
        %v6296 = vpop.f32.mrb[0].mxu0
        %v6297 = vadd.f32 %v6256, %v6296
        %v6298 = vpop.f32.mrb[0].mxu0
        %v6299 = vpop.f32.mrb[0].mxu0
        %6300 = vdwg.mxu0
        %6301 = vmatprep.subr.bf16.mxu0 %v4595
        %6302 = vmatpush1.bf16.msra.mxu0 %v4594
        %6303 = vmatprep.subr.bf16.mxu0 %v4597
        %6304 = vmatpush1.bf16.msra.mxu0 %v4596
        %6305 = vmatprep.subr.bf16.mxu0 %v4599
        %6306 = vmatpush1.bf16.msra.mxu0 %v4598
        %6307 = vmatprep.subr.bf16.mxu0 %v4601
        %6308 = vmatpush1.bf16.msra.mxu0 %v4600
        %6309 = vmatprep.subr.bf16.mxu0 %v4603
        %6310 = vmatpush1.bf16.msra.mxu0 %v4602
        %6311 = vmatprep.subr.bf16.mxu0 %v4605
        %6312 = vmatpush1.bf16.msra.mxu0 %v4604
        %6313 = vmatprep.subr.bf16.mxu0 %v4607
        %6314 = vmatpush1.bf16.msra.mxu0 %v4606
        %6315 = vmatprep.subr.bf16.mxu0 %v4609
        %6316 = vmatpush1.bf16.msra.mxu0 %v4608
        %6317 = vmatprep.subr.bf16.mxu0 %v4611
        %6318 = vmatpush1.bf16.msra.mxu0 %v4610
        %6319 = vmatprep.subr.bf16.mxu0 %v4613
        %6320 = vmatpush1.bf16.msra.mxu0 %v4612
        %6321 = vmatprep.subr.bf16.mxu0 %v4615
        %6322 = vmatpush1.bf16.msra.mxu0 %v4614
        %6323 = vmatprep.subr.bf16.mxu0 %v4617
        %6324 = vmatpush1.bf16.msra.mxu0 %v4616
        %6325 = vmatprep.subr.bf16.mxu0 %v4619
        %6326 = vmatpush1.bf16.msra.mxu0 %v4618
        %6327 = vmatprep.subr.bf16.mxu0 %v4621
        %6328 = vmatpush1.bf16.msra.mxu0 %v4620
        %6329 = vmatprep.subr.bf16.mxu0 %v4623
        %6330 = vmatpush1.bf16.msra.mxu0 %v4622
        %6331 = vmatprep.subr.bf16.mxu0 %v4625
        %6332 = vmatpush1.bf16.msra.mxu0 %v4624
        %6333 = vmatprep.mubr.bf16.mxu0 %v1625
        %6334 = vmatmul.mubr.bf16.gmra.mrb[0].mxu0 %v1624
        %v6335 = vpop.f32.mrb[0].mxu0
        %v6336 = vadd.f32 %v6295, %v6335
        %v6337 = vpop.f32.mrb[0].mxu0
        %v6338 = vadd.f32 %v6297, %v6337
        %v6339 = vpop.f32.mrb[0].mxu0
        %v6340 = vpop.f32.mrb[0].mxu0
        %6341 = vdwg.mxu0
        %6342 = vmatprep.subr.bf16.mxu0 %v4627
        %6343 = vmatpush1.bf16.msra.mxu0 %v4626
        %6344 = vmatprep.subr.bf16.mxu0 %v4629
        %6345 = vmatpush1.bf16.msra.mxu0 %v4628
        %6346 = vmatprep.subr.bf16.mxu0 %v4631
        %6347 = vmatpush1.bf16.msra.mxu0 %v4630
        %6348 = vmatprep.subr.bf16.mxu0 %v4633
        %6349 = vmatpush1.bf16.msra.mxu0 %v4632
        %6350 = vmatprep.subr.bf16.mxu0 %v4635
        %6351 = vmatpush1.bf16.msra.mxu0 %v4634
        %6352 = vmatprep.subr.bf16.mxu0 %v4637
        %6353 = vmatpush1.bf16.msra.mxu0 %v4636
        %6354 = vmatprep.subr.bf16.mxu0 %v4639
        %6355 = vmatpush1.bf16.msra.mxu0 %v4638
        %6356 = vmatprep.subr.bf16.mxu0 %v4641
        %6357 = vmatpush1.bf16.msra.mxu0 %v4640
        %6358 = vmatprep.subr.bf16.mxu0 %v4643
        %6359 = vmatpush1.bf16.msra.mxu0 %v4642
        %6360 = vmatprep.subr.bf16.mxu0 %v4645
        %6361 = vmatpush1.bf16.msra.mxu0 %v4644
        %6362 = vmatprep.subr.bf16.mxu0 %v4647
        %6363 = vmatpush1.bf16.msra.mxu0 %v4646
        %6364 = vmatprep.subr.bf16.mxu0 %v4649
        %6365 = vmatpush1.bf16.msra.mxu0 %v4648
        %6366 = vmatprep.subr.bf16.mxu0 %v4651
        %6367 = vmatpush1.bf16.msra.mxu0 %v4650
        %6368 = vmatprep.subr.bf16.mxu0 %v4653
        %6369 = vmatpush1.bf16.msra.mxu0 %v4652
        %6370 = vmatprep.subr.bf16.mxu0 %v4655
        %6371 = vmatpush1.bf16.msra.mxu0 %v4654
        %6372 = vmatprep.subr.bf16.mxu0 %v4657
        %6373 = vmatpush1.bf16.msra.mxu0 %v4656
        %6374 = vmatprep.mubr.bf16.mxu0 %v1627
        %6375 = vmatmul.mubr.bf16.gmra.mrb[0].mxu0 %v1626
        %v6376 = vpop.f32.mrb[0].mxu0
        %v6377 = vadd.f32 %v6336, %v6376
        %v6378 = vpop.f32.mrb[0].mxu0
        %v6379 = vadd.f32 %v6338, %v6378
        %v6380 = vpop.f32.mrb[0].mxu0
        %v6381 = vpop.f32.mrb[0].mxu0
        %6382 = vdwg.mxu0
        %6383 = vmatprep.subr.bf16.mxu0 %v4659
        %6384 = vmatpush1.bf16.msra.mxu0 %v4658
        %6385 = vmatprep.subr.bf16.mxu0 %v4661
        %6386 = vmatpush1.bf16.msra.mxu0 %v4660
        %6387 = vmatprep.subr.bf16.mxu0 %v4663
        %6388 = vmatpush1.bf16.msra.mxu0 %v4662
        %6389 = vmatprep.subr.bf16.mxu0 %v4665
        %6390 = vmatpush1.bf16.msra.mxu0 %v4664
        %6391 = vmatprep.subr.bf16.mxu0 %v4667
        %6392 = vmatpush1.bf16.msra.mxu0 %v4666
        %6393 = vmatprep.subr.bf16.mxu0 %v4669
        %6394 = vmatpush1.bf16.msra.mxu0 %v4668
        %6395 = vmatprep.subr.bf16.mxu0 %v4671
        %6396 = vmatpush1.bf16.msra.mxu0 %v4670
        %6397 = vmatprep.subr.bf16.mxu0 %v4673
        %6398 = vmatpush1.bf16.msra.mxu0 %v4672
        %6399 = vmatprep.subr.bf16.mxu0 %v4675
        %6400 = vmatpush1.bf16.msra.mxu0 %v4674
        %6401 = vmatprep.subr.bf16.mxu0 %v4677
        %6402 = vmatpush1.bf16.msra.mxu0 %v4676
        %6403 = vmatprep.subr.bf16.mxu0 %v4679
        %6404 = vmatpush1.bf16.msra.mxu0 %v4678
        %6405 = vmatprep.subr.bf16.mxu0 %v4681
        %6406 = vmatpush1.bf16.msra.mxu0 %v4680
        %6407 = vmatprep.subr.bf16.mxu0 %v4683
        %6408 = vmatpush1.bf16.msra.mxu0 %v4682
        %6409 = vmatprep.subr.bf16.mxu0 %v4685
        %6410 = vmatpush1.bf16.msra.mxu0 %v4684
        %6411 = vmatprep.subr.bf16.mxu0 %v4687
        %6412 = vmatpush1.bf16.msra.mxu0 %v4686
        %6413 = vmatprep.subr.bf16.mxu0 %v4689
        %6414 = vmatpush1.bf16.msra.mxu0 %v4688
        %6415 = vmatprep.mubr.bf16.mxu0 %v1629
        %6416 = vmatmul.mubr.bf16.gmra.mrb[0].mxu0 %v1628
        %v6417 = vpop.f32.mrb[0].mxu0
        %v6418 = vadd.f32 %v6377, %v6417
        %v6419 = vpop.f32.mrb[0].mxu0
        %v6420 = vadd.f32 %v6379, %v6419
        %v6421 = vpop.f32.mrb[0].mxu0
        %v6422 = vpop.f32.mrb[0].mxu0
        %6423 = vdwg.mxu0
        %6424 = vmatprep.subr.bf16.mxu0 %v4691
        %6425 = vmatpush1.bf16.msra.mxu0 %v4690
        %6426 = vmatprep.subr.bf16.mxu0 %v4693
        %6427 = vmatpush1.bf16.msra.mxu0 %v4692
        %6428 = vmatprep.subr.bf16.mxu0 %v4695
        %6429 = vmatpush1.bf16.msra.mxu0 %v4694
        %6430 = vmatprep.subr.bf16.mxu0 %v4697
        %6431 = vmatpush1.bf16.msra.mxu0 %v4696
        %6432 = vmatprep.subr.bf16.mxu0 %v4699
        %6433 = vmatpush1.bf16.msra.mxu0 %v4698
        %6434 = vmatprep.subr.bf16.mxu0 %v4701
        %6435 = vmatpush1.bf16.msra.mxu0 %v4700
        %6436 = vmatprep.subr.bf16.mxu0 %v4703
        %6437 = vmatpush1.bf16.msra.mxu0 %v4702
        %6438 = vmatprep.subr.bf16.mxu0 %v4705
        %6439 = vmatpush1.bf16.msra.mxu0 %v4704
        %6440 = vmatprep.subr.bf16.mxu0 %v4707
        %6441 = vmatpush1.bf16.msra.mxu0 %v4706
        %6442 = vmatprep.subr.bf16.mxu0 %v4709
        %6443 = vmatpush1.bf16.msra.mxu0 %v4708
        %6444 = vmatprep.subr.bf16.mxu0 %v4711
        %6445 = vmatpush1.bf16.msra.mxu0 %v4710
        %6446 = vmatprep.subr.bf16.mxu0 %v4713
        %6447 = vmatpush1.bf16.msra.mxu0 %v4712
        %6448 = vmatprep.subr.bf16.mxu0 %v4715
        %6449 = vmatpush1.bf16.msra.mxu0 %v4714
        %6450 = vmatprep.subr.bf16.mxu0 %v4717
        %6451 = vmatpush1.bf16.msra.mxu0 %v4716
        %6452 = vmatprep.subr.bf16.mxu0 %v4719
        %6453 = vmatpush1.bf16.msra.mxu0 %v4718
        %6454 = vmatprep.subr.bf16.mxu0 %v4721
        %6455 = vmatpush1.bf16.msra.mxu0 %v4720
        %6456 = vmatprep.mubr.bf16.mxu0 %v1631
        %6457 = vmatmul.mubr.bf16.gmra.mrb[0].mxu0 %v1630
        %v6458 = vpop.f32.mrb[0].mxu0
        %v6459 = vadd.f32 %v6418, %v6458
        %v6460 = vpop.f32.mrb[0].mxu0
        %v6461 = vadd.f32 %v6420, %v6460
        %v6462 = vpop.f32.mrb[0].mxu0
        %v6463 = vpop.f32.mrb[0].mxu0
        %6464 = vdwg.mxu0
        %6465 = vmatprep.subr.bf16.mxu0 %v4723
        %6466 = vmatpush1.bf16.msra.mxu0 %v4722
        %6467 = vmatprep.subr.bf16.mxu0 %v4725
        %6468 = vmatpush1.bf16.msra.mxu0 %v4724
        %6469 = vmatprep.subr.bf16.mxu0 %v4727
        %6470 = vmatpush1.bf16.msra.mxu0 %v4726
        %6471 = vmatprep.subr.bf16.mxu0 %v4729
        %6472 = vmatpush1.bf16.msra.mxu0 %v4728
        %6473 = vmatprep.subr.bf16.mxu0 %v4731
        %6474 = vmatpush1.bf16.msra.mxu0 %v4730
        %6475 = vmatprep.subr.bf16.mxu0 %v4733
        %6476 = vmatpush1.bf16.msra.mxu0 %v4732
        %6477 = vmatprep.subr.bf16.mxu0 %v4735
        %6478 = vmatpush1.bf16.msra.mxu0 %v4734
        %6479 = vmatprep.subr.bf16.mxu0 %v4737
        %6480 = vmatpush1.bf16.msra.mxu0 %v4736
        %6481 = vmatprep.subr.bf16.mxu0 %v4739
        %6482 = vmatpush1.bf16.msra.mxu0 %v4738
        %6483 = vmatprep.subr.bf16.mxu0 %v4741
        %6484 = vmatpush1.bf16.msra.mxu0 %v4740
        %6485 = vmatprep.subr.bf16.mxu0 %v4743
        %6486 = vmatpush1.bf16.msra.mxu0 %v4742
        %6487 = vmatprep.subr.bf16.mxu0 %v4745
        %6488 = vmatpush1.bf16.msra.mxu0 %v4744
        %6489 = vmatprep.subr.bf16.mxu0 %v4747
        %6490 = vmatpush1.bf16.msra.mxu0 %v4746
        %6491 = vmatprep.subr.bf16.mxu0 %v4749
        %6492 = vmatpush1.bf16.msra.mxu0 %v4748
        %6493 = vmatprep.subr.bf16.mxu0 %v4751
        %6494 = vmatpush1.bf16.msra.mxu0 %v4750
        %6495 = vmatprep.subr.bf16.mxu0 %v4753
        %6496 = vmatpush1.bf16.msra.mxu0 %v4752
        %6497 = vmatprep.mubr.bf16.mxu0 %v1633
        %6498 = vmatmul.mubr.bf16.gmra.mrb[0].mxu0 %v1632
        %v6499 = vpop.f32.mrb[0].mxu0
        %v6500 = vadd.f32 %v6459, %v6499
        %v6501 = vpop.f32.mrb[0].mxu0
        %v6502 = vadd.f32 %v6461, %v6501
        %v6503 = vpop.f32.mrb[0].mxu0
        %v6504 = vpop.f32.mrb[0].mxu0
        %6505 = vdwg.mxu0
        %v6506 = vadd.f32 %v720, %v6500
        %v6507 = vadd.f32 %v721, %v6502
        %6508 = vst [vmem:[#allocation2] sm:$0xff] %v6506
        %6509 = vst [vmem:[#allocation2 + $0x8] sm:$0xff] %v6507
        %p6510 = scmp.eq.s32.totalorder %s39, 1
        // Predicated region
        $region141: #{tpu_custom_call.1} parent=79 // pred_check
          %p6511 = pneg %p6510
        $region142: #{tpu_custom_call.1} parent=79 // pred_check_branch
          %6513 = sbr.rel (%p6511) target = $region144
        $region143: #{tpu_custom_call.1} parent=79 // pred_region
          %v6514 = vld [vmem:[#allocation2] sm:$0xff]
          %v6515 = vld [vmem:[#allocation2 + $0x8] sm:$0xff]
          %v6516 = vmax.f32 %v6514, 0.0
          %v6517 = vmax.f32 %v6515, 0.0
          %v6518 = vld [vmem:[#allocation9] sm:$0xff]
          %v6519 = vld [vmem:[#allocation9 + $0x8] sm:$0xff]
          %v6520 = vld [vmem:[#allocation9 + $0x10] sm:$0xff]
          %v6521 = vld [vmem:[#allocation9 + $0x18] sm:$0xff]
          %v6522 = vld [vmem:[#allocation9 + $0x20] sm:$0xff]
          %v6523 = vld [vmem:[#allocation9 + $0x28] sm:$0xff]
          %v6524 = vld [vmem:[#allocation9 + $0x30] sm:$0xff]
          %v6525 = vld [vmem:[#allocation9 + $0x38] sm:$0xff]
          %v6526 = vld [vmem:[#allocation9 + $0x40] sm:$0xff]
          %v6527 = vld [vmem:[#allocation9 + $0x48] sm:$0xff]
          %v6528 = vld [vmem:[#allocation9 + $0x50] sm:$0xff]
          %v6529 = vld [vmem:[#allocation9 + $0x58] sm:$0xff]
          %v6530 = vld [vmem:[#allocation9 + $0x60] sm:$0xff]
          %v6531 = vld [vmem:[#allocation9 + $0x68] sm:$0xff]
          %v6532 = vld [vmem:[#allocation9 + $0x70] sm:$0xff]
          %v6533 = vld [vmem:[#allocation9 + $0x78] sm:$0xff]
          %v6534 = vld [vmem:[#allocation9 + $0x80] sm:$0xff]
          %v6535 = vld [vmem:[#allocation9 + $0x88] sm:$0xff]
          %v6536 = vld [vmem:[#allocation9 + $0x90] sm:$0xff]
          %v6537 = vld [vmem:[#allocation9 + $0x98] sm:$0xff]
          %v6538 = vld [vmem:[#allocation9 + $0xa0] sm:$0xff]
          %v6539 = vld [vmem:[#allocation9 + $0xa8] sm:$0xff]
          %v6540 = vld [vmem:[#allocation9 + $0xb0] sm:$0xff]
          %v6541 = vld [vmem:[#allocation9 + $0xb8] sm:$0xff]
          %v6542 = vld [vmem:[#allocation9 + $0xc0] sm:$0xff]
          %v6543 = vld [vmem:[#allocation9 + $0xc8] sm:$0xff]
          %v6544 = vld [vmem:[#allocation9 + $0xd0] sm:$0xff]
          %v6545 = vld [vmem:[#allocation9 + $0xd8] sm:$0xff]
          %v6546 = vld [vmem:[#allocation9 + $0xe0] sm:$0xff]
          %v6547 = vld [vmem:[#allocation9 + $0xe8] sm:$0xff]
          %v6548 = vld [vmem:[#allocation9 + $0xf0] sm:$0xff]
          %v6549 = vld [vmem:[#allocation9 + $0xf8] sm:$0xff]
          %v6550 = vld [vmem:[#allocation9 + $0x100] sm:$0xff]
          %v6551 = vld [vmem:[#allocation9 + $0x108] sm:$0xff]
          %v6552 = vld [vmem:[#allocation9 + $0x110] sm:$0xff]
          %v6553 = vld [vmem:[#allocation9 + $0x118] sm:$0xff]
          %v6554 = vld [vmem:[#allocation9 + $0x120] sm:$0xff]
          %v6555 = vld [vmem:[#allocation9 + $0x128] sm:$0xff]
          %v6556 = vld [vmem:[#allocation9 + $0x130] sm:$0xff]
          %v6557 = vld [vmem:[#allocation9 + $0x138] sm:$0xff]
          %v6558 = vld [vmem:[#allocation9 + $0x140] sm:$0xff]
          %v6559 = vld [vmem:[#allocation9 + $0x148] sm:$0xff]
          %v6560 = vld [vmem:[#allocation9 + $0x150] sm:$0xff]
          %v6561 = vld [vmem:[#allocation9 + $0x158] sm:$0xff]
          %v6562 = vld [vmem:[#allocation9 + $0x160] sm:$0xff]
          %v6563 = vld [vmem:[#allocation9 + $0x168] sm:$0xff]
          %v6564 = vld [vmem:[#allocation9 + $0x170] sm:$0xff]
          %v6565 = vld [vmem:[#allocation9 + $0x178] sm:$0xff]
          %v6566 = vld [vmem:[#allocation9 + $0x180] sm:$0xff]
          %v6567 = vld [vmem:[#allocation9 + $0x188] sm:$0xff]
          %v6568 = vld [vmem:[#allocation9 + $0x190] sm:$0xff]
          %v6569 = vld [vmem:[#allocation9 + $0x198] sm:$0xff]
          %v6570 = vld [vmem:[#allocation9 + $0x1a0] sm:$0xff]
          %v6571 = vld [vmem:[#allocation9 + $0x1a8] sm:$0xff]
          %v6572 = vld [vmem:[#allocation9 + $0x1b0] sm:$0xff]
          %v6573 = vld [vmem:[#allocation9 + $0x1b8] sm:$0xff]
          %v6574 = vld [vmem:[#allocation9 + $0x1c0] sm:$0xff]
          %v6575 = vld [vmem:[#allocation9 + $0x1c8] sm:$0xff]
          %v6576 = vld [vmem:[#allocation9 + $0x1d0] sm:$0xff]
          %v6577 = vld [vmem:[#allocation9 + $0x1d8] sm:$0xff]
          %v6578 = vld [vmem:[#allocation9 + $0x1e0] sm:$0xff]
          %v6579 = vld [vmem:[#allocation9 + $0x1e8] sm:$0xff]
          %v6580 = vld [vmem:[#allocation9 + $0x1f0] sm:$0xff]
          %v6581 = vld [vmem:[#allocation9 + $0x1f8] sm:$0xff]
          %v6582 = vunpack.c.l.bf16 %v6518
          %v6583 = vunpack.c.h.bf16 %v6518
          %v6584 = vunpack.c.l.bf16 %v6519
          %v6585 = vunpack.c.h.bf16 %v6519
          %v6586 = vunpack.c.l.bf16 %v6520
          %v6587 = vunpack.c.h.bf16 %v6520
          %v6588 = vunpack.c.l.bf16 %v6521
          %v6589 = vunpack.c.h.bf16 %v6521
          %v6590 = vunpack.c.l.bf16 %v6522
          %v6591 = vunpack.c.h.bf16 %v6522
          %v6592 = vunpack.c.l.bf16 %v6523
          %v6593 = vunpack.c.h.bf16 %v6523
          %v6594 = vunpack.c.l.bf16 %v6524
          %v6595 = vunpack.c.h.bf16 %v6524
          %v6596 = vunpack.c.l.bf16 %v6525
          %v6597 = vunpack.c.h.bf16 %v6525
          %v6598 = vunpack.c.l.bf16 %v6526
          %v6599 = vunpack.c.h.bf16 %v6526
          %v6600 = vunpack.c.l.bf16 %v6527
          %v6601 = vunpack.c.h.bf16 %v6527
          %v6602 = vunpack.c.l.bf16 %v6528
          %v6603 = vunpack.c.h.bf16 %v6528
          %v6604 = vunpack.c.l.bf16 %v6529
          %v6605 = vunpack.c.h.bf16 %v6529
          %v6606 = vunpack.c.l.bf16 %v6530
          %v6607 = vunpack.c.h.bf16 %v6530
          %v6608 = vunpack.c.l.bf16 %v6531
          %v6609 = vunpack.c.h.bf16 %v6531
          %v6610 = vunpack.c.l.bf16 %v6532
          %v6611 = vunpack.c.h.bf16 %v6532
          %v6612 = vunpack.c.l.bf16 %v6533
          %v6613 = vunpack.c.h.bf16 %v6533
          %v6614 = vunpack.c.l.bf16 %v6534
          %v6615 = vunpack.c.h.bf16 %v6534
          %v6616 = vunpack.c.l.bf16 %v6535
          %v6617 = vunpack.c.h.bf16 %v6535
          %v6618 = vunpack.c.l.bf16 %v6536
          %v6619 = vunpack.c.h.bf16 %v6536
          %v6620 = vunpack.c.l.bf16 %v6537
          %v6621 = vunpack.c.h.bf16 %v6537
          %v6622 = vunpack.c.l.bf16 %v6538
          %v6623 = vunpack.c.h.bf16 %v6538
          %v6624 = vunpack.c.l.bf16 %v6539
          %v6625 = vunpack.c.h.bf16 %v6539
          %v6626 = vunpack.c.l.bf16 %v6540
          %v6627 = vunpack.c.h.bf16 %v6540
          %v6628 = vunpack.c.l.bf16 %v6541
          %v6629 = vunpack.c.h.bf16 %v6541
          %v6630 = vunpack.c.l.bf16 %v6542
          %v6631 = vunpack.c.h.bf16 %v6542
          %v6632 = vunpack.c.l.bf16 %v6543
          %v6633 = vunpack.c.h.bf16 %v6543
          %v6634 = vunpack.c.l.bf16 %v6544
          %v6635 = vunpack.c.h.bf16 %v6544
          %v6636 = vunpack.c.l.bf16 %v6545
          %v6637 = vunpack.c.h.bf16 %v6545
          %v6638 = vunpack.c.l.bf16 %v6546
          %v6639 = vunpack.c.h.bf16 %v6546
          %v6640 = vunpack.c.l.bf16 %v6547
          %v6641 = vunpack.c.h.bf16 %v6547
          %v6642 = vunpack.c.l.bf16 %v6548
          %v6643 = vunpack.c.h.bf16 %v6548
          %v6644 = vunpack.c.l.bf16 %v6549
          %v6645 = vunpack.c.h.bf16 %v6549
          %v6646 = vunpack.c.l.bf16 %v6550
          %v6647 = vunpack.c.h.bf16 %v6550
          %v6648 = vunpack.c.l.bf16 %v6551
          %v6649 = vunpack.c.h.bf16 %v6551
          %v6650 = vunpack.c.l.bf16 %v6552
          %v6651 = vunpack.c.h.bf16 %v6552
          %v6652 = vunpack.c.l.bf16 %v6553
          %v6653 = vunpack.c.h.bf16 %v6553
          %v6654 = vunpack.c.l.bf16 %v6554
          %v6655 = vunpack.c.h.bf16 %v6554
          %v6656 = vunpack.c.l.bf16 %v6555
          %v6657 = vunpack.c.h.bf16 %v6555
          %v6658 = vunpack.c.l.bf16 %v6556
          %v6659 = vunpack.c.h.bf16 %v6556
          %v6660 = vunpack.c.l.bf16 %v6557
          %v6661 = vunpack.c.h.bf16 %v6557
          %v6662 = vunpack.c.l.bf16 %v6558
          %v6663 = vunpack.c.h.bf16 %v6558
          %v6664 = vunpack.c.l.bf16 %v6559
          %v6665 = vunpack.c.h.bf16 %v6559
          %v6666 = vunpack.c.l.bf16 %v6560
          %v6667 = vunpack.c.h.bf16 %v6560
          %v6668 = vunpack.c.l.bf16 %v6561
          %v6669 = vunpack.c.h.bf16 %v6561
          %v6670 = vunpack.c.l.bf16 %v6562
          %v6671 = vunpack.c.h.bf16 %v6562
          %v6672 = vunpack.c.l.bf16 %v6563
          %v6673 = vunpack.c.h.bf16 %v6563
          %v6674 = vunpack.c.l.bf16 %v6564
          %v6675 = vunpack.c.h.bf16 %v6564
          %v6676 = vunpack.c.l.bf16 %v6565
          %v6677 = vunpack.c.h.bf16 %v6565
          %v6678 = vunpack.c.l.bf16 %v6566
          %v6679 = vunpack.c.h.bf16 %v6566
          %v6680 = vunpack.c.l.bf16 %v6567
          %v6681 = vunpack.c.h.bf16 %v6567
          %v6682 = vunpack.c.l.bf16 %v6568
          %v6683 = vunpack.c.h.bf16 %v6568
          %v6684 = vunpack.c.l.bf16 %v6569
          %v6685 = vunpack.c.h.bf16 %v6569
          %v6686 = vunpack.c.l.bf16 %v6570
          %v6687 = vunpack.c.h.bf16 %v6570
          %v6688 = vunpack.c.l.bf16 %v6571
          %v6689 = vunpack.c.h.bf16 %v6571
          %v6690 = vunpack.c.l.bf16 %v6572
          %v6691 = vunpack.c.h.bf16 %v6572
          %v6692 = vunpack.c.l.bf16 %v6573
          %v6693 = vunpack.c.h.bf16 %v6573
          %v6694 = vunpack.c.l.bf16 %v6574
          %v6695 = vunpack.c.h.bf16 %v6574
          %v6696 = vunpack.c.l.bf16 %v6575
          %v6697 = vunpack.c.h.bf16 %v6575
          %v6698 = vunpack.c.l.bf16 %v6576
          %v6699 = vunpack.c.h.bf16 %v6576
          %v6700 = vunpack.c.l.bf16 %v6577
          %v6701 = vunpack.c.h.bf16 %v6577
          %v6702 = vunpack.c.l.bf16 %v6578
          %v6703 = vunpack.c.h.bf16 %v6578
          %v6704 = vunpack.c.l.bf16 %v6579
          %v6705 = vunpack.c.h.bf16 %v6579
          %v6706 = vunpack.c.l.bf16 %v6580
          %v6707 = vunpack.c.h.bf16 %v6580
          %v6708 = vunpack.c.l.bf16 %v6581
          %v6709 = vunpack.c.h.bf16 %v6581
          %v6710 = vld [vmem:[#allocation11] sm:$0xf]
          %v6712 = vlaneseq
          %v6713 = vshrl.u32 %v6712, 7
          %v6714 = vsub.s32 0, %v6713
          %v6715 = vrot.slane %v6710, %v6714
          %v6716 = vlaneseq
          %v6717 = vshrl.u32 %v6716, 7
          %v6718 = vsub.s32 1, %v6717
          %v6719 = vrot.slane %v6710, %v6718
          %v6720 = vlaneseq
          %v6721 = vshrl.u32 %v6720, 7
          %v6722 = vsub.s32 2, %v6721
          %v6723 = vrot.slane %v6710, %v6722
          %v6724 = vlaneseq
          %v6725 = vshrl.u32 %v6724, 7
          %v6726 = vsub.s32 3, %v6725
          %v6727 = vrot.slane %v6710, %v6726
          %6732 = vmatprep.subr.mxu0 %v6583
          %6733 = vmatpush1.msra.mxu0 %v6582
          %6734 = vmatprep.subr.mxu0 %v6587
          %6735 = vmatpush1.msra.mxu0 %v6586
          %6736 = vmatprep.subr.mxu0 %v6591
          %6737 = vmatpush1.msra.mxu0 %v6590
          %6738 = vmatprep.subr.mxu0 %v6595
          %6739 = vmatpush1.msra.mxu0 %v6594
          %6740 = vmatprep.subr.mxu0 %v6599
          %6741 = vmatpush1.msra.mxu0 %v6598
          %6742 = vmatprep.subr.mxu0 %v6603
          %6743 = vmatpush1.msra.mxu0 %v6602
          %6744 = vmatprep.subr.mxu0 %v6607
          %6745 = vmatpush1.msra.mxu0 %v6606
          %6746 = vmatprep.subr.mxu0 %v6611
          %6747 = vmatpush1.msra.mxu0 %v6610
          %6748 = vmatprep.subr.mxu0 %v6615
          %6749 = vmatpush1.msra.mxu0 %v6614
          %6750 = vmatprep.subr.mxu0 %v6619
          %6751 = vmatpush1.msra.mxu0 %v6618
          %6752 = vmatprep.subr.mxu0 %v6623
          %6753 = vmatpush1.msra.mxu0 %v6622
          %6754 = vmatprep.subr.mxu0 %v6627
          %6755 = vmatpush1.msra.mxu0 %v6626
          %6756 = vmatprep.subr.mxu0 %v6631
          %6757 = vmatpush1.msra.mxu0 %v6630
          %6758 = vmatprep.subr.mxu0 %v6635
          %6759 = vmatpush1.msra.mxu0 %v6634
          %6760 = vmatprep.subr.mxu0 %v6639
          %6761 = vmatpush1.msra.mxu0 %v6638
          %6762 = vmatprep.subr.mxu0 %v6643
          %6763 = vmatpush1.msra.mxu0 %v6642
          %6764 = vmatprep.subr.mxu0 %v6647
          %6765 = vmatpush1.msra.mxu0 %v6646
          %6766 = vmatprep.subr.mxu0 %v6651
          %6767 = vmatpush1.msra.mxu0 %v6650
          %6768 = vmatprep.subr.mxu0 %v6655
          %6769 = vmatpush1.msra.mxu0 %v6654
          %6770 = vmatprep.subr.mxu0 %v6659
          %6771 = vmatpush1.msra.mxu0 %v6658
          %6772 = vmatprep.subr.mxu0 %v6663
          %6773 = vmatpush1.msra.mxu0 %v6662
          %6774 = vmatprep.subr.mxu0 %v6667
          %6775 = vmatpush1.msra.mxu0 %v6666
          %6776 = vmatprep.subr.mxu0 %v6671
          %6777 = vmatpush1.msra.mxu0 %v6670
          %6778 = vmatprep.subr.mxu0 %v6675
          %6779 = vmatpush1.msra.mxu0 %v6674
          %6780 = vmatprep.subr.mxu0 %v6679
          %6781 = vmatpush1.msra.mxu0 %v6678
          %6782 = vmatprep.subr.mxu0 %v6683
          %6783 = vmatpush1.msra.mxu0 %v6682
          %6784 = vmatprep.subr.mxu0 %v6687
          %6785 = vmatpush1.msra.mxu0 %v6686
          %6786 = vmatprep.subr.mxu0 %v6691
          %6787 = vmatpush1.msra.mxu0 %v6690
          %6788 = vmatprep.subr.mxu0 %v6695
          %6789 = vmatpush1.msra.mxu0 %v6694
          %6790 = vmatprep.subr.mxu0 %v6699
          %6791 = vmatpush1.msra.mxu0 %v6698
          %6792 = vmatprep.subr.mxu0 %v6703
          %6793 = vmatpush1.msra.mxu0 %v6702
          %6794 = vmatprep.subr.mxu0 %v6707
          %6795 = vmatpush1.msra.mxu0 %v6706
          %6796 = vmatprep.mubr.f32.mxu0 %v6517
          %6797 = vmatmul.mubr.f32.gmra.mrb[0].mxu0 %v6516
          %v6798 = vpop.f32.mrb[0].mxu0
          %v6799 = vadd.f32 %v6715, %v6798
          %v6800 = vpop.f32.mrb[0].mxu0
          %v6801 = vadd.f32 %v6719, %v6800
          %6802 = vdwg.mxu0
          %6803 = vmatprep.subr.mxu0 %v6585
          %6804 = vmatpush1.msra.mxu0 %v6584
          %6805 = vmatprep.subr.mxu0 %v6589
          %6806 = vmatpush1.msra.mxu0 %v6588
          %6807 = vmatprep.subr.mxu0 %v6593
          %6808 = vmatpush1.msra.mxu0 %v6592
          %6809 = vmatprep.subr.mxu0 %v6597
          %6810 = vmatpush1.msra.mxu0 %v6596
          %6811 = vmatprep.subr.mxu0 %v6601
          %6812 = vmatpush1.msra.mxu0 %v6600
          %6813 = vmatprep.subr.mxu0 %v6605
          %6814 = vmatpush1.msra.mxu0 %v6604
          %6815 = vmatprep.subr.mxu0 %v6609
          %6816 = vmatpush1.msra.mxu0 %v6608
          %6817 = vmatprep.subr.mxu0 %v6613
          %6818 = vmatpush1.msra.mxu0 %v6612
          %6819 = vmatprep.subr.mxu0 %v6617
          %6820 = vmatpush1.msra.mxu0 %v6616
          %6821 = vmatprep.subr.mxu0 %v6621
          %6822 = vmatpush1.msra.mxu0 %v6620
          %6823 = vmatprep.subr.mxu0 %v6625
          %6824 = vmatpush1.msra.mxu0 %v6624
          %6825 = vmatprep.subr.mxu0 %v6629
          %6826 = vmatpush1.msra.mxu0 %v6628
          %6827 = vmatprep.subr.mxu0 %v6633
          %6828 = vmatpush1.msra.mxu0 %v6632
          %6829 = vmatprep.subr.mxu0 %v6637
          %6830 = vmatpush1.msra.mxu0 %v6636
          %6831 = vmatprep.subr.mxu0 %v6641
          %6832 = vmatpush1.msra.mxu0 %v6640
          %6833 = vmatprep.subr.mxu0 %v6645
          %6834 = vmatpush1.msra.mxu0 %v6644
          %6835 = vmatprep.subr.mxu0 %v6649
          %6836 = vmatpush1.msra.mxu0 %v6648
          %6837 = vmatprep.subr.mxu0 %v6653
          %6838 = vmatpush1.msra.mxu0 %v6652
          %6839 = vmatprep.subr.mxu0 %v6657
          %6840 = vmatpush1.msra.mxu0 %v6656
          %6841 = vmatprep.subr.mxu0 %v6661
          %6842 = vmatpush1.msra.mxu0 %v6660
          %6843 = vmatprep.subr.mxu0 %v6665
          %6844 = vmatpush1.msra.mxu0 %v6664
          %6845 = vmatprep.subr.mxu0 %v6669
          %6846 = vmatpush1.msra.mxu0 %v6668
          %6847 = vmatprep.subr.mxu0 %v6673
          %6848 = vmatpush1.msra.mxu0 %v6672
          %6849 = vmatprep.subr.mxu0 %v6677
          %6850 = vmatpush1.msra.mxu0 %v6676
          %6851 = vmatprep.subr.mxu0 %v6681
          %6852 = vmatpush1.msra.mxu0 %v6680
          %6853 = vmatprep.subr.mxu0 %v6685
          %6854 = vmatpush1.msra.mxu0 %v6684
          %6855 = vmatprep.subr.mxu0 %v6689
          %6856 = vmatpush1.msra.mxu0 %v6688
          %6857 = vmatprep.subr.mxu0 %v6693
          %6858 = vmatpush1.msra.mxu0 %v6692
          %6859 = vmatprep.subr.mxu0 %v6697
          %6860 = vmatpush1.msra.mxu0 %v6696
          %6861 = vmatprep.subr.mxu0 %v6701
          %6862 = vmatpush1.msra.mxu0 %v6700
          %6863 = vmatprep.subr.mxu0 %v6705
          %6864 = vmatpush1.msra.mxu0 %v6704
          %6865 = vmatprep.subr.mxu0 %v6709
          %6866 = vmatpush1.msra.mxu0 %v6708
          %6867 = vmatprep.mubr.f32.mxu0 %v6517
          %6868 = vmatmul.mubr.f32.gmra.mrb[0].mxu0 %v6516
          %v6869 = vpop.f32.mrb[0].mxu0
          %v6870 = vadd.f32 %v6723, %v6869
          %v6871 = vpop.f32.mrb[0].mxu0
          %v6872 = vadd.f32 %v6727, %v6871
          %6873 = vdwg.mxu0
          %v6874 = vmax.f32 %v6799, 0.0
          %v6875 = vmax.f32 %v6801, 0.0
          %v6876 = vmax.f32 %v6870, 0.0
          %v6877 = vmax.f32 %v6872, 0.0
          %v6878 = vld [vmem:[#allocation12] sm:$0xff]
          %v6879 = vld [vmem:[#allocation12 + $0x8] sm:$0xff]
          %v6880 = vld [vmem:[#allocation12 + $0x10] sm:$0xff]
          %v6881 = vld [vmem:[#allocation12 + $0x18] sm:$0xff]
          %v6882 = vld [vmem:[#allocation12 + $0x20] sm:$0xff]
          %v6883 = vld [vmem:[#allocation12 + $0x28] sm:$0xff]
          %v6884 = vld [vmem:[#allocation12 + $0x30] sm:$0xff]
          %v6885 = vld [vmem:[#allocation12 + $0x38] sm:$0xff]
          %v6886 = vld [vmem:[#allocation12 + $0x40] sm:$0xff]
          %v6887 = vld [vmem:[#allocation12 + $0x48] sm:$0xff]
          %v6888 = vld [vmem:[#allocation12 + $0x50] sm:$0xff]
          %v6889 = vld [vmem:[#allocation12 + $0x58] sm:$0xff]
          %v6890 = vld [vmem:[#allocation12 + $0x60] sm:$0xff]
          %v6891 = vld [vmem:[#allocation12 + $0x68] sm:$0xff]
          %v6892 = vld [vmem:[#allocation12 + $0x70] sm:$0xff]
          %v6893 = vld [vmem:[#allocation12 + $0x78] sm:$0xff]
          %v6894 = vld [vmem:[#allocation12 + $0x80] sm:$0xff]
          %v6895 = vld [vmem:[#allocation12 + $0x88] sm:$0xff]
          %v6896 = vld [vmem:[#allocation12 + $0x90] sm:$0xff]
          %v6897 = vld [vmem:[#allocation12 + $0x98] sm:$0xff]
          %v6898 = vld [vmem:[#allocation12 + $0xa0] sm:$0xff]
          %v6899 = vld [vmem:[#allocation12 + $0xa8] sm:$0xff]
          %v6900 = vld [vmem:[#allocation12 + $0xb0] sm:$0xff]
          %v6901 = vld [vmem:[#allocation12 + $0xb8] sm:$0xff]
          %v6902 = vld [vmem:[#allocation12 + $0xc0] sm:$0xff]
          %v6903 = vld [vmem:[#allocation12 + $0xc8] sm:$0xff]
          %v6904 = vld [vmem:[#allocation12 + $0xd0] sm:$0xff]
          %v6905 = vld [vmem:[#allocation12 + $0xd8] sm:$0xff]
          %v6906 = vld [vmem:[#allocation12 + $0xe0] sm:$0xff]
          %v6907 = vld [vmem:[#allocation12 + $0xe8] sm:$0xff]
          %v6908 = vld [vmem:[#allocation12 + $0xf0] sm:$0xff]
          %v6909 = vld [vmem:[#allocation12 + $0xf8] sm:$0xff]
          %v6910 = vld [vmem:[#allocation12 + $0x100] sm:$0xff]
          %v6911 = vld [vmem:[#allocation12 + $0x108] sm:$0xff]
          %v6912 = vld [vmem:[#allocation12 + $0x110] sm:$0xff]
          %v6913 = vld [vmem:[#allocation12 + $0x118] sm:$0xff]
          %v6914 = vld [vmem:[#allocation12 + $0x120] sm:$0xff]
          %v6915 = vld [vmem:[#allocation12 + $0x128] sm:$0xff]
          %v6916 = vld [vmem:[#allocation12 + $0x130] sm:$0xff]
          %v6917 = vld [vmem:[#allocation12 + $0x138] sm:$0xff]
          %v6918 = vld [vmem:[#allocation12 + $0x140] sm:$0xff]
          %v6919 = vld [vmem:[#allocation12 + $0x148] sm:$0xff]
          %v6920 = vld [vmem:[#allocation12 + $0x150] sm:$0xff]
          %v6921 = vld [vmem:[#allocation12 + $0x158] sm:$0xff]
          %v6922 = vld [vmem:[#allocation12 + $0x160] sm:$0xff]
          %v6923 = vld [vmem:[#allocation12 + $0x168] sm:$0xff]
          %v6924 = vld [vmem:[#allocation12 + $0x170] sm:$0xff]
          %v6925 = vld [vmem:[#allocation12 + $0x178] sm:$0xff]
          %v6926 = vld [vmem:[#allocation12 + $0x180] sm:$0xff]
          %v6927 = vld [vmem:[#allocation12 + $0x188] sm:$0xff]
          %v6928 = vld [vmem:[#allocation12 + $0x190] sm:$0xff]
          %v6929 = vld [vmem:[#allocation12 + $0x198] sm:$0xff]
          %v6930 = vld [vmem:[#allocation12 + $0x1a0] sm:$0xff]
          %v6931 = vld [vmem:[#allocation12 + $0x1a8] sm:$0xff]
          %v6932 = vld [vmem:[#allocation12 + $0x1b0] sm:$0xff]
          %v6933 = vld [vmem:[#allocation12 + $0x1b8] sm:$0xff]
          %v6934 = vld [vmem:[#allocation12 + $0x1c0] sm:$0xff]
          %v6935 = vld [vmem:[#allocation12 + $0x1c8] sm:$0xff]
          %v6936 = vld [vmem:[#allocation12 + $0x1d0] sm:$0xff]
          %v6937 = vld [vmem:[#allocation12 + $0x1d8] sm:$0xff]
          %v6938 = vld [vmem:[#allocation12 + $0x1e0] sm:$0xff]
          %v6939 = vld [vmem:[#allocation12 + $0x1e8] sm:$0xff]
          %v6940 = vld [vmem:[#allocation12 + $0x1f0] sm:$0xff]
          %v6941 = vld [vmem:[#allocation12 + $0x1f8] sm:$0xff]
          %v6942 = vld [vmem:[#allocation12 + $0x200] sm:$0xff]
          %v6943 = vld [vmem:[#allocation12 + $0x208] sm:$0xff]
          %v6944 = vld [vmem:[#allocation12 + $0x210] sm:$0xff]
          %v6945 = vld [vmem:[#allocation12 + $0x218] sm:$0xff]
          %v6946 = vld [vmem:[#allocation12 + $0x220] sm:$0xff]
          %v6947 = vld [vmem:[#allocation12 + $0x228] sm:$0xff]
          %v6948 = vld [vmem:[#allocation12 + $0x230] sm:$0xff]
          %v6949 = vld [vmem:[#allocation12 + $0x238] sm:$0xff]
          %v6950 = vld [vmem:[#allocation12 + $0x240] sm:$0xff]
          %v6951 = vld [vmem:[#allocation12 + $0x248] sm:$0xff]
          %v6952 = vld [vmem:[#allocation12 + $0x250] sm:$0xff]
          %v6953 = vld [vmem:[#allocation12 + $0x258] sm:$0xff]
          %v6954 = vld [vmem:[#allocation12 + $0x260] sm:$0xff]
          %v6955 = vld [vmem:[#allocation12 + $0x268] sm:$0xff]
          %v6956 = vld [vmem:[#allocation12 + $0x270] sm:$0xff]
          %v6957 = vld [vmem:[#allocation12 + $0x278] sm:$0xff]
          %v6958 = vld [vmem:[#allocation12 + $0x280] sm:$0xff]
          %v6959 = vld [vmem:[#allocation12 + $0x288] sm:$0xff]
          %v6960 = vld [vmem:[#allocation12 + $0x290] sm:$0xff]
          %v6961 = vld [vmem:[#allocation12 + $0x298] sm:$0xff]
          %v6962 = vld [vmem:[#allocation12 + $0x2a0] sm:$0xff]
          %v6963 = vld [vmem:[#allocation12 + $0x2a8] sm:$0xff]
          %v6964 = vld [vmem:[#allocation12 + $0x2b0] sm:$0xff]
          %v6965 = vld [vmem:[#allocation12 + $0x2b8] sm:$0xff]
          %v6966 = vld [vmem:[#allocation12 + $0x2c0] sm:$0xff]
          %v6967 = vld [vmem:[#allocation12 + $0x2c8] sm:$0xff]
          %v6968 = vld [vmem:[#allocation12 + $0x2d0] sm:$0xff]
          %v6969 = vld [vmem:[#allocation12 + $0x2d8] sm:$0xff]
          %v6970 = vld [vmem:[#allocation12 + $0x2e0] sm:$0xff]
          %v6971 = vld [vmem:[#allocation12 + $0x2e8] sm:$0xff]
          %v6972 = vld [vmem:[#allocation12 + $0x2f0] sm:$0xff]
          %v6973 = vld [vmem:[#allocation12 + $0x2f8] sm:$0xff]
          %v6974 = vld [vmem:[#allocation12 + $0x300] sm:$0xff]
          %v6975 = vld [vmem:[#allocation12 + $0x308] sm:$0xff]
          %v6976 = vld [vmem:[#allocation12 + $0x310] sm:$0xff]
          %v6977 = vld [vmem:[#allocation12 + $0x318] sm:$0xff]
          %v6978 = vld [vmem:[#allocation12 + $0x320] sm:$0xff]
          %v6979 = vld [vmem:[#allocation12 + $0x328] sm:$0xff]
          %v6980 = vld [vmem:[#allocation12 + $0x330] sm:$0xff]
          %v6981 = vld [vmem:[#allocation12 + $0x338] sm:$0xff]
          %v6982 = vld [vmem:[#allocation12 + $0x340] sm:$0xff]
          %v6983 = vld [vmem:[#allocation12 + $0x348] sm:$0xff]
          %v6984 = vld [vmem:[#allocation12 + $0x350] sm:$0xff]
          %v6985 = vld [vmem:[#allocation12 + $0x358] sm:$0xff]
          %v6986 = vld [vmem:[#allocation12 + $0x360] sm:$0xff]
          %v6987 = vld [vmem:[#allocation12 + $0x368] sm:$0xff]
          %v6988 = vld [vmem:[#allocation12 + $0x370] sm:$0xff]
          %v6989 = vld [vmem:[#allocation12 + $0x378] sm:$0xff]
          %v6990 = vld [vmem:[#allocation12 + $0x380] sm:$0xff]
          %v6991 = vld [vmem:[#allocation12 + $0x388] sm:$0xff]
          %v6992 = vld [vmem:[#allocation12 + $0x390] sm:$0xff]
          %v6993 = vld [vmem:[#allocation12 + $0x398] sm:$0xff]
          %v6994 = vld [vmem:[#allocation12 + $0x3a0] sm:$0xff]
          %v6995 = vld [vmem:[#allocation12 + $0x3a8] sm:$0xff]
          %v6996 = vld [vmem:[#allocation12 + $0x3b0] sm:$0xff]
          %v6997 = vld [vmem:[#allocation12 + $0x3b8] sm:$0xff]
          %v6998 = vld [vmem:[#allocation12 + $0x3c0] sm:$0xff]
          %v6999 = vld [vmem:[#allocation12 + $0x3c8] sm:$0xff]
          %v7000 = vld [vmem:[#allocation12 + $0x3d0] sm:$0xff]
          %v7001 = vld [vmem:[#allocation12 + $0x3d8] sm:$0xff]
          %v7002 = vld [vmem:[#allocation12 + $0x3e0] sm:$0xff]
          %v7003 = vld [vmem:[#allocation12 + $0x3e8] sm:$0xff]
          %v7004 = vld [vmem:[#allocation12 + $0x3f0] sm:$0xff]
          %v7005 = vld [vmem:[#allocation12 + $0x3f8] sm:$0xff]
          %v7006 = vunpack.c.l.bf16 %v6878
          %v7007 = vunpack.c.h.bf16 %v6878
          %v7008 = vunpack.c.l.bf16 %v6879
          %v7009 = vunpack.c.h.bf16 %v6879
          %v7010 = vunpack.c.l.bf16 %v6880
          %v7011 = vunpack.c.h.bf16 %v6880
          %v7012 = vunpack.c.l.bf16 %v6881
          %v7013 = vunpack.c.h.bf16 %v6881
          %v7014 = vunpack.c.l.bf16 %v6882
          %v7015 = vunpack.c.h.bf16 %v6882
          %v7016 = vunpack.c.l.bf16 %v6883
          %v7017 = vunpack.c.h.bf16 %v6883
          %v7018 = vunpack.c.l.bf16 %v6884
          %v7019 = vunpack.c.h.bf16 %v6884
          %v7020 = vunpack.c.l.bf16 %v6885
          %v7021 = vunpack.c.h.bf16 %v6885
          %v7022 = vunpack.c.l.bf16 %v6886
          %v7023 = vunpack.c.h.bf16 %v6886
          %v7024 = vunpack.c.l.bf16 %v6887
          %v7025 = vunpack.c.h.bf16 %v6887
          %v7026 = vunpack.c.l.bf16 %v6888
          %v7027 = vunpack.c.h.bf16 %v6888
          %v7028 = vunpack.c.l.bf16 %v6889
          %v7029 = vunpack.c.h.bf16 %v6889
          %v7030 = vunpack.c.l.bf16 %v6890
          %v7031 = vunpack.c.h.bf16 %v6890
          %v7032 = vunpack.c.l.bf16 %v6891
          %v7033 = vunpack.c.h.bf16 %v6891
          %v7034 = vunpack.c.l.bf16 %v6892
          %v7035 = vunpack.c.h.bf16 %v6892
          %v7036 = vunpack.c.l.bf16 %v6893
          %v7037 = vunpack.c.h.bf16 %v6893
          %v7038 = vunpack.c.l.bf16 %v6894
          %v7039 = vunpack.c.h.bf16 %v6894
          %v7040 = vunpack.c.l.bf16 %v6895
          %v7041 = vunpack.c.h.bf16 %v6895
          %v7042 = vunpack.c.l.bf16 %v6896
          %v7043 = vunpack.c.h.bf16 %v6896
          %v7044 = vunpack.c.l.bf16 %v6897
          %v7045 = vunpack.c.h.bf16 %v6897
          %v7046 = vunpack.c.l.bf16 %v6898
          %v7047 = vunpack.c.h.bf16 %v6898
          %v7048 = vunpack.c.l.bf16 %v6899
          %v7049 = vunpack.c.h.bf16 %v6899
          %v7050 = vunpack.c.l.bf16 %v6900
          %v7051 = vunpack.c.h.bf16 %v6900
          %v7052 = vunpack.c.l.bf16 %v6901
          %v7053 = vunpack.c.h.bf16 %v6901
          %v7054 = vunpack.c.l.bf16 %v6902
          %v7055 = vunpack.c.h.bf16 %v6902
          %v7056 = vunpack.c.l.bf16 %v6903
          %v7057 = vunpack.c.h.bf16 %v6903
          %v7058 = vunpack.c.l.bf16 %v6904
          %v7059 = vunpack.c.h.bf16 %v6904
          %v7060 = vunpack.c.l.bf16 %v6905
          %v7061 = vunpack.c.h.bf16 %v6905
          %v7062 = vunpack.c.l.bf16 %v6906
          %v7063 = vunpack.c.h.bf16 %v6906
          %v7064 = vunpack.c.l.bf16 %v6907
          %v7065 = vunpack.c.h.bf16 %v6907
          %v7066 = vunpack.c.l.bf16 %v6908
          %v7067 = vunpack.c.h.bf16 %v6908
          %v7068 = vunpack.c.l.bf16 %v6909
          %v7069 = vunpack.c.h.bf16 %v6909
          %v7070 = vunpack.c.l.bf16 %v6910
          %v7071 = vunpack.c.h.bf16 %v6910
          %v7072 = vunpack.c.l.bf16 %v6911
          %v7073 = vunpack.c.h.bf16 %v6911
          %v7074 = vunpack.c.l.bf16 %v6912
          %v7075 = vunpack.c.h.bf16 %v6912
          %v7076 = vunpack.c.l.bf16 %v6913
          %v7077 = vunpack.c.h.bf16 %v6913
          %v7078 = vunpack.c.l.bf16 %v6914
          %v7079 = vunpack.c.h.bf16 %v6914
          %v7080 = vunpack.c.l.bf16 %v6915
          %v7081 = vunpack.c.h.bf16 %v6915
          %v7082 = vunpack.c.l.bf16 %v6916
          %v7083 = vunpack.c.h.bf16 %v6916
          %v7084 = vunpack.c.l.bf16 %v6917
          %v7085 = vunpack.c.h.bf16 %v6917
          %v7086 = vunpack.c.l.bf16 %v6918
          %v7087 = vunpack.c.h.bf16 %v6918
          %v7088 = vunpack.c.l.bf16 %v6919
          %v7089 = vunpack.c.h.bf16 %v6919
          %v7090 = vunpack.c.l.bf16 %v6920
          %v7091 = vunpack.c.h.bf16 %v6920
          %v7092 = vunpack.c.l.bf16 %v6921
          %v7093 = vunpack.c.h.bf16 %v6921
          %v7094 = vunpack.c.l.bf16 %v6922
          %v7095 = vunpack.c.h.bf16 %v6922
          %v7096 = vunpack.c.l.bf16 %v6923
          %v7097 = vunpack.c.h.bf16 %v6923
          %v7098 = vunpack.c.l.bf16 %v6924
          %v7099 = vunpack.c.h.bf16 %v6924
          %v7100 = vunpack.c.l.bf16 %v6925
          %v7101 = vunpack.c.h.bf16 %v6925
          %v7102 = vunpack.c.l.bf16 %v6926
          %v7103 = vunpack.c.h.bf16 %v6926
          %v7104 = vunpack.c.l.bf16 %v6927
          %v7105 = vunpack.c.h.bf16 %v6927
          %v7106 = vunpack.c.l.bf16 %v6928
          %v7107 = vunpack.c.h.bf16 %v6928
          %v7108 = vunpack.c.l.bf16 %v6929
          %v7109 = vunpack.c.h.bf16 %v6929
          %v7110 = vunpack.c.l.bf16 %v6930
          %v7111 = vunpack.c.h.bf16 %v6930
          %v7112 = vunpack.c.l.bf16 %v6931
          %v7113 = vunpack.c.h.bf16 %v6931
          %v7114 = vunpack.c.l.bf16 %v6932
          %v7115 = vunpack.c.h.bf16 %v6932
          %v7116 = vunpack.c.l.bf16 %v6933
          %v7117 = vunpack.c.h.bf16 %v6933
          %v7118 = vunpack.c.l.bf16 %v6934
          %v7119 = vunpack.c.h.bf16 %v6934
          %v7120 = vunpack.c.l.bf16 %v6935
          %v7121 = vunpack.c.h.bf16 %v6935
          %v7122 = vunpack.c.l.bf16 %v6936
          %v7123 = vunpack.c.h.bf16 %v6936
          %v7124 = vunpack.c.l.bf16 %v6937
          %v7125 = vunpack.c.h.bf16 %v6937
          %v7126 = vunpack.c.l.bf16 %v6938
          %v7127 = vunpack.c.h.bf16 %v6938
          %v7128 = vunpack.c.l.bf16 %v6939
          %v7129 = vunpack.c.h.bf16 %v6939
          %v7130 = vunpack.c.l.bf16 %v6940
          %v7131 = vunpack.c.h.bf16 %v6940
          %v7132 = vunpack.c.l.bf16 %v6941
          %v7133 = vunpack.c.h.bf16 %v6941
          %v7134 = vunpack.c.l.bf16 %v6942
          %v7135 = vunpack.c.h.bf16 %v6942
          %v7136 = vunpack.c.l.bf16 %v6943
          %v7137 = vunpack.c.h.bf16 %v6943
          %v7138 = vunpack.c.l.bf16 %v6944
          %v7139 = vunpack.c.h.bf16 %v6944
          %v7140 = vunpack.c.l.bf16 %v6945
          %v7141 = vunpack.c.h.bf16 %v6945
          %v7142 = vunpack.c.l.bf16 %v6946
          %v7143 = vunpack.c.h.bf16 %v6946
          %v7144 = vunpack.c.l.bf16 %v6947
          %v7145 = vunpack.c.h.bf16 %v6947
          %v7146 = vunpack.c.l.bf16 %v6948
          %v7147 = vunpack.c.h.bf16 %v6948
          %v7148 = vunpack.c.l.bf16 %v6949
          %v7149 = vunpack.c.h.bf16 %v6949
          %v7150 = vunpack.c.l.bf16 %v6950
          %v7151 = vunpack.c.h.bf16 %v6950
          %v7152 = vunpack.c.l.bf16 %v6951
          %v7153 = vunpack.c.h.bf16 %v6951
          %v7154 = vunpack.c.l.bf16 %v6952
          %v7155 = vunpack.c.h.bf16 %v6952
          %v7156 = vunpack.c.l.bf16 %v6953
          %v7157 = vunpack.c.h.bf16 %v6953
          %v7158 = vunpack.c.l.bf16 %v6954
          %v7159 = vunpack.c.h.bf16 %v6954
          %v7160 = vunpack.c.l.bf16 %v6955
          %v7161 = vunpack.c.h.bf16 %v6955
          %v7162 = vunpack.c.l.bf16 %v6956
          %v7163 = vunpack.c.h.bf16 %v6956
          %v7164 = vunpack.c.l.bf16 %v6957
          %v7165 = vunpack.c.h.bf16 %v6957
          %v7166 = vunpack.c.l.bf16 %v6958
          %v7167 = vunpack.c.h.bf16 %v6958
          %v7168 = vunpack.c.l.bf16 %v6959
          %v7169 = vunpack.c.h.bf16 %v6959
          %v7170 = vunpack.c.l.bf16 %v6960
          %v7171 = vunpack.c.h.bf16 %v6960
          %v7172 = vunpack.c.l.bf16 %v6961
          %v7173 = vunpack.c.h.bf16 %v6961
          %v7174 = vunpack.c.l.bf16 %v6962
          %v7175 = vunpack.c.h.bf16 %v6962
          %v7176 = vunpack.c.l.bf16 %v6963
          %v7177 = vunpack.c.h.bf16 %v6963
          %v7178 = vunpack.c.l.bf16 %v6964
          %v7179 = vunpack.c.h.bf16 %v6964
          %v7180 = vunpack.c.l.bf16 %v6965
          %v7181 = vunpack.c.h.bf16 %v6965
          %v7182 = vunpack.c.l.bf16 %v6966
          %v7183 = vunpack.c.h.bf16 %v6966
          %v7184 = vunpack.c.l.bf16 %v6967
          %v7185 = vunpack.c.h.bf16 %v6967
          %v7186 = vunpack.c.l.bf16 %v6968
          %v7187 = vunpack.c.h.bf16 %v6968
          %v7188 = vunpack.c.l.bf16 %v6969
          %v7189 = vunpack.c.h.bf16 %v6969
          %v7190 = vunpack.c.l.bf16 %v6970
          %v7191 = vunpack.c.h.bf16 %v6970
          %v7192 = vunpack.c.l.bf16 %v6971
          %v7193 = vunpack.c.h.bf16 %v6971
          %v7194 = vunpack.c.l.bf16 %v6972
          %v7195 = vunpack.c.h.bf16 %v6972
          %v7196 = vunpack.c.l.bf16 %v6973
          %v7197 = vunpack.c.h.bf16 %v6973
          %v7198 = vunpack.c.l.bf16 %v6974
          %v7199 = vunpack.c.h.bf16 %v6974
          %v7200 = vunpack.c.l.bf16 %v6975
          %v7201 = vunpack.c.h.bf16 %v6975
          %v7202 = vunpack.c.l.bf16 %v6976
          %v7203 = vunpack.c.h.bf16 %v6976
          %v7204 = vunpack.c.l.bf16 %v6977
          %v7205 = vunpack.c.h.bf16 %v6977
          %v7206 = vunpack.c.l.bf16 %v6978
          %v7207 = vunpack.c.h.bf16 %v6978
          %v7208 = vunpack.c.l.bf16 %v6979
          %v7209 = vunpack.c.h.bf16 %v6979
          %v7210 = vunpack.c.l.bf16 %v6980
          %v7211 = vunpack.c.h.bf16 %v6980
          %v7212 = vunpack.c.l.bf16 %v6981
          %v7213 = vunpack.c.h.bf16 %v6981
          %v7214 = vunpack.c.l.bf16 %v6982
          %v7215 = vunpack.c.h.bf16 %v6982
          %v7216 = vunpack.c.l.bf16 %v6983
          %v7217 = vunpack.c.h.bf16 %v6983
          %v7218 = vunpack.c.l.bf16 %v6984
          %v7219 = vunpack.c.h.bf16 %v6984
          %v7220 = vunpack.c.l.bf16 %v6985
          %v7221 = vunpack.c.h.bf16 %v6985
          %v7222 = vunpack.c.l.bf16 %v6986
          %v7223 = vunpack.c.h.bf16 %v6986
          %v7224 = vunpack.c.l.bf16 %v6987
          %v7225 = vunpack.c.h.bf16 %v6987
          %v7226 = vunpack.c.l.bf16 %v6988
          %v7227 = vunpack.c.h.bf16 %v6988
          %v7228 = vunpack.c.l.bf16 %v6989
          %v7229 = vunpack.c.h.bf16 %v6989
          %v7230 = vunpack.c.l.bf16 %v6990
          %v7231 = vunpack.c.h.bf16 %v6990
          %v7232 = vunpack.c.l.bf16 %v6991
          %v7233 = vunpack.c.h.bf16 %v6991
          %v7234 = vunpack.c.l.bf16 %v6992
          %v7235 = vunpack.c.h.bf16 %v6992
          %v7236 = vunpack.c.l.bf16 %v6993
          %v7237 = vunpack.c.h.bf16 %v6993
          %v7238 = vunpack.c.l.bf16 %v6994
          %v7239 = vunpack.c.h.bf16 %v6994
          %v7240 = vunpack.c.l.bf16 %v6995
          %v7241 = vunpack.c.h.bf16 %v6995
          %v7242 = vunpack.c.l.bf16 %v6996
          %v7243 = vunpack.c.h.bf16 %v6996
          %v7244 = vunpack.c.l.bf16 %v6997
          %v7245 = vunpack.c.h.bf16 %v6997
          %v7246 = vunpack.c.l.bf16 %v6998
          %v7247 = vunpack.c.h.bf16 %v6998
          %v7248 = vunpack.c.l.bf16 %v6999
          %v7249 = vunpack.c.h.bf16 %v6999
          %v7250 = vunpack.c.l.bf16 %v7000
          %v7251 = vunpack.c.h.bf16 %v7000
          %v7252 = vunpack.c.l.bf16 %v7001
          %v7253 = vunpack.c.h.bf16 %v7001
          %v7254 = vunpack.c.l.bf16 %v7002
          %v7255 = vunpack.c.h.bf16 %v7002
          %v7256 = vunpack.c.l.bf16 %v7003
          %v7257 = vunpack.c.h.bf16 %v7003
          %v7258 = vunpack.c.l.bf16 %v7004
          %v7259 = vunpack.c.h.bf16 %v7004
          %v7260 = vunpack.c.l.bf16 %v7005
          %v7261 = vunpack.c.h.bf16 %v7005
          %v7262 = vld [vmem:[#allocation14] sm:$0xf]
          %v7264 = vlaneseq
          %v7265 = vshrl.u32 %v7264, 7
          %v7266 = vsub.s32 0, %v7265
          %v7267 = vrot.slane %v7262, %v7266
          %v7268 = vlaneseq
          %v7269 = vshrl.u32 %v7268, 7
          %v7270 = vsub.s32 1, %v7269
          %v7271 = vrot.slane %v7262, %v7270
          %v7272 = vlaneseq
          %v7273 = vshrl.u32 %v7272, 7
          %v7274 = vsub.s32 2, %v7273
          %v7275 = vrot.slane %v7262, %v7274
          %v7276 = vlaneseq
          %v7277 = vshrl.u32 %v7276, 7
          %v7278 = vsub.s32 3, %v7277
          %v7279 = vrot.slane %v7262, %v7278
          %7284 = vmatprep.subr.mxu0 %v7007
          %7285 = vmatpush1.msra.mxu0 %v7006
          %7286 = vmatprep.subr.mxu0 %v7011
          %7287 = vmatpush1.msra.mxu0 %v7010
          %7288 = vmatprep.subr.mxu0 %v7015
          %7289 = vmatpush1.msra.mxu0 %v7014
          %7290 = vmatprep.subr.mxu0 %v7019
          %7291 = vmatpush1.msra.mxu0 %v7018
          %7292 = vmatprep.subr.mxu0 %v7023
          %7293 = vmatpush1.msra.mxu0 %v7022
          %7294 = vmatprep.subr.mxu0 %v7027
          %7295 = vmatpush1.msra.mxu0 %v7026
          %7296 = vmatprep.subr.mxu0 %v7031
          %7297 = vmatpush1.msra.mxu0 %v7030
          %7298 = vmatprep.subr.mxu0 %v7035
          %7299 = vmatpush1.msra.mxu0 %v7034
          %7300 = vmatprep.subr.mxu0 %v7039
          %7301 = vmatpush1.msra.mxu0 %v7038
          %7302 = vmatprep.subr.mxu0 %v7043
          %7303 = vmatpush1.msra.mxu0 %v7042
          %7304 = vmatprep.subr.mxu0 %v7047
          %7305 = vmatpush1.msra.mxu0 %v7046
          %7306 = vmatprep.subr.mxu0 %v7051
          %7307 = vmatpush1.msra.mxu0 %v7050
          %7308 = vmatprep.subr.mxu0 %v7055
          %7309 = vmatpush1.msra.mxu0 %v7054
          %7310 = vmatprep.subr.mxu0 %v7059
          %7311 = vmatpush1.msra.mxu0 %v7058
          %7312 = vmatprep.subr.mxu0 %v7063
          %7313 = vmatpush1.msra.mxu0 %v7062
          %7314 = vmatprep.subr.mxu0 %v7067
          %7315 = vmatpush1.msra.mxu0 %v7066
          %7316 = vmatprep.subr.mxu0 %v7071
          %7317 = vmatpush1.msra.mxu0 %v7070
          %7318 = vmatprep.subr.mxu0 %v7075
          %7319 = vmatpush1.msra.mxu0 %v7074
          %7320 = vmatprep.subr.mxu0 %v7079
          %7321 = vmatpush1.msra.mxu0 %v7078
          %7322 = vmatprep.subr.mxu0 %v7083
          %7323 = vmatpush1.msra.mxu0 %v7082
          %7324 = vmatprep.subr.mxu0 %v7087
          %7325 = vmatpush1.msra.mxu0 %v7086
          %7326 = vmatprep.subr.mxu0 %v7091
          %7327 = vmatpush1.msra.mxu0 %v7090
          %7328 = vmatprep.subr.mxu0 %v7095
          %7329 = vmatpush1.msra.mxu0 %v7094
          %7330 = vmatprep.subr.mxu0 %v7099
          %7331 = vmatpush1.msra.mxu0 %v7098
          %7332 = vmatprep.subr.mxu0 %v7103
          %7333 = vmatpush1.msra.mxu0 %v7102
          %7334 = vmatprep.subr.mxu0 %v7107
          %7335 = vmatpush1.msra.mxu0 %v7106
          %7336 = vmatprep.subr.mxu0 %v7111
          %7337 = vmatpush1.msra.mxu0 %v7110
          %7338 = vmatprep.subr.mxu0 %v7115
          %7339 = vmatpush1.msra.mxu0 %v7114
          %7340 = vmatprep.subr.mxu0 %v7119
          %7341 = vmatpush1.msra.mxu0 %v7118
          %7342 = vmatprep.subr.mxu0 %v7123
          %7343 = vmatpush1.msra.mxu0 %v7122
          %7344 = vmatprep.subr.mxu0 %v7127
          %7345 = vmatpush1.msra.mxu0 %v7126
          %7346 = vmatprep.subr.mxu0 %v7131
          %7347 = vmatpush1.msra.mxu0 %v7130
          %7348 = vmatprep.mubr.f32.mxu0 %v6875
          %7349 = vmatmul.mubr.f32.gmra.mrb[0].mxu0 %v6874
          %v7350 = vpop.f32.mrb[0].mxu0
          %v7351 = vadd.f32 %v7267, %v7350
          %v7352 = vpop.f32.mrb[0].mxu0
          %v7353 = vadd.f32 %v7271, %v7352
          %7354 = vdwg.mxu0
          %7355 = vmatprep.subr.mxu0 %v7135
          %7356 = vmatpush1.msra.mxu0 %v7134
          %7357 = vmatprep.subr.mxu0 %v7139
          %7358 = vmatpush1.msra.mxu0 %v7138
          %7359 = vmatprep.subr.mxu0 %v7143
          %7360 = vmatpush1.msra.mxu0 %v7142
          %7361 = vmatprep.subr.mxu0 %v7147
          %7362 = vmatpush1.msra.mxu0 %v7146
          %7363 = vmatprep.subr.mxu0 %v7151
          %7364 = vmatpush1.msra.mxu0 %v7150
          %7365 = vmatprep.subr.mxu0 %v7155
          %7366 = vmatpush1.msra.mxu0 %v7154
          %7367 = vmatprep.subr.mxu0 %v7159
          %7368 = vmatpush1.msra.mxu0 %v7158
          %7369 = vmatprep.subr.mxu0 %v7163
          %7370 = vmatpush1.msra.mxu0 %v7162
          %7371 = vmatprep.subr.mxu0 %v7167
          %7372 = vmatpush1.msra.mxu0 %v7166
          %7373 = vmatprep.subr.mxu0 %v7171
          %7374 = vmatpush1.msra.mxu0 %v7170
          %7375 = vmatprep.subr.mxu0 %v7175
          %7376 = vmatpush1.msra.mxu0 %v7174
          %7377 = vmatprep.subr.mxu0 %v7179
          %7378 = vmatpush1.msra.mxu0 %v7178
          %7379 = vmatprep.subr.mxu0 %v7183
          %7380 = vmatpush1.msra.mxu0 %v7182
          %7381 = vmatprep.subr.mxu0 %v7187
          %7382 = vmatpush1.msra.mxu0 %v7186
          %7383 = vmatprep.subr.mxu0 %v7191
          %7384 = vmatpush1.msra.mxu0 %v7190
          %7385 = vmatprep.subr.mxu0 %v7195
          %7386 = vmatpush1.msra.mxu0 %v7194
          %7387 = vmatprep.subr.mxu0 %v7199
          %7388 = vmatpush1.msra.mxu0 %v7198
          %7389 = vmatprep.subr.mxu0 %v7203
          %7390 = vmatpush1.msra.mxu0 %v7202
          %7391 = vmatprep.subr.mxu0 %v7207
          %7392 = vmatpush1.msra.mxu0 %v7206
          %7393 = vmatprep.subr.mxu0 %v7211
          %7394 = vmatpush1.msra.mxu0 %v7210
          %7395 = vmatprep.subr.mxu0 %v7215
          %7396 = vmatpush1.msra.mxu0 %v7214
          %7397 = vmatprep.subr.mxu0 %v7219
          %7398 = vmatpush1.msra.mxu0 %v7218
          %7399 = vmatprep.subr.mxu0 %v7223
          %7400 = vmatpush1.msra.mxu0 %v7222
          %7401 = vmatprep.subr.mxu0 %v7227
          %7402 = vmatpush1.msra.mxu0 %v7226
          %7403 = vmatprep.subr.mxu0 %v7231
          %7404 = vmatpush1.msra.mxu0 %v7230
          %7405 = vmatprep.subr.mxu0 %v7235
          %7406 = vmatpush1.msra.mxu0 %v7234
          %7407 = vmatprep.subr.mxu0 %v7239
          %7408 = vmatpush1.msra.mxu0 %v7238
          %7409 = vmatprep.subr.mxu0 %v7243
          %7410 = vmatpush1.msra.mxu0 %v7242
          %7411 = vmatprep.subr.mxu0 %v7247
          %7412 = vmatpush1.msra.mxu0 %v7246
          %7413 = vmatprep.subr.mxu0 %v7251
          %7414 = vmatpush1.msra.mxu0 %v7250
          %7415 = vmatprep.subr.mxu0 %v7255
          %7416 = vmatpush1.msra.mxu0 %v7254
          %7417 = vmatprep.subr.mxu0 %v7259
          %7418 = vmatpush1.msra.mxu0 %v7258
          %7419 = vmatprep.mubr.f32.mxu0 %v6877
          %7420 = vmatmul.mubr.f32.gmra.mrb[0].mxu0 %v6876
          %v7421 = vpop.f32.mrb[0].mxu0
          %v7422 = vadd.f32 %v7351, %v7421
          %v7423 = vpop.f32.mrb[0].mxu0
          %v7424 = vadd.f32 %v7353, %v7423
          %7425 = vdwg.mxu0
          %7426 = vmatprep.subr.mxu0 %v7009
          %7427 = vmatpush1.msra.mxu0 %v7008
          %7428 = vmatprep.subr.mxu0 %v7013
          %7429 = vmatpush1.msra.mxu0 %v7012
          %7430 = vmatprep.subr.mxu0 %v7017
          %7431 = vmatpush1.msra.mxu0 %v7016
          %7432 = vmatprep.subr.mxu0 %v7021
          %7433 = vmatpush1.msra.mxu0 %v7020
          %7434 = vmatprep.subr.mxu0 %v7025
          %7435 = vmatpush1.msra.mxu0 %v7024
          %7436 = vmatprep.subr.mxu0 %v7029
          %7437 = vmatpush1.msra.mxu0 %v7028
          %7438 = vmatprep.subr.mxu0 %v7033
          %7439 = vmatpush1.msra.mxu0 %v7032
          %7440 = vmatprep.subr.mxu0 %v7037
          %7441 = vmatpush1.msra.mxu0 %v7036
          %7442 = vmatprep.subr.mxu0 %v7041
          %7443 = vmatpush1.msra.mxu0 %v7040
          %7444 = vmatprep.subr.mxu0 %v7045
          %7445 = vmatpush1.msra.mxu0 %v7044
          %7446 = vmatprep.subr.mxu0 %v7049
          %7447 = vmatpush1.msra.mxu0 %v7048
          %7448 = vmatprep.subr.mxu0 %v7053
          %7449 = vmatpush1.msra.mxu0 %v7052
          %7450 = vmatprep.subr.mxu0 %v7057
          %7451 = vmatpush1.msra.mxu0 %v7056
          %7452 = vmatprep.subr.mxu0 %v7061
          %7453 = vmatpush1.msra.mxu0 %v7060
          %7454 = vmatprep.subr.mxu0 %v7065
          %7455 = vmatpush1.msra.mxu0 %v7064
          %7456 = vmatprep.subr.mxu0 %v7069
          %7457 = vmatpush1.msra.mxu0 %v7068
          %7458 = vmatprep.subr.mxu0 %v7073
          %7459 = vmatpush1.msra.mxu0 %v7072
          %7460 = vmatprep.subr.mxu0 %v7077
          %7461 = vmatpush1.msra.mxu0 %v7076
          %7462 = vmatprep.subr.mxu0 %v7081
          %7463 = vmatpush1.msra.mxu0 %v7080
          %7464 = vmatprep.subr.mxu0 %v7085
          %7465 = vmatpush1.msra.mxu0 %v7084
          %7466 = vmatprep.subr.mxu0 %v7089
          %7467 = vmatpush1.msra.mxu0 %v7088
          %7468 = vmatprep.subr.mxu0 %v7093
          %7469 = vmatpush1.msra.mxu0 %v7092
          %7470 = vmatprep.subr.mxu0 %v7097
          %7471 = vmatpush1.msra.mxu0 %v7096
          %7472 = vmatprep.subr.mxu0 %v7101
          %7473 = vmatpush1.msra.mxu0 %v7100
          %7474 = vmatprep.subr.mxu0 %v7105
          %7475 = vmatpush1.msra.mxu0 %v7104
          %7476 = vmatprep.subr.mxu0 %v7109
          %7477 = vmatpush1.msra.mxu0 %v7108
          %7478 = vmatprep.subr.mxu0 %v7113
          %7479 = vmatpush1.msra.mxu0 %v7112
          %7480 = vmatprep.subr.mxu0 %v7117
          %7481 = vmatpush1.msra.mxu0 %v7116
          %7482 = vmatprep.subr.mxu0 %v7121
          %7483 = vmatpush1.msra.mxu0 %v7120
          %7484 = vmatprep.subr.mxu0 %v7125
          %7485 = vmatpush1.msra.mxu0 %v7124
          %7486 = vmatprep.subr.mxu0 %v7129
          %7487 = vmatpush1.msra.mxu0 %v7128
          %7488 = vmatprep.subr.mxu0 %v7133
          %7489 = vmatpush1.msra.mxu0 %v7132
          %7490 = vmatprep.mubr.f32.mxu0 %v6875
          %7491 = vmatmul.mubr.f32.gmra.mrb[0].mxu0 %v6874
          %v7492 = vpop.f32.mrb[0].mxu0
          %v7493 = vadd.f32 %v7275, %v7492
          %v7494 = vpop.f32.mrb[0].mxu0
          %v7495 = vadd.f32 %v7279, %v7494
          %7496 = vdwg.mxu0
          %7497 = vmatprep.subr.mxu0 %v7137
          %7498 = vmatpush1.msra.mxu0 %v7136
          %7499 = vmatprep.subr.mxu0 %v7141
          %7500 = vmatpush1.msra.mxu0 %v7140
          %7501 = vmatprep.subr.mxu0 %v7145
          %7502 = vmatpush1.msra.mxu0 %v7144
          %7503 = vmatprep.subr.mxu0 %v7149
          %7504 = vmatpush1.msra.mxu0 %v7148
          %7505 = vmatprep.subr.mxu0 %v7153
          %7506 = vmatpush1.msra.mxu0 %v7152
          %7507 = vmatprep.subr.mxu0 %v7157
          %7508 = vmatpush1.msra.mxu0 %v7156
          %7509 = vmatprep.subr.mxu0 %v7161
          %7510 = vmatpush1.msra.mxu0 %v7160
          %7511 = vmatprep.subr.mxu0 %v7165
          %7512 = vmatpush1.msra.mxu0 %v7164
          %7513 = vmatprep.subr.mxu0 %v7169
          %7514 = vmatpush1.msra.mxu0 %v7168
          %7515 = vmatprep.subr.mxu0 %v7173
          %7516 = vmatpush1.msra.mxu0 %v7172
          %7517 = vmatprep.subr.mxu0 %v7177
          %7518 = vmatpush1.msra.mxu0 %v7176
          %7519 = vmatprep.subr.mxu0 %v7181
          %7520 = vmatpush1.msra.mxu0 %v7180
          %7521 = vmatprep.subr.mxu0 %v7185
          %7522 = vmatpush1.msra.mxu0 %v7184
          %7523 = vmatprep.subr.mxu0 %v7189
          %7524 = vmatpush1.msra.mxu0 %v7188
          %7525 = vmatprep.subr.mxu0 %v7193
          %7526 = vmatpush1.msra.mxu0 %v7192
          %7527 = vmatprep.subr.mxu0 %v7197
          %7528 = vmatpush1.msra.mxu0 %v7196
          %7529 = vmatprep.subr.mxu0 %v7201
          %7530 = vmatpush1.msra.mxu0 %v7200
          %7531 = vmatprep.subr.mxu0 %v7205
          %7532 = vmatpush1.msra.mxu0 %v7204
          %7533 = vmatprep.subr.mxu0 %v7209
          %7534 = vmatpush1.msra.mxu0 %v7208
          %7535 = vmatprep.subr.mxu0 %v7213
          %7536 = vmatpush1.msra.mxu0 %v7212
          %7537 = vmatprep.subr.mxu0 %v7217
          %7538 = vmatpush1.msra.mxu0 %v7216
          %7539 = vmatprep.subr.mxu0 %v7221
          %7540 = vmatpush1.msra.mxu0 %v7220
          %7541 = vmatprep.subr.mxu0 %v7225
          %7542 = vmatpush1.msra.mxu0 %v7224
          %7543 = vmatprep.subr.mxu0 %v7229
          %7544 = vmatpush1.msra.mxu0 %v7228
          %7545 = vmatprep.subr.mxu0 %v7233
          %7546 = vmatpush1.msra.mxu0 %v7232
          %7547 = vmatprep.subr.mxu0 %v7237
          %7548 = vmatpush1.msra.mxu0 %v7236
          %7549 = vmatprep.subr.mxu0 %v7241
          %7550 = vmatpush1.msra.mxu0 %v7240
          %7551 = vmatprep.subr.mxu0 %v7245
          %7552 = vmatpush1.msra.mxu0 %v7244
          %7553 = vmatprep.subr.mxu0 %v7249
          %7554 = vmatpush1.msra.mxu0 %v7248
          %7555 = vmatprep.subr.mxu0 %v7253
          %7556 = vmatpush1.msra.mxu0 %v7252
          %7557 = vmatprep.subr.mxu0 %v7257
          %7558 = vmatpush1.msra.mxu0 %v7256
          %7559 = vmatprep.subr.mxu0 %v7261
          %7560 = vmatpush1.msra.mxu0 %v7260
          %7561 = vmatprep.mubr.f32.mxu0 %v6877
          %7562 = vmatmul.mubr.f32.gmra.mrb[0].mxu0 %v6876
          %v7563 = vpop.f32.mrb[0].mxu0
          %v7564 = vadd.f32 %v7493, %v7563
          %v7565 = vpop.f32.mrb[0].mxu0
          %v7566 = vadd.f32 %v7495, %v7565
          %7567 = vdwg.mxu0
          %v7568 = vmax.f32 %v7422, 0.0
          %v7569 = vmax.f32 %v7424, 0.0
          %v7570 = vmax.f32 %v7564, 0.0
          %v7571 = vmax.f32 %v7566, 0.0
          %v7572 = vld [vmem:[#allocation15] sm:$0xff]
          %v7573 = vld [vmem:[#allocation15 + $0x8] sm:$0xff]
          %v7574 = vld [vmem:[#allocation15 + $0x10] sm:$0xff]
          %v7575 = vld [vmem:[#allocation15 + $0x18] sm:$0xff]
          %v7576 = vld [vmem:[#allocation15 + $0x20] sm:$0xff]
          %v7577 = vld [vmem:[#allocation15 + $0x28] sm:$0xff]
          %v7578 = vld [vmem:[#allocation15 + $0x30] sm:$0xff]
          %v7579 = vld [vmem:[#allocation15 + $0x38] sm:$0xff]
          %v7580 = vld [vmem:[#allocation15 + $0x40] sm:$0xff]
          %v7581 = vld [vmem:[#allocation15 + $0x48] sm:$0xff]
          %v7582 = vld [vmem:[#allocation15 + $0x50] sm:$0xff]
          %v7583 = vld [vmem:[#allocation15 + $0x58] sm:$0xff]
          %v7584 = vld [vmem:[#allocation15 + $0x60] sm:$0xff]
          %v7585 = vld [vmem:[#allocation15 + $0x68] sm:$0xff]
          %v7586 = vld [vmem:[#allocation15 + $0x70] sm:$0xff]
          %v7587 = vld [vmem:[#allocation15 + $0x78] sm:$0xff]
          %v7588 = vld [vmem:[#allocation15 + $0x80] sm:$0xff]
          %v7589 = vld [vmem:[#allocation15 + $0x88] sm:$0xff]
          %v7590 = vld [vmem:[#allocation15 + $0x90] sm:$0xff]
          %v7591 = vld [vmem:[#allocation15 + $0x98] sm:$0xff]
          %v7592 = vld [vmem:[#allocation15 + $0xa0] sm:$0xff]
          %v7593 = vld [vmem:[#allocation15 + $0xa8] sm:$0xff]
          %v7594 = vld [vmem:[#allocation15 + $0xb0] sm:$0xff]
          %v7595 = vld [vmem:[#allocation15 + $0xb8] sm:$0xff]
          %v7596 = vld [vmem:[#allocation15 + $0xc0] sm:$0xff]
          %v7597 = vld [vmem:[#allocation15 + $0xc8] sm:$0xff]
          %v7598 = vld [vmem:[#allocation15 + $0xd0] sm:$0xff]
          %v7599 = vld [vmem:[#allocation15 + $0xd8] sm:$0xff]
          %v7600 = vld [vmem:[#allocation15 + $0xe0] sm:$0xff]
          %v7601 = vld [vmem:[#allocation15 + $0xe8] sm:$0xff]
          %v7602 = vld [vmem:[#allocation15 + $0xf0] sm:$0xff]
          %v7603 = vld [vmem:[#allocation15 + $0xf8] sm:$0xff]
          %v7604 = vld [vmem:[#allocation15 + $0x100] sm:$0xff]
          %v7605 = vld [vmem:[#allocation15 + $0x108] sm:$0xff]
          %v7606 = vld [vmem:[#allocation15 + $0x110] sm:$0xff]
          %v7607 = vld [vmem:[#allocation15 + $0x118] sm:$0xff]
          %v7608 = vld [vmem:[#allocation15 + $0x120] sm:$0xff]
          %v7609 = vld [vmem:[#allocation15 + $0x128] sm:$0xff]
          %v7610 = vld [vmem:[#allocation15 + $0x130] sm:$0xff]
          %v7611 = vld [vmem:[#allocation15 + $0x138] sm:$0xff]
          %v7612 = vld [vmem:[#allocation15 + $0x140] sm:$0xff]
          %v7613 = vld [vmem:[#allocation15 + $0x148] sm:$0xff]
          %v7614 = vld [vmem:[#allocation15 + $0x150] sm:$0xff]
          %v7615 = vld [vmem:[#allocation15 + $0x158] sm:$0xff]
          %v7616 = vld [vmem:[#allocation15 + $0x160] sm:$0xff]
          %v7617 = vld [vmem:[#allocation15 + $0x168] sm:$0xff]
          %v7618 = vld [vmem:[#allocation15 + $0x170] sm:$0xff]
          %v7619 = vld [vmem:[#allocation15 + $0x178] sm:$0xff]
          %v7620 = vld [vmem:[#allocation15 + $0x180] sm:$0xff]
          %v7621 = vld [vmem:[#allocation15 + $0x188] sm:$0xff]
          %v7622 = vld [vmem:[#allocation15 + $0x190] sm:$0xff]
          %v7623 = vld [vmem:[#allocation15 + $0x198] sm:$0xff]
          %v7624 = vld [vmem:[#allocation15 + $0x1a0] sm:$0xff]
          %v7625 = vld [vmem:[#allocation15 + $0x1a8] sm:$0xff]
          %v7626 = vld [vmem:[#allocation15 + $0x1b0] sm:$0xff]
          %v7627 = vld [vmem:[#allocation15 + $0x1b8] sm:$0xff]
          %v7628 = vld [vmem:[#allocation15 + $0x1c0] sm:$0xff]
          %v7629 = vld [vmem:[#allocation15 + $0x1c8] sm:$0xff]
          %v7630 = vld [vmem:[#allocation15 + $0x1d0] sm:$0xff]
          %v7631 = vld [vmem:[#allocation15 + $0x1d8] sm:$0xff]
          %v7632 = vld [vmem:[#allocation15 + $0x1e0] sm:$0xff]
          %v7633 = vld [vmem:[#allocation15 + $0x1e8] sm:$0xff]
          %v7634 = vld [vmem:[#allocation15 + $0x1f0] sm:$0xff]
          %v7635 = vld [vmem:[#allocation15 + $0x1f8] sm:$0xff]
          %v7636 = vunpack.c.l.bf16 %v7572
          %v7637 = vunpack.c.h.bf16 %v7572
          %v7638 = vunpack.c.l.bf16 %v7573
          %v7639 = vunpack.c.h.bf16 %v7573
          %v7640 = vunpack.c.l.bf16 %v7574
          %v7641 = vunpack.c.h.bf16 %v7574
          %v7642 = vunpack.c.l.bf16 %v7575
          %v7643 = vunpack.c.h.bf16 %v7575
          %v7644 = vunpack.c.l.bf16 %v7576
          %v7645 = vunpack.c.h.bf16 %v7576
          %v7646 = vunpack.c.l.bf16 %v7577
          %v7647 = vunpack.c.h.bf16 %v7577
          %v7648 = vunpack.c.l.bf16 %v7578
          %v7649 = vunpack.c.h.bf16 %v7578
          %v7650 = vunpack.c.l.bf16 %v7579
          %v7651 = vunpack.c.h.bf16 %v7579
          %v7652 = vunpack.c.l.bf16 %v7580
          %v7653 = vunpack.c.h.bf16 %v7580
          %v7654 = vunpack.c.l.bf16 %v7581
          %v7655 = vunpack.c.h.bf16 %v7581
          %v7656 = vunpack.c.l.bf16 %v7582
          %v7657 = vunpack.c.h.bf16 %v7582
          %v7658 = vunpack.c.l.bf16 %v7583
          %v7659 = vunpack.c.h.bf16 %v7583
          %v7660 = vunpack.c.l.bf16 %v7584
          %v7661 = vunpack.c.h.bf16 %v7584
          %v7662 = vunpack.c.l.bf16 %v7585
          %v7663 = vunpack.c.h.bf16 %v7585
          %v7664 = vunpack.c.l.bf16 %v7586
          %v7665 = vunpack.c.h.bf16 %v7586
          %v7666 = vunpack.c.l.bf16 %v7587
          %v7667 = vunpack.c.h.bf16 %v7587
          %v7668 = vunpack.c.l.bf16 %v7588
          %v7669 = vunpack.c.h.bf16 %v7588
          %v7670 = vunpack.c.l.bf16 %v7589
          %v7671 = vunpack.c.h.bf16 %v7589
          %v7672 = vunpack.c.l.bf16 %v7590
          %v7673 = vunpack.c.h.bf16 %v7590
          %v7674 = vunpack.c.l.bf16 %v7591
          %v7675 = vunpack.c.h.bf16 %v7591
          %v7676 = vunpack.c.l.bf16 %v7592
          %v7677 = vunpack.c.h.bf16 %v7592
          %v7678 = vunpack.c.l.bf16 %v7593
          %v7679 = vunpack.c.h.bf16 %v7593
          %v7680 = vunpack.c.l.bf16 %v7594
          %v7681 = vunpack.c.h.bf16 %v7594
          %v7682 = vunpack.c.l.bf16 %v7595
          %v7683 = vunpack.c.h.bf16 %v7595
          %v7684 = vunpack.c.l.bf16 %v7596
          %v7685 = vunpack.c.h.bf16 %v7596
          %v7686 = vunpack.c.l.bf16 %v7597
          %v7687 = vunpack.c.h.bf16 %v7597
          %v7688 = vunpack.c.l.bf16 %v7598
          %v7689 = vunpack.c.h.bf16 %v7598
          %v7690 = vunpack.c.l.bf16 %v7599
          %v7691 = vunpack.c.h.bf16 %v7599
          %v7692 = vunpack.c.l.bf16 %v7600
          %v7693 = vunpack.c.h.bf16 %v7600
          %v7694 = vunpack.c.l.bf16 %v7601
          %v7695 = vunpack.c.h.bf16 %v7601
          %v7696 = vunpack.c.l.bf16 %v7602
          %v7697 = vunpack.c.h.bf16 %v7602
          %v7698 = vunpack.c.l.bf16 %v7603
          %v7699 = vunpack.c.h.bf16 %v7603
          %v7700 = vunpack.c.l.bf16 %v7604
          %v7701 = vunpack.c.h.bf16 %v7604
          %v7702 = vunpack.c.l.bf16 %v7605
          %v7703 = vunpack.c.h.bf16 %v7605
          %v7704 = vunpack.c.l.bf16 %v7606
          %v7705 = vunpack.c.h.bf16 %v7606
          %v7706 = vunpack.c.l.bf16 %v7607
          %v7707 = vunpack.c.h.bf16 %v7607
          %v7708 = vunpack.c.l.bf16 %v7608
          %v7709 = vunpack.c.h.bf16 %v7608
          %v7710 = vunpack.c.l.bf16 %v7609
          %v7711 = vunpack.c.h.bf16 %v7609
          %v7712 = vunpack.c.l.bf16 %v7610
          %v7713 = vunpack.c.h.bf16 %v7610
          %v7714 = vunpack.c.l.bf16 %v7611
          %v7715 = vunpack.c.h.bf16 %v7611
          %v7716 = vunpack.c.l.bf16 %v7612
          %v7717 = vunpack.c.h.bf16 %v7612
          %v7718 = vunpack.c.l.bf16 %v7613
          %v7719 = vunpack.c.h.bf16 %v7613
          %v7720 = vunpack.c.l.bf16 %v7614
          %v7721 = vunpack.c.h.bf16 %v7614
          %v7722 = vunpack.c.l.bf16 %v7615
          %v7723 = vunpack.c.h.bf16 %v7615
          %v7724 = vunpack.c.l.bf16 %v7616
          %v7725 = vunpack.c.h.bf16 %v7616
          %v7726 = vunpack.c.l.bf16 %v7617
          %v7727 = vunpack.c.h.bf16 %v7617
          %v7728 = vunpack.c.l.bf16 %v7618
          %v7729 = vunpack.c.h.bf16 %v7618
          %v7730 = vunpack.c.l.bf16 %v7619
          %v7731 = vunpack.c.h.bf16 %v7619
          %v7732 = vunpack.c.l.bf16 %v7620
          %v7733 = vunpack.c.h.bf16 %v7620
          %v7734 = vunpack.c.l.bf16 %v7621
          %v7735 = vunpack.c.h.bf16 %v7621
          %v7736 = vunpack.c.l.bf16 %v7622
          %v7737 = vunpack.c.h.bf16 %v7622
          %v7738 = vunpack.c.l.bf16 %v7623
          %v7739 = vunpack.c.h.bf16 %v7623
          %v7740 = vunpack.c.l.bf16 %v7624
          %v7741 = vunpack.c.h.bf16 %v7624
          %v7742 = vunpack.c.l.bf16 %v7625
          %v7743 = vunpack.c.h.bf16 %v7625
          %v7744 = vunpack.c.l.bf16 %v7626
          %v7745 = vunpack.c.h.bf16 %v7626
          %v7746 = vunpack.c.l.bf16 %v7627
          %v7747 = vunpack.c.h.bf16 %v7627
          %v7748 = vunpack.c.l.bf16 %v7628
          %v7749 = vunpack.c.h.bf16 %v7628
          %v7750 = vunpack.c.l.bf16 %v7629
          %v7751 = vunpack.c.h.bf16 %v7629
          %v7752 = vunpack.c.l.bf16 %v7630
          %v7753 = vunpack.c.h.bf16 %v7630
          %v7754 = vunpack.c.l.bf16 %v7631
          %v7755 = vunpack.c.h.bf16 %v7631
          %v7756 = vunpack.c.l.bf16 %v7632
          %v7757 = vunpack.c.h.bf16 %v7632
          %v7758 = vunpack.c.l.bf16 %v7633
          %v7759 = vunpack.c.h.bf16 %v7633
          %v7760 = vunpack.c.l.bf16 %v7634
          %v7761 = vunpack.c.h.bf16 %v7634
          %v7762 = vunpack.c.l.bf16 %v7635
          %v7763 = vunpack.c.h.bf16 %v7635
          %v7764 = vld [vmem:[#allocation17] sm:$0x3]
          %v7766 = vlaneseq
          %v7767 = vshrl.u32 %v7766, 7
          %v7768 = vsub.s32 0, %v7767
          %v7769 = vrot.slane %v7764, %v7768
          %v7770 = vlaneseq
          %v7771 = vshrl.u32 %v7770, 7
          %v7772 = vsub.s32 1, %v7771
          %v7773 = vrot.slane %v7764, %v7772
          %7776 = vmatprep.subr.mxu0 %v7637
          %7777 = vmatpush1.msra.mxu0 %v7636
          %7778 = vmatprep.subr.mxu0 %v7639
          %7779 = vmatpush1.msra.mxu0 %v7638
          %7780 = vmatprep.subr.mxu0 %v7641
          %7781 = vmatpush1.msra.mxu0 %v7640
          %7782 = vmatprep.subr.mxu0 %v7643
          %7783 = vmatpush1.msra.mxu0 %v7642
          %7784 = vmatprep.subr.mxu0 %v7645
          %7785 = vmatpush1.msra.mxu0 %v7644
          %7786 = vmatprep.subr.mxu0 %v7647
          %7787 = vmatpush1.msra.mxu0 %v7646
          %7788 = vmatprep.subr.mxu0 %v7649
          %7789 = vmatpush1.msra.mxu0 %v7648
          %7790 = vmatprep.subr.mxu0 %v7651
          %7791 = vmatpush1.msra.mxu0 %v7650
          %7792 = vmatprep.subr.mxu0 %v7653
          %7793 = vmatpush1.msra.mxu0 %v7652
          %7794 = vmatprep.subr.mxu0 %v7655
          %7795 = vmatpush1.msra.mxu0 %v7654
          %7796 = vmatprep.subr.mxu0 %v7657
          %7797 = vmatpush1.msra.mxu0 %v7656
          %7798 = vmatprep.subr.mxu0 %v7659
          %7799 = vmatpush1.msra.mxu0 %v7658
          %7800 = vmatprep.subr.mxu0 %v7661
          %7801 = vmatpush1.msra.mxu0 %v7660
          %7802 = vmatprep.subr.mxu0 %v7663
          %7803 = vmatpush1.msra.mxu0 %v7662
          %7804 = vmatprep.subr.mxu0 %v7665
          %7805 = vmatpush1.msra.mxu0 %v7664
          %7806 = vmatprep.subr.mxu0 %v7667
          %7807 = vmatpush1.msra.mxu0 %v7666
          %7808 = vmatprep.subr.mxu0 %v7669
          %7809 = vmatpush1.msra.mxu0 %v7668
          %7810 = vmatprep.subr.mxu0 %v7671
          %7811 = vmatpush1.msra.mxu0 %v7670
          %7812 = vmatprep.subr.mxu0 %v7673
          %7813 = vmatpush1.msra.mxu0 %v7672
          %7814 = vmatprep.subr.mxu0 %v7675
          %7815 = vmatpush1.msra.mxu0 %v7674
          %7816 = vmatprep.subr.mxu0 %v7677
          %7817 = vmatpush1.msra.mxu0 %v7676
          %7818 = vmatprep.subr.mxu0 %v7679
          %7819 = vmatpush1.msra.mxu0 %v7678
          %7820 = vmatprep.subr.mxu0 %v7681
          %7821 = vmatpush1.msra.mxu0 %v7680
          %7822 = vmatprep.subr.mxu0 %v7683
          %7823 = vmatpush1.msra.mxu0 %v7682
          %7824 = vmatprep.subr.mxu0 %v7685
          %7825 = vmatpush1.msra.mxu0 %v7684
          %7826 = vmatprep.subr.mxu0 %v7687
          %7827 = vmatpush1.msra.mxu0 %v7686
          %7828 = vmatprep.subr.mxu0 %v7689
          %7829 = vmatpush1.msra.mxu0 %v7688
          %7830 = vmatprep.subr.mxu0 %v7691
          %7831 = vmatpush1.msra.mxu0 %v7690
          %7832 = vmatprep.subr.mxu0 %v7693
          %7833 = vmatpush1.msra.mxu0 %v7692
          %7834 = vmatprep.subr.mxu0 %v7695
          %7835 = vmatpush1.msra.mxu0 %v7694
          %7836 = vmatprep.subr.mxu0 %v7697
          %7837 = vmatpush1.msra.mxu0 %v7696
          %7838 = vmatprep.subr.mxu0 %v7699
          %7839 = vmatpush1.msra.mxu0 %v7698
          %7840 = vmatprep.mubr.f32.mxu0 %v7569
          %7841 = vmatmul.mubr.f32.gmra.mrb[0].mxu0 %v7568
          %v7842 = vpop.f32.mrb[0].mxu0
          %v7843 = vadd.f32 %v7769, %v7842
          %v7844 = vpop.f32.mrb[0].mxu0
          %v7845 = vadd.f32 %v7773, %v7844
          %7846 = vdwg.mxu0
          %7847 = vmatprep.subr.mxu0 %v7701
          %7848 = vmatpush1.msra.mxu0 %v7700
          %7849 = vmatprep.subr.mxu0 %v7703
          %7850 = vmatpush1.msra.mxu0 %v7702
          %7851 = vmatprep.subr.mxu0 %v7705
          %7852 = vmatpush1.msra.mxu0 %v7704
          %7853 = vmatprep.subr.mxu0 %v7707
          %7854 = vmatpush1.msra.mxu0 %v7706
          %7855 = vmatprep.subr.mxu0 %v7709
          %7856 = vmatpush1.msra.mxu0 %v7708
          %7857 = vmatprep.subr.mxu0 %v7711
          %7858 = vmatpush1.msra.mxu0 %v7710
          %7859 = vmatprep.subr.mxu0 %v7713
          %7860 = vmatpush1.msra.mxu0 %v7712
          %7861 = vmatprep.subr.mxu0 %v7715
          %7862 = vmatpush1.msra.mxu0 %v7714
          %7863 = vmatprep.subr.mxu0 %v7717
          %7864 = vmatpush1.msra.mxu0 %v7716
          %7865 = vmatprep.subr.mxu0 %v7719
          %7866 = vmatpush1.msra.mxu0 %v7718
          %7867 = vmatprep.subr.mxu0 %v7721
          %7868 = vmatpush1.msra.mxu0 %v7720
          %7869 = vmatprep.subr.mxu0 %v7723
          %7870 = vmatpush1.msra.mxu0 %v7722
          %7871 = vmatprep.subr.mxu0 %v7725
          %7872 = vmatpush1.msra.mxu0 %v7724
          %7873 = vmatprep.subr.mxu0 %v7727
          %7874 = vmatpush1.msra.mxu0 %v7726
          %7875 = vmatprep.subr.mxu0 %v7729
          %7876 = vmatpush1.msra.mxu0 %v7728
          %7877 = vmatprep.subr.mxu0 %v7731
          %7878 = vmatpush1.msra.mxu0 %v7730
          %7879 = vmatprep.subr.mxu0 %v7733
          %7880 = vmatpush1.msra.mxu0 %v7732
          %7881 = vmatprep.subr.mxu0 %v7735
          %7882 = vmatpush1.msra.mxu0 %v7734
          %7883 = vmatprep.subr.mxu0 %v7737
          %7884 = vmatpush1.msra.mxu0 %v7736
          %7885 = vmatprep.subr.mxu0 %v7739
          %7886 = vmatpush1.msra.mxu0 %v7738
          %7887 = vmatprep.subr.mxu0 %v7741
          %7888 = vmatpush1.msra.mxu0 %v7740
          %7889 = vmatprep.subr.mxu0 %v7743
          %7890 = vmatpush1.msra.mxu0 %v7742
          %7891 = vmatprep.subr.mxu0 %v7745
          %7892 = vmatpush1.msra.mxu0 %v7744
          %7893 = vmatprep.subr.mxu0 %v7747
          %7894 = vmatpush1.msra.mxu0 %v7746
          %7895 = vmatprep.subr.mxu0 %v7749
          %7896 = vmatpush1.msra.mxu0 %v7748
          %7897 = vmatprep.subr.mxu0 %v7751
          %7898 = vmatpush1.msra.mxu0 %v7750
          %7899 = vmatprep.subr.mxu0 %v7753
          %7900 = vmatpush1.msra.mxu0 %v7752
          %7901 = vmatprep.subr.mxu0 %v7755
          %7902 = vmatpush1.msra.mxu0 %v7754
          %7903 = vmatprep.subr.mxu0 %v7757
          %7904 = vmatpush1.msra.mxu0 %v7756
          %7905 = vmatprep.subr.mxu0 %v7759
          %7906 = vmatpush1.msra.mxu0 %v7758
          %7907 = vmatprep.subr.mxu0 %v7761
          %7908 = vmatpush1.msra.mxu0 %v7760
          %7909 = vmatprep.subr.mxu0 %v7763
          %7910 = vmatpush1.msra.mxu0 %v7762
          %7911 = vmatprep.mubr.f32.mxu0 %v7571
          %7912 = vmatmul.mubr.f32.gmra.mrb[0].mxu0 %v7570
          %v7913 = vpop.f32.mrb[0].mxu0
          %v7914 = vadd.f32 %v7843, %v7913
          %v7915 = vpop.f32.mrb[0].mxu0
          %v7916 = vadd.f32 %v7845, %v7915
          %7917 = vdwg.mxu0
          %v7918 = vmax.f32 %v7914, 0.0
          %v7919 = vmax.f32 %v7916, 0.0
          %v7920 = vld [vmem:[#allocation18] sm:$0xf]
          %v7921 = vld [vmem:[#allocation18 + $0x4] sm:$0xf]
          %v7922 = vld [vmem:[#allocation18 + $0x8] sm:$0xf]
          %v7923 = vld [vmem:[#allocation18 + $0xc] sm:$0xf]
          %v7924 = vld [vmem:[#allocation18 + $0x10] sm:$0xf]
          %v7925 = vld [vmem:[#allocation18 + $0x14] sm:$0xf]
          %v7926 = vld [vmem:[#allocation18 + $0x18] sm:$0xf]
          %v7927 = vld [vmem:[#allocation18 + $0x1c] sm:$0xf]
          %v7928 = vld [vmem:[#allocation18 + $0x20] sm:$0xf]
          %v7929 = vld [vmem:[#allocation18 + $0x24] sm:$0xf]
          %v7930 = vld [vmem:[#allocation18 + $0x28] sm:$0xf]
          %v7931 = vld [vmem:[#allocation18 + $0x2c] sm:$0xf]
          %v7932 = vld [vmem:[#allocation18 + $0x30] sm:$0xf]
          %v7933 = vld [vmem:[#allocation18 + $0x34] sm:$0xf]
          %v7934 = vld [vmem:[#allocation18 + $0x38] sm:$0xf]
          %v7935 = vld [vmem:[#allocation18 + $0x3c] sm:$0xf]
          %v7936 = vld [vmem:[#allocation18 + $0x40] sm:$0xf]
          %v7937 = vld [vmem:[#allocation18 + $0x44] sm:$0xf]
          %v7938 = vld [vmem:[#allocation18 + $0x48] sm:$0xf]
          %v7939 = vld [vmem:[#allocation18 + $0x4c] sm:$0xf]
          %v7940 = vld [vmem:[#allocation18 + $0x50] sm:$0xf]
          %v7941 = vld [vmem:[#allocation18 + $0x54] sm:$0xf]
          %v7942 = vld [vmem:[#allocation18 + $0x58] sm:$0xf]
          %v7943 = vld [vmem:[#allocation18 + $0x5c] sm:$0xf]
          %v7944 = vld [vmem:[#allocation18 + $0x60] sm:$0xf]
          %v7945 = vld [vmem:[#allocation18 + $0x64] sm:$0xf]
          %v7946 = vld [vmem:[#allocation18 + $0x68] sm:$0xf]
          %v7947 = vld [vmem:[#allocation18 + $0x6c] sm:$0xf]
          %v7948 = vld [vmem:[#allocation18 + $0x70] sm:$0xf]
          %v7949 = vld [vmem:[#allocation18 + $0x74] sm:$0xf]
          %v7950 = vld [vmem:[#allocation18 + $0x78] sm:$0xf]
          %v7951 = vld [vmem:[#allocation18 + $0x7c] sm:$0xf]
          %v7952 = vunpack.c.l.bf16 %v7920
          %v7953 = vunpack.c.l.bf16 %v7921
          %v7954 = vunpack.c.l.bf16 %v7922
          %v7955 = vunpack.c.l.bf16 %v7923
          %v7956 = vunpack.c.l.bf16 %v7924
          %v7957 = vunpack.c.l.bf16 %v7925
          %v7958 = vunpack.c.l.bf16 %v7926
          %v7959 = vunpack.c.l.bf16 %v7927
          %v7960 = vunpack.c.l.bf16 %v7928
          %v7961 = vunpack.c.l.bf16 %v7929
          %v7962 = vunpack.c.l.bf16 %v7930
          %v7963 = vunpack.c.l.bf16 %v7931
          %v7964 = vunpack.c.l.bf16 %v7932
          %v7965 = vunpack.c.l.bf16 %v7933
          %v7966 = vunpack.c.l.bf16 %v7934
          %v7967 = vunpack.c.l.bf16 %v7935
          %v7968 = vunpack.c.l.bf16 %v7936
          %v7969 = vunpack.c.l.bf16 %v7937
          %v7970 = vunpack.c.l.bf16 %v7938
          %v7971 = vunpack.c.l.bf16 %v7939
          %v7972 = vunpack.c.l.bf16 %v7940
          %v7973 = vunpack.c.l.bf16 %v7941
          %v7974 = vunpack.c.l.bf16 %v7942
          %v7975 = vunpack.c.l.bf16 %v7943
          %v7976 = vunpack.c.l.bf16 %v7944
          %v7977 = vunpack.c.l.bf16 %v7945
          %v7978 = vunpack.c.l.bf16 %v7946
          %v7979 = vunpack.c.l.bf16 %v7947
          %v7980 = vunpack.c.l.bf16 %v7948
          %v7981 = vunpack.c.l.bf16 %v7949
          %v7982 = vunpack.c.l.bf16 %v7950
          %v7983 = vunpack.c.l.bf16 %v7951
          %v7984 = vld [vmem:[#allocation20] sm:$0x1]
          %v7986 = vlaneseq
          %v7987 = vshrl.u32 %v7986, 7
          %v7988 = vsub.s32 0, %v7987
          %v7989 = vrot.slane %v7984, %v7988
          %7991 = vmatprep.subr.mxu0 0.0
          %7992 = vmatpush1.msra.mxu0 %v7952
          %7993 = vmatprep.subr.mxu0 0.0
          %7994 = vmatpush1.msra.mxu0 %v7953
          %7995 = vmatprep.subr.mxu0 0.0
          %7996 = vmatpush1.msra.mxu0 %v7954
          %7997 = vmatprep.subr.mxu0 0.0
          %7998 = vmatpush1.msra.mxu0 %v7955
          %7999 = vmatprep.subr.mxu0 0.0
          %8000 = vmatpush1.msra.mxu0 %v7956
          %8001 = vmatprep.subr.mxu0 0.0
          %8002 = vmatpush1.msra.mxu0 %v7957
          %8003 = vmatprep.subr.mxu0 0.0
          %8004 = vmatpush1.msra.mxu0 %v7958
          %8005 = vmatprep.subr.mxu0 0.0
          %8006 = vmatpush1.msra.mxu0 %v7959
          %8007 = vmatprep.subr.mxu0 0.0
          %8008 = vmatpush1.msra.mxu0 %v7960
          %8009 = vmatprep.subr.mxu0 0.0
          %8010 = vmatpush1.msra.mxu0 %v7961
          %8011 = vmatprep.subr.mxu0 0.0
          %8012 = vmatpush1.msra.mxu0 %v7962
          %8013 = vmatprep.subr.mxu0 0.0
          %8014 = vmatpush1.msra.mxu0 %v7963
          %8015 = vmatprep.subr.mxu0 0.0
          %8016 = vmatpush1.msra.mxu0 %v7964
          %8017 = vmatprep.subr.mxu0 0.0
          %8018 = vmatpush1.msra.mxu0 %v7965
          %8019 = vmatprep.subr.mxu0 0.0
          %8020 = vmatpush1.msra.mxu0 %v7966
          %8021 = vmatprep.subr.mxu0 0.0
          %8022 = vmatpush1.msra.mxu0 %v7967
          %8023 = vmatprep.subr.mxu0 0.0
          %8024 = vmatpush1.msra.mxu0 %v7968
          %8025 = vmatprep.subr.mxu0 0.0
          %8026 = vmatpush1.msra.mxu0 %v7969
          %8027 = vmatprep.subr.mxu0 0.0
          %8028 = vmatpush1.msra.mxu0 %v7970
          %8029 = vmatprep.subr.mxu0 0.0
          %8030 = vmatpush1.msra.mxu0 %v7971
          %8031 = vmatprep.subr.mxu0 0.0
          %8032 = vmatpush1.msra.mxu0 %v7972
          %8033 = vmatprep.subr.mxu0 0.0
          %8034 = vmatpush1.msra.mxu0 %v7973
          %8035 = vmatprep.subr.mxu0 0.0
          %8036 = vmatpush1.msra.mxu0 %v7974
          %8037 = vmatprep.subr.mxu0 0.0
          %8038 = vmatpush1.msra.mxu0 %v7975
          %8039 = vmatprep.subr.mxu0 0.0
          %8040 = vmatpush1.msra.mxu0 %v7976
          %8041 = vmatprep.subr.mxu0 0.0
          %8042 = vmatpush1.msra.mxu0 %v7977
          %8043 = vmatprep.subr.mxu0 0.0
          %8044 = vmatpush1.msra.mxu0 %v7978
          %8045 = vmatprep.subr.mxu0 0.0
          %8046 = vmatpush1.msra.mxu0 %v7979
          %8047 = vmatprep.subr.mxu0 0.0
          %8048 = vmatpush1.msra.mxu0 %v7980
          %8049 = vmatprep.subr.mxu0 0.0
          %8050 = vmatpush1.msra.mxu0 %v7981
          %8051 = vmatprep.subr.mxu0 0.0
          %8052 = vmatpush1.msra.mxu0 %v7982
          %8053 = vmatprep.subr.mxu0 0.0
          %8054 = vmatpush1.msra.mxu0 %v7983
          %8055 = vmatprep.mubr.f32.mxu0 %v7919
          %8056 = vmatmul.mubr.f32.gmra.mrb[0].mxu0 %v7918
          %v8057 = vpop.f32.mrb[0].mxu0
          %v8058 = vadd.f32 %v7989, %v8057
          %v8059 = vpop.f32.mrb[0].mxu0
          %8060 = vdwg.mxu0
          %v8061 = vmax.f32 %v8058, 0.0
          %v8062 = vld [vmem:[%s11] sm:$0xf]
          %v8063 = vld [vmem:[%s11 + $0x4] sm:$0xf]
          %v8064 = vld [vmem:[%s11 + $0x8] sm:$0xf]
          %v8065 = vld [vmem:[%s11 + $0xc] sm:$0xf]
          %v8066 = vld [vmem:[%s11 + $0x10] sm:$0xf]
          %v8067 = vld [vmem:[%s11 + $0x14] sm:$0xf]
          %v8068 = vld [vmem:[%s11 + $0x18] sm:$0xf]
          %v8069 = vld [vmem:[%s11 + $0x1c] sm:$0xf]
          %v8070 = vld [vmem:[%s11 + $0x20] sm:$0xf]
          %v8071 = vld [vmem:[%s11 + $0x24] sm:$0xf]
          %v8072 = vld [vmem:[%s11 + $0x28] sm:$0xf]
          %v8073 = vld [vmem:[%s11 + $0x2c] sm:$0xf]
          %v8074 = vld [vmem:[%s11 + $0x30] sm:$0xf]
          %v8075 = vld [vmem:[%s11 + $0x34] sm:$0xf]
          %v8076 = vld [vmem:[%s11 + $0x38] sm:$0xf]
          %v8077 = vld [vmem:[%s11 + $0x3c] sm:$0xf]
          %v8078 = vunpack.c.l.bf16 %v8062
          %v8079 = vunpack.c.l.bf16 %v8063
          %v8080 = vunpack.c.l.bf16 %v8064
          %v8081 = vunpack.c.l.bf16 %v8065
          %v8082 = vunpack.c.l.bf16 %v8066
          %v8083 = vunpack.c.l.bf16 %v8067
          %v8084 = vunpack.c.l.bf16 %v8068
          %v8085 = vunpack.c.l.bf16 %v8069
          %v8086 = vunpack.c.l.bf16 %v8070
          %v8087 = vunpack.c.l.bf16 %v8071
          %v8088 = vunpack.c.l.bf16 %v8072
          %v8089 = vunpack.c.l.bf16 %v8073
          %v8090 = vunpack.c.l.bf16 %v8074
          %v8091 = vunpack.c.l.bf16 %v8075
          %v8092 = vunpack.c.l.bf16 %v8076
          %v8093 = vunpack.c.l.bf16 %v8077
          %v8094 = vld [vmem:[#allocation21] sm:$0x1]
          %v8096 = vlaneseq
          %v8097 = vshrl.u32 %v8096, 7
          %v8098 = vsub.s32 0, %v8097
          %v8099 = vrot.slane %v8094, %v8098
          %8101 = vmatprep.subr.mxu0 0.0
          %8102 = vmatpush1.msra.mxu0 %v8078
          %8103 = vmatprep.subr.mxu0 0.0
          %8104 = vmatpush1.msra.mxu0 %v8079
          %8105 = vmatprep.subr.mxu0 0.0
          %8106 = vmatpush1.msra.mxu0 %v8080
          %8107 = vmatprep.subr.mxu0 0.0
          %8108 = vmatpush1.msra.mxu0 %v8081
          %8109 = vmatprep.subr.mxu0 0.0
          %8110 = vmatpush1.msra.mxu0 %v8082
          %8111 = vmatprep.subr.mxu0 0.0
          %8112 = vmatpush1.msra.mxu0 %v8083
          %8113 = vmatprep.subr.mxu0 0.0
          %8114 = vmatpush1.msra.mxu0 %v8084
          %8115 = vmatprep.subr.mxu0 0.0
          %8116 = vmatpush1.msra.mxu0 %v8085
          %8117 = vmatprep.subr.mxu0 0.0
          %8118 = vmatpush1.msra.mxu0 %v8086
          %8119 = vmatprep.subr.mxu0 0.0
          %8120 = vmatpush1.msra.mxu0 %v8087
          %8121 = vmatprep.subr.mxu0 0.0
          %8122 = vmatpush1.msra.mxu0 %v8088
          %8123 = vmatprep.subr.mxu0 0.0
          %8124 = vmatpush1.msra.mxu0 %v8089
          %8125 = vmatprep.subr.mxu0 0.0
          %8126 = vmatpush1.msra.mxu0 %v8090
          %8127 = vmatprep.subr.mxu0 0.0
          %8128 = vmatpush1.msra.mxu0 %v8091
          %8129 = vmatprep.subr.mxu0 0.0
          %8130 = vmatpush1.msra.mxu0 %v8092
          %8131 = vmatprep.subr.mxu0 0.0
          %8132 = vmatpush1.msra.mxu0 %v8093
          %8133 = vmatprep.subr.mxu0 0.0
          %8134 = vmatpush1.msra.mxu0 0.0
          %8135 = vmatprep.subr.mxu0 0.0
          %8136 = vmatpush1.msra.mxu0 0.0
          %8137 = vmatprep.subr.mxu0 0.0
          %8138 = vmatpush1.msra.mxu0 0.0
          %8139 = vmatprep.subr.mxu0 0.0
          %8140 = vmatpush1.msra.mxu0 0.0
          %8141 = vmatprep.subr.mxu0 0.0
          %8142 = vmatpush1.msra.mxu0 0.0
          %8143 = vmatprep.subr.mxu0 0.0
          %8144 = vmatpush1.msra.mxu0 0.0
          %8145 = vmatprep.subr.mxu0 0.0
          %8146 = vmatpush1.msra.mxu0 0.0
          %8147 = vmatprep.subr.mxu0 0.0
          %8148 = vmatpush1.msra.mxu0 0.0
          %8149 = vmatprep.subr.mxu0 0.0
          %8150 = vmatpush1.msra.mxu0 0.0
          %8151 = vmatprep.subr.mxu0 0.0
          %8152 = vmatpush1.msra.mxu0 0.0
          %8153 = vmatprep.subr.mxu0 0.0
          %8154 = vmatpush1.msra.mxu0 0.0
          %8155 = vmatprep.subr.mxu0 0.0
          %8156 = vmatpush1.msra.mxu0 0.0
          %8157 = vmatprep.subr.mxu0 0.0
          %8158 = vmatpush1.msra.mxu0 0.0
          %8159 = vmatprep.subr.mxu0 0.0
          %8160 = vmatpush1.msra.mxu0 0.0
          %8161 = vmatprep.subr.mxu0 0.0
          %8162 = vmatpush1.msra.mxu0 0.0
          %8163 = vmatprep.subr.mxu0 0.0
          %8164 = vmatpush1.msra.mxu0 0.0
          %8165 = vmatprep.mubr.f32.mxu0 0.0
          %8166 = vmatmul.mubr.f32.gmra.mrb[0].mxu0 %v8061
          %v8167 = vpop.f32.mrb[0].mxu0
          %v8168 = vadd.f32 %v8099, %v8167
          %v8169 = vpop.f32.mrb[0].mxu0
          %8170 = vdwg.mxu0
          %v8171 = vmax.f32 %v8168, 0.0
          %v8172 = vld [vmem:[#allocation23] sm:$0xf]
          %v8173 = vld [vmem:[#allocation23 + $0x4] sm:$0xf]
          %v8174 = vld [vmem:[#allocation23 + $0x8] sm:$0xf]
          %v8175 = vld [vmem:[#allocation23 + $0xc] sm:$0xf]
          %v8176 = vld [vmem:[#allocation23 + $0x10] sm:$0xf]
          %v8177 = vld [vmem:[#allocation23 + $0x14] sm:$0xf]
          %v8178 = vld [vmem:[#allocation23 + $0x18] sm:$0xf]
          %v8179 = vld [vmem:[#allocation23 + $0x1c] sm:$0xf]
          %v8180 = vunpack.c.l.bf16 %v8172
          %v8181 = vunpack.c.l.bf16 %v8173
          %v8182 = vunpack.c.l.bf16 %v8174
          %v8183 = vunpack.c.l.bf16 %v8175
          %v8184 = vunpack.c.l.bf16 %v8176
          %v8185 = vunpack.c.l.bf16 %v8177
          %v8186 = vunpack.c.l.bf16 %v8178
          %v8187 = vunpack.c.l.bf16 %v8179
          %v8188 = vld [vmem:[#allocation24] sm:$0x1]
          %v8190 = vlaneseq
          %v8191 = vshrl.u32 %v8190, 7
          %v8192 = vsub.s32 0, %v8191
          %v8193 = vrot.slane %v8188, %v8192
          %vm8195 = vcmask 523264
          %v8197 = vsel %vm8195, %v8171, 0
          %8199 = vmatprep.subr.mxu0 0.0
          %8200 = vmatpush1.msra.mxu0 %v8180
          %8201 = vmatprep.subr.mxu0 0.0
          %8202 = vmatpush1.msra.mxu0 %v8181
          %8203 = vmatprep.subr.mxu0 0.0
          %8204 = vmatpush1.msra.mxu0 %v8182
          %8205 = vmatprep.subr.mxu0 0.0
          %8206 = vmatpush1.msra.mxu0 %v8183
          %8207 = vmatprep.subr.mxu0 0.0
          %8208 = vmatpush1.msra.mxu0 %v8184
          %8209 = vmatprep.subr.mxu0 0.0
          %8210 = vmatpush1.msra.mxu0 %v8185
          %8211 = vmatprep.subr.mxu0 0.0
          %8212 = vmatpush1.msra.mxu0 %v8186
          %8213 = vmatprep.subr.mxu0 0.0
          %8214 = vmatpush1.msra.mxu0 %v8187
          %8215 = vmatprep.subr.mxu0 0.0
          %8216 = vmatpush1.msra.mxu0 0.0
          %8217 = vmatprep.subr.mxu0 0.0
          %8218 = vmatpush1.msra.mxu0 0.0
          %8219 = vmatprep.subr.mxu0 0.0
          %8220 = vmatpush1.msra.mxu0 0.0
          %8221 = vmatprep.subr.mxu0 0.0
          %8222 = vmatpush1.msra.mxu0 0.0
          %8223 = vmatprep.subr.mxu0 0.0
          %8224 = vmatpush1.msra.mxu0 0.0
          %8225 = vmatprep.subr.mxu0 0.0
          %8226 = vmatpush1.msra.mxu0 0.0
          %8227 = vmatprep.subr.mxu0 0.0
          %8228 = vmatpush1.msra.mxu0 0.0
          %8229 = vmatprep.subr.mxu0 0.0
          %8230 = vmatpush1.msra.mxu0 0.0
          %8231 = vmatprep.subr.mxu0 0.0
          %8232 = vmatpush1.msra.mxu0 0.0
          %8233 = vmatprep.subr.mxu0 0.0
          %8234 = vmatpush1.msra.mxu0 0.0
          %8235 = vmatprep.subr.mxu0 0.0
          %8236 = vmatpush1.msra.mxu0 0.0
          %8237 = vmatprep.subr.mxu0 0.0
          %8238 = vmatpush1.msra.mxu0 0.0
          %8239 = vmatprep.subr.mxu0 0.0
          %8240 = vmatpush1.msra.mxu0 0.0
          %8241 = vmatprep.subr.mxu0 0.0
          %8242 = vmatpush1.msra.mxu0 0.0
          %8243 = vmatprep.subr.mxu0 0.0
          %8244 = vmatpush1.msra.mxu0 0.0
          %8245 = vmatprep.subr.mxu0 0.0
          %8246 = vmatpush1.msra.mxu0 0.0
          %8247 = vmatprep.subr.mxu0 0.0
          %8248 = vmatpush1.msra.mxu0 0.0
          %8249 = vmatprep.subr.mxu0 0.0
          %8250 = vmatpush1.msra.mxu0 0.0
          %8251 = vmatprep.subr.mxu0 0.0
          %8252 = vmatpush1.msra.mxu0 0.0
          %8253 = vmatprep.subr.mxu0 0.0
          %8254 = vmatpush1.msra.mxu0 0.0
          %8255 = vmatprep.subr.mxu0 0.0
          %8256 = vmatpush1.msra.mxu0 0.0
          %8257 = vmatprep.subr.mxu0 0.0
          %8258 = vmatpush1.msra.mxu0 0.0
          %8259 = vmatprep.subr.mxu0 0.0
          %8260 = vmatpush1.msra.mxu0 0.0
          %8261 = vmatprep.subr.mxu0 0.0
          %8262 = vmatpush1.msra.mxu0 0.0
          %8263 = vmatprep.mubr.f32.mxu0 0.0
          %8264 = vmatmul.mubr.f32.gmra.mrb[0].mxu0 %v8197
          %v8265 = vpop.f32.mrb[0].mxu0
          %v8266 = vadd.f32 %v8193, %v8265
          %v8267 = vpop.f32.mrb[0].mxu0
          %8268 = vdwg.mxu0
          %8269 = vmax.xlane.f32.xlu0 %v8266
          %v8270 = vpop.xlane.xlu0 %8269
          %v8271 = vsub.f32 %v8266, %v8270
          %v8272 = vmul.f32 %v8271, 1.442695
          %v8273 = vpow.pop %v8272
          %8274 = vadd.xlane.f32.xlu0 %v8273
          %v8275 = vpop.xlane.xlu0 %8274
          %v8276 = vlog2.pop %v8275
          %v8277 = vmul.f32 %v8276, 0.6931472
          %v8278 = vadd.f32 %v8277, %v8270
          %v8279 = vsub.f32 %v8266, %v8278
          %8280 = vst [vmem:[#allocation26] sm:$0xff] %v8279
        $region144: #{tpu_custom_call.1} parent=79 // pred_fallthru
          _
        // Predicated region
        $region145: #{tpu_custom_call.1} parent=79 // pred_check
          %p8281 = pneg %p377
        $region146: #{tpu_custom_call.1} parent=79 // pred_check_branch
          %8283 = sbr.rel (%p8281) target = $region148
        $region147: #{tpu_custom_call.1} parent=79 // pred_region
          %s8285 = ssub.s32 128, 128
          %8286 = vsyncadd [#allocation5], %s8285
          %s8288 = sshll.u32 [#allocation26], 4
          %s8289 = int_to_ptr.vmem [resolvable:$true] %s8288
          %8291 = dma.vmem_to_hbm [thread:$0]  %s8289, 128, %s15, [#allocation5]
        $region148: #{tpu_custom_call.1} parent=79 // pred_fallthru
          _
        // Predicated region
        $region149: #{tpu_custom_call.1} parent=79 // pred_check
          %p8292 = pneg %p377
        $region150: #{tpu_custom_call.1} parent=79 // pred_check_branch
          %8294 = sbr.rel (%p8292) target = $region152
        $region151: #{tpu_custom_call.1} parent=79 // pred_region
          %8295 = dma.done [#allocation5], 128
        $region152: #{tpu_custom_call.1} parent=79 // pred_fallthru
          _
      $region80: #{tpu_custom_call.1} parent=5 // pred_fallthru
        _
      %p8296 = scmp.le.s32.totalorder 2, %s34
      // Predicated region
      $region153: #{tpu_custom_call.1} parent=5 // pred_check
        %p8297 = pneg %p8296
      $region154: #{tpu_custom_call.1} parent=5 // pred_check_branch
        %8299 = sbr.rel (%p8297) target = $region156
      $region155: #{tpu_custom_call.1} parent=5 // pred_region
        %s8300 = ssub.s32 %s34, 2
      $region156: #{tpu_custom_call.1} parent=5 // pred_fallthru
        _
    $region6: #{tpu_custom_call.1} parent=1 // loop_footer
      %s38 = sadd.s32 1, %s34
    $region7: #{tpu_custom_call.1} parent=1 // loop_footer_branch
      %33 = sbr.rel target = $region3
    $region8: #{tpu_custom_call.1} parent=1 // loop_exit
      _
    %8301 = vsyncpa [#allocation4], 1
    %s8302 = scalar_lea.sflag [#allocation4], 1
    %8303 = vsyncpa %s8302, 1
    %8304 = vsyncpa [#allocation7], 1
    %s8305 = scalar_lea.sflag [#allocation7], 1
    %8306 = vsyncpa %s8305, 1
    %8307 = vsyncpa [#allocation10], 1
    %8308 = vsyncpa [#allocation13], 1
    %8309 = vsyncpa [#allocation16], 1
    %8310 = vsyncpa [#allocation19], 1
    %8311 = vsyncpa [#allocation22], 1
    %8312 = vsyncpa [#allocation25], 1
    %8313 = vsyncpa [#allocation5], 1
    %s8314 = scalar_lea.sflag [#allocation5], 1
    %8315 = vsyncpa %s8314, 1

</llo_original>
